<compile_context>
chip_gen: v6e
topology: v6e:2x2x1
jax: 0.10.0
libtpu: 0.0.40
codegen_flags: <defaults>
</compile_context>

<pallas_src>
import numpy as np
import jax
import jax.numpy as jnp
from jax import lax
from jax.experimental import pallas as pl
from jax.experimental.pallas import tpu as pltpu

LANE = 128


def _ceil_to(v, m):
    return (v + m - 1) // m * m


# ----------------------------------------------------------------------------
# Fused extractor-stage kernel (one grid step = NB batch elements)
# ----------------------------------------------------------------------------
def _make_stage_kernel(nums_rb):
    def kernel(*refs):
        x_ref = refs[0]
        w_in_ref, b_in_ref = refs[1], refs[2]
        rb_refs = refs[3:3 + 4 * nums_rb]
        w_out_ref = refs[3 + 4 * nums_rb]
        b_out_ref = refs[4 + 4 * nums_rb]
        o_ref = refs[5 + 4 * nums_rb]
        pad_ref = refs[6 + 4 * nums_rb]          # VMEM halo (NB, H+2, W+2, Cip) bf16

        NB, H, W, Kin = x_ref.shape
        Cip = w_in_ref.shape[1]                  # lane-padded intermediate channels
        Cp = o_ref.shape[-1]                     # lane-padded output channels
        M = NB * H * W

        # Zero ONLY the 1-pixel border each grid step (O(H+W), not O(H*W));
        # the interior is fully rewritten by every conv.  This is the 3x3
        # "padding=1" zero halo, and it is megacore-safe (no program_id gate).
        zrow = jnp.zeros((NB, 1, W + 2, Cip), jnp.bfloat16)
        zcol = jnp.zeros((NB, H + 2, 1, Cip), jnp.bfloat16)
        pad_ref[:, 0:1, :, :] = zrow
        pad_ref[:, H + 1:H + 2, :, :] = zrow
        pad_ref[:, :, 0:1, :] = zcol
        pad_ref[:, :, W + 1:W + 2, :] = zcol

        # 1x1 in_conv.  For down-sampling stages the wrapper already applied a
        # layout-only 2x2 space-to-depth and folded the avg-pool into w_in
        # (tiled w/4), so this single matmul is pool + in_conv.
        x = x_ref[...].reshape(M, Kin)                              # bf16
        h = jnp.dot(x, w_in_ref[...], preferred_element_type=jnp.float32)
        h = h + b_in_ref[...]                                       # (M, Cip) f32

        def conv3x3(a_f32, w_ref, b_ref):
            # 9 accumulating MXU matmuls into a persistent f32 accumulator:
            # no (M, 9*Ci) im2col concat / extra VMEM pass.  The dx sublane
            # shift is paid once per dx and shared by the 3 dy taps.
            pad_ref[:, 1:H + 1, 1:W + 1, :] = (
                a_f32.reshape(NB, H, W, Cip).astype(jnp.bfloat16))
            acc = jnp.zeros((M, Cip), jnp.float32)
            for dx in range(3):
                col = pad_ref[:, :, dx:dx + W, :]        # one dx-shifted copy
                for dy in range(3):
                    tap = col[:, dy:dy + H].reshape(M, Cip)   # cheap dy slice
                    acc = acc + jnp.dot(tap, w_ref[dy * 3 + dx],
                                        preferred_element_type=jnp.float32)
            return acc + b_ref[...]                               # (M, Cip) f32

        for r in range(nums_rb):                 # ResnetBlock_light chain
            w1, b1, w2, b2 = rb_refs[4 * r:4 * r + 4]
            t = jnp.maximum(conv3x3(h, w1, b1), 0.0)              # block1+ReLU
            h = conv3x3(t, w2, b2) + h                            # block2+res

        # 1x1 out_conv; Cout zero-padded to Cp (multiple of 128) -> lane-dense
        # bf16 HBM store.
        out = jnp.dot(h.astype(jnp.bfloat16), w_out_ref[...],
                      preferred_element_type=jnp.float32) + b_out_ref[...]
        o_ref[...] = out.reshape(NB, H, W, Cp).astype(o_ref.dtype)

    return kernel


def _vmem_limit_bytes():
    """Per-generation scoped VMEM limit: ~48 MiB on v7x (64 MiB physical),
    up to 96 MiB on v5e/v6e (128 MiB physical)."""
    try:
        cap = int(pltpu.get_tpu_info().vmem_capacity_bytes)
    except Exception:
        return None
    limit = min(cap - 16 * 1024 * 1024, 96 * 1024 * 1024)
    return int(limit) if limit >= 32 * 1024 * 1024 else None


def _run_stage(x, w_in, b_in, rb_mats, w_out, b_out):
    """x: (N,H,W,Kin) NHWC bf16; weight matrices already folded/padded/bf16."""
    N, H, W, Kin = x.shape
    Cip = w_in.shape[1]
    Cp = w_out.shape[1]
    nums_rb = len(rb_mats)

    # Fold the batch into the matmul M dimension for tiny-spatial stages so the
    # MXU sees more than H*W rows per matmul and per-grid-step overhead is
    # amortized (stage 3 here has H*W == 1).
    NB = N if H * W <= 64 else 1
    assert N % NB == 0

    args = [x, w_in, b_in]
    for blk in rb_mats:
        args += list(blk)
    args += [w_out, b_out]

    def _full_spec(a):
        nd = a.ndim
        return pl.BlockSpec(a.shape, lambda n: (0,) * nd)

    in_specs = [pl.BlockSpec((NB, H, W, Kin), lambda n: (n, 0, 0, 0))]
    in_specs += [_full_spec(a) for a in args[1:]]

    # TODO(synk): for SD-scale resolutions add a second ("parallel") grid axis
    # over row tiles of H (with a 2*nums_rb-row halo, or split the fusion at
    # resblock boundaries) so one block stays under v7x's 64 MiB VMEM and both
    # TensorCores stay busy at batch 1.
    # TODO(synk): single-buffer the constant-index weight operands
    # (pipeline_mode=pl.Buffered(1)) when VMEM headroom matters on v7x.
    return pl.pallas_call(
        _make_stage_kernel(nums_rb),
        out_shape=jax.ShapeDtypeStruct((N, H, W, Cp), jnp.bfloat16),
        grid=(N // NB,),
        in_specs=in_specs,
        out_specs=pl.BlockSpec((NB, H, W, Cp), lambda n: (n, 0, 0, 0)),
        scratch_shapes=[pltpu.VMEM((NB, H + 2, W + 2, Cip), jnp.bfloat16)],
        compiler_params=pltpu.CompilerParams(
            dimension_semantics=("parallel",),          # both TCs on v7x
            vmem_limit_bytes=_vmem_limit_bytes()),
    )(*args)


# ----------------------------------------------------------------------------
# Wrapper-side weight preparation (layout / fold / pad / bf16 cast only)
# ----------------------------------------------------------------------------
def _prep_stage_mats(stage, c_have):
    """c_have: channel count of the incoming activation (already trimmed to the
       previous stage's real out_c, so normally c_have == in_c)."""
    w_in, b_in = stage["in_conv"]             # (1,1,in_c,Ci) HWIO, (Ci,)
    in_c, Ci = w_in.shape[2], w_in.shape[3]
    w_out, b_out = stage["out_conv"]          # (1,1,Ci,Cout), (Cout,)
    Cout = w_out.shape[3]
    Cip = _ceil_to(Ci, LANE)                  # lane-pad intermediate channels
    Cp = _ceil_to(Cout, LANE)                 # lane-pad output channels
    assert c_have >= in_c

    w_in_mat = jnp.pad(w_in.reshape(in_c, Ci),
                       ((0, c_have - in_c), (0, Cip - Ci)))
    if stage["down"]:
        # Fold the 2x2/stride-2 avg pool into the 1x1 conv: space-to-depth on
        # x (in the forward) + tiled weight / 4 here.
        w_in_mat = jnp.tile(w_in_mat * 0.25, (4, 1))
    w_in_mat = w_in_mat.astype(jnp.bfloat16)
    b_in_mat = jnp.pad(b_in, (0, Cip - Ci)).reshape(1, Cip).astype(jnp.float32)

    def _pad_w3(w):   # (3,3,Ci,Ci) -> (9, Cip, Cip) bf16, tap index = dy*3+dx
        w = jnp.pad(w, ((0, 0), (0, 0), (0, Cip - Ci), (0, Cip - Ci)))
        return w.reshape(9, Cip, Cip).astype(jnp.bfloat16)

    def _pad_b(b):
        return jnp.pad(b, (0, Cip - Ci)).reshape(1, Cip).astype(jnp.float32)

    rb_mats = []
    for (w1, b1), (w2, b2) in stage["body"]:
        rb_mats.append((_pad_w3(w1), _pad_b(b1), _pad_w3(w2), _pad_b(b2)))

    # INVARIANT: the w_out / b_out padding must stay exactly zero — the padded
    # output channels are sliced off for `features` and trimmed before the next
    # stage, and correctness of the lane-padded chain relies on them being 0.
    w_out_mat = jnp.pad(w_out.reshape(Ci, Cout),
                        ((0, Cip - Ci), (0, Cp - Cout))).astype(jnp.bfloat16)
    b_out_mat = jnp.pad(b_out, (0, Cp - Cout)).reshape(1, Cp).astype(jnp.float32)
    return w_in_mat, b_in_mat, rb_mats, w_out_mat, b_out_mat, Cout


def _space_to_depth_2x2(x):
    N, H, W, C = x.shape
    x = x.reshape(N, H // 2, 2, W // 2, 2, C).transpose(0, 1, 3, 2, 4, 5)
    return x.reshape(N, H // 2, W // 2, 4 * C)


def pixel_unshuffle_nchw(x, r):
    N, C, H, W = x.shape
    x = x.reshape(N, C, H // r, r, W // r, r)
    x = x.transpose(0, 1, 3, 5, 2, 4)
    return x.reshape(N, C * r * r, H // r, W // r)


# ----------------------------------------------------------------------------
# Parameter init (deterministic, PyTorch-Conv2d-style uniform bounds)
# ----------------------------------------------------------------------------
def _init_conv(key, kh, kw, cin, cout):
    kw_key, kb_key = jax.random.split(key)
    bound = 1.0 / np.sqrt(cin * kh * kw)
    w = jax.random.uniform(kw_key, (kh, kw, cin, cout), jnp.float32, -bound, bound)
    b = jax.random.uniform(kb_key, (cout,), jnp.float32, -bound, bound)
    return w, b


def init_adapter_light_params(key, channels, nums_rb, cin):
    params = []
    for i, ch in enumerate(channels):
        inter = ch // 4
        in_c = cin if i == 0 else channels[i - 1]
        key, k_in, k_out = jax.random.split(key, 3)
        stage = {
            "down": i != 0,                         # Downsample(use_conv=False)
            "in_conv": _init_conv(k_in, 1, 1, in_c, inter),
            "body": [],
            "out_conv": _init_conv(k_out, 1, 1, inter, ch),
        }
        for _ in range(nums_rb):
            key, k1, k2 = jax.random.split(key, 3)
            stage["body"].append((_init_conv(k1, 3, 3, inter, inter),
                                  _init_conv(k2, 3, 3, inter, inter)))
        params.append(stage)
    return params


# ----------------------------------------------------------------------------
# Forward pass: 4 fused pallas_calls, everything else is layout glue
# ----------------------------------------------------------------------------
def adapter_light_forward(params, x_nchw):
    x = pixel_unshuffle_nchw(x_nchw, 8)               # nn.PixelUnshuffle(8)
    x = jnp.transpose(x, (0, 2, 3, 1)).astype(jnp.bfloat16)   # NCHW -> NHWC bf16
    features = []
    for stage in params:
        c_have = x.shape[-1]
        w_in, b_in, rb_mats, w_out, b_out, cout = _prep_stage_mats(stage, c_have)
        if stage["down"]:
            x = _space_to_depth_2x2(x)    # layout only; pool math lives in w_in
        y = _run_stage(x, w_in, b_in, rb_mats, w_out, b_out)     # bf16, Cp chans
        features.append(
            jnp.transpose(y[..., :cout], (0, 3, 1, 2)).astype(jnp.float32))
        x = y[..., :cout]   # trim padded zero channels before the next stage
    return features


# ----------------------------------------------------------------------------
# Pure-JAX reference (NCHW, matches PyTorch semantics) for validation
# ----------------------------------------------------------------------------
def _ref_conv(x, w_hwio, b, padding):
    w_oihw = jnp.transpose(w_hwio, (3, 2, 0, 1))
    out = lax.conv_general_dilated(
        x, w_oihw, window_strides=(1, 1),
        padding=[(padding, padding), (padding, padding)],
        dimension_numbers=("NCHW", "OIHW", "NCHW"),
        precision=lax.Precision.HIGHEST)
    return out + b[None, :, None, None]


def adapter_light_reference(params, x_nchw):
    x = pixel_unshuffle_nchw(x_nchw, 8)
    features = []
    for stage in params:
        if stage["down"]:
            N, C, H, W = x.shape
            x = x.reshape(N, C, H // 2, 2, W // 2, 2).mean(axis=(3, 5))
        w, b = stage["in_conv"]
        x = _ref_conv(x, w, b, 0)
        for (w1, b1), (w2, b2) in stage["body"]:
            h = jnp.maximum(_ref_conv(x, w1, b1, 1), 0.0)
            x = _ref_conv(h, w2, b2, 1) + x
        w, b = stage["out_conv"]
        x = _ref_conv(x, w, b, 0)
        features.append(x)
    return features


if __name__ == "__main__":
    # Small config consistent with the module (channels divisible by 4,
    # cin == in_channels * 8 * 8 after PixelUnshuffle(8)).
    channels = [32, 64, 128, 128]
    nums_rb = 2
    cin = 64

    key = jax.random.PRNGKey(0)
    k_params, k_x = jax.random.split(key)
    params = init_adapter_light_params(k_params, channels, nums_rb, cin)
    x = jax.random.normal(k_x, (2, 1, 64, 64), jnp.float32)     # NCHW input

    feats = adapter_light_forward(params, x)
    feats = jax.block_until_ready(feats)

    refs = adapter_light_reference(params, x)
    expected_shapes = [(2, 32, 8, 8), (2, 64, 4, 4), (2, 128, 2, 2), (2, 128, 1, 1)]
    for f, r, s in zip(feats, refs, expected_shapes):
        assert f.shape == s, (f.shape, s)
        assert bool(jnp.all(jnp.isfinite(f)))
        assert bool(jnp.allclose(f, r, rtol=6e-2, atol=6e-2)), \
            float(jnp.max(jnp.abs(f - r)))

    print("KERNEL_OK")
</pallas_src>

<mosaic_0001>
module attributes {stable_mosaic.version = 11 : i64} {
  func.func @kernel(%arg0: i32, %arg1: memref<2x8x8x64xbf16, #tpu.memory_space<vmem>>, %arg2: memref<64x128xbf16, #tpu.memory_space<vmem>>, %arg3: memref<1x128xf32, #tpu.memory_space<vmem>>, %arg4: memref<9x128x128xbf16, #tpu.memory_space<vmem>>, %arg5: memref<1x128xf32, #tpu.memory_space<vmem>>, %arg6: memref<9x128x128xbf16, #tpu.memory_space<vmem>>, %arg7: memref<1x128xf32, #tpu.memory_space<vmem>>, %arg8: memref<9x128x128xbf16, #tpu.memory_space<vmem>>, %arg9: memref<1x128xf32, #tpu.memory_space<vmem>>, %arg10: memref<9x128x128xbf16, #tpu.memory_space<vmem>>, %arg11: memref<1x128xf32, #tpu.memory_space<vmem>>, %arg12: memref<128x128xbf16, #tpu.memory_space<vmem>>, %arg13: memref<1x128xf32, #tpu.memory_space<vmem>>, %arg14: memref<2x8x8x128xbf16, #tpu.memory_space<vmem>>, %arg15: memref<2x10x10x128xbf16, #tpu.memory_space<vmem>>) attributes {dimension_semantics = [#tpu.dimension_semantics<parallel>], iteration_bounds = array<i64: 1>, scalar_prefetch = 0 : i64, scratch_operands = 1 : i64, tpu.core_type = #tpu.core_type<tc>, window_params = [{transform_indices = @transform_0, window_bounds = array<i64: 2, 8, 8, 64>}, {pipeline_mode = #tpu.pipeline_mode<synchronous>, transform_indices = @transform_1, window_bounds = array<i64: 64, 128>}, {pipeline_mode = #tpu.pipeline_mode<synchronous>, transform_indices = @transform_2, window_bounds = array<i64: 1, 128>}, {pipeline_mode = #tpu.pipeline_mode<synchronous>, transform_indices = @transform_3, window_bounds = array<i64: 9, 128, 128>}, {pipeline_mode = #tpu.pipeline_mode<synchronous>, transform_indices = @transform_4, window_bounds = array<i64: 1, 128>}, {pipeline_mode = #tpu.pipeline_mode<synchronous>, transform_indices = @transform_5, window_bounds = array<i64: 9, 128, 128>}, {pipeline_mode = #tpu.pipeline_mode<synchronous>, transform_indices = @transform_6, window_bounds = array<i64: 1, 128>}, {pipeline_mode = #tpu.pipeline_mode<synchronous>, transform_indices = @transform_7, window_bounds = array<i64: 9, 128, 128>}, {pipeline_mode = #tpu.pipeline_mode<synchronous>, transform_indices = @transform_8, window_bounds = array<i64: 1, 128>}, {pipeline_mode = #tpu.pipeline_mode<synchronous>, transform_indices = @transform_9, window_bounds = array<i64: 9, 128, 128>}, {pipeline_mode = #tpu.pipeline_mode<synchronous>, transform_indices = @transform_10, window_bounds = array<i64: 1, 128>}, {pipeline_mode = #tpu.pipeline_mode<synchronous>, transform_indices = @transform_11, window_bounds = array<i64: 128, 128>}, {pipeline_mode = #tpu.pipeline_mode<synchronous>, transform_indices = @transform_12, window_bounds = array<i64: 1, 128>}, {transform_indices = @transform_13, window_bounds = array<i64: 2, 8, 8, 128>}]} {
    %cst = arith.constant 0.000000e+00 : bf16
    %0 = vector.broadcast %cst : bf16 to vector<2x1x10x128xbf16>
    %cst_0 = arith.constant 0.000000e+00 : bf16
    %1 = vector.broadcast %cst_0 : bf16 to vector<2x10x1x128xbf16>
    %c0 = arith.constant 0 : index
    %c0_1 = arith.constant 0 : index
    %c0_2 = arith.constant 0 : index
    %c0_3 = arith.constant 0 : index
    %2 = vector.load %arg15[%c0, %c0_1, %c0_2, %c0_3] : memref<2x10x10x128xbf16, #tpu.memory_space<vmem>>, vector<2x1x10x128xbf16>
    tpu.vector_store %arg15[%c0, %c0_1, %c0_2, %c0_3], %0 {strides = array<i32>} : memref<2x10x10x128xbf16, #tpu.memory_space<vmem>>, vector<2x1x10x128xbf16>,
    %c0_4 = arith.constant 0 : index
    %c9 = arith.constant 9 : index
    %c0_5 = arith.constant 0 : index
    %c0_6 = arith.constant 0 : index
    %3 = vector.load %arg15[%c0_4, %c9, %c0_5, %c0_6] : memref<2x10x10x128xbf16, #tpu.memory_space<vmem>>, vector<2x1x10x128xbf16>
    tpu.vector_store %arg15[%c0_4, %c9, %c0_5, %c0_6], %0 {strides = array<i32>} : memref<2x10x10x128xbf16, #tpu.memory_space<vmem>>, vector<2x1x10x128xbf16>,
    %c0_7 = arith.constant 0 : index
    %c0_8 = arith.constant 0 : index
    %c0_9 = arith.constant 0 : index
    %c0_10 = arith.constant 0 : index
    %4 = vector.load %arg15[%c0_7, %c0_8, %c0_9, %c0_10] : memref<2x10x10x128xbf16, #tpu.memory_space<vmem>>, vector<2x10x1x128xbf16>
    tpu.vector_store %arg15[%c0_7, %c0_8, %c0_9, %c0_10], %1 {strides = array<i32>} : memref<2x10x10x128xbf16, #tpu.memory_space<vmem>>, vector<2x10x1x128xbf16>,
    %c0_11 = arith.constant 0 : index
    %c0_12 = arith.constant 0 : index
    %c9_13 = arith.constant 9 : index
    %c0_14 = arith.constant 0 : index
    %5 = vector.load %arg15[%c0_11, %c0_12, %c9_13, %c0_14] : memref<2x10x10x128xbf16, #tpu.memory_space<vmem>>, vector<2x10x1x128xbf16>
    tpu.vector_store %arg15[%c0_11, %c0_12, %c9_13, %c0_14], %1 {strides = array<i32>} : memref<2x10x10x128xbf16, #tpu.memory_space<vmem>>, vector<2x10x1x128xbf16>,
    %c0_15 = arith.constant 0 : index
    %c0_16 = arith.constant 0 : index
    %c0_17 = arith.constant 0 : index
    %c0_18 = arith.constant 0 : index
    %6 = vector.load %arg1[%c0_15, %c0_16, %c0_17, %c0_18] : memref<2x8x8x64xbf16, #tpu.memory_space<vmem>>, vector<2x8x8x64xbf16>
    %7 = vector.shape_cast %6 : vector<2x8x8x64xbf16> to vector<128x64xbf16>
    %c0_19 = arith.constant 0 : index
    %c0_20 = arith.constant 0 : index
    %8 = vector.load %arg2[%c0_19, %c0_20] : memref<64x128xbf16, #tpu.memory_space<vmem>>, vector<64x128xbf16>
    %cst_21 = arith.constant dense<0.000000e+00> : vector<128x128xf32>
    %9 = tpu.matmul %7, %8, %cst_21 {dimension_numbers = #tpu.dot_dimension_numbers<[1], [0], [0], [1], [0, 0, 1, 1], [], []>} : vector<128x64xbf16>, vector<64x128xbf16>, vector<128x128xf32> -> vector<128x128xf32>
    %c0_22 = arith.constant 0 : index
    %c0_23 = arith.constant 0 : index
    %10 = vector.load %arg3[%c0_22, %c0_23] : memref<1x128xf32, #tpu.memory_space<vmem>>, vector<1x128xf32>
    %11 = vector.broadcast %10 : vector<1x128xf32> to vector<128x128xf32>
    %12 = arith.addf %9, %11 : vector<128x128xf32>
    %13 = vector.shape_cast %12 : vector<128x128xf32> to vector<2x8x8x128xf32>
    %14 = arith.truncf %13 : vector<2x8x8x128xf32> to vector<2x8x8x128xbf16>
    %c0_24 = arith.constant 0 : index
    %c1 = arith.constant 1 : index
    %c1_25 = arith.constant 1 : index
    %c0_26 = arith.constant 0 : index
    %15 = vector.load %arg15[%c0_24, %c1, %c1_25, %c0_26] : memref<2x10x10x128xbf16, #tpu.memory_space<vmem>>, vector<2x8x8x128xbf16>
    tpu.vector_store %arg15[%c0_24, %c1, %c1_25, %c0_26], %14 {strides = array<i32>} : memref<2x10x10x128xbf16, #tpu.memory_space<vmem>>, vector<2x8x8x128xbf16>,
    %cst_27 = arith.constant 0.000000e+00 : f32
    %16 = vector.broadcast %cst_27 : f32 to vector<128x128xf32>
    %c0_28 = arith.constant 0 : index
    %c0_29 = arith.constant 0 : index
    %c0_30 = arith.constant 0 : index
    %c0_31 = arith.constant 0 : index
    %17 = vector.load %arg15[%c0_28, %c0_29, %c0_30, %c0_31] : memref<2x10x10x128xbf16, #tpu.memory_space<vmem>>, vector<2x10x8x128xbf16>
    %18 = vector.extract_strided_slice %17 {offsets = [0, 0, 0, 0], sizes = [2, 8, 8, 128], strides = [1, 1, 1, 1]} : vector<2x10x8x128xbf16> to vector<2x8x8x128xbf16>
    %19 = vector.shape_cast %18 : vector<2x8x8x128xbf16> to vector<128x128xbf16>
    %c0_32 = arith.constant 0 : index
    %c0_33 = arith.constant 0 : index
    %c0_34 = arith.constant 0 : index
    %20 = vector.load %arg4[%c0_32, %c0_33, %c0_34] : memref<9x128x128xbf16, #tpu.memory_space<vmem>>, vector<1x128x128xbf16>
    %21 = vector.shape_cast %20 : vector<1x128x128xbf16> to vector<128x128xbf16>
    %cst_35 = arith.constant dense<0.000000e+00> : vector<128x128xf32>
    %22 = tpu.matmul %19, %21, %cst_35 {dimension_numbers = #tpu.dot_dimension_numbers<[1], [0], [0], [1], [0, 0, 1, 1], [], []>} : vector<128x128xbf16>, vector<128x128xbf16>, vector<128x128xf32> -> vector<128x128xf32>
    %23 = arith.addf %16, %22 : vector<128x128xf32>
    %24 = vector.extract_strided_slice %17 {offsets = [0, 1, 0, 0], sizes = [2, 8, 8, 128], strides = [1, 1, 1, 1]} : vector<2x10x8x128xbf16> to vector<2x8x8x128xbf16>
    %25 = vector.shape_cast %24 : vector<2x8x8x128xbf16> to vector<128x128xbf16>
    %c3 = arith.constant 3 : index
    %c0_36 = arith.constant 0 : index
    %c0_37 = arith.constant 0 : index
    %26 = vector.load %arg4[%c3, %c0_36, %c0_37] : memref<9x128x128xbf16, #tpu.memory_space<vmem>>, vector<1x128x128xbf16>
    %27 = vector.shape_cast %26 : vector<1x128x128xbf16> to vector<128x128xbf16>
    %cst_38 = arith.constant dense<0.000000e+00> : vector<128x128xf32>
    %28 = tpu.matmul %25, %27, %cst_38 {dimension_numbers = #tpu.dot_dimension_numbers<[1], [0], [0], [1], [0, 0, 1, 1], [], []>} : vector<128x128xbf16>, vector<128x128xbf16>, vector<128x128xf32> -> vector<128x128xf32>
    %29 = arith.addf %23, %28 : vector<128x128xf32>
    %30 = vector.extract_strided_slice %17 {offsets = [0, 2, 0, 0], sizes = [2, 8, 8, 128], strides = [1, 1, 1, 1]} : vector<2x10x8x128xbf16> to vector<2x8x8x128xbf16>
    %31 = vector.shape_cast %30 : vector<2x8x8x128xbf16> to vector<128x128xbf16>
    %c6 = arith.constant 6 : index
    %c0_39 = arith.constant 0 : index
    %c0_40 = arith.constant 0 : index
    %32 = vector.load %arg4[%c6, %c0_39, %c0_40] : memref<9x128x128xbf16, #tpu.memory_space<vmem>>, vector<1x128x128xbf16>
    %33 = vector.shape_cast %32 : vector<1x128x128xbf16> to vector<128x128xbf16>
    %cst_41 = arith.constant dense<0.000000e+00> : vector<128x128xf32>
    %34 = tpu.matmul %31, %33, %cst_41 {dimension_numbers = #tpu.dot_dimension_numbers<[1], [0], [0], [1], [0, 0, 1, 1], [], []>} : vector<128x128xbf16>, vector<128x128xbf16>, vector<128x128xf32> -> vector<128x128xf32>
    %35 = arith.addf %29, %34 : vector<128x128xf32>
    %c0_42 = arith.constant 0 : index
    %c0_43 = arith.constant 0 : index
    %c1_44 = arith.constant 1 : index
    %c0_45 = arith.constant 0 : index
    %36 = vector.load %arg15[%c0_42, %c0_43, %c1_44, %c0_45] : memref<2x10x10x128xbf16, #tpu.memory_space<vmem>>, vector<2x10x8x128xbf16>
    %37 = vector.extract_strided_slice %36 {offsets = [0, 0, 0, 0], sizes = [2, 8, 8, 128], strides = [1, 1, 1, 1]} : vector<2x10x8x128xbf16> to vector<2x8x8x128xbf16>
    %38 = vector.shape_cast %37 : vector<2x8x8x128xbf16> to vector<128x128xbf16>
    %c1_46 = arith.constant 1 : index
    %c0_47 = arith.constant 0 : index
    %c0_48 = arith.constant 0 : index
    %39 = vector.load %arg4[%c1_46, %c0_47, %c0_48] : memref<9x128x128xbf16, #tpu.memory_space<vmem>>, vector<1x128x128xbf16>
    %40 = vector.shape_cast %39 : vector<1x128x128xbf16> to vector<128x128xbf16>
    %cst_49 = arith.constant dense<0.000000e+00> : vector<128x128xf32>
    %41 = tpu.matmul %38, %40, %cst_49 {dimension_numbers = #tpu.dot_dimension_numbers<[1], [0], [0], [1], [0, 0, 1, 1], [], []>} : vector<128x128xbf16>, vector<128x128xbf16>, vector<128x128xf32> -> vector<128x128xf32>
    %42 = arith.addf %35, %41 : vector<128x128xf32>
    %43 = vector.extract_strided_slice %36 {offsets = [0, 1, 0, 0], sizes = [2, 8, 8, 128], strides = [1, 1, 1, 1]} : vector<2x10x8x128xbf16> to vector<2x8x8x128xbf16>
    %44 = vector.shape_cast %43 : vector<2x8x8x128xbf16> to vector<128x128xbf16>
    %c4 = arith.constant 4 : index
    %c0_50 = arith.constant 0 : index
    %c0_51 = arith.constant 0 : index
    %45 = vector.load %arg4[%c4, %c0_50, %c0_51] : memref<9x128x128xbf16, #tpu.memory_space<vmem>>, vector<1x128x128xbf16>
    %46 = vector.shape_cast %45 : vector<1x128x128xbf16> to vector<128x128xbf16>
    %cst_52 = arith.constant dense<0.000000e+00> : vector<128x128xf32>
    %47 = tpu.matmul %44, %46, %cst_52 {dimension_numbers = #tpu.dot_dimension_numbers<[1], [0], [0], [1], [0, 0, 1, 1], [], []>} : vector<128x128xbf16>, vector<128x128xbf16>, vector<128x128xf32> -> vector<128x128xf32>
    %48 = arith.addf %42, %47 : vector<128x128xf32>
    %49 = vector.extract_strided_slice %36 {offsets = [0, 2, 0, 0], sizes = [2, 8, 8, 128], strides = [1, 1, 1, 1]} : vector<2x10x8x128xbf16> to vector<2x8x8x128xbf16>
    %50 = vector.shape_cast %49 : vector<2x8x8x128xbf16> to vector<128x128xbf16>
    %c7 = arith.constant 7 : index
    %c0_53 = arith.constant 0 : index
    %c0_54 = arith.constant 0 : index
    %51 = vector.load %arg4[%c7, %c0_53, %c0_54] : memref<9x128x128xbf16, #tpu.memory_space<vmem>>, vector<1x128x128xbf16>
    %52 = vector.shape_cast %51 : vector<1x128x128xbf16> to vector<128x128xbf16>
    %cst_55 = arith.constant dense<0.000000e+00> : vector<128x128xf32>
    %53 = tpu.matmul %50, %52, %cst_55 {dimension_numbers = #tpu.dot_dimension_numbers<[1], [0], [0], [1], [0, 0, 1, 1], [], []>} : vector<128x128xbf16>, vector<128x128xbf16>, vector<128x128xf32> -> vector<128x128xf32>
    %54 = arith.addf %48, %53 : vector<128x128xf32>
    %c0_56 = arith.constant 0 : index
    %c0_57 = arith.constant 0 : index
    %c2 = arith.constant 2 : index
    %c0_58 = arith.constant 0 : index
    %55 = vector.load %arg15[%c0_56, %c0_57, %c2, %c0_58] : memref<2x10x10x128xbf16, #tpu.memory_space<vmem>>, vector<2x10x8x128xbf16>
    %56 = vector.extract_strided_slice %55 {offsets = [0, 0, 0, 0], sizes = [2, 8, 8, 128], strides = [1, 1, 1, 1]} : vector<2x10x8x128xbf16> to vector<2x8x8x128xbf16>
    %57 = vector.shape_cast %56 : vector<2x8x8x128xbf16> to vector<128x128xbf16>
    %c2_59 = arith.constant 2 : index
    %c0_60 = arith.constant 0 : index
    %c0_61 = arith.constant 0 : index
    %58 = vector.load %arg4[%c2_59, %c0_60, %c0_61] : memref<9x128x128xbf16, #tpu.memory_space<vmem>>, vector<1x128x128xbf16>
    %59 = vector.shape_cast %58 : vector<1x128x128xbf16> to vector<128x128xbf16>
    %cst_62 = arith.constant dense<0.000000e+00> : vector<128x128xf32>
    %60 = tpu.matmul %57, %59, %cst_62 {dimension_numbers = #tpu.dot_dimension_numbers<[1], [0], [0], [1], [0, 0, 1, 1], [], []>} : vector<128x128xbf16>, vector<128x128xbf16>, vector<128x128xf32> -> vector<128x128xf32>
    %61 = arith.addf %54, %60 : vector<128x128xf32>
    %62 = vector.extract_strided_slice %55 {offsets = [0, 1, 0, 0], sizes = [2, 8, 8, 128], strides = [1, 1, 1, 1]} : vector<2x10x8x128xbf16> to vector<2x8x8x128xbf16>
    %63 = vector.shape_cast %62 : vector<2x8x8x128xbf16> to vector<128x128xbf16>
    %c5 = arith.constant 5 : index
    %c0_63 = arith.constant 0 : index
    %c0_64 = arith.constant 0 : index
    %64 = vector.load %arg4[%c5, %c0_63, %c0_64] : memref<9x128x128xbf16, #tpu.memory_space<vmem>>, vector<1x128x128xbf16>
    %65 = vector.shape_cast %64 : vector<1x128x128xbf16> to vector<128x128xbf16>
    %cst_65 = arith.constant dense<0.000000e+00> : vector<128x128xf32>
    %66 = tpu.matmul %63, %65, %cst_65 {dimension_numbers = #tpu.dot_dimension_numbers<[1], [0], [0], [1], [0, 0, 1, 1], [], []>} : vector<128x128xbf16>, vector<128x128xbf16>, vector<128x128xf32> -> vector<128x128xf32>
    %67 = arith.addf %61, %66 : vector<128x128xf32>
    %68 = vector.extract_strided_slice %55 {offsets = [0, 2, 0, 0], sizes = [2, 8, 8, 128], strides = [1, 1, 1, 1]} : vector<2x10x8x128xbf16> to vector<2x8x8x128xbf16>
    %69 = vector.shape_cast %68 : vector<2x8x8x128xbf16> to vector<128x128xbf16>
    %c8 = arith.constant 8 : index
    %c0_66 = arith.constant 0 : index
    %c0_67 = arith.constant 0 : index
    %70 = vector.load %arg4[%c8, %c0_66, %c0_67] : memref<9x128x128xbf16, #tpu.memory_space<vmem>>, vector<1x128x128xbf16>
    %71 = vector.shape_cast %70 : vector<1x128x128xbf16> to vector<128x128xbf16>
    %cst_68 = arith.constant dense<0.000000e+00> : vector<128x128xf32>
    %72 = tpu.matmul %69, %71, %cst_68 {dimension_numbers = #tpu.dot_dimension_numbers<[1], [0], [0], [1], [0, 0, 1, 1], [], []>} : vector<128x128xbf16>, vector<128x128xbf16>, vector<128x128xf32> -> vector<128x128xf32>
    %73 = arith.addf %67, %72 : vector<128x128xf32>
    %c0_69 = arith.constant 0 : index
    %c0_70 = arith.constant 0 : index
    %74 = vector.load %arg5[%c0_69, %c0_70] : memref<1x128xf32, #tpu.memory_space<vmem>>, vector<1x128xf32>
    %75 = vector.broadcast %74 : vector<1x128xf32> to vector<128x128xf32>
    %76 = arith.addf %73, %75 : vector<128x128xf32>
    %cst_71 = arith.constant 0.000000e+00 : f32
    %77 = vector.broadcast %cst_71 : f32 to vector<128x128xf32>
    %78 = arith.maximumf %76, %77 : vector<128x128xf32>
    %79 = vector.shape_cast %78 : vector<128x128xf32> to vector<2x8x8x128xf32>
    %80 = arith.truncf %79 : vector<2x8x8x128xf32> to vector<2x8x8x128xbf16>
    %c0_72 = arith.constant 0 : index
    %c1_73 = arith.constant 1 : index
    %c1_74 = arith.constant 1 : index
    %c0_75 = arith.constant 0 : index
    %81 = vector.load %arg15[%c0_72, %c1_73, %c1_74, %c0_75] : memref<2x10x10x128xbf16, #tpu.memory_space<vmem>>, vector<2x8x8x128xbf16>
    tpu.vector_store %arg15[%c0_72, %c1_73, %c1_74, %c0_75], %80 {strides = array<i32>} : memref<2x10x10x128xbf16, #tpu.memory_space<vmem>>, vector<2x8x8x128xbf16>,
    %cst_76 = arith.constant 0.000000e+00 : f32
    %82 = vector.broadcast %cst_76 : f32 to vector<128x128xf32>
    %c0_77 = arith.constant 0 : index
    %c0_78 = arith.constant 0 : index
    %c0_79 = arith.constant 0 : index
    %c0_80 = arith.constant 0 : index
    %83 = vector.load %arg15[%c0_77, %c0_78, %c0_79, %c0_80] : memref<2x10x10x128xbf16, #tpu.memory_space<vmem>>, vector<2x10x8x128xbf16>
    %84 = vector.extract_strided_slice %83 {offsets = [0, 0, 0, 0], sizes = [2, 8, 8, 128], strides = [1, 1, 1, 1]} : vector<2x10x8x128xbf16> to vector<2x8x8x128xbf16>
    %85 = vector.shape_cast %84 : vector<2x8x8x128xbf16> to vector<128x128xbf16>
    %c0_81 = arith.constant 0 : index
    %c0_82 = arith.constant 0 : index
    %c0_83 = arith.constant 0 : index
    %86 = vector.load %arg6[%c0_81, %c0_82, %c0_83] : memref<9x128x128xbf16, #tpu.memory_space<vmem>>, vector<1x128x128xbf16>
    %87 = vector.shape_cast %86 : vector<1x128x128xbf16> to vector<128x128xbf16>
    %cst_84 = arith.constant dense<0.000000e+00> : vector<128x128xf32>
    %88 = tpu.matmul %85, %87, %cst_84 {dimension_numbers = #tpu.dot_dimension_numbers<[1], [0], [0], [1], [0, 0, 1, 1], [], []>} : vector<128x128xbf16>, vector<128x128xbf16>, vector<128x128xf32> -> vector<128x128xf32>
    %89 = arith.addf %82, %88 : vector<128x128xf32>
    %90 = vector.extract_strided_slice %83 {offsets = [0, 1, 0, 0], sizes = [2, 8, 8, 128], strides = [1, 1, 1, 1]} : vector<2x10x8x128xbf16> to vector<2x8x8x128xbf16>
    %91 = vector.shape_cast %90 : vector<2x8x8x128xbf16> to vector<128x128xbf16>
    %c3_85 = arith.constant 3 : index
    %c0_86 = arith.constant 0 : index
    %c0_87 = arith.constant 0 : index
    %92 = vector.load %arg6[%c3_85, %c0_86, %c0_87] : memref<9x128x128xbf16, #tpu.memory_space<vmem>>, vector<1x128x128xbf16>
    %93 = vector.shape_cast %92 : vector<1x128x128xbf16> to vector<128x128xbf16>
    %cst_88 = arith.constant dense<0.000000e+00> : vector<128x128xf32>
    %94 = tpu.matmul %91, %93, %cst_88 {dimension_numbers = #tpu.dot_dimension_numbers<[1], [0], [0], [1], [0, 0, 1, 1], [], []>} : vector<128x128xbf16>, vector<128x128xbf16>, vector<128x128xf32> -> vector<128x128xf32>
    %95 = arith.addf %89, %94 : vector<128x128xf32>
    %96 = vector.extract_strided_slice %83 {offsets = [0, 2, 0, 0], sizes = [2, 8, 8, 128], strides = [1, 1, 1, 1]} : vector<2x10x8x128xbf16> to vector<2x8x8x128xbf16>
    %97 = vector.shape_cast %96 : vector<2x8x8x128xbf16> to vector<128x128xbf16>
    %c6_89 = arith.constant 6 : index
    %c0_90 = arith.constant 0 : index
    %c0_91 = arith.constant 0 : index
    %98 = vector.load %arg6[%c6_89, %c0_90, %c0_91] : memref<9x128x128xbf16, #tpu.memory_space<vmem>>, vector<1x128x128xbf16>
    %99 = vector.shape_cast %98 : vector<1x128x128xbf16> to vector<128x128xbf16>
    %cst_92 = arith.constant dense<0.000000e+00> : vector<128x128xf32>
    %100 = tpu.matmul %97, %99, %cst_92 {dimension_numbers = #tpu.dot_dimension_numbers<[1], [0], [0], [1], [0, 0, 1, 1], [], []>} : vector<128x128xbf16>, vector<128x128xbf16>, vector<128x128xf32> -> vector<128x128xf32>
    %101 = arith.addf %95, %100 : vector<128x128xf32>
    %c0_93 = arith.constant 0 : index
    %c0_94 = arith.constant 0 : index
    %c1_95 = arith.constant 1 : index
    %c0_96 = arith.constant 0 : index
    %102 = vector.load %arg15[%c0_93, %c0_94, %c1_95, %c0_96] : memref<2x10x10x128xbf16, #tpu.memory_space<vmem>>, vector<2x10x8x128xbf16>
    %103 = vector.extract_strided_slice %102 {offsets = [0, 0, 0, 0], sizes = [2, 8, 8, 128], strides = [1, 1, 1, 1]} : vector<2x10x8x128xbf16> to vector<2x8x8x128xbf16>
    %104 = vector.shape_cast %103 : vector<2x8x8x128xbf16> to vector<128x128xbf16>
    %c1_97 = arith.constant 1 : index
    %c0_98 = arith.constant 0 : index
    %c0_99 = arith.constant 0 : index
    %105 = vector.load %arg6[%c1_97, %c0_98, %c0_99] : memref<9x128x128xbf16, #tpu.memory_space<vmem>>, vector<1x128x128xbf16>
    %106 = vector.shape_cast %105 : vector<1x128x128xbf16> to vector<128x128xbf16>
    %cst_100 = arith.constant dense<0.000000e+00> : vector<128x128xf32>
    %107 = tpu.matmul %104, %106, %cst_100 {dimension_numbers = #tpu.dot_dimension_numbers<[1], [0], [0], [1], [0, 0, 1, 1], [], []>} : vector<128x128xbf16>, vector<128x128xbf16>, vector<128x128xf32> -> vector<128x128xf32>
    %108 = arith.addf %101, %107 : vector<128x128xf32>
    %109 = vector.extract_strided_slice %102 {offsets = [0, 1, 0, 0], sizes = [2, 8, 8, 128], strides = [1, 1, 1, 1]} : vector<2x10x8x128xbf16> to vector<2x8x8x128xbf16>
    %110 = vector.shape_cast %109 : vector<2x8x8x128xbf16> to vector<128x128xbf16>
    %c4_101 = arith.constant 4 : index
    %c0_102 = arith.constant 0 : index
    %c0_103 = arith.constant 0 : index
    %111 = vector.load %arg6[%c4_101, %c0_102, %c0_103] : memref<9x128x128xbf16, #tpu.memory_space<vmem>>, vector<1x128x128xbf16>
    %112 = vector.shape_cast %111 : vector<1x128x128xbf16> to vector<128x128xbf16>
    %cst_104 = arith.constant dense<0.000000e+00> : vector<128x128xf32>
    %113 = tpu.matmul %110, %112, %cst_104 {dimension_numbers = #tpu.dot_dimension_numbers<[1], [0], [0], [1], [0, 0, 1, 1], [], []>} : vector<128x128xbf16>, vector<128x128xbf16>, vector<128x128xf32> -> vector<128x128xf32>
    %114 = arith.addf %108, %113 : vector<128x128xf32>
    %115 = vector.extract_strided_slice %102 {offsets = [0, 2, 0, 0], sizes = [2, 8, 8, 128], strides = [1, 1, 1, 1]} : vector<2x10x8x128xbf16> to vector<2x8x8x128xbf16>
    %116 = vector.shape_cast %115 : vector<2x8x8x128xbf16> to vector<128x128xbf16>
    %c7_105 = arith.constant 7 : index
    %c0_106 = arith.constant 0 : index
    %c0_107 = arith.constant 0 : index
    %117 = vector.load %arg6[%c7_105, %c0_106, %c0_107] : memref<9x128x128xbf16, #tpu.memory_space<vmem>>, vector<1x128x128xbf16>
    %118 = vector.shape_cast %117 : vector<1x128x128xbf16> to vector<128x128xbf16>
    %cst_108 = arith.constant dense<0.000000e+00> : vector<128x128xf32>
    %119 = tpu.matmul %116, %118, %cst_108 {dimension_numbers = #tpu.dot_dimension_numbers<[1], [0], [0], [1], [0, 0, 1, 1], [], []>} : vector<128x128xbf16>, vector<128x128xbf16>, vector<128x128xf32> -> vector<128x128xf32>
    %120 = arith.addf %114, %119 : vector<128x128xf32>
    %c0_109 = arith.constant 0 : index
    %c0_110 = arith.constant 0 : index
    %c2_111 = arith.constant 2 : index
    %c0_112 = arith.constant 0 : index
    %121 = vector.load %arg15[%c0_109, %c0_110, %c2_111, %c0_112] : memref<2x10x10x128xbf16, #tpu.memory_space<vmem>>, vector<2x10x8x128xbf16>
    %122 = vector.extract_strided_slice %121 {offsets = [0, 0, 0, 0], sizes = [2, 8, 8, 128], strides = [1, 1, 1, 1]} : vector<2x10x8x128xbf16> to vector<2x8x8x128xbf16>
    %123 = vector.shape_cast %122 : vector<2x8x8x128xbf16> to vector<128x128xbf16>
    %c2_113 = arith.constant 2 : index
    %c0_114 = arith.constant 0 : index
    %c0_115 = arith.constant 0 : index
    %124 = vector.load %arg6[%c2_113, %c0_114, %c0_115] : memref<9x128x128xbf16, #tpu.memory_space<vmem>>, vector<1x128x128xbf16>
    %125 = vector.shape_cast %124 : vector<1x128x128xbf16> to vector<128x128xbf16>
    %cst_116 = arith.constant dense<0.000000e+00> : vector<128x128xf32>
    %126 = tpu.matmul %123, %125, %cst_116 {dimension_numbers = #tpu.dot_dimension_numbers<[1], [0], [0], [1], [0, 0, 1, 1], [], []>} : vector<128x128xbf16>, vector<128x128xbf16>, vector<128x128xf32> -> vector<128x128xf32>
    %127 = arith.addf %120, %126 : vector<128x128xf32>
    %128 = vector.extract_strided_slice %121 {offsets = [0, 1, 0, 0], sizes = [2, 8, 8, 128], strides = [1, 1, 1, 1]} : vector<2x10x8x128xbf16> to vector<2x8x8x128xbf16>
    %129 = vector.shape_cast %128 : vector<2x8x8x128xbf16> to vector<128x128xbf16>
    %c5_117 = arith.constant 5 : index
    %c0_118 = arith.constant 0 : index
    %c0_119 = arith.constant 0 : index
    %130 = vector.load %arg6[%c5_117, %c0_118, %c0_119] : memref<9x128x128xbf16, #tpu.memory_space<vmem>>, vector<1x128x128xbf16>
    %131 = vector.shape_cast %130 : vector<1x128x128xbf16> to vector<128x128xbf16>
    %cst_120 = arith.constant dense<0.000000e+00> : vector<128x128xf32>
    %132 = tpu.matmul %129, %131, %cst_120 {dimension_numbers = #tpu.dot_dimension_numbers<[1], [0], [0], [1], [0, 0, 1, 1], [], []>} : vector<128x128xbf16>, vector<128x128xbf16>, vector<128x128xf32> -> vector<128x128xf32>
    %133 = arith.addf %127, %132 : vector<128x128xf32>
    %134 = vector.extract_strided_slice %121 {offsets = [0, 2, 0, 0], sizes = [2, 8, 8, 128], strides = [1, 1, 1, 1]} : vector<2x10x8x128xbf16> to vector<2x8x8x128xbf16>
    %135 = vector.shape_cast %134 : vector<2x8x8x128xbf16> to vector<128x128xbf16>
    %c8_121 = arith.constant 8 : index
    %c0_122 = arith.constant 0 : index
    %c0_123 = arith.constant 0 : index
    %136 = vector.load %arg6[%c8_121, %c0_122, %c0_123] : memref<9x128x128xbf16, #tpu.memory_space<vmem>>, vector<1x128x128xbf16>
    %137 = vector.shape_cast %136 : vector<1x128x128xbf16> to vector<128x128xbf16>
    %cst_124 = arith.constant dense<0.000000e+00> : vector<128x128xf32>
    %138 = tpu.matmul %135, %137, %cst_124 {dimension_numbers = #tpu.dot_dimension_numbers<[1], [0], [0], [1], [0, 0, 1, 1], [], []>} : vector<128x128xbf16>, vector<128x128xbf16>, vector<128x128xf32> -> vector<128x128xf32>
    %139 = arith.addf %133, %138 : vector<128x128xf32>
    %c0_125 = arith.constant 0 : index
    %c0_126 = arith.constant 0 : index
    %140 = vector.load %arg7[%c0_125, %c0_126] : memref<1x128xf32, #tpu.memory_space<vmem>>, vector<1x128xf32>
    %141 = vector.broadcast %140 : vector<1x128xf32> to vector<128x128xf32>
    %142 = arith.addf %139, %141 : vector<128x128xf32>
    %143 = arith.addf %142, %12 : vector<128x128xf32>
    %144 = vector.shape_cast %143 : vector<128x128xf32> to vector<2x8x8x128xf32>
    %145 = arith.truncf %144 : vector<2x8x8x128xf32> to vector<2x8x8x128xbf16>
    %c0_127 = arith.constant 0 : index
    %c1_128 = arith.constant 1 : index
    %c1_129 = arith.constant 1 : index
    %c0_130 = arith.constant 0 : index
    %146 = vector.load %arg15[%c0_127, %c1_128, %c1_129, %c0_130] : memref<2x10x10x128xbf16, #tpu.memory_space<vmem>>, vector<2x8x8x128xbf16>
    tpu.vector_store %arg15[%c0_127, %c1_128, %c1_129, %c0_130], %145 {strides = array<i32>} : memref<2x10x10x128xbf16, #tpu.memory_space<vmem>>, vector<2x8x8x128xbf16>,
    %cst_131 = arith.constant 0.000000e+00 : f32
    %147 = vector.broadcast %cst_131 : f32 to vector<128x128xf32>
    %c0_132 = arith.constant 0 : index
    %c0_133 = arith.constant 0 : index
    %c0_134 = arith.constant 0 : index
    %c0_135 = arith.constant 0 : index
    %148 = vector.load %arg15[%c0_132, %c0_133, %c0_134, %c0_135] : memref<2x10x10x128xbf16, #tpu.memory_space<vmem>>, vector<2x10x8x128xbf16>
    %149 = vector.extract_strided_slice %148 {offsets = [0, 0, 0, 0], sizes = [2, 8, 8, 128], strides = [1, 1, 1, 1]} : vector<2x10x8x128xbf16> to vector<2x8x8x128xbf16>
    %150 = vector.shape_cast %149 : vector<2x8x8x128xbf16> to vector<128x128xbf16>
    %c0_136 = arith.constant 0 : index
    %c0_137 = arith.constant 0 : index
    %c0_138 = arith.constant 0 : index
    %151 = vector.load %arg8[%c0_136, %c0_137, %c0_138] : memref<9x128x128xbf16, #tpu.memory_space<vmem>>, vector<1x128x128xbf16>
    %152 = vector.shape_cast %151 : vector<1x128x128xbf16> to vector<128x128xbf16>
    %cst_139 = arith.constant dense<0.000000e+00> : vector<128x128xf32>
    %153 = tpu.matmul %150, %152, %cst_139 {dimension_numbers = #tpu.dot_dimension_numbers<[1], [0], [0], [1], [0, 0, 1, 1], [], []>} : vector<128x128xbf16>, vector<128x128xbf16>, vector<128x128xf32> -> vector<128x128xf32>
    %154 = arith.addf %147, %153 : vector<128x128xf32>
    %155 = vector.extract_strided_slice %148 {offsets = [0, 1, 0, 0], sizes = [2, 8, 8, 128], strides = [1, 1, 1, 1]} : vector<2x10x8x128xbf16> to vector<2x8x8x128xbf16>
    %156 = vector.shape_cast %155 : vector<2x8x8x128xbf16> to vector<128x128xbf16>
    %c3_140 = arith.constant 3 : index
    %c0_141 = arith.constant 0 : index
    %c0_142 = arith.constant 0 : index
    %157 = vector.load %arg8[%c3_140, %c0_141, %c0_142] : memref<9x128x128xbf16, #tpu.memory_space<vmem>>, vector<1x128x128xbf16>
    %158 = vector.shape_cast %157 : vector<1x128x128xbf16> to vector<128x128xbf16>
    %cst_143 = arith.constant dense<0.000000e+00> : vector<128x128xf32>
    %159 = tpu.matmul %156, %158, %cst_143 {dimension_numbers = #tpu.dot_dimension_numbers<[1], [0], [0], [1], [0, 0, 1, 1], [], []>} : vector<128x128xbf16>, vector<128x128xbf16>, vector<128x128xf32> -> vector<128x128xf32>
    %160 = arith.addf %154, %159 : vector<128x128xf32>
    %161 = vector.extract_strided_slice %148 {offsets = [0, 2, 0, 0], sizes = [2, 8, 8, 128], strides = [1, 1, 1, 1]} : vector<2x10x8x128xbf16> to vector<2x8x8x128xbf16>
    %162 = vector.shape_cast %161 : vector<2x8x8x128xbf16> to vector<128x128xbf16>
    %c6_144 = arith.constant 6 : index
    %c0_145 = arith.constant 0 : index
    %c0_146 = arith.constant 0 : index
    %163 = vector.load %arg8[%c6_144, %c0_145, %c0_146] : memref<9x128x128xbf16, #tpu.memory_space<vmem>>, vector<1x128x128xbf16>
    %164 = vector.shape_cast %163 : vector<1x128x128xbf16> to vector<128x128xbf16>
    %cst_147 = arith.constant dense<0.000000e+00> : vector<128x128xf32>
    %165 = tpu.matmul %162, %164, %cst_147 {dimension_numbers = #tpu.dot_dimension_numbers<[1], [0], [0], [1], [0, 0, 1, 1], [], []>} : vector<128x128xbf16>, vector<128x128xbf16>, vector<128x128xf32> -> vector<128x128xf32>
    %166 = arith.addf %160, %165 : vector<128x128xf32>
    %c0_148 = arith.constant 0 : index
    %c0_149 = arith.constant 0 : index
    %c1_150 = arith.constant 1 : index
    %c0_151 = arith.constant 0 : index
    %167 = vector.load %arg15[%c0_148, %c0_149, %c1_150, %c0_151] : memref<2x10x10x128xbf16, #tpu.memory_space<vmem>>, vector<2x10x8x128xbf16>
    %168 = vector.extract_strided_slice %167 {offsets = [0, 0, 0, 0], sizes = [2, 8, 8, 128], strides = [1, 1, 1, 1]} : vector<2x10x8x128xbf16> to vector<2x8x8x128xbf16>
    %169 = vector.shape_cast %168 : vector<2x8x8x128xbf16> to vector<128x128xbf16>
    %c1_152 = arith.constant 1 : index
    %c0_153 = arith.constant 0 : index
    %c0_154 = arith.constant 0 : index
    %170 = vector.load %arg8[%c1_152, %c0_153, %c0_154] : memref<9x128x128xbf16, #tpu.memory_space<vmem>>, vector<1x128x128xbf16>
    %171 = vector.shape_cast %170 : vector<1x128x128xbf16> to vector<128x128xbf16>
    %cst_155 = arith.constant dense<0.000000e+00> : vector<128x128xf32>
    %172 = tpu.matmul %169, %171, %cst_155 {dimension_numbers = #tpu.dot_dimension_numbers<[1], [0], [0], [1], [0, 0, 1, 1], [], []>} : vector<128x128xbf16>, vector<128x128xbf16>, vector<128x128xf32> -> vector<128x128xf32>
    %173 = arith.addf %166, %172 : vector<128x128xf32>
    %174 = vector.extract_strided_slice %167 {offsets = [0, 1, 0, 0], sizes = [2, 8, 8, 128], strides = [1, 1, 1, 1]} : vector<2x10x8x128xbf16> to vector<2x8x8x128xbf16>
    %175 = vector.shape_cast %174 : vector<2x8x8x128xbf16> to vector<128x128xbf16>
    %c4_156 = arith.constant 4 : index
    %c0_157 = arith.constant 0 : index
    %c0_158 = arith.constant 0 : index
    %176 = vector.load %arg8[%c4_156, %c0_157, %c0_158] : memref<9x128x128xbf16, #tpu.memory_space<vmem>>, vector<1x128x128xbf16>
    %177 = vector.shape_cast %176 : vector<1x128x128xbf16> to vector<128x128xbf16>
    %cst_159 = arith.constant dense<0.000000e+00> : vector<128x128xf32>
    %178 = tpu.matmul %175, %177, %cst_159 {dimension_numbers = #tpu.dot_dimension_numbers<[1], [0], [0], [1], [0, 0, 1, 1], [], []>} : vector<128x128xbf16>, vector<128x128xbf16>, vector<128x128xf32> -> vector<128x128xf32>
    %179 = arith.addf %173, %178 : vector<128x128xf32>
    %180 = vector.extract_strided_slice %167 {offsets = [0, 2, 0, 0], sizes = [2, 8, 8, 128], strides = [1, 1, 1, 1]} : vector<2x10x8x128xbf16> to vector<2x8x8x128xbf16>
    %181 = vector.shape_cast %180 : vector<2x8x8x128xbf16> to vector<128x128xbf16>
    %c7_160 = arith.constant 7 : index
    %c0_161 = arith.constant 0 : index
    %c0_162 = arith.constant 0 : index
    %182 = vector.load %arg8[%c7_160, %c0_161, %c0_162] : memref<9x128x128xbf16, #tpu.memory_space<vmem>>, vector<1x128x128xbf16>
    %183 = vector.shape_cast %182 : vector<1x128x128xbf16> to vector<128x128xbf16>
    %cst_163 = arith.constant dense<0.000000e+00> : vector<128x128xf32>
    %184 = tpu.matmul %181, %183, %cst_163 {dimension_numbers = #tpu.dot_dimension_numbers<[1], [0], [0], [1], [0, 0, 1, 1], [], []>} : vector<128x128xbf16>, vector<128x128xbf16>, vector<128x128xf32> -> vector<128x128xf32>
    %185 = arith.addf %179, %184 : vector<128x128xf32>
    %c0_164 = arith.constant 0 : index
    %c0_165 = arith.constant 0 : index
    %c2_166 = arith.constant 2 : index
    %c0_167 = arith.constant 0 : index
    %186 = vector.load %arg15[%c0_164, %c0_165, %c2_166, %c0_167] : memref<2x10x10x128xbf16, #tpu.memory_space<vmem>>, vector<2x10x8x128xbf16>
    %187 = vector.extract_strided_slice %186 {offsets = [0, 0, 0, 0], sizes = [2, 8, 8, 128], strides = [1, 1, 1, 1]} : vector<2x10x8x128xbf16> to vector<2x8x8x128xbf16>
    %188 = vector.shape_cast %187 : vector<2x8x8x128xbf16> to vector<128x128xbf16>
    %c2_168 = arith.constant 2 : index
    %c0_169 = arith.constant 0 : index
    %c0_170 = arith.constant 0 : index
    %189 = vector.load %arg8[%c2_168, %c0_169, %c0_170] : memref<9x128x128xbf16, #tpu.memory_space<vmem>>, vector<1x128x128xbf16>
    %190 = vector.shape_cast %189 : vector<1x128x128xbf16> to vector<128x128xbf16>
    %cst_171 = arith.constant dense<0.000000e+00> : vector<128x128xf32>
    %191 = tpu.matmul %188, %190, %cst_171 {dimension_numbers = #tpu.dot_dimension_numbers<[1], [0], [0], [1], [0, 0, 1, 1], [], []>} : vector<128x128xbf16>, vector<128x128xbf16>, vector<128x128xf32> -> vector<128x128xf32>
    %192 = arith.addf %185, %191 : vector<128x128xf32>
    %193 = vector.extract_strided_slice %186 {offsets = [0, 1, 0, 0], sizes = [2, 8, 8, 128], strides = [1, 1, 1, 1]} : vector<2x10x8x128xbf16> to vector<2x8x8x128xbf16>
    %194 = vector.shape_cast %193 : vector<2x8x8x128xbf16> to vector<128x128xbf16>
    %c5_172 = arith.constant 5 : index
    %c0_173 = arith.constant 0 : index
    %c0_174 = arith.constant 0 : index
    %195 = vector.load %arg8[%c5_172, %c0_173, %c0_174] : memref<9x128x128xbf16, #tpu.memory_space<vmem>>, vector<1x128x128xbf16>
    %196 = vector.shape_cast %195 : vector<1x128x128xbf16> to vector<128x128xbf16>
    %cst_175 = arith.constant dense<0.000000e+00> : vector<128x128xf32>
    %197 = tpu.matmul %194, %196, %cst_175 {dimension_numbers = #tpu.dot_dimension_numbers<[1], [0], [0], [1], [0, 0, 1, 1], [], []>} : vector<128x128xbf16>, vector<128x128xbf16>, vector<128x128xf32> -> vector<128x128xf32>
    %198 = arith.addf %192, %197 : vector<128x128xf32>
    %199 = vector.extract_strided_slice %186 {offsets = [0, 2, 0, 0], sizes = [2, 8, 8, 128], strides = [1, 1, 1, 1]} : vector<2x10x8x128xbf16> to vector<2x8x8x128xbf16>
    %200 = vector.shape_cast %199 : vector<2x8x8x128xbf16> to vector<128x128xbf16>
    %c8_176 = arith.constant 8 : index
    %c0_177 = arith.constant 0 : index
    %c0_178 = arith.constant 0 : index
    %201 = vector.load %arg8[%c8_176, %c0_177, %c0_178] : memref<9x128x128xbf16, #tpu.memory_space<vmem>>, vector<1x128x128xbf16>
    %202 = vector.shape_cast %201 : vector<1x128x128xbf16> to vector<128x128xbf16>
    %cst_179 = arith.constant dense<0.000000e+00> : vector<128x128xf32>
    %203 = tpu.matmul %200, %202, %cst_179 {dimension_numbers = #tpu.dot_dimension_numbers<[1], [0], [0], [1], [0, 0, 1, 1], [], []>} : vector<128x128xbf16>, vector<128x128xbf16>, vector<128x128xf32> -> vector<128x128xf32>
    %204 = arith.addf %198, %203 : vector<128x128xf32>
    %c0_180 = arith.constant 0 : index
    %c0_181 = arith.constant 0 : index
    %205 = vector.load %arg9[%c0_180, %c0_181] : memref<1x128xf32, #tpu.memory_space<vmem>>, vector<1x128xf32>
    %206 = vector.broadcast %205 : vector<1x128xf32> to vector<128x128xf32>
    %207 = arith.addf %204, %206 : vector<128x128xf32>
    %cst_182 = arith.constant 0.000000e+00 : f32
    %208 = vector.broadcast %cst_182 : f32 to vector<128x128xf32>
    %209 = arith.maximumf %207, %208 : vector<128x128xf32>
    %210 = vector.shape_cast %209 : vector<128x128xf32> to vector<2x8x8x128xf32>
    %211 = arith.truncf %210 : vector<2x8x8x128xf32> to vector<2x8x8x128xbf16>
    %c0_183 = arith.constant 0 : index
    %c1_184 = arith.constant 1 : index
    %c1_185 = arith.constant 1 : index
    %c0_186 = arith.constant 0 : index
    %212 = vector.load %arg15[%c0_183, %c1_184, %c1_185, %c0_186] : memref<2x10x10x128xbf16, #tpu.memory_space<vmem>>, vector<2x8x8x128xbf16>
    tpu.vector_store %arg15[%c0_183, %c1_184, %c1_185, %c0_186], %211 {strides = array<i32>} : memref<2x10x10x128xbf16, #tpu.memory_space<vmem>>, vector<2x8x8x128xbf16>,
    %cst_187 = arith.constant 0.000000e+00 : f32
    %213 = vector.broadcast %cst_187 : f32 to vector<128x128xf32>
    %c0_188 = arith.constant 0 : index
    %c0_189 = arith.constant 0 : index
    %c0_190 = arith.constant 0 : index
    %c0_191 = arith.constant 0 : index
    %214 = vector.load %arg15[%c0_188, %c0_189, %c0_190, %c0_191] : memref<2x10x10x128xbf16, #tpu.memory_space<vmem>>, vector<2x10x8x128xbf16>
    %215 = vector.extract_strided_slice %214 {offsets = [0, 0, 0, 0], sizes = [2, 8, 8, 128], strides = [1, 1, 1, 1]} : vector<2x10x8x128xbf16> to vector<2x8x8x128xbf16>
    %216 = vector.shape_cast %215 : vector<2x8x8x128xbf16> to vector<128x128xbf16>
    %c0_192 = arith.constant 0 : index
    %c0_193 = arith.constant 0 : index
    %c0_194 = arith.constant 0 : index
    %217 = vector.load %arg10[%c0_192, %c0_193, %c0_194] : memref<9x128x128xbf16, #tpu.memory_space<vmem>>, vector<1x128x128xbf16>
    %218 = vector.shape_cast %217 : vector<1x128x128xbf16> to vector<128x128xbf16>
    %cst_195 = arith.constant dense<0.000000e+00> : vector<128x128xf32>
    %219 = tpu.matmul %216, %218, %cst_195 {dimension_numbers = #tpu.dot_dimension_numbers<[1], [0], [0], [1], [0, 0, 1, 1], [], []>} : vector<128x128xbf16>, vector<128x128xbf16>, vector<128x128xf32> -> vector<128x128xf32>
    %220 = arith.addf %213, %219 : vector<128x128xf32>
    %221 = vector.extract_strided_slice %214 {offsets = [0, 1, 0, 0], sizes = [2, 8, 8, 128], strides = [1, 1, 1, 1]} : vector<2x10x8x128xbf16> to vector<2x8x8x128xbf16>
    %222 = vector.shape_cast %221 : vector<2x8x8x128xbf16> to vector<128x128xbf16>
    %c3_196 = arith.constant 3 : index
    %c0_197 = arith.constant 0 : index
    %c0_198 = arith.constant 0 : index
    %223 = vector.load %arg10[%c3_196, %c0_197, %c0_198] : memref<9x128x128xbf16, #tpu.memory_space<vmem>>, vector<1x128x128xbf16>
    %224 = vector.shape_cast %223 : vector<1x128x128xbf16> to vector<128x128xbf16>
    %cst_199 = arith.constant dense<0.000000e+00> : vector<128x128xf32>
    %225 = tpu.matmul %222, %224, %cst_199 {dimension_numbers = #tpu.dot_dimension_numbers<[1], [0], [0], [1], [0, 0, 1, 1], [], []>} : vector<128x128xbf16>, vector<128x128xbf16>, vector<128x128xf32> -> vector<128x128xf32>
    %226 = arith.addf %220, %225 : vector<128x128xf32>
    %227 = vector.extract_strided_slice %214 {offsets = [0, 2, 0, 0], sizes = [2, 8, 8, 128], strides = [1, 1, 1, 1]} : vector<2x10x8x128xbf16> to vector<2x8x8x128xbf16>
    %228 = vector.shape_cast %227 : vector<2x8x8x128xbf16> to vector<128x128xbf16>
    %c6_200 = arith.constant 6 : index
    %c0_201 = arith.constant 0 : index
    %c0_202 = arith.constant 0 : index
    %229 = vector.load %arg10[%c6_200, %c0_201, %c0_202] : memref<9x128x128xbf16, #tpu.memory_space<vmem>>, vector<1x128x128xbf16>
    %230 = vector.shape_cast %229 : vector<1x128x128xbf16> to vector<128x128xbf16>
    %cst_203 = arith.constant dense<0.000000e+00> : vector<128x128xf32>
    %231 = tpu.matmul %228, %230, %cst_203 {dimension_numbers = #tpu.dot_dimension_numbers<[1], [0], [0], [1], [0, 0, 1, 1], [], []>} : vector<128x128xbf16>, vector<128x128xbf16>, vector<128x128xf32> -> vector<128x128xf32>
    %232 = arith.addf %226, %231 : vector<128x128xf32>
    %c0_204 = arith.constant 0 : index
    %c0_205 = arith.constant 0 : index
    %c1_206 = arith.constant 1 : index
    %c0_207 = arith.constant 0 : index
    %233 = vector.load %arg15[%c0_204, %c0_205, %c1_206, %c0_207] : memref<2x10x10x128xbf16, #tpu.memory_space<vmem>>, vector<2x10x8x128xbf16>
    %234 = vector.extract_strided_slice %233 {offsets = [0, 0, 0, 0], sizes = [2, 8, 8, 128], strides = [1, 1, 1, 1]} : vector<2x10x8x128xbf16> to vector<2x8x8x128xbf16>
    %235 = vector.shape_cast %234 : vector<2x8x8x128xbf16> to vector<128x128xbf16>
    %c1_208 = arith.constant 1 : index
    %c0_209 = arith.constant 0 : index
    %c0_210 = arith.constant 0 : index
    %236 = vector.load %arg10[%c1_208, %c0_209, %c0_210] : memref<9x128x128xbf16, #tpu.memory_space<vmem>>, vector<1x128x128xbf16>
    %237 = vector.shape_cast %236 : vector<1x128x128xbf16> to vector<128x128xbf16>
    %cst_211 = arith.constant dense<0.000000e+00> : vector<128x128xf32>
    %238 = tpu.matmul %235, %237, %cst_211 {dimension_numbers = #tpu.dot_dimension_numbers<[1], [0], [0], [1], [0, 0, 1, 1], [], []>} : vector<128x128xbf16>, vector<128x128xbf16>, vector<128x128xf32> -> vector<128x128xf32>
    %239 = arith.addf %232, %238 : vector<128x128xf32>
    %240 = vector.extract_strided_slice %233 {offsets = [0, 1, 0, 0], sizes = [2, 8, 8, 128], strides = [1, 1, 1, 1]} : vector<2x10x8x128xbf16> to vector<2x8x8x128xbf16>
    %241 = vector.shape_cast %240 : vector<2x8x8x128xbf16> to vector<128x128xbf16>
    %c4_212 = arith.constant 4 : index
    %c0_213 = arith.constant 0 : index
    %c0_214 = arith.constant 0 : index
    %242 = vector.load %arg10[%c4_212, %c0_213, %c0_214] : memref<9x128x128xbf16, #tpu.memory_space<vmem>>, vector<1x128x128xbf16>
    %243 = vector.shape_cast %242 : vector<1x128x128xbf16> to vector<128x128xbf16>
    %cst_215 = arith.constant dense<0.000000e+00> : vector<128x128xf32>
    %244 = tpu.matmul %241, %243, %cst_215 {dimension_numbers = #tpu.dot_dimension_numbers<[1], [0], [0], [1], [0, 0, 1, 1], [], []>} : vector<128x128xbf16>, vector<128x128xbf16>, vector<128x128xf32> -> vector<128x128xf32>
    %245 = arith.addf %239, %244 : vector<128x128xf32>
    %246 = vector.extract_strided_slice %233 {offsets = [0, 2, 0, 0], sizes = [2, 8, 8, 128], strides = [1, 1, 1, 1]} : vector<2x10x8x128xbf16> to vector<2x8x8x128xbf16>
    %247 = vector.shape_cast %246 : vector<2x8x8x128xbf16> to vector<128x128xbf16>
    %c7_216 = arith.constant 7 : index
    %c0_217 = arith.constant 0 : index
    %c0_218 = arith.constant 0 : index
    %248 = vector.load %arg10[%c7_216, %c0_217, %c0_218] : memref<9x128x128xbf16, #tpu.memory_space<vmem>>, vector<1x128x128xbf16>
    %249 = vector.shape_cast %248 : vector<1x128x128xbf16> to vector<128x128xbf16>
    %cst_219 = arith.constant dense<0.000000e+00> : vector<128x128xf32>
    %250 = tpu.matmul %247, %249, %cst_219 {dimension_numbers = #tpu.dot_dimension_numbers<[1], [0], [0], [1], [0, 0, 1, 1], [], []>} : vector<128x128xbf16>, vector<128x128xbf16>, vector<128x128xf32> -> vector<128x128xf32>
    %251 = arith.addf %245, %250 : vector<128x128xf32>
    %c0_220 = arith.constant 0 : index
    %c0_221 = arith.constant 0 : index
    %c2_222 = arith.constant 2 : index
    %c0_223 = arith.constant 0 : index
    %252 = vector.load %arg15[%c0_220, %c0_221, %c2_222, %c0_223] : memref<2x10x10x128xbf16, #tpu.memory_space<vmem>>, vector<2x10x8x128xbf16>
    %253 = vector.extract_strided_slice %252 {offsets = [0, 0, 0, 0], sizes = [2, 8, 8, 128], strides = [1, 1, 1, 1]} : vector<2x10x8x128xbf16> to vector<2x8x8x128xbf16>
    %254 = vector.shape_cast %253 : vector<2x8x8x128xbf16> to vector<128x128xbf16>
    %c2_224 = arith.constant 2 : index
    %c0_225 = arith.constant 0 : index
    %c0_226 = arith.constant 0 : index
    %255 = vector.load %arg10[%c2_224, %c0_225, %c0_226] : memref<9x128x128xbf16, #tpu.memory_space<vmem>>, vector<1x128x128xbf16>
    %256 = vector.shape_cast %255 : vector<1x128x128xbf16> to vector<128x128xbf16>
    %cst_227 = arith.constant dense<0.000000e+00> : vector<128x128xf32>
    %257 = tpu.matmul %254, %256, %cst_227 {dimension_numbers = #tpu.dot_dimension_numbers<[1], [0], [0], [1], [0, 0, 1, 1], [], []>} : vector<128x128xbf16>, vector<128x128xbf16>, vector<128x128xf32> -> vector<128x128xf32>
    %258 = arith.addf %251, %257 : vector<128x128xf32>
    %259 = vector.extract_strided_slice %252 {offsets = [0, 1, 0, 0], sizes = [2, 8, 8, 128], strides = [1, 1, 1, 1]} : vector<2x10x8x128xbf16> to vector<2x8x8x128xbf16>
    %260 = vector.shape_cast %259 : vector<2x8x8x128xbf16> to vector<128x128xbf16>
    %c5_228 = arith.constant 5 : index
    %c0_229 = arith.constant 0 : index
    %c0_230 = arith.constant 0 : index
    %261 = vector.load %arg10[%c5_228, %c0_229, %c0_230] : memref<9x128x128xbf16, #tpu.memory_space<vmem>>, vector<1x128x128xbf16>
    %262 = vector.shape_cast %261 : vector<1x128x128xbf16> to vector<128x128xbf16>
    %cst_231 = arith.constant dense<0.000000e+00> : vector<128x128xf32>
    %263 = tpu.matmul %260, %262, %cst_231 {dimension_numbers = #tpu.dot_dimension_numbers<[1], [0], [0], [1], [0, 0, 1, 1], [], []>} : vector<128x128xbf16>, vector<128x128xbf16>, vector<128x128xf32> -> vector<128x128xf32>
    %264 = arith.addf %258, %263 : vector<128x128xf32>
    %265 = vector.extract_strided_slice %252 {offsets = [0, 2, 0, 0], sizes = [2, 8, 8, 128], strides = [1, 1, 1, 1]} : vector<2x10x8x128xbf16> to vector<2x8x8x128xbf16>
    %266 = vector.shape_cast %265 : vector<2x8x8x128xbf16> to vector<128x128xbf16>
    %c8_232 = arith.constant 8 : index
    %c0_233 = arith.constant 0 : index
    %c0_234 = arith.constant 0 : index
    %267 = vector.load %arg10[%c8_232, %c0_233, %c0_234] : memref<9x128x128xbf16, #tpu.memory_space<vmem>>, vector<1x128x128xbf16>
    %268 = vector.shape_cast %267 : vector<1x128x128xbf16> to vector<128x128xbf16>
    %cst_235 = arith.constant dense<0.000000e+00> : vector<128x128xf32>
    %269 = tpu.matmul %266, %268, %cst_235 {dimension_numbers = #tpu.dot_dimension_numbers<[1], [0], [0], [1], [0, 0, 1, 1], [], []>} : vector<128x128xbf16>, vector<128x128xbf16>, vector<128x128xf32> -> vector<128x128xf32>
    %270 = arith.addf %264, %269 : vector<128x128xf32>
    %c0_236 = arith.constant 0 : index
    %c0_237 = arith.constant 0 : index
    %271 = vector.load %arg11[%c0_236, %c0_237] : memref<1x128xf32, #tpu.memory_space<vmem>>, vector<1x128xf32>
    %272 = vector.broadcast %271 : vector<1x128xf32> to vector<128x128xf32>
    %273 = arith.addf %270, %272 : vector<128x128xf32>
    %274 = arith.addf %273, %143 : vector<128x128xf32>
    %275 = arith.truncf %274 : vector<128x128xf32> to vector<128x128xbf16>
    %c0_238 = arith.constant 0 : index
    %c0_239 = arith.constant 0 : index
    %276 = vector.load %arg12[%c0_238, %c0_239] : memref<128x128xbf16, #tpu.memory_space<vmem>>, vector<128x128xbf16>
    %cst_240 = arith.constant dense<0.000000e+00> : vector<128x128xf32>
    %277 = tpu.matmul %275, %276, %cst_240 {dimension_numbers = #tpu.dot_dimension_numbers<[1], [0], [0], [1], [0, 0, 1, 1], [], []>} : vector<128x128xbf16>, vector<128x128xbf16>, vector<128x128xf32> -> vector<128x128xf32>
    %c0_241 = arith.constant 0 : index
    %c0_242 = arith.constant 0 : index
    %278 = vector.load %arg13[%c0_241, %c0_242] : memref<1x128xf32, #tpu.memory_space<vmem>>, vector<1x128xf32>
    %279 = vector.broadcast %278 : vector<1x128xf32> to vector<128x128xf32>
    %280 = arith.addf %277, %279 : vector<128x128xf32>
    %281 = vector.shape_cast %280 : vector<128x128xf32> to vector<2x8x8x128xf32>
    %282 = arith.truncf %281 : vector<2x8x8x128xf32> to vector<2x8x8x128xbf16>
    %c0_243 = arith.constant 0 : index
    %c0_244 = arith.constant 0 : index
    %c0_245 = arith.constant 0 : index
    %c0_246 = arith.constant 0 : index
    %283 = vector.load %arg14[%c0_243, %c0_244, %c0_245, %c0_246] : memref<2x8x8x128xbf16, #tpu.memory_space<vmem>>, vector<2x8x8x128xbf16>
    tpu.vector_store %arg14[%c0_243, %c0_244, %c0_245, %c0_246], %282 {strides = array<i32>} : memref<2x8x8x128xbf16, #tpu.memory_space<vmem>>, vector<2x8x8x128xbf16>,
    return
  }
  func.func @transform_0(%arg0: i32) -> (i32, i32, i32, i32) {
    %c0_i32 = arith.constant 0 : i32
    %c0_i32_0 = arith.constant 0 : i32
    %c0_i32_1 = arith.constant 0 : i32
    %c0_i32_2 = arith.constant 0 : i32
    return %arg0, %c0_i32, %c0_i32_0, %c0_i32_1 : i32, i32, i32, i32
  }
  func.func @transform_1(%arg0: i32) -> (i32, i32) {
    %c0_i32 = arith.constant 0 : i32
    %c0_i32_0 = arith.constant 0 : i32
    %c0_i32_1 = arith.constant 0 : i32
    return %c0_i32, %c0_i32_0 : i32, i32
  }
  func.func @transform_2(%arg0: i32) -> (i32, i32) {
    %c0_i32 = arith.constant 0 : i32
    %c0_i32_0 = arith.constant 0 : i32
    %c0_i32_1 = arith.constant 0 : i32
    return %c0_i32, %c0_i32_0 : i32, i32
  }
  func.func @transform_3(%arg0: i32) -> (i32, i32, i32) {
    %c0_i32 = arith.constant 0 : i32
    %c0_i32_0 = arith.constant 0 : i32
    %c0_i32_1 = arith.constant 0 : i32
    %c0_i32_2 = arith.constant 0 : i32
    return %c0_i32, %c0_i32_0, %c0_i32_1 : i32, i32, i32
  }
  func.func @transform_4(%arg0: i32) -> (i32, i32) {
    %c0_i32 = arith.constant 0 : i32
    %c0_i32_0 = arith.constant 0 : i32
    %c0_i32_1 = arith.constant 0 : i32
    return %c0_i32, %c0_i32_0 : i32, i32
  }
  func.func @transform_5(%arg0: i32) -> (i32, i32, i32) {
    %c0_i32 = arith.constant 0 : i32
    %c0_i32_0 = arith.constant 0 : i32
    %c0_i32_1 = arith.constant 0 : i32
    %c0_i32_2 = arith.constant 0 : i32
    return %c0_i32, %c0_i32_0, %c0_i32_1 : i32, i32, i32
  }
  func.func @transform_6(%arg0: i32) -> (i32, i32) {
    %c0_i32 = arith.constant 0 : i32
    %c0_i32_0 = arith.constant 0 : i32
    %c0_i32_1 = arith.constant 0 : i32
    return %c0_i32, %c0_i32_0 : i32, i32
  }
  func.func @transform_7(%arg0: i32) -> (i32, i32, i32) {
    %c0_i32 = arith.constant 0 : i32
    %c0_i32_0 = arith.constant 0 : i32
    %c0_i32_1 = arith.constant 0 : i32
    %c0_i32_2 = arith.constant 0 : i32
    return %c0_i32, %c0_i32_0, %c0_i32_1 : i32, i32, i32
  }
  func.func @transform_8(%arg0: i32) -> (i32, i32) {
    %c0_i32 = arith.constant 0 : i32
    %c0_i32_0 = arith.constant 0 : i32
    %c0_i32_1 = arith.constant 0 : i32
    return %c0_i32, %c0_i32_0 : i32, i32
  }
  func.func @transform_9(%arg0: i32) -> (i32, i32, i32) {
    %c0_i32 = arith.constant 0 : i32
    %c0_i32_0 = arith.constant 0 : i32
    %c0_i32_1 = arith.constant 0 : i32
    %c0_i32_2 = arith.constant 0 : i32
    return %c0_i32, %c0_i32_0, %c0_i32_1 : i32, i32, i32
  }
  func.func @transform_10(%arg0: i32) -> (i32, i32) {
    %c0_i32 = arith.constant 0 : i32
    %c0_i32_0 = arith.constant 0 : i32
    %c0_i32_1 = arith.constant 0 : i32
    return %c0_i32, %c0_i32_0 : i32, i32
  }
  func.func @transform_11(%arg0: i32) -> (i32, i32) {
    %c0_i32 = arith.constant 0 : i32
    %c0_i32_0 = arith.constant 0 : i32
    %c0_i32_1 = arith.constant 0 : i32
    return %c0_i32, %c0_i32_0 : i32, i32
  }
  func.func @transform_12(%arg0: i32) -> (i32, i32) {
    %c0_i32 = arith.constant 0 : i32
    %c0_i32_0 = arith.constant 0 : i32
    %c0_i32_1 = arith.constant 0 : i32
    return %c0_i32, %c0_i32_0 : i32, i32
  }
  func.func @transform_13(%arg0: i32) -> (i32, i32, i32, i32) {
    %c0_i32 = arith.constant 0 : i32
    %c0_i32_0 = arith.constant 0 : i32
    %c0_i32_1 = arith.constant 0 : i32
    %c0_i32_2 = arith.constant 0 : i32
    return %arg0, %c0_i32, %c0_i32_0, %c0_i32_1 : i32, i32, i32, i32
  }
}

</mosaic_0001>

<llo_original>
// kernel: tpu_custom_call.1
$region0: #{tpu_custom_call.1}
  #allocation0 [shape = 'u32[]', space=smem, size = 0x4, offset = 0x4, fixed_abs, tag = 'smem constant byte address 0x4 - core index']
  #allocation1 [shape = 'u32[144,128]{1,0:T(1,128)}', space=vmem, size = 0x12000, scoped, tag = 'internal scratch']
  #allocation2 [shape = 'bf16[2,10,10,128]{3,2,1,0:T(8,128)(2,1)}', space=vmem, size = 0x14000, scoped, tag = 'scratch operand']
  %s0 = inlined_call_operand.hbm [shape: bf16[2,8,8,64], index: 0, kind: input, shape index: {}]
  %s1 = inlined_call_operand.hbm [shape: bf16[64,128], index: 1, kind: input, shape index: {}]
  %s2 = inlined_call_operand.vmem [shape: f32[1,128], index: 2, kind: input, shape index: {}]
  %s3 = inlined_call_operand.hbm [shape: bf16[9,128,128], index: 3, kind: input, shape index: {}]
  %s4 = inlined_call_operand.vmem [shape: f32[1,128], index: 4, kind: input, shape index: {}]
  %s5 = inlined_call_operand.hbm [shape: bf16[9,128,128], index: 5, kind: input, shape index: {}]
  %s6 = inlined_call_operand.vmem [shape: f32[1,128], index: 6, kind: input, shape index: {}]
  %s7 = inlined_call_operand.hbm [shape: bf16[9,128,128], index: 7, kind: input, shape index: {}]
  %s8 = inlined_call_operand.vmem [shape: f32[1,128], index: 8, kind: input, shape index: {}]
  %s9 = inlined_call_operand.hbm [shape: bf16[9,128,128], index: 9, kind: input, shape index: {}]
  %s10 = inlined_call_operand.vmem [shape: f32[1,128], index: 10, kind: input, shape index: {}]
  %s11 = inlined_call_operand.hbm [shape: bf16[128,128], index: 11, kind: input, shape index: {}]
  %s12 = inlined_call_operand.vmem [shape: f32[1,128], index: 12, kind: input, shape index: {}]
  %s13 = inlined_call_operand.hbm [shape: bf16[2,8,8,128], index: 13, kind: output, shape index: {}]
  %s14 = sld [smem:[#allocation0]]
  $region90: #{tpu_custom_call.1} parent=0
    _
  %s16 = ssub.s32 1, %s14
  %s17 = scalar_select 0, %s16, %s14
  $region1: #{tpu_custom_call.1} parent=0
    #allocation3 [shape = 'u8[32768]{0}', space=vmem, size = 0x8000, scoped, tag = 'input window, operand 0, single buffered']
    #allocation4 [shape = 's32[1]{0}', space=sflag, size = 0x4, scoped, tag = 'scoped memory for tpu_custom_call.1']
    #allocation5 [shape = 's32[1]{0}', space=sflag, size = 0x4, scoped, tag = 'scoped memory for tpu_custom_call.1']
    #allocation6 [shape = 'u8[16384]{0}', space=vmem, size = 0x4000, scoped, tag = 'input window, operand 1, single buffered']
    #allocation7 [shape = 's32[1]{0}', space=sflag, size = 0x4, scoped, tag = 'scoped memory for tpu_custom_call.1']
    #allocation8 [shape = 'u8[294912]{0}', space=vmem, size = 0x48000, scoped, tag = 'input window, operand 3, single buffered']
    #allocation9 [shape = 'u8[294912]{0}', space=vmem, size = 0x48000, scoped, tag = 'input window, operand 5, single buffered']
    #allocation10 [shape = 's32[1]{0}', space=sflag, size = 0x4, scoped, tag = 'scoped memory for tpu_custom_call.1']
    #allocation11 [shape = 'u8[294912]{0}', space=vmem, size = 0x48000, scoped, tag = 'input window, operand 7, single buffered']
    #allocation12 [shape = 'u8[294912]{0}', space=vmem, size = 0x48000, scoped, tag = 'input window, operand 9, single buffered']
    #allocation13 [shape = 's32[1]{0}', space=sflag, size = 0x4, scoped, tag = 'scoped memory for tpu_custom_call.1']
    #allocation14 [shape = 'u8[32768]{0}', space=vmem, size = 0x8000, scoped, tag = 'input window, operand 11, single buffered']
    #allocation15 [shape = 'u8[32768]{0}', space=vmem, size = 0x8000, scoped, tag = 'output window, operand 0, single buffered']
    %18 = vsyncpa [#allocation4], 0
    %19 = vsyncpa [#allocation7], 0
    %20 = vsyncpa [#allocation10], 0
    %21 = vsyncpa [#allocation13], 0
    %22 = vsyncpa [#allocation5], 0
    // Predicated region
    $region2: #{tpu_custom_call.1} parent=1 // pred_check
      _
    $region3: #{tpu_custom_call.1} parent=1 // pred_check_branch
      %24 = sbr.rel (0) target = $region5
    $region4: #{tpu_custom_call.1} parent=1 // pred_region
      %s26 = ssub.s32 1024, 1024
      %27 = vsyncadd [#allocation4], %s26
      %s28 = sshll.u32 [#allocation3], 4
      %s29 = int_to_ptr.vmem [resolvable:$true] %s28
      %34 = dma.hbm_to_vmem [thread:$0]  %s0, 1024, %s29, [#allocation4], 64, 64, 4
    $region5: #{tpu_custom_call.1} parent=1 // pred_fallthru
      _
    // Predicated region
    $region6: #{tpu_custom_call.1} parent=1 // pred_check
      _
    $region7: #{tpu_custom_call.1} parent=1 // pred_check_branch
      %36 = sbr.rel (0) target = $region9
    $region8: #{tpu_custom_call.1} parent=1 // pred_region
      %s38 = ssub.s32 512, 512
      %39 = vsyncadd [#allocation7], %s38
      %s40 = sshll.u32 [#allocation6], 4
      %s41 = int_to_ptr.vmem [resolvable:$true] %s40
      %46 = dma.hbm_to_vmem [thread:$0]  %s1, 512, %s41, [#allocation7], 64, 64, 4
    $region9: #{tpu_custom_call.1} parent=1 // pred_fallthru
      _
    // Predicated region
    $region10: #{tpu_custom_call.1} parent=1 // pred_check
      _
    $region11: #{tpu_custom_call.1} parent=1 // pred_check_branch
      %48 = sbr.rel (0) target = $region13
    $region12: #{tpu_custom_call.1} parent=1 // pred_region
      _
    $region13: #{tpu_custom_call.1} parent=1 // pred_fallthru
      _
    // Predicated region
    $region14: #{tpu_custom_call.1} parent=1 // pred_check
      _
    $region15: #{tpu_custom_call.1} parent=1 // pred_check_branch
      %50 = sbr.rel (0) target = $region17
    $region16: #{tpu_custom_call.1} parent=1 // pred_region
      %s52 = ssub.s32 9216, 9216
      %53 = vsyncadd [#allocation7], %s52
      %s54 = sshll.u32 [#allocation8], 4
      %s55 = int_to_ptr.vmem [resolvable:$true] %s54
      %60 = dma.hbm_to_vmem [thread:$0]  %s3, 9216, %s55, [#allocation7], 64, 64, 4
    $region17: #{tpu_custom_call.1} parent=1 // pred_fallthru
      _
    // Predicated region
    $region18: #{tpu_custom_call.1} parent=1 // pred_check
      _
    $region19: #{tpu_custom_call.1} parent=1 // pred_check_branch
      %62 = sbr.rel (0) target = $region21
    $region20: #{tpu_custom_call.1} parent=1 // pred_region
      _
    $region21: #{tpu_custom_call.1} parent=1 // pred_fallthru
      _
    // Predicated region
    $region22: #{tpu_custom_call.1} parent=1 // pred_check
      _
    $region23: #{tpu_custom_call.1} parent=1 // pred_check_branch
      %64 = sbr.rel (0) target = $region25
    $region24: #{tpu_custom_call.1} parent=1 // pred_region
      %s66 = ssub.s32 9216, 9216
      %67 = vsyncadd [#allocation10], %s66
      %s68 = sshll.u32 [#allocation9], 4
      %s69 = int_to_ptr.vmem [resolvable:$true] %s68
      %74 = dma.hbm_to_vmem [thread:$0]  %s5, 9216, %s69, [#allocation10], 64, 64, 4
    $region25: #{tpu_custom_call.1} parent=1 // pred_fallthru
      _
    // Predicated region
    $region26: #{tpu_custom_call.1} parent=1 // pred_check
      _
    $region27: #{tpu_custom_call.1} parent=1 // pred_check_branch
      %76 = sbr.rel (0) target = $region29
    $region28: #{tpu_custom_call.1} parent=1 // pred_region
      _
    $region29: #{tpu_custom_call.1} parent=1 // pred_fallthru
      _
    // Predicated region
    $region30: #{tpu_custom_call.1} parent=1 // pred_check
      _
    $region31: #{tpu_custom_call.1} parent=1 // pred_check_branch
      %78 = sbr.rel (0) target = $region33
    $region32: #{tpu_custom_call.1} parent=1 // pred_region
      %s80 = ssub.s32 9216, 9216
      %81 = vsyncadd [#allocation10], %s80
      %s82 = sshll.u32 [#allocation11], 4
      %s83 = int_to_ptr.vmem [resolvable:$true] %s82
      %88 = dma.hbm_to_vmem [thread:$0]  %s7, 9216, %s83, [#allocation10], 64, 64, 4
    $region33: #{tpu_custom_call.1} parent=1 // pred_fallthru
      _
    // Predicated region
    $region34: #{tpu_custom_call.1} parent=1 // pred_check
      _
    $region35: #{tpu_custom_call.1} parent=1 // pred_check_branch
      %90 = sbr.rel (0) target = $region37
    $region36: #{tpu_custom_call.1} parent=1 // pred_region
      _
    $region37: #{tpu_custom_call.1} parent=1 // pred_fallthru
      _
    // Predicated region
    $region38: #{tpu_custom_call.1} parent=1 // pred_check
      _
    $region39: #{tpu_custom_call.1} parent=1 // pred_check_branch
      %92 = sbr.rel (0) target = $region41
    $region40: #{tpu_custom_call.1} parent=1 // pred_region
      %s94 = ssub.s32 9216, 9216
      %95 = vsyncadd [#allocation13], %s94
      %s96 = sshll.u32 [#allocation12], 4
      %s97 = int_to_ptr.vmem [resolvable:$true] %s96
      %102 = dma.hbm_to_vmem [thread:$0]  %s9, 9216, %s97, [#allocation13], 64, 64, 4
    $region41: #{tpu_custom_call.1} parent=1 // pred_fallthru
      _
    // Predicated region
    $region42: #{tpu_custom_call.1} parent=1 // pred_check
      _
    $region43: #{tpu_custom_call.1} parent=1 // pred_check_branch
      %104 = sbr.rel (0) target = $region45
    $region44: #{tpu_custom_call.1} parent=1 // pred_region
      _
    $region45: #{tpu_custom_call.1} parent=1 // pred_fallthru
      _
    // Predicated region
    $region46: #{tpu_custom_call.1} parent=1 // pred_check
      _
    $region47: #{tpu_custom_call.1} parent=1 // pred_check_branch
      %106 = sbr.rel (0) target = $region49
    $region48: #{tpu_custom_call.1} parent=1 // pred_region
      %s108 = ssub.s32 1024, 1024
      %109 = vsyncadd [#allocation13], %s108
      %s110 = sshll.u32 [#allocation14], 4
      %s111 = int_to_ptr.vmem [resolvable:$true] %s110
      %116 = dma.hbm_to_vmem [thread:$0]  %s11, 1024, %s111, [#allocation13], 64, 64, 4
    $region49: #{tpu_custom_call.1} parent=1 // pred_fallthru
      _
    // Predicated region
    $region50: #{tpu_custom_call.1} parent=1 // pred_check
      _
    $region51: #{tpu_custom_call.1} parent=1 // pred_check_branch
      %118 = sbr.rel (0) target = $region53
    $region52: #{tpu_custom_call.1} parent=1 // pred_region
      _
    $region53: #{tpu_custom_call.1} parent=1 // pred_fallthru
      _
    // Predicated region
    $region54: #{tpu_custom_call.1} parent=1 // pred_check
      _
    $region55: #{tpu_custom_call.1} parent=1 // pred_check_branch
      %120 = sbr.rel (0) target = $region57
    $region56: #{tpu_custom_call.1} parent=1 // pred_region
      %121 = dma.done [#allocation4], 1024
    $region57: #{tpu_custom_call.1} parent=1 // pred_fallthru
      _
    // Predicated region
    $region58: #{tpu_custom_call.1} parent=1 // pred_check
      _
    $region59: #{tpu_custom_call.1} parent=1 // pred_check_branch
      %123 = sbr.rel (0) target = $region61
    $region60: #{tpu_custom_call.1} parent=1 // pred_region
      %124 = dma.done [#allocation7], 512
    $region61: #{tpu_custom_call.1} parent=1 // pred_fallthru
      _
    // Predicated region
    $region62: #{tpu_custom_call.1} parent=1 // pred_check
      _
    $region63: #{tpu_custom_call.1} parent=1 // pred_check_branch
      %126 = sbr.rel (0) target = $region65
    $region64: #{tpu_custom_call.1} parent=1 // pred_region
      %127 = dma.done [#allocation7], 9216
    $region65: #{tpu_custom_call.1} parent=1 // pred_fallthru
      _
    // Predicated region
    $region66: #{tpu_custom_call.1} parent=1 // pred_check
      _
    $region67: #{tpu_custom_call.1} parent=1 // pred_check_branch
      %129 = sbr.rel (0) target = $region69
    $region68: #{tpu_custom_call.1} parent=1 // pred_region
      %130 = dma.done [#allocation10], 9216
    $region69: #{tpu_custom_call.1} parent=1 // pred_fallthru
      _
    // Predicated region
    $region70: #{tpu_custom_call.1} parent=1 // pred_check
      _
    $region71: #{tpu_custom_call.1} parent=1 // pred_check_branch
      %132 = sbr.rel (0) target = $region73
    $region72: #{tpu_custom_call.1} parent=1 // pred_region
      %133 = dma.done [#allocation10], 9216
    $region73: #{tpu_custom_call.1} parent=1 // pred_fallthru
      _
    // Predicated region
    $region74: #{tpu_custom_call.1} parent=1 // pred_check
      _
    $region75: #{tpu_custom_call.1} parent=1 // pred_check_branch
      %135 = sbr.rel (0) target = $region77
    $region76: #{tpu_custom_call.1} parent=1 // pred_region
      %136 = dma.done [#allocation13], 9216
    $region77: #{tpu_custom_call.1} parent=1 // pred_fallthru
      _
    // Predicated region
    $region78: #{tpu_custom_call.1} parent=1 // pred_check
      _
    $region79: #{tpu_custom_call.1} parent=1 // pred_check_branch
      %138 = sbr.rel (0) target = $region81
    $region80: #{tpu_custom_call.1} parent=1 // pred_region
      %139 = dma.done [#allocation13], 1024
    $region81: #{tpu_custom_call.1} parent=1 // pred_fallthru
      _
    %141 = vst [vmem:[#allocation2] sm:$0xf] 0
    %142 = vst [vmem:[#allocation2 + $0x4] sm:$0x1] 0
    %143 = vst [vmem:[#allocation2 + $0x50] sm:$0xf] 0
    %144 = vst [vmem:[#allocation2 + $0x54] sm:$0x1] 0
    %s145 = scalar_lea.vmem [#allocation2], 72
    %146 = vst [vmem:[%s145] sm:$0xf] 0
    %147 = vst [vmem:[%s145 + $0x4] sm:$0x1] 0
    %148 = vst [vmem:[%s145 + $0x50] sm:$0xf] 0
    %149 = vst [vmem:[%s145 + $0x54] sm:$0x1] 0
    %vm150 = vcmask 1040384
    %vm151 = vsmask.f32 256
    %vm152 = vmand %vm150, %vm151
    %v153 = vld [vmem:[#allocation2] sm:$0x1]
    %v154 = vsel %vm152, 0, %v153
    %155 = vst [vmem:[#allocation2] sm:$0x1] %v154
    %v156 = vld [vmem:[#allocation2 + $0x8] sm:$0x1]
    %v157 = vsel %vm152, 0, %v156
    %158 = vst [vmem:[#allocation2 + $0x8] sm:$0x1] %v157
    %v159 = vld [vmem:[#allocation2 + $0x10] sm:$0x1]
    %v160 = vsel %vm152, 0, %v159
    %161 = vst [vmem:[#allocation2 + $0x10] sm:$0x1] %v160
    %v162 = vld [vmem:[#allocation2 + $0x18] sm:$0x1]
    %v163 = vsel %vm152, 0, %v162
    %164 = vst [vmem:[#allocation2 + $0x18] sm:$0x1] %v163
    %v165 = vld [vmem:[#allocation2 + $0x20] sm:$0x1]
    %v166 = vsel %vm152, 0, %v165
    %167 = vst [vmem:[#allocation2 + $0x20] sm:$0x1] %v166
    %v168 = vld [vmem:[#allocation2 + $0x28] sm:$0x1]
    %v169 = vsel %vm152, 0, %v168
    %170 = vst [vmem:[#allocation2 + $0x28] sm:$0x1] %v169
    %v171 = vld [vmem:[#allocation2 + $0x30] sm:$0x1]
    %v172 = vsel %vm152, 0, %v171
    %173 = vst [vmem:[#allocation2 + $0x30] sm:$0x1] %v172
    %v174 = vld [vmem:[#allocation2 + $0x38] sm:$0x1]
    %v175 = vsel %vm152, 0, %v174
    %176 = vst [vmem:[#allocation2 + $0x38] sm:$0x1] %v175
    %v177 = vld [vmem:[#allocation2 + $0x40] sm:$0x1]
    %v178 = vsel %vm152, 0, %v177
    %179 = vst [vmem:[#allocation2 + $0x40] sm:$0x1] %v178
    %v180 = vld [vmem:[#allocation2 + $0x48] sm:$0x1]
    %v181 = vsel %vm152, 0, %v180
    %182 = vst [vmem:[#allocation2 + $0x48] sm:$0x1] %v181
    %v183 = vld [vmem:[#allocation2 + $0x50] sm:$0x1]
    %v184 = vsel %vm152, 0, %v183
    %185 = vst [vmem:[#allocation2 + $0x50] sm:$0x1] %v184
    %v186 = vld [vmem:[#allocation2 + $0x58] sm:$0x1]
    %v187 = vsel %vm152, 0, %v186
    %188 = vst [vmem:[#allocation2 + $0x58] sm:$0x1] %v187
    %v189 = vld [vmem:[#allocation2 + $0x60] sm:$0x1]
    %v190 = vsel %vm152, 0, %v189
    %191 = vst [vmem:[#allocation2 + $0x60] sm:$0x1] %v190
    %v192 = vld [vmem:[#allocation2 + $0x68] sm:$0x1]
    %v193 = vsel %vm152, 0, %v192
    %194 = vst [vmem:[#allocation2 + $0x68] sm:$0x1] %v193
    %v195 = vld [vmem:[#allocation2 + $0x70] sm:$0x1]
    %v196 = vsel %vm152, 0, %v195
    %197 = vst [vmem:[#allocation2 + $0x70] sm:$0x1] %v196
    %v198 = vld [vmem:[#allocation2 + $0x78] sm:$0x1]
    %v199 = vsel %vm152, 0, %v198
    %200 = vst [vmem:[#allocation2 + $0x78] sm:$0x1] %v199
    %v201 = vld [vmem:[#allocation2 + $0x80] sm:$0x1]
    %v202 = vsel %vm152, 0, %v201
    %203 = vst [vmem:[#allocation2 + $0x80] sm:$0x1] %v202
    %v204 = vld [vmem:[#allocation2 + $0x88] sm:$0x1]
    %v205 = vsel %vm152, 0, %v204
    %206 = vst [vmem:[#allocation2 + $0x88] sm:$0x1] %v205
    %v207 = vld [vmem:[#allocation2 + $0x90] sm:$0x1]
    %v208 = vsel %vm152, 0, %v207
    %209 = vst [vmem:[#allocation2 + $0x90] sm:$0x1] %v208
    %v210 = vld [vmem:[#allocation2 + $0x98] sm:$0x1]
    %v211 = vsel %vm152, 0, %v210
    %212 = vst [vmem:[#allocation2 + $0x98] sm:$0x1] %v211
    %vm213 = vsmask.f32 7938
    %vm214 = vmand %vm150, %vm213
    %v215 = vld [vmem:[#allocation2 + $0x4] sm:$0x1]
    %v216 = vsel %vm214, 0, %v215
    %217 = vst [vmem:[#allocation2 + $0x4] sm:$0x1] %v216
    %v218 = vld [vmem:[#allocation2 + $0xc] sm:$0x1]
    %v219 = vsel %vm214, 0, %v218
    %220 = vst [vmem:[#allocation2 + $0xc] sm:$0x1] %v219
    %v221 = vld [vmem:[#allocation2 + $0x14] sm:$0x1]
    %v222 = vsel %vm214, 0, %v221
    %223 = vst [vmem:[#allocation2 + $0x14] sm:$0x1] %v222
    %v224 = vld [vmem:[#allocation2 + $0x1c] sm:$0x1]
    %v225 = vsel %vm214, 0, %v224
    %226 = vst [vmem:[#allocation2 + $0x1c] sm:$0x1] %v225
    %v227 = vld [vmem:[#allocation2 + $0x24] sm:$0x1]
    %v228 = vsel %vm214, 0, %v227
    %229 = vst [vmem:[#allocation2 + $0x24] sm:$0x1] %v228
    %v230 = vld [vmem:[#allocation2 + $0x2c] sm:$0x1]
    %v231 = vsel %vm214, 0, %v230
    %232 = vst [vmem:[#allocation2 + $0x2c] sm:$0x1] %v231
    %v233 = vld [vmem:[#allocation2 + $0x34] sm:$0x1]
    %v234 = vsel %vm214, 0, %v233
    %235 = vst [vmem:[#allocation2 + $0x34] sm:$0x1] %v234
    %v236 = vld [vmem:[#allocation2 + $0x3c] sm:$0x1]
    %v237 = vsel %vm214, 0, %v236
    %238 = vst [vmem:[#allocation2 + $0x3c] sm:$0x1] %v237
    %v239 = vld [vmem:[#allocation2 + $0x44] sm:$0x1]
    %v240 = vsel %vm214, 0, %v239
    %241 = vst [vmem:[#allocation2 + $0x44] sm:$0x1] %v240
    %v242 = vld [vmem:[#allocation2 + $0x4c] sm:$0x1]
    %v243 = vsel %vm214, 0, %v242
    %244 = vst [vmem:[#allocation2 + $0x4c] sm:$0x1] %v243
    %v245 = vld [vmem:[#allocation2 + $0x54] sm:$0x1]
    %v246 = vsel %vm214, 0, %v245
    %247 = vst [vmem:[#allocation2 + $0x54] sm:$0x1] %v246
    %v248 = vld [vmem:[#allocation2 + $0x5c] sm:$0x1]
    %v249 = vsel %vm214, 0, %v248
    %250 = vst [vmem:[#allocation2 + $0x5c] sm:$0x1] %v249
    %v251 = vld [vmem:[#allocation2 + $0x64] sm:$0x1]
    %v252 = vsel %vm214, 0, %v251
    %253 = vst [vmem:[#allocation2 + $0x64] sm:$0x1] %v252
    %v254 = vld [vmem:[#allocation2 + $0x6c] sm:$0x1]
    %v255 = vsel %vm214, 0, %v254
    %256 = vst [vmem:[#allocation2 + $0x6c] sm:$0x1] %v255
    %v257 = vld [vmem:[#allocation2 + $0x74] sm:$0x1]
    %v258 = vsel %vm214, 0, %v257
    %259 = vst [vmem:[#allocation2 + $0x74] sm:$0x1] %v258
    %v260 = vld [vmem:[#allocation2 + $0x7c] sm:$0x1]
    %v261 = vsel %vm214, 0, %v260
    %262 = vst [vmem:[#allocation2 + $0x7c] sm:$0x1] %v261
    %v263 = vld [vmem:[#allocation2 + $0x84] sm:$0x1]
    %v264 = vsel %vm214, 0, %v263
    %265 = vst [vmem:[#allocation2 + $0x84] sm:$0x1] %v264
    %v266 = vld [vmem:[#allocation2 + $0x8c] sm:$0x1]
    %v267 = vsel %vm214, 0, %v266
    %268 = vst [vmem:[#allocation2 + $0x8c] sm:$0x1] %v267
    %v269 = vld [vmem:[#allocation2 + $0x94] sm:$0x1]
    %v270 = vsel %vm214, 0, %v269
    %271 = vst [vmem:[#allocation2 + $0x94] sm:$0x1] %v270
    %v272 = vld [vmem:[#allocation2 + $0x9c] sm:$0x1]
    %v273 = vsel %vm214, 0, %v272
    %274 = vst [vmem:[#allocation2 + $0x9c] sm:$0x1] %v273
    %v275 = vld [vmem:[#allocation3] sm:$0xf]
    %v276 = vld [vmem:[#allocation3 + $0x4] sm:$0xf]
    %v277 = vld [vmem:[#allocation3 + $0x8] sm:$0xf]
    %v278 = vld [vmem:[#allocation3 + $0xc] sm:$0xf]
    %v279 = vld [vmem:[#allocation3 + $0x10] sm:$0xf]
    %v280 = vld [vmem:[#allocation3 + $0x14] sm:$0xf]
    %v281 = vld [vmem:[#allocation3 + $0x18] sm:$0xf]
    %v282 = vld [vmem:[#allocation3 + $0x1c] sm:$0xf]
    %v283 = vld [vmem:[#allocation3 + $0x20] sm:$0xf]
    %v284 = vld [vmem:[#allocation3 + $0x24] sm:$0xf]
    %v285 = vld [vmem:[#allocation3 + $0x28] sm:$0xf]
    %v286 = vld [vmem:[#allocation3 + $0x2c] sm:$0xf]
    %v287 = vld [vmem:[#allocation3 + $0x30] sm:$0xf]
    %v288 = vld [vmem:[#allocation3 + $0x34] sm:$0xf]
    %v289 = vld [vmem:[#allocation3 + $0x38] sm:$0xf]
    %v290 = vld [vmem:[#allocation3 + $0x3c] sm:$0xf]
    %v291 = vld [vmem:[#allocation6] sm:$0xf]
    %v292 = vld [vmem:[#allocation6 + $0x4] sm:$0xf]
    %v293 = vld [vmem:[#allocation6 + $0x8] sm:$0xf]
    %v294 = vld [vmem:[#allocation6 + $0xc] sm:$0xf]
    %v295 = vld [vmem:[#allocation6 + $0x10] sm:$0xf]
    %v296 = vld [vmem:[#allocation6 + $0x14] sm:$0xf]
    %v297 = vld [vmem:[#allocation6 + $0x18] sm:$0xf]
    %v298 = vld [vmem:[#allocation6 + $0x1c] sm:$0xf]
    %v299 = vld [vmem:[%s2] sm:$0x1]
    %v301 = vlaneseq
    %v302 = vshrl.u32 %v301, 7
    %v303 = vsub.s32 0, %v302
    %v304 = vrot.slane %v299, %v303
    %v322 = vunpack.c.l.b16 %v275
    %v323 = vunpack.c.l.b16 %v276
    %v324 = vunpack.c.l.b16 %v277
    %v325 = vunpack.c.l.b16 %v278
    %v326 = vunpack.c.l.b16 %v279
    %v327 = vunpack.c.l.b16 %v280
    %v328 = vunpack.c.l.b16 %v281
    %v329 = vunpack.c.l.b16 %v282
    %v330 = vunpack.c.l.b16 %v283
    %v331 = vunpack.c.l.b16 %v284
    %v332 = vunpack.c.l.b16 %v285
    %v333 = vunpack.c.l.b16 %v286
    %v334 = vunpack.c.l.b16 %v287
    %v335 = vunpack.c.l.b16 %v288
    %v336 = vunpack.c.l.b16 %v289
    %v337 = vunpack.c.l.b16 %v290
    %v338 = vpack.c.b16 %v323, %v322
    %v339 = vpack.c.b16 %v325, %v324
    %v340 = vpack.c.b16 %v327, %v326
    %v341 = vpack.c.b16 %v329, %v328
    %v342 = vpack.c.b16 %v331, %v330
    %v343 = vpack.c.b16 %v333, %v332
    %v344 = vpack.c.b16 %v335, %v334
    %v345 = vpack.c.b16 %v337, %v336
    %v354 = vunpack.c.l.b16 %v291
    %v355 = vunpack.c.l.b16 %v292
    %v356 = vunpack.c.l.b16 %v293
    %v357 = vunpack.c.l.b16 %v294
    %v358 = vunpack.c.l.b16 %v295
    %v359 = vunpack.c.l.b16 %v296
    %v360 = vunpack.c.l.b16 %v297
    %v361 = vunpack.c.l.b16 %v298
    %v362 = vpack.c.b16 %v355, %v354
    %v363 = vpack.c.b16 %v357, %v356
    %v364 = vpack.c.b16 %v359, %v358
    %v365 = vpack.c.b16 %v361, %v360
    %vm370 = vcmask 523264
    %v372 = vsel %vm370, %v338, 0
    %v375 = vsel %vm370, %v339, 0
    %v378 = vsel %vm370, %v340, 0
    %v381 = vsel %vm370, %v341, 0
    %v384 = vsel %vm370, %v342, 0
    %v387 = vsel %vm370, %v343, 0
    %v390 = vsel %vm370, %v344, 0
    %v393 = vsel %vm370, %v345, 0
    %395 = vmatprep.subr.bf16.mxu0 0
    %396 = vmatpush1.bf16.msra.mxu0 0
    %397 = vmatprep.subr.bf16.mxu0 0
    %398 = vmatpush1.bf16.msra.mxu0 0
    %399 = vmatprep.subr.bf16.mxu0 0
    %400 = vmatpush1.bf16.msra.mxu0 0
    %401 = vmatprep.subr.bf16.mxu0 0
    %402 = vmatpush1.bf16.msra.mxu0 0
    %403 = vmatprep.subr.bf16.mxu0 0
    %404 = vmatpush1.bf16.msra.mxu0 %v365
    %405 = vmatprep.subr.bf16.mxu0 0
    %406 = vmatpush1.bf16.msra.mxu0 %v364
    %407 = vmatprep.subr.bf16.mxu0 0
    %408 = vmatpush1.bf16.msra.mxu0 %v363
    %409 = vmatprep.subr.bf16.mxu0 0
    %410 = vmatpush1.bf16.msra.mxu0 %v362
    %411 = vmatprep.subr.bf16.mxu0 0
    %412 = vmatpush2.bf16.msra.mxu0 0
    %413 = vmatprep.subr.bf16.mxu0 0
    %414 = vmatpush2.bf16.msra.mxu0 0
    %415 = vmatprep.subr.bf16.mxu0 0
    %416 = vmatpush2.bf16.msra.mxu0 0
    %417 = vmatprep.subr.bf16.mxu0 0
    %418 = vmatpush2.bf16.msra.mxu0 0
    %419 = vmatprep.subr.bf16.mxu0 0
    %420 = vmatpush2.bf16.msra.mxu0 0
    %421 = vmatprep.subr.bf16.mxu0 0
    %422 = vmatpush2.bf16.msra.mxu0 0
    %423 = vmatprep.subr.bf16.mxu0 0
    %424 = vmatpush2.bf16.msra.mxu0 0
    %425 = vmatprep.subr.bf16.mxu0 0
    %426 = vmatpush2.bf16.msra.mxu0 0
    %427 = vmatprep.mubr.bf16.mxu0 0
    %428 = vmatmul.mubr.bf16.gmra.mxu0 %v372
    %v429 = vpop.f32.mrf.mxu0
    %v430 = vadd.f32 %v304, %v429
    %v431 = vpop.f32.mrf.mxu0
    %v432 = vpop.f32.mrf.mxu0
    %v433 = vadd.f32 %v304, %v432
    %v434 = vpop.f32.mrf.mxu0
    %435 = vmatprep.mubr.bf16.mxu0 0
    %436 = vmatmul.mubr.bf16.gmra.mxu0 %v375
    %v437 = vpop.f32.mrf.mxu0
    %v438 = vadd.f32 %v304, %v437
    %v439 = vpop.f32.mrf.mxu0
    %v440 = vpop.f32.mrf.mxu0
    %v441 = vadd.f32 %v304, %v440
    %v442 = vpop.f32.mrf.mxu0
    %443 = vmatprep.mubr.bf16.mxu0 0
    %444 = vmatmul.mubr.bf16.gmra.mxu0 %v378
    %v445 = vpop.f32.mrf.mxu0
    %v446 = vadd.f32 %v304, %v445
    %v447 = vpop.f32.mrf.mxu0
    %v448 = vpop.f32.mrf.mxu0
    %v449 = vadd.f32 %v304, %v448
    %v450 = vpop.f32.mrf.mxu0
    %451 = vmatprep.mubr.bf16.mxu0 0
    %452 = vmatmul.mubr.bf16.gmra.mxu0 %v381
    %v453 = vpop.f32.mrf.mxu0
    %v454 = vadd.f32 %v304, %v453
    %v455 = vpop.f32.mrf.mxu0
    %v456 = vpop.f32.mrf.mxu0
    %v457 = vadd.f32 %v304, %v456
    %v458 = vpop.f32.mrf.mxu0
    %459 = vmatprep.mubr.bf16.mxu0 0
    %460 = vmatmul.mubr.bf16.gmra.mxu0 %v384
    %v461 = vpop.f32.mrf.mxu0
    %v462 = vadd.f32 %v304, %v461
    %v463 = vpop.f32.mrf.mxu0
    %v464 = vpop.f32.mrf.mxu0
    %v465 = vadd.f32 %v304, %v464
    %v466 = vpop.f32.mrf.mxu0
    %467 = vmatprep.mubr.bf16.mxu0 0
    %468 = vmatmul.mubr.bf16.gmra.mxu0 %v387
    %v469 = vpop.f32.mrf.mxu0
    %v470 = vadd.f32 %v304, %v469
    %v471 = vpop.f32.mrf.mxu0
    %v472 = vpop.f32.mrf.mxu0
    %v473 = vadd.f32 %v304, %v472
    %v474 = vpop.f32.mrf.mxu0
    %475 = vmatprep.mubr.bf16.mxu0 0
    %476 = vmatmul.mubr.bf16.gmra.mxu0 %v390
    %v477 = vpop.f32.mrf.mxu0
    %v478 = vadd.f32 %v304, %v477
    %v479 = vpop.f32.mrf.mxu0
    %v480 = vpop.f32.mrf.mxu0
    %v481 = vadd.f32 %v304, %v480
    %v482 = vpop.f32.mrf.mxu0
    %483 = vmatprep.mubr.bf16.mxu0 0
    %484 = vmatmul.mubr.bf16.gmra.mxu0 %v393
    %v485 = vpop.f32.mrf.mxu0
    %v486 = vadd.f32 %v304, %v485
    %v487 = vpop.f32.mrf.mxu0
    %v488 = vpop.f32.mrf.mxu0
    %v489 = vadd.f32 %v304, %v488
    %v490 = vpop.f32.mrf.mxu0
    %491 = vdwg.mxu0
    %v492 = vpack.c.bf16 %v430, %v430
    %v493 = vpack.c.bf16 %v433, %v433
    %v494 = vpack.c.bf16 %v438, %v438
    %v495 = vpack.c.bf16 %v441, %v441
    %v496 = vpack.c.bf16 %v446, %v446
    %v497 = vpack.c.bf16 %v449, %v449
    %v498 = vpack.c.bf16 %v454, %v454
    %v499 = vpack.c.bf16 %v457, %v457
    %v500 = vpack.c.bf16 %v462, %v462
    %v501 = vpack.c.bf16 %v465, %v465
    %v502 = vpack.c.bf16 %v470, %v470
    %v503 = vpack.c.bf16 %v473, %v473
    %v504 = vpack.c.bf16 %v478, %v478
    %v505 = vpack.c.bf16 %v481, %v481
    %v506 = vpack.c.bf16 %v486, %v486
    %v507 = vpack.c.bf16 %v489, %v489
    %v524 = vunpack.c.l.b16 %v492
    %v525 = vunpack.c.l.b16 %v493
    %v526 = vunpack.c.l.b16 %v494
    %v527 = vunpack.c.l.b16 %v495
    %v528 = vunpack.c.l.b16 %v496
    %v529 = vunpack.c.l.b16 %v497
    %v530 = vunpack.c.l.b16 %v498
    %v531 = vunpack.c.l.b16 %v499
    %v532 = vunpack.c.l.b16 %v500
    %v533 = vunpack.c.l.b16 %v501
    %v534 = vunpack.c.l.b16 %v502
    %v535 = vunpack.c.l.b16 %v503
    %v536 = vunpack.c.l.b16 %v504
    %v537 = vunpack.c.l.b16 %v505
    %v538 = vunpack.c.l.b16 %v506
    %v539 = vunpack.c.l.b16 %v507
    %v540 = vpack.c.b16 %v524, %v524
    %v541 = vpack.c.b16 %v525, %v525
    %v542 = vpack.c.b16 %v526, %v526
    %v543 = vpack.c.b16 %v527, %v527
    %v544 = vpack.c.b16 %v528, %v528
    %v545 = vpack.c.b16 %v529, %v529
    %v546 = vpack.c.b16 %v530, %v530
    %v547 = vpack.c.b16 %v531, %v531
    %v548 = vpack.c.b16 %v532, %v532
    %v549 = vpack.c.b16 %v533, %v533
    %v550 = vpack.c.b16 %v534, %v534
    %v551 = vpack.c.b16 %v535, %v535
    %v552 = vpack.c.b16 %v536, %v536
    %v553 = vpack.c.b16 %v537, %v537
    %v554 = vpack.c.b16 %v538, %v538
    %v555 = vpack.c.b16 %v539, %v539
    %v557 = vshrl.u32 %v540, 16
    %v559 = vrot.slane %v557, 7
    %v560 = vshll.u32 %v540, 16
    %v562 = vor.u32 %v559, %v560
    %v563 = vrot.slane %v559, 4
    %v565 = vshrl.u32 %v541, 16
    %v567 = vrot.slane %v565, 7
    %v568 = vshll.u32 %v541, 16
    %v570 = vor.u32 %v567, %v568
    %v571 = vrot.slane %v567, 4
    %v573 = vshrl.u32 %v542, 16
    %v575 = vrot.slane %v573, 7
    %v576 = vshll.u32 %v542, 16
    %v578 = vor.u32 %v575, %v576
    %v579 = vrot.slane %v575, 4
    %v581 = vshrl.u32 %v543, 16
    %v583 = vrot.slane %v581, 7
    %v584 = vshll.u32 %v543, 16
    %v586 = vor.u32 %v583, %v584
    %v587 = vrot.slane %v583, 4
    %v589 = vshrl.u32 %v544, 16
    %v591 = vrot.slane %v589, 7
    %v592 = vshll.u32 %v544, 16
    %v594 = vor.u32 %v591, %v592
    %v595 = vrot.slane %v591, 4
    %v597 = vshrl.u32 %v545, 16
    %v599 = vrot.slane %v597, 7
    %v600 = vshll.u32 %v545, 16
    %v602 = vor.u32 %v599, %v600
    %v603 = vrot.slane %v599, 4
    %v605 = vshrl.u32 %v546, 16
    %v607 = vrot.slane %v605, 7
    %v608 = vshll.u32 %v546, 16
    %v610 = vor.u32 %v607, %v608
    %v611 = vrot.slane %v607, 4
    %v613 = vshrl.u32 %v547, 16
    %v615 = vrot.slane %v613, 7
    %v616 = vshll.u32 %v547, 16
    %v618 = vor.u32 %v615, %v616
    %v619 = vrot.slane %v615, 4
    %v621 = vshrl.u32 %v548, 16
    %v623 = vrot.slane %v621, 7
    %v624 = vshll.u32 %v548, 16
    %v626 = vor.u32 %v623, %v624
    %v627 = vrot.slane %v623, 4
    %v629 = vshrl.u32 %v549, 16
    %v631 = vrot.slane %v629, 7
    %v632 = vshll.u32 %v549, 16
    %v634 = vor.u32 %v631, %v632
    %v635 = vrot.slane %v631, 4
    %v637 = vshrl.u32 %v550, 16
    %v639 = vrot.slane %v637, 7
    %v640 = vshll.u32 %v550, 16
    %v642 = vor.u32 %v639, %v640
    %v643 = vrot.slane %v639, 4
    %v645 = vshrl.u32 %v551, 16
    %v647 = vrot.slane %v645, 7
    %v648 = vshll.u32 %v551, 16
    %v650 = vor.u32 %v647, %v648
    %v651 = vrot.slane %v647, 4
    %v653 = vshrl.u32 %v552, 16
    %v655 = vrot.slane %v653, 7
    %v656 = vshll.u32 %v552, 16
    %v658 = vor.u32 %v655, %v656
    %v659 = vrot.slane %v655, 4
    %v661 = vshrl.u32 %v553, 16
    %v663 = vrot.slane %v661, 7
    %v664 = vshll.u32 %v553, 16
    %v666 = vor.u32 %v663, %v664
    %v667 = vrot.slane %v663, 4
    %v669 = vshrl.u32 %v554, 16
    %v671 = vrot.slane %v669, 7
    %v672 = vshll.u32 %v554, 16
    %v674 = vor.u32 %v671, %v672
    %v675 = vrot.slane %v671, 4
    %v677 = vshrl.u32 %v555, 16
    %v679 = vrot.slane %v677, 7
    %v680 = vshll.u32 %v555, 16
    %v682 = vor.u32 %v679, %v680
    %v683 = vrot.slane %v679, 4
    %s716 = scalar_lea.vmem [#allocation2], 8
    %vm717 = vcmask 1043456
    %vm718 = vmand %vm717, %vm213
    %v719 = vld [vmem:[%s716] sm:$0xf]
    %v720 = vsel %vm718, %v562, %v719
    %721 = vst [vmem:[%s716] sm:$0xf] %v720
    %v722 = vld [vmem:[%s716 + $0x4] sm:$0x1]
    %v723 = vsel %vm152, %v563, %v722
    %724 = vst [vmem:[%s716 + $0x4] sm:$0x1] %v723
    %v725 = vld [vmem:[%s716 + $0x8] sm:$0xf]
    %v726 = vsel %vm718, %v570, %v725
    %727 = vst [vmem:[%s716 + $0x8] sm:$0xf] %v726
    %v728 = vld [vmem:[%s716 + $0xc] sm:$0x1]
    %v729 = vsel %vm152, %v571, %v728
    %730 = vst [vmem:[%s716 + $0xc] sm:$0x1] %v729
    %v731 = vld [vmem:[%s716 + $0x10] sm:$0xf]
    %v732 = vsel %vm718, %v578, %v731
    %733 = vst [vmem:[%s716 + $0x10] sm:$0xf] %v732
    %v734 = vld [vmem:[%s716 + $0x14] sm:$0x1]
    %v735 = vsel %vm152, %v579, %v734
    %736 = vst [vmem:[%s716 + $0x14] sm:$0x1] %v735
    %v737 = vld [vmem:[%s716 + $0x18] sm:$0xf]
    %v738 = vsel %vm718, %v586, %v737
    %739 = vst [vmem:[%s716 + $0x18] sm:$0xf] %v738
    %v740 = vld [vmem:[%s716 + $0x1c] sm:$0x1]
    %v741 = vsel %vm152, %v587, %v740
    %742 = vst [vmem:[%s716 + $0x1c] sm:$0x1] %v741
    %v743 = vld [vmem:[%s716 + $0x20] sm:$0xf]
    %v744 = vsel %vm718, %v594, %v743
    %745 = vst [vmem:[%s716 + $0x20] sm:$0xf] %v744
    %v746 = vld [vmem:[%s716 + $0x24] sm:$0x1]
    %v747 = vsel %vm152, %v595, %v746
    %748 = vst [vmem:[%s716 + $0x24] sm:$0x1] %v747
    %v749 = vld [vmem:[%s716 + $0x28] sm:$0xf]
    %v750 = vsel %vm718, %v602, %v749
    %751 = vst [vmem:[%s716 + $0x28] sm:$0xf] %v750
    %v752 = vld [vmem:[%s716 + $0x2c] sm:$0x1]
    %v753 = vsel %vm152, %v603, %v752
    %754 = vst [vmem:[%s716 + $0x2c] sm:$0x1] %v753
    %v755 = vld [vmem:[%s716 + $0x30] sm:$0xf]
    %v756 = vsel %vm718, %v610, %v755
    %757 = vst [vmem:[%s716 + $0x30] sm:$0xf] %v756
    %v758 = vld [vmem:[%s716 + $0x34] sm:$0x1]
    %v759 = vsel %vm152, %v611, %v758
    %760 = vst [vmem:[%s716 + $0x34] sm:$0x1] %v759
    %v761 = vld [vmem:[%s716 + $0x38] sm:$0xf]
    %v762 = vsel %vm718, %v618, %v761
    %763 = vst [vmem:[%s716 + $0x38] sm:$0xf] %v762
    %v764 = vld [vmem:[%s716 + $0x3c] sm:$0x1]
    %v765 = vsel %vm152, %v619, %v764
    %766 = vst [vmem:[%s716 + $0x3c] sm:$0x1] %v765
    %v767 = vld [vmem:[%s716 + $0x50] sm:$0xf]
    %v768 = vsel %vm718, %v626, %v767
    %769 = vst [vmem:[%s716 + $0x50] sm:$0xf] %v768
    %v770 = vld [vmem:[%s716 + $0x54] sm:$0x1]
    %v771 = vsel %vm152, %v627, %v770
    %772 = vst [vmem:[%s716 + $0x54] sm:$0x1] %v771
    %v773 = vld [vmem:[%s716 + $0x58] sm:$0xf]
    %v774 = vsel %vm718, %v634, %v773
    %775 = vst [vmem:[%s716 + $0x58] sm:$0xf] %v774
    %v776 = vld [vmem:[%s716 + $0x5c] sm:$0x1]
    %v777 = vsel %vm152, %v635, %v776
    %778 = vst [vmem:[%s716 + $0x5c] sm:$0x1] %v777
    %v779 = vld [vmem:[%s716 + $0x60] sm:$0xf]
    %v780 = vsel %vm718, %v642, %v779
    %781 = vst [vmem:[%s716 + $0x60] sm:$0xf] %v780
    %v782 = vld [vmem:[%s716 + $0x64] sm:$0x1]
    %v783 = vsel %vm152, %v643, %v782
    %784 = vst [vmem:[%s716 + $0x64] sm:$0x1] %v783
    %v785 = vld [vmem:[%s716 + $0x68] sm:$0xf]
    %v786 = vsel %vm718, %v650, %v785
    %787 = vst [vmem:[%s716 + $0x68] sm:$0xf] %v786
    %v788 = vld [vmem:[%s716 + $0x6c] sm:$0x1]
    %v789 = vsel %vm152, %v651, %v788
    %790 = vst [vmem:[%s716 + $0x6c] sm:$0x1] %v789
    %v791 = vld [vmem:[%s716 + $0x70] sm:$0xf]
    %v792 = vsel %vm718, %v658, %v791
    %793 = vst [vmem:[%s716 + $0x70] sm:$0xf] %v792
    %v794 = vld [vmem:[%s716 + $0x74] sm:$0x1]
    %v795 = vsel %vm152, %v659, %v794
    %796 = vst [vmem:[%s716 + $0x74] sm:$0x1] %v795
    %v797 = vld [vmem:[%s716 + $0x78] sm:$0xf]
    %v798 = vsel %vm718, %v666, %v797
    %799 = vst [vmem:[%s716 + $0x78] sm:$0xf] %v798
    %v800 = vld [vmem:[%s716 + $0x7c] sm:$0x1]
    %v801 = vsel %vm152, %v667, %v800
    %802 = vst [vmem:[%s716 + $0x7c] sm:$0x1] %v801
    %v803 = vld [vmem:[%s716 + $0x80] sm:$0xf]
    %v804 = vsel %vm718, %v674, %v803
    %805 = vst [vmem:[%s716 + $0x80] sm:$0xf] %v804
    %v806 = vld [vmem:[%s716 + $0x84] sm:$0x1]
    %v807 = vsel %vm152, %v675, %v806
    %808 = vst [vmem:[%s716 + $0x84] sm:$0x1] %v807
    %v809 = vld [vmem:[%s716 + $0x88] sm:$0xf]
    %v810 = vsel %vm718, %v682, %v809
    %811 = vst [vmem:[%s716 + $0x88] sm:$0xf] %v810
    %v812 = vld [vmem:[%s716 + $0x8c] sm:$0x1]
    %v813 = vsel %vm152, %v683, %v812
    %814 = vst [vmem:[%s716 + $0x8c] sm:$0x1] %v813
    %v815 = vld [vmem:[#allocation2] sm:$0xf]
    %v816 = vld [vmem:[#allocation2 + $0x8] sm:$0xf]
    %v817 = vld [vmem:[#allocation2 + $0x10] sm:$0xf]
    %v818 = vld [vmem:[#allocation2 + $0x18] sm:$0xf]
    %v819 = vld [vmem:[#allocation2 + $0x20] sm:$0xf]
    %v820 = vld [vmem:[#allocation2 + $0x28] sm:$0xf]
    %v821 = vld [vmem:[#allocation2 + $0x30] sm:$0xf]
    %v822 = vld [vmem:[#allocation2 + $0x38] sm:$0xf]
    %v823 = vld [vmem:[#allocation2 + $0x40] sm:$0xf]
    %v824 = vld [vmem:[#allocation2 + $0x48] sm:$0xf]
    %v825 = vld [vmem:[#allocation2 + $0x50] sm:$0xf]
    %v826 = vld [vmem:[#allocation2 + $0x58] sm:$0xf]
    %v827 = vld [vmem:[#allocation2 + $0x60] sm:$0xf]
    %v828 = vld [vmem:[#allocation2 + $0x68] sm:$0xf]
    %v829 = vld [vmem:[#allocation2 + $0x70] sm:$0xf]
    %v830 = vld [vmem:[#allocation2 + $0x78] sm:$0xf]
    %v831 = vld [vmem:[#allocation2 + $0x80] sm:$0xf]
    %v832 = vld [vmem:[#allocation2 + $0x88] sm:$0xf]
    %v833 = vld [vmem:[#allocation2 + $0x90] sm:$0xf]
    %v834 = vld [vmem:[#allocation2 + $0x98] sm:$0xf]
    %v835 = vld [vmem:[#allocation8] sm:$0xf]
    %v836 = vld [vmem:[#allocation8 + $0x4] sm:$0xf]
    %v837 = vld [vmem:[#allocation8 + $0x8] sm:$0xf]
    %v838 = vld [vmem:[#allocation8 + $0xc] sm:$0xf]
    %v839 = vld [vmem:[#allocation8 + $0x10] sm:$0xf]
    %v840 = vld [vmem:[#allocation8 + $0x14] sm:$0xf]
    %v841 = vld [vmem:[#allocation8 + $0x18] sm:$0xf]
    %v842 = vld [vmem:[#allocation8 + $0x1c] sm:$0xf]
    %v843 = vld [vmem:[#allocation8 + $0x20] sm:$0xf]
    %v844 = vld [vmem:[#allocation8 + $0x24] sm:$0xf]
    %v845 = vld [vmem:[#allocation8 + $0x28] sm:$0xf]
    %v846 = vld [vmem:[#allocation8 + $0x2c] sm:$0xf]
    %v847 = vld [vmem:[#allocation8 + $0x30] sm:$0xf]
    %v848 = vld [vmem:[#allocation8 + $0x34] sm:$0xf]
    %v849 = vld [vmem:[#allocation8 + $0x38] sm:$0xf]
    %v850 = vld [vmem:[#allocation8 + $0x3c] sm:$0xf]
    %s851 = scalar_lea.vmem [#allocation8], 192
    %v852 = vld [vmem:[%s851] sm:$0xf]
    %v853 = vld [vmem:[%s851 + $0x4] sm:$0xf]
    %v854 = vld [vmem:[%s851 + $0x8] sm:$0xf]
    %v855 = vld [vmem:[%s851 + $0xc] sm:$0xf]
    %v856 = vld [vmem:[%s851 + $0x10] sm:$0xf]
    %v857 = vld [vmem:[%s851 + $0x14] sm:$0xf]
    %v858 = vld [vmem:[%s851 + $0x18] sm:$0xf]
    %v859 = vld [vmem:[%s851 + $0x1c] sm:$0xf]
    %v860 = vld [vmem:[%s851 + $0x20] sm:$0xf]
    %v861 = vld [vmem:[%s851 + $0x24] sm:$0xf]
    %v862 = vld [vmem:[%s851 + $0x28] sm:$0xf]
    %v863 = vld [vmem:[%s851 + $0x2c] sm:$0xf]
    %v864 = vld [vmem:[%s851 + $0x30] sm:$0xf]
    %v865 = vld [vmem:[%s851 + $0x34] sm:$0xf]
    %v866 = vld [vmem:[%s851 + $0x38] sm:$0xf]
    %v867 = vld [vmem:[%s851 + $0x3c] sm:$0xf]
    %v884 = vunpack.c.l.b16 %v816
    %v885 = vunpack.c.l.b16 %v817
    %v886 = vunpack.c.l.b16 %v818
    %v887 = vunpack.c.l.b16 %v819
    %v888 = vunpack.c.l.b16 %v820
    %v889 = vunpack.c.l.b16 %v821
    %v890 = vunpack.c.l.b16 %v822
    %v891 = vunpack.c.l.b16 %v823
    %v892 = vunpack.c.l.b16 %v826
    %v893 = vunpack.c.l.b16 %v827
    %v894 = vunpack.c.l.b16 %v828
    %v895 = vunpack.c.l.b16 %v829
    %v896 = vunpack.c.l.b16 %v830
    %v897 = vunpack.c.l.b16 %v831
    %v898 = vunpack.c.l.b16 %v832
    %v899 = vunpack.c.l.b16 %v833
    %v900 = vpack.c.b16 %v885, %v884
    %v901 = vpack.c.b16 %v887, %v886
    %v902 = vpack.c.b16 %v889, %v888
    %v903 = vpack.c.b16 %v891, %v890
    %v904 = vpack.c.b16 %v893, %v892
    %v905 = vpack.c.b16 %v895, %v894
    %v906 = vpack.c.b16 %v897, %v896
    %v907 = vpack.c.b16 %v899, %v898
    %v932 = vunpack.c.l.b16 %v852
    %v933 = vunpack.c.l.b16 %v853
    %v934 = vunpack.c.l.b16 %v854
    %v935 = vunpack.c.l.b16 %v855
    %v936 = vunpack.c.l.b16 %v856
    %v937 = vunpack.c.l.b16 %v857
    %v938 = vunpack.c.l.b16 %v858
    %v939 = vunpack.c.l.b16 %v859
    %v940 = vunpack.c.l.b16 %v860
    %v941 = vunpack.c.l.b16 %v861
    %v942 = vunpack.c.l.b16 %v862
    %v943 = vunpack.c.l.b16 %v863
    %v944 = vunpack.c.l.b16 %v864
    %v945 = vunpack.c.l.b16 %v865
    %v946 = vunpack.c.l.b16 %v866
    %v947 = vunpack.c.l.b16 %v867
    %v948 = vpack.c.b16 %v933, %v932
    %v949 = vpack.c.b16 %v935, %v934
    %v950 = vpack.c.b16 %v937, %v936
    %v951 = vpack.c.b16 %v939, %v938
    %v952 = vpack.c.b16 %v941, %v940
    %v953 = vpack.c.b16 %v943, %v942
    %v954 = vpack.c.b16 %v945, %v944
    %v955 = vpack.c.b16 %v947, %v946
    %964 = vmatprep.subr.bf16.mxu0 0
    %965 = vmatpush1.bf16.msra.mxu0 %v955
    %966 = vmatprep.subr.bf16.mxu0 0
    %967 = vmatpush1.bf16.msra.mxu0 %v954
    %968 = vmatprep.subr.bf16.mxu0 0
    %969 = vmatpush1.bf16.msra.mxu0 %v953
    %970 = vmatprep.subr.bf16.mxu0 0
    %971 = vmatpush1.bf16.msra.mxu0 %v952
    %972 = vmatprep.subr.bf16.mxu0 0
    %973 = vmatpush1.bf16.msra.mxu0 %v951
    %974 = vmatprep.subr.bf16.mxu0 0
    %975 = vmatpush1.bf16.msra.mxu0 %v950
    %976 = vmatprep.subr.bf16.mxu0 0
    %977 = vmatpush1.bf16.msra.mxu0 %v949
    %978 = vmatprep.subr.bf16.mxu0 0
    %979 = vmatpush1.bf16.msra.mxu0 %v948
    %980 = vmatprep.subr.bf16.mxu0 0
    %981 = vmatpush2.bf16.msra.mxu0 0
    %982 = vmatprep.subr.bf16.mxu0 0
    %983 = vmatpush2.bf16.msra.mxu0 0
    %984 = vmatprep.subr.bf16.mxu0 0
    %985 = vmatpush2.bf16.msra.mxu0 0
    %986 = vmatprep.subr.bf16.mxu0 0
    %987 = vmatpush2.bf16.msra.mxu0 0
    %988 = vmatprep.subr.bf16.mxu0 0
    %989 = vmatpush2.bf16.msra.mxu0 0
    %990 = vmatprep.subr.bf16.mxu0 0
    %991 = vmatpush2.bf16.msra.mxu0 0
    %992 = vmatprep.subr.bf16.mxu0 0
    %993 = vmatpush2.bf16.msra.mxu0 0
    %994 = vmatprep.subr.bf16.mxu0 0
    %995 = vmatpush2.bf16.msra.mxu0 0
    %996 = vmatprep.mubr.bf16.mxu0 0
    %997 = vmatmul.mubr.bf16.gmra.mxu0 %v900
    %v998 = vpop.f32.mrf.mxu0
    %v999 = vadd.f32 0.0, %v998
    %v1000 = vpop.f32.mrf.mxu0
    %v1001 = vpop.f32.mrf.mxu0
    %v1002 = vadd.f32 0.0, %v1001
    %v1003 = vpop.f32.mrf.mxu0
    %1004 = vmatprep.mubr.bf16.mxu0 0
    %1005 = vmatmul.mubr.bf16.gmra.mxu0 %v901
    %v1006 = vpop.f32.mrf.mxu0
    %v1007 = vadd.f32 0.0, %v1006
    %v1008 = vpop.f32.mrf.mxu0
    %v1009 = vpop.f32.mrf.mxu0
    %v1010 = vadd.f32 0.0, %v1009
    %v1011 = vpop.f32.mrf.mxu0
    %1012 = vmatprep.mubr.bf16.mxu0 0
    %1013 = vmatmul.mubr.bf16.gmra.mxu0 %v902
    %v1014 = vpop.f32.mrf.mxu0
    %v1015 = vadd.f32 0.0, %v1014
    %v1016 = vpop.f32.mrf.mxu0
    %v1017 = vpop.f32.mrf.mxu0
    %v1018 = vadd.f32 0.0, %v1017
    %v1019 = vpop.f32.mrf.mxu0
    %1020 = vmatprep.mubr.bf16.mxu0 0
    %1021 = vmatmul.mubr.bf16.gmra.mxu0 %v903
    %v1022 = vpop.f32.mrf.mxu0
    %v1023 = vadd.f32 0.0, %v1022
    %v1024 = vpop.f32.mrf.mxu0
    %v1025 = vpop.f32.mrf.mxu0
    %v1026 = vadd.f32 0.0, %v1025
    %v1027 = vpop.f32.mrf.mxu0
    %1028 = vmatprep.mubr.bf16.mxu0 0
    %1029 = vmatmul.mubr.bf16.gmra.mxu0 %v904
    %v1030 = vpop.f32.mrf.mxu0
    %v1031 = vadd.f32 0.0, %v1030
    %v1032 = vpop.f32.mrf.mxu0
    %v1033 = vpop.f32.mrf.mxu0
    %v1034 = vadd.f32 0.0, %v1033
    %v1035 = vpop.f32.mrf.mxu0
    %1036 = vmatprep.mubr.bf16.mxu0 0
    %1037 = vmatmul.mubr.bf16.gmra.mxu0 %v905
    %v1038 = vpop.f32.mrf.mxu0
    %v1039 = vadd.f32 0.0, %v1038
    %v1040 = vpop.f32.mrf.mxu0
    %v1041 = vpop.f32.mrf.mxu0
    %v1042 = vadd.f32 0.0, %v1041
    %v1043 = vpop.f32.mrf.mxu0
    %1044 = vmatprep.mubr.bf16.mxu0 0
    %1045 = vmatmul.mubr.bf16.gmra.mxu0 %v906
    %v1046 = vpop.f32.mrf.mxu0
    %v1047 = vadd.f32 0.0, %v1046
    %v1048 = vpop.f32.mrf.mxu0
    %v1049 = vpop.f32.mrf.mxu0
    %v1050 = vadd.f32 0.0, %v1049
    %v1051 = vpop.f32.mrf.mxu0
    %1052 = vmatprep.mubr.bf16.mxu0 0
    %1053 = vmatmul.mubr.bf16.gmra.mxu0 %v907
    %v1054 = vpop.f32.mrf.mxu0
    %v1055 = vadd.f32 0.0, %v1054
    %v1056 = vpop.f32.mrf.mxu0
    %v1057 = vpop.f32.mrf.mxu0
    %v1058 = vadd.f32 0.0, %v1057
    %v1059 = vpop.f32.mrf.mxu0
    %1060 = vdwg.mxu0
    %v1063 = vunpack.c.l.b16 %v815
    %v1064 = vunpack.c.l.b16 %v825
    %v1065 = vpack.c.b16 %v884, %v1063
    %v1066 = vpack.c.b16 %v886, %v885
    %v1067 = vpack.c.b16 %v888, %v887
    %v1068 = vpack.c.b16 %v890, %v889
    %v1069 = vpack.c.b16 %v892, %v1064
    %v1070 = vpack.c.b16 %v894, %v893
    %v1071 = vpack.c.b16 %v896, %v895
    %v1072 = vpack.c.b16 %v898, %v897
    %v1097 = vunpack.c.l.b16 %v835
    %v1098 = vunpack.c.l.b16 %v836
    %v1099 = vunpack.c.l.b16 %v837
    %v1100 = vunpack.c.l.b16 %v838
    %v1101 = vunpack.c.l.b16 %v839
    %v1102 = vunpack.c.l.b16 %v840
    %v1103 = vunpack.c.l.b16 %v841
    %v1104 = vunpack.c.l.b16 %v842
    %v1105 = vunpack.c.l.b16 %v843
    %v1106 = vunpack.c.l.b16 %v844
    %v1107 = vunpack.c.l.b16 %v845
    %v1108 = vunpack.c.l.b16 %v846
    %v1109 = vunpack.c.l.b16 %v847
    %v1110 = vunpack.c.l.b16 %v848
    %v1111 = vunpack.c.l.b16 %v849
    %v1112 = vunpack.c.l.b16 %v850
    %v1113 = vpack.c.b16 %v1098, %v1097
    %v1114 = vpack.c.b16 %v1100, %v1099
    %v1115 = vpack.c.b16 %v1102, %v1101
    %v1116 = vpack.c.b16 %v1104, %v1103
    %v1117 = vpack.c.b16 %v1106, %v1105
    %v1118 = vpack.c.b16 %v1108, %v1107
    %v1119 = vpack.c.b16 %v1110, %v1109
    %v1120 = vpack.c.b16 %v1112, %v1111
    %1129 = vmatprep.subr.bf16.mxu0 0
    %1130 = vmatpush1.bf16.msra.mxu0 %v1120
    %1131 = vmatprep.subr.bf16.mxu0 0
    %1132 = vmatpush1.bf16.msra.mxu0 %v1119
    %1133 = vmatprep.subr.bf16.mxu0 0
    %1134 = vmatpush1.bf16.msra.mxu0 %v1118
    %1135 = vmatprep.subr.bf16.mxu0 0
    %1136 = vmatpush1.bf16.msra.mxu0 %v1117
    %1137 = vmatprep.subr.bf16.mxu0 0
    %1138 = vmatpush1.bf16.msra.mxu0 %v1116
    %1139 = vmatprep.subr.bf16.mxu0 0
    %1140 = vmatpush1.bf16.msra.mxu0 %v1115
    %1141 = vmatprep.subr.bf16.mxu0 0
    %1142 = vmatpush1.bf16.msra.mxu0 %v1114
    %1143 = vmatprep.subr.bf16.mxu0 0
    %1144 = vmatpush1.bf16.msra.mxu0 %v1113
    %1145 = vmatprep.subr.bf16.mxu0 0
    %1146 = vmatpush2.bf16.msra.mxu0 0
    %1147 = vmatprep.subr.bf16.mxu0 0
    %1148 = vmatpush2.bf16.msra.mxu0 0
    %1149 = vmatprep.subr.bf16.mxu0 0
    %1150 = vmatpush2.bf16.msra.mxu0 0
    %1151 = vmatprep.subr.bf16.mxu0 0
    %1152 = vmatpush2.bf16.msra.mxu0 0
    %1153 = vmatprep.subr.bf16.mxu0 0
    %1154 = vmatpush2.bf16.msra.mxu0 0
    %1155 = vmatprep.subr.bf16.mxu0 0
    %1156 = vmatpush2.bf16.msra.mxu0 0
    %1157 = vmatprep.subr.bf16.mxu0 0
    %1158 = vmatpush2.bf16.msra.mxu0 0
    %1159 = vmatprep.subr.bf16.mxu0 0
    %1160 = vmatpush2.bf16.msra.mxu0 0
    %1161 = vmatprep.mubr.bf16.mxu0 0
    %1162 = vmatmul.mubr.bf16.gmra.mxu0 %v1065
    %v1163 = vpop.f32.mrf.mxu0
    %v1164 = vadd.f32 %v999, %v1163
    %v1165 = vpop.f32.mrf.mxu0
    %v1166 = vpop.f32.mrf.mxu0
    %v1167 = vadd.f32 %v1002, %v1166
    %v1168 = vpop.f32.mrf.mxu0
    %1169 = vmatprep.mubr.bf16.mxu0 0
    %1170 = vmatmul.mubr.bf16.gmra.mxu0 %v1066
    %v1171 = vpop.f32.mrf.mxu0
    %v1172 = vadd.f32 %v1007, %v1171
    %v1173 = vpop.f32.mrf.mxu0
    %v1174 = vpop.f32.mrf.mxu0
    %v1175 = vadd.f32 %v1010, %v1174
    %v1176 = vpop.f32.mrf.mxu0
    %1177 = vmatprep.mubr.bf16.mxu0 0
    %1178 = vmatmul.mubr.bf16.gmra.mxu0 %v1067
    %v1179 = vpop.f32.mrf.mxu0
    %v1180 = vadd.f32 %v1015, %v1179
    %v1181 = vpop.f32.mrf.mxu0
    %v1182 = vpop.f32.mrf.mxu0
    %v1183 = vadd.f32 %v1018, %v1182
    %v1184 = vpop.f32.mrf.mxu0
    %1185 = vmatprep.mubr.bf16.mxu0 0
    %1186 = vmatmul.mubr.bf16.gmra.mxu0 %v1068
    %v1187 = vpop.f32.mrf.mxu0
    %v1188 = vadd.f32 %v1023, %v1187
    %v1189 = vpop.f32.mrf.mxu0
    %v1190 = vpop.f32.mrf.mxu0
    %v1191 = vadd.f32 %v1026, %v1190
    %v1192 = vpop.f32.mrf.mxu0
    %1193 = vmatprep.mubr.bf16.mxu0 0
    %1194 = vmatmul.mubr.bf16.gmra.mxu0 %v1069
    %v1195 = vpop.f32.mrf.mxu0
    %v1196 = vadd.f32 %v1031, %v1195
    %v1197 = vpop.f32.mrf.mxu0
    %v1198 = vpop.f32.mrf.mxu0
    %v1199 = vadd.f32 %v1034, %v1198
    %v1200 = vpop.f32.mrf.mxu0
    %1201 = vmatprep.mubr.bf16.mxu0 0
    %1202 = vmatmul.mubr.bf16.gmra.mxu0 %v1070
    %v1203 = vpop.f32.mrf.mxu0
    %v1204 = vadd.f32 %v1039, %v1203
    %v1205 = vpop.f32.mrf.mxu0
    %v1206 = vpop.f32.mrf.mxu0
    %v1207 = vadd.f32 %v1042, %v1206
    %v1208 = vpop.f32.mrf.mxu0
    %1209 = vmatprep.mubr.bf16.mxu0 0
    %1210 = vmatmul.mubr.bf16.gmra.mxu0 %v1071
    %v1211 = vpop.f32.mrf.mxu0
    %v1212 = vadd.f32 %v1047, %v1211
    %v1213 = vpop.f32.mrf.mxu0
    %v1214 = vpop.f32.mrf.mxu0
    %v1215 = vadd.f32 %v1050, %v1214
    %v1216 = vpop.f32.mrf.mxu0
    %1217 = vmatprep.mubr.bf16.mxu0 0
    %1218 = vmatmul.mubr.bf16.gmra.mxu0 %v1072
    %v1219 = vpop.f32.mrf.mxu0
    %v1220 = vadd.f32 %v1055, %v1219
    %v1221 = vpop.f32.mrf.mxu0
    %v1222 = vpop.f32.mrf.mxu0
    %v1223 = vadd.f32 %v1058, %v1222
    %v1224 = vpop.f32.mrf.mxu0
    %1225 = vdwg.mxu0
    %s1226 = scalar_lea.vmem [#allocation8], 384
    %v1227 = vld [vmem:[%s1226] sm:$0xf]
    %v1228 = vld [vmem:[%s1226 + $0x4] sm:$0xf]
    %v1229 = vld [vmem:[%s1226 + $0x8] sm:$0xf]
    %v1230 = vld [vmem:[%s1226 + $0xc] sm:$0xf]
    %v1231 = vld [vmem:[%s1226 + $0x10] sm:$0xf]
    %v1232 = vld [vmem:[%s1226 + $0x14] sm:$0xf]
    %v1233 = vld [vmem:[%s1226 + $0x18] sm:$0xf]
    %v1234 = vld [vmem:[%s1226 + $0x1c] sm:$0xf]
    %v1235 = vld [vmem:[%s1226 + $0x20] sm:$0xf]
    %v1236 = vld [vmem:[%s1226 + $0x24] sm:$0xf]
    %v1237 = vld [vmem:[%s1226 + $0x28] sm:$0xf]
    %v1238 = vld [vmem:[%s1226 + $0x2c] sm:$0xf]
    %v1239 = vld [vmem:[%s1226 + $0x30] sm:$0xf]
    %v1240 = vld [vmem:[%s1226 + $0x34] sm:$0xf]
    %v1241 = vld [vmem:[%s1226 + $0x38] sm:$0xf]
    %v1242 = vld [vmem:[%s1226 + $0x3c] sm:$0xf]
    %v1245 = vunpack.c.l.b16 %v824
    %v1246 = vunpack.c.l.b16 %v834
    %v1247 = vpack.c.b16 %v1245, %v891
    %v1248 = vpack.c.b16 %v1246, %v899
    %v1267 = vunpack.c.l.b16 %v1227
    %v1268 = vunpack.c.l.b16 %v1228
    %v1269 = vunpack.c.l.b16 %v1229
    %v1270 = vunpack.c.l.b16 %v1230
    %v1271 = vunpack.c.l.b16 %v1231
    %v1272 = vunpack.c.l.b16 %v1232
    %v1273 = vunpack.c.l.b16 %v1233
    %v1274 = vunpack.c.l.b16 %v1234
    %v1275 = vunpack.c.l.b16 %v1235
    %v1276 = vunpack.c.l.b16 %v1236
    %v1277 = vunpack.c.l.b16 %v1237
    %v1278 = vunpack.c.l.b16 %v1238
    %v1279 = vunpack.c.l.b16 %v1239
    %v1280 = vunpack.c.l.b16 %v1240
    %v1281 = vunpack.c.l.b16 %v1241
    %v1282 = vunpack.c.l.b16 %v1242
    %v1283 = vpack.c.b16 %v1268, %v1267
    %v1284 = vpack.c.b16 %v1270, %v1269
    %v1285 = vpack.c.b16 %v1272, %v1271
    %v1286 = vpack.c.b16 %v1274, %v1273
    %v1287 = vpack.c.b16 %v1276, %v1275
    %v1288 = vpack.c.b16 %v1278, %v1277
    %v1289 = vpack.c.b16 %v1280, %v1279
    %v1290 = vpack.c.b16 %v1282, %v1281
    %1299 = vmatprep.subr.bf16.mxu0 0
    %1300 = vmatpush1.bf16.msra.mxu0 %v1290
    %1301 = vmatprep.subr.bf16.mxu0 0
    %1302 = vmatpush1.bf16.msra.mxu0 %v1289
    %1303 = vmatprep.subr.bf16.mxu0 0
    %1304 = vmatpush1.bf16.msra.mxu0 %v1288
    %1305 = vmatprep.subr.bf16.mxu0 0
    %1306 = vmatpush1.bf16.msra.mxu0 %v1287
    %1307 = vmatprep.subr.bf16.mxu0 0
    %1308 = vmatpush1.bf16.msra.mxu0 %v1286
    %1309 = vmatprep.subr.bf16.mxu0 0
    %1310 = vmatpush1.bf16.msra.mxu0 %v1285
    %1311 = vmatprep.subr.bf16.mxu0 0
    %1312 = vmatpush1.bf16.msra.mxu0 %v1284
    %1313 = vmatprep.subr.bf16.mxu0 0
    %1314 = vmatpush1.bf16.msra.mxu0 %v1283
    %1315 = vmatprep.subr.bf16.mxu0 0
    %1316 = vmatpush2.bf16.msra.mxu0 0
    %1317 = vmatprep.subr.bf16.mxu0 0
    %1318 = vmatpush2.bf16.msra.mxu0 0
    %1319 = vmatprep.subr.bf16.mxu0 0
    %1320 = vmatpush2.bf16.msra.mxu0 0
    %1321 = vmatprep.subr.bf16.mxu0 0
    %1322 = vmatpush2.bf16.msra.mxu0 0
    %1323 = vmatprep.subr.bf16.mxu0 0
    %1324 = vmatpush2.bf16.msra.mxu0 0
    %1325 = vmatprep.subr.bf16.mxu0 0
    %1326 = vmatpush2.bf16.msra.mxu0 0
    %1327 = vmatprep.subr.bf16.mxu0 0
    %1328 = vmatpush2.bf16.msra.mxu0 0
    %1329 = vmatprep.subr.bf16.mxu0 0
    %1330 = vmatpush2.bf16.msra.mxu0 0
    %1331 = vmatprep.mubr.bf16.mxu0 0
    %1332 = vmatmul.mubr.bf16.gmra.mxu0 %v1066
    %v1333 = vpop.f32.mrf.mxu0
    %v1334 = vadd.f32 0.0, %v1333
    %v1335 = vpop.f32.mrf.mxu0
    %v1336 = vpop.f32.mrf.mxu0
    %v1337 = vadd.f32 0.0, %v1336
    %v1338 = vpop.f32.mrf.mxu0
    %1339 = vmatprep.mubr.bf16.mxu0 0
    %1340 = vmatmul.mubr.bf16.gmra.mxu0 %v1067
    %v1341 = vpop.f32.mrf.mxu0
    %v1342 = vadd.f32 0.0, %v1341
    %v1343 = vpop.f32.mrf.mxu0
    %v1344 = vpop.f32.mrf.mxu0
    %v1345 = vadd.f32 0.0, %v1344
    %v1346 = vpop.f32.mrf.mxu0
    %1347 = vmatprep.mubr.bf16.mxu0 0
    %1348 = vmatmul.mubr.bf16.gmra.mxu0 %v1068
    %v1349 = vpop.f32.mrf.mxu0
    %v1350 = vadd.f32 0.0, %v1349
    %v1351 = vpop.f32.mrf.mxu0
    %v1352 = vpop.f32.mrf.mxu0
    %v1353 = vadd.f32 0.0, %v1352
    %v1354 = vpop.f32.mrf.mxu0
    %1355 = vmatprep.mubr.bf16.mxu0 0
    %1356 = vmatmul.mubr.bf16.gmra.mxu0 %v1247
    %v1357 = vpop.f32.mrf.mxu0
    %v1358 = vadd.f32 0.0, %v1357
    %v1359 = vpop.f32.mrf.mxu0
    %v1360 = vpop.f32.mrf.mxu0
    %v1361 = vadd.f32 0.0, %v1360
    %v1362 = vpop.f32.mrf.mxu0
    %1363 = vmatprep.mubr.bf16.mxu0 0
    %1364 = vmatmul.mubr.bf16.gmra.mxu0 %v1070
    %v1365 = vpop.f32.mrf.mxu0
    %v1366 = vadd.f32 0.0, %v1365
    %v1367 = vpop.f32.mrf.mxu0
    %v1368 = vpop.f32.mrf.mxu0
    %v1369 = vadd.f32 0.0, %v1368
    %v1370 = vpop.f32.mrf.mxu0
    %1371 = vmatprep.mubr.bf16.mxu0 0
    %1372 = vmatmul.mubr.bf16.gmra.mxu0 %v1071
    %v1373 = vpop.f32.mrf.mxu0
    %v1374 = vadd.f32 0.0, %v1373
    %v1375 = vpop.f32.mrf.mxu0
    %v1376 = vpop.f32.mrf.mxu0
    %v1377 = vadd.f32 0.0, %v1376
    %v1378 = vpop.f32.mrf.mxu0
    %1379 = vmatprep.mubr.bf16.mxu0 0
    %1380 = vmatmul.mubr.bf16.gmra.mxu0 %v1072
    %v1381 = vpop.f32.mrf.mxu0
    %v1382 = vadd.f32 0.0, %v1381
    %v1383 = vpop.f32.mrf.mxu0
    %v1384 = vpop.f32.mrf.mxu0
    %v1385 = vadd.f32 0.0, %v1384
    %v1386 = vpop.f32.mrf.mxu0
    %1387 = vmatprep.mubr.bf16.mxu0 0
    %1388 = vmatmul.mubr.bf16.gmra.mxu0 %v1248
    %v1389 = vpop.f32.mrf.mxu0
    %v1390 = vadd.f32 0.0, %v1389
    %v1391 = vpop.f32.mrf.mxu0
    %v1392 = vpop.f32.mrf.mxu0
    %v1393 = vadd.f32 0.0, %v1392
    %v1394 = vpop.f32.mrf.mxu0
    %1395 = vdwg.mxu0
    %v1396 = vadd.f32 %v1164, %v1334
    %v1397 = vadd.f32 %v1167, %v1337
    %v1398 = vadd.f32 %v1172, %v1342
    %v1399 = vadd.f32 %v1175, %v1345
    %v1400 = vadd.f32 %v1180, %v1350
    %v1401 = vadd.f32 %v1183, %v1353
    %v1402 = vadd.f32 %v1188, %v1358
    %v1403 = vadd.f32 %v1191, %v1361
    %v1404 = vadd.f32 %v1196, %v1366
    %v1405 = vadd.f32 %v1199, %v1369
    %v1406 = vadd.f32 %v1204, %v1374
    %v1407 = vadd.f32 %v1207, %v1377
    %v1408 = vadd.f32 %v1212, %v1382
    %v1409 = vadd.f32 %v1215, %v1385
    %v1410 = vadd.f32 %v1220, %v1390
    %v1411 = vadd.f32 %v1223, %v1393
    %v1412 = vld [vmem:[#allocation2] sm:$0xf]
    %v1413 = vld [vmem:[#allocation2 + $0x4] sm:$0x1]
    %v1414 = vld [vmem:[#allocation2 + $0x8] sm:$0xf]
    %v1415 = vld [vmem:[#allocation2 + $0xc] sm:$0x1]
    %v1416 = vld [vmem:[#allocation2 + $0x10] sm:$0xf]
    %v1417 = vld [vmem:[#allocation2 + $0x14] sm:$0x1]
    %v1418 = vld [vmem:[#allocation2 + $0x18] sm:$0xf]
    %v1419 = vld [vmem:[#allocation2 + $0x1c] sm:$0x1]
    %v1420 = vld [vmem:[#allocation2 + $0x20] sm:$0xf]
    %v1421 = vld [vmem:[#allocation2 + $0x24] sm:$0x1]
    %v1422 = vld [vmem:[#allocation2 + $0x28] sm:$0xf]
    %v1423 = vld [vmem:[#allocation2 + $0x2c] sm:$0x1]
    %v1424 = vld [vmem:[#allocation2 + $0x30] sm:$0xf]
    %v1425 = vld [vmem:[#allocation2 + $0x34] sm:$0x1]
    %v1426 = vld [vmem:[#allocation2 + $0x38] sm:$0xf]
    %v1427 = vld [vmem:[#allocation2 + $0x3c] sm:$0x1]
    %v1428 = vld [vmem:[#allocation2 + $0x40] sm:$0xf]
    %v1429 = vld [vmem:[#allocation2 + $0x44] sm:$0x1]
    %v1430 = vld [vmem:[#allocation2 + $0x48] sm:$0xf]
    %v1431 = vld [vmem:[#allocation2 + $0x4c] sm:$0x1]
    %v1432 = vld [vmem:[#allocation2 + $0x50] sm:$0xf]
    %v1433 = vld [vmem:[#allocation2 + $0x54] sm:$0x1]
    %v1434 = vld [vmem:[#allocation2 + $0x58] sm:$0xf]
    %v1435 = vld [vmem:[#allocation2 + $0x5c] sm:$0x1]
    %v1436 = vld [vmem:[#allocation2 + $0x60] sm:$0xf]
    %v1437 = vld [vmem:[#allocation2 + $0x64] sm:$0x1]
    %v1438 = vld [vmem:[#allocation2 + $0x68] sm:$0xf]
    %v1439 = vld [vmem:[#allocation2 + $0x6c] sm:$0x1]
    %v1440 = vld [vmem:[#allocation2 + $0x70] sm:$0xf]
    %v1441 = vld [vmem:[#allocation2 + $0x74] sm:$0x1]
    %v1442 = vld [vmem:[#allocation2 + $0x78] sm:$0xf]
    %v1443 = vld [vmem:[#allocation2 + $0x7c] sm:$0x1]
    %v1444 = vld [vmem:[#allocation2 + $0x80] sm:$0xf]
    %v1445 = vld [vmem:[#allocation2 + $0x84] sm:$0x1]
    %v1446 = vld [vmem:[#allocation2 + $0x88] sm:$0xf]
    %v1447 = vld [vmem:[#allocation2 + $0x8c] sm:$0x1]
    %v1448 = vld [vmem:[#allocation2 + $0x90] sm:$0xf]
    %v1449 = vld [vmem:[#allocation2 + $0x94] sm:$0x1]
    %v1450 = vld [vmem:[#allocation2 + $0x98] sm:$0xf]
    %v1451 = vld [vmem:[#allocation2 + $0x9c] sm:$0x1]
    %vm1452 = vsmask.f32 3328
    %vm1453 = vsmask.f32 7440
    %vm1454 = vmor %vm1452, %vm1453
    %v1456 = vshrl.u32 %v1412, 16
    %v1458 = vrot.slane %v1456, 4
    %v1459 = vshll.u32 %v1412, 16
    %v1461 = vrot.slane %v1459, 5
    %v1462 = vor.u32 %v1458, %v1461
    %v1463 = vrot.slane %v1462, 4
    %v1465 = vshll.u32 %v1413, 16
    %v1467 = vrot.slane %v1465, 5
    %v1468 = vsel %vm1454, %v1463, %v1467
    %v1470 = vshrl.u32 %v1414, 16
    %v1472 = vrot.slane %v1470, 4
    %v1473 = vshll.u32 %v1414, 16
    %v1475 = vrot.slane %v1473, 5
    %v1476 = vor.u32 %v1472, %v1475
    %v1477 = vrot.slane %v1476, 4
    %v1479 = vshll.u32 %v1415, 16
    %v1481 = vrot.slane %v1479, 5
    %v1482 = vsel %vm1454, %v1477, %v1481
    %v1484 = vshrl.u32 %v1416, 16
    %v1486 = vrot.slane %v1484, 4
    %v1487 = vshll.u32 %v1416, 16
    %v1489 = vrot.slane %v1487, 5
    %v1490 = vor.u32 %v1486, %v1489
    %v1491 = vrot.slane %v1490, 4
    %v1493 = vshll.u32 %v1417, 16
    %v1495 = vrot.slane %v1493, 5
    %v1496 = vsel %vm1454, %v1491, %v1495
    %v1498 = vshrl.u32 %v1418, 16
    %v1500 = vrot.slane %v1498, 4
    %v1501 = vshll.u32 %v1418, 16
    %v1503 = vrot.slane %v1501, 5
    %v1504 = vor.u32 %v1500, %v1503
    %v1505 = vrot.slane %v1504, 4
    %v1507 = vshll.u32 %v1419, 16
    %v1509 = vrot.slane %v1507, 5
    %v1510 = vsel %vm1454, %v1505, %v1509
    %v1512 = vshrl.u32 %v1420, 16
    %v1514 = vrot.slane %v1512, 4
    %v1515 = vshll.u32 %v1420, 16
    %v1517 = vrot.slane %v1515, 5
    %v1518 = vor.u32 %v1514, %v1517
    %v1519 = vrot.slane %v1518, 4
    %v1521 = vshll.u32 %v1421, 16
    %v1523 = vrot.slane %v1521, 5
    %v1524 = vsel %vm1454, %v1519, %v1523
    %v1526 = vshrl.u32 %v1422, 16
    %v1528 = vrot.slane %v1526, 4
    %v1529 = vshll.u32 %v1422, 16
    %v1531 = vrot.slane %v1529, 5
    %v1532 = vor.u32 %v1528, %v1531
    %v1533 = vrot.slane %v1532, 4
    %v1535 = vshll.u32 %v1423, 16
    %v1537 = vrot.slane %v1535, 5
    %v1538 = vsel %vm1454, %v1533, %v1537
    %v1540 = vshrl.u32 %v1424, 16
    %v1542 = vrot.slane %v1540, 4
    %v1543 = vshll.u32 %v1424, 16
    %v1545 = vrot.slane %v1543, 5
    %v1546 = vor.u32 %v1542, %v1545
    %v1547 = vrot.slane %v1546, 4
    %v1549 = vshll.u32 %v1425, 16
    %v1551 = vrot.slane %v1549, 5
    %v1552 = vsel %vm1454, %v1547, %v1551
    %v1554 = vshrl.u32 %v1426, 16
    %v1556 = vrot.slane %v1554, 4
    %v1557 = vshll.u32 %v1426, 16
    %v1559 = vrot.slane %v1557, 5
    %v1560 = vor.u32 %v1556, %v1559
    %v1561 = vrot.slane %v1560, 4
    %v1563 = vshll.u32 %v1427, 16
    %v1565 = vrot.slane %v1563, 5
    %v1566 = vsel %vm1454, %v1561, %v1565
    %v1568 = vshrl.u32 %v1432, 16
    %v1570 = vrot.slane %v1568, 4
    %v1571 = vshll.u32 %v1432, 16
    %v1573 = vrot.slane %v1571, 5
    %v1574 = vor.u32 %v1570, %v1573
    %v1575 = vrot.slane %v1574, 4
    %v1577 = vshll.u32 %v1433, 16
    %v1579 = vrot.slane %v1577, 5
    %v1580 = vsel %vm1454, %v1575, %v1579
    %v1582 = vshrl.u32 %v1434, 16
    %v1584 = vrot.slane %v1582, 4
    %v1585 = vshll.u32 %v1434, 16
    %v1587 = vrot.slane %v1585, 5
    %v1588 = vor.u32 %v1584, %v1587
    %v1589 = vrot.slane %v1588, 4
    %v1591 = vshll.u32 %v1435, 16
    %v1593 = vrot.slane %v1591, 5
    %v1594 = vsel %vm1454, %v1589, %v1593
    %v1596 = vshrl.u32 %v1436, 16
    %v1598 = vrot.slane %v1596, 4
    %v1599 = vshll.u32 %v1436, 16
    %v1601 = vrot.slane %v1599, 5
    %v1602 = vor.u32 %v1598, %v1601
    %v1603 = vrot.slane %v1602, 4
    %v1605 = vshll.u32 %v1437, 16
    %v1607 = vrot.slane %v1605, 5
    %v1608 = vsel %vm1454, %v1603, %v1607
    %v1610 = vshrl.u32 %v1438, 16
    %v1612 = vrot.slane %v1610, 4
    %v1613 = vshll.u32 %v1438, 16
    %v1615 = vrot.slane %v1613, 5
    %v1616 = vor.u32 %v1612, %v1615
    %v1617 = vrot.slane %v1616, 4
    %v1619 = vshll.u32 %v1439, 16
    %v1621 = vrot.slane %v1619, 5
    %v1622 = vsel %vm1454, %v1617, %v1621
    %v1624 = vshrl.u32 %v1440, 16
    %v1626 = vrot.slane %v1624, 4
    %v1627 = vshll.u32 %v1440, 16
    %v1629 = vrot.slane %v1627, 5
    %v1630 = vor.u32 %v1626, %v1629
    %v1631 = vrot.slane %v1630, 4
    %v1633 = vshll.u32 %v1441, 16
    %v1635 = vrot.slane %v1633, 5
    %v1636 = vsel %vm1454, %v1631, %v1635
    %v1638 = vshrl.u32 %v1442, 16
    %v1640 = vrot.slane %v1638, 4
    %v1641 = vshll.u32 %v1442, 16
    %v1643 = vrot.slane %v1641, 5
    %v1644 = vor.u32 %v1640, %v1643
    %v1645 = vrot.slane %v1644, 4
    %v1647 = vshll.u32 %v1443, 16
    %v1649 = vrot.slane %v1647, 5
    %v1650 = vsel %vm1454, %v1645, %v1649
    %v1652 = vshrl.u32 %v1444, 16
    %v1654 = vrot.slane %v1652, 4
    %v1655 = vshll.u32 %v1444, 16
    %v1657 = vrot.slane %v1655, 5
    %v1658 = vor.u32 %v1654, %v1657
    %v1659 = vrot.slane %v1658, 4
    %v1661 = vshll.u32 %v1445, 16
    %v1663 = vrot.slane %v1661, 5
    %v1664 = vsel %vm1454, %v1659, %v1663
    %v1666 = vshrl.u32 %v1446, 16
    %v1668 = vrot.slane %v1666, 4
    %v1669 = vshll.u32 %v1446, 16
    %v1671 = vrot.slane %v1669, 5
    %v1672 = vor.u32 %v1668, %v1671
    %v1673 = vrot.slane %v1672, 4
    %v1675 = vshll.u32 %v1447, 16
    %v1677 = vrot.slane %v1675, 5
    %v1678 = vsel %vm1454, %v1673, %v1677
    %s1679 = scalar_lea.vmem [#allocation8], 64
    %v1680 = vld [vmem:[%s1679] sm:$0xf]
    %v1681 = vld [vmem:[%s1679 + $0x4] sm:$0xf]
    %v1682 = vld [vmem:[%s1679 + $0x8] sm:$0xf]
    %v1683 = vld [vmem:[%s1679 + $0xc] sm:$0xf]
    %v1684 = vld [vmem:[%s1679 + $0x10] sm:$0xf]
    %v1685 = vld [vmem:[%s1679 + $0x14] sm:$0xf]
    %v1686 = vld [vmem:[%s1679 + $0x18] sm:$0xf]
    %v1687 = vld [vmem:[%s1679 + $0x1c] sm:$0xf]
    %v1688 = vld [vmem:[%s1679 + $0x20] sm:$0xf]
    %v1689 = vld [vmem:[%s1679 + $0x24] sm:$0xf]
    %v1690 = vld [vmem:[%s1679 + $0x28] sm:$0xf]
    %v1691 = vld [vmem:[%s1679 + $0x2c] sm:$0xf]
    %v1692 = vld [vmem:[%s1679 + $0x30] sm:$0xf]
    %v1693 = vld [vmem:[%s1679 + $0x34] sm:$0xf]
    %v1694 = vld [vmem:[%s1679 + $0x38] sm:$0xf]
    %v1695 = vld [vmem:[%s1679 + $0x3c] sm:$0xf]
    %v1696 = vunpack.c.l.b16 %v1468
    %v1697 = vunpack.c.l.b16 %v1482
    %v1698 = vunpack.c.l.b16 %v1496
    %v1699 = vunpack.c.l.b16 %v1510
    %v1700 = vunpack.c.l.b16 %v1524
    %v1701 = vunpack.c.l.b16 %v1538
    %v1702 = vunpack.c.l.b16 %v1552
    %v1703 = vunpack.c.l.b16 %v1566
    %v1704 = vunpack.c.l.b16 %v1580
    %v1705 = vunpack.c.l.b16 %v1594
    %v1706 = vunpack.c.l.b16 %v1608
    %v1707 = vunpack.c.l.b16 %v1622
    %v1708 = vunpack.c.l.b16 %v1636
    %v1709 = vunpack.c.l.b16 %v1650
    %v1710 = vunpack.c.l.b16 %v1664
    %v1711 = vunpack.c.l.b16 %v1678
    %v1712 = vpack.c.b16 %v1697, %v1696
    %v1713 = vpack.c.b16 %v1699, %v1698
    %v1714 = vpack.c.b16 %v1701, %v1700
    %v1715 = vpack.c.b16 %v1703, %v1702
    %v1716 = vpack.c.b16 %v1705, %v1704
    %v1717 = vpack.c.b16 %v1707, %v1706
    %v1718 = vpack.c.b16 %v1709, %v1708
    %v1719 = vpack.c.b16 %v1711, %v1710
    %v1744 = vunpack.c.l.b16 %v1680
    %v1745 = vunpack.c.l.b16 %v1681
    %v1746 = vunpack.c.l.b16 %v1682
    %v1747 = vunpack.c.l.b16 %v1683
    %v1748 = vunpack.c.l.b16 %v1684
    %v1749 = vunpack.c.l.b16 %v1685
    %v1750 = vunpack.c.l.b16 %v1686
    %v1751 = vunpack.c.l.b16 %v1687
    %v1752 = vunpack.c.l.b16 %v1688
    %v1753 = vunpack.c.l.b16 %v1689
    %v1754 = vunpack.c.l.b16 %v1690
    %v1755 = vunpack.c.l.b16 %v1691
    %v1756 = vunpack.c.l.b16 %v1692
    %v1757 = vunpack.c.l.b16 %v1693
    %v1758 = vunpack.c.l.b16 %v1694
    %v1759 = vunpack.c.l.b16 %v1695
    %v1760 = vpack.c.b16 %v1745, %v1744
    %v1761 = vpack.c.b16 %v1747, %v1746
    %v1762 = vpack.c.b16 %v1749, %v1748
    %v1763 = vpack.c.b16 %v1751, %v1750
    %v1764 = vpack.c.b16 %v1753, %v1752
    %v1765 = vpack.c.b16 %v1755, %v1754
    %v1766 = vpack.c.b16 %v1757, %v1756
    %v1767 = vpack.c.b16 %v1759, %v1758
    %1776 = vmatprep.subr.bf16.mxu0 0
    %1777 = vmatpush1.bf16.msra.mxu0 %v1767
    %1778 = vmatprep.subr.bf16.mxu0 0
    %1779 = vmatpush1.bf16.msra.mxu0 %v1766
    %1780 = vmatprep.subr.bf16.mxu0 0
    %1781 = vmatpush1.bf16.msra.mxu0 %v1765
    %1782 = vmatprep.subr.bf16.mxu0 0
    %1783 = vmatpush1.bf16.msra.mxu0 %v1764
    %1784 = vmatprep.subr.bf16.mxu0 0
    %1785 = vmatpush1.bf16.msra.mxu0 %v1763
    %1786 = vmatprep.subr.bf16.mxu0 0
    %1787 = vmatpush1.bf16.msra.mxu0 %v1762
    %1788 = vmatprep.subr.bf16.mxu0 0
    %1789 = vmatpush1.bf16.msra.mxu0 %v1761
    %1790 = vmatprep.subr.bf16.mxu0 0
    %1791 = vmatpush1.bf16.msra.mxu0 %v1760
    %1792 = vmatprep.subr.bf16.mxu0 0
    %1793 = vmatpush2.bf16.msra.mxu0 0
    %1794 = vmatprep.subr.bf16.mxu0 0
    %1795 = vmatpush2.bf16.msra.mxu0 0
    %1796 = vmatprep.subr.bf16.mxu0 0
    %1797 = vmatpush2.bf16.msra.mxu0 0
    %1798 = vmatprep.subr.bf16.mxu0 0
    %1799 = vmatpush2.bf16.msra.mxu0 0
    %1800 = vmatprep.subr.bf16.mxu0 0
    %1801 = vmatpush2.bf16.msra.mxu0 0
    %1802 = vmatprep.subr.bf16.mxu0 0
    %1803 = vmatpush2.bf16.msra.mxu0 0
    %1804 = vmatprep.subr.bf16.mxu0 0
    %1805 = vmatpush2.bf16.msra.mxu0 0
    %1806 = vmatprep.subr.bf16.mxu0 0
    %1807 = vmatpush2.bf16.msra.mxu0 0
    %1808 = vmatprep.mubr.bf16.mxu0 0
    %1809 = vmatmul.mubr.bf16.gmra.mxu0 %v1712
    %v1810 = vpop.f32.mrf.mxu0
    %v1811 = vadd.f32 0.0, %v1810
    %v1812 = vpop.f32.mrf.mxu0
    %v1813 = vpop.f32.mrf.mxu0
    %v1814 = vadd.f32 0.0, %v1813
    %v1815 = vpop.f32.mrf.mxu0
    %1816 = vmatprep.mubr.bf16.mxu0 0
    %1817 = vmatmul.mubr.bf16.gmra.mxu0 %v1713
    %v1818 = vpop.f32.mrf.mxu0
    %v1819 = vadd.f32 0.0, %v1818
    %v1820 = vpop.f32.mrf.mxu0
    %v1821 = vpop.f32.mrf.mxu0
    %v1822 = vadd.f32 0.0, %v1821
    %v1823 = vpop.f32.mrf.mxu0
    %1824 = vmatprep.mubr.bf16.mxu0 0
    %1825 = vmatmul.mubr.bf16.gmra.mxu0 %v1714
    %v1826 = vpop.f32.mrf.mxu0
    %v1827 = vadd.f32 0.0, %v1826
    %v1828 = vpop.f32.mrf.mxu0
    %v1829 = vpop.f32.mrf.mxu0
    %v1830 = vadd.f32 0.0, %v1829
    %v1831 = vpop.f32.mrf.mxu0
    %1832 = vmatprep.mubr.bf16.mxu0 0
    %1833 = vmatmul.mubr.bf16.gmra.mxu0 %v1715
    %v1834 = vpop.f32.mrf.mxu0
    %v1835 = vadd.f32 0.0, %v1834
    %v1836 = vpop.f32.mrf.mxu0
    %v1837 = vpop.f32.mrf.mxu0
    %v1838 = vadd.f32 0.0, %v1837
    %v1839 = vpop.f32.mrf.mxu0
    %1840 = vmatprep.mubr.bf16.mxu0 0
    %1841 = vmatmul.mubr.bf16.gmra.mxu0 %v1716
    %v1842 = vpop.f32.mrf.mxu0
    %v1843 = vadd.f32 0.0, %v1842
    %v1844 = vpop.f32.mrf.mxu0
    %v1845 = vpop.f32.mrf.mxu0
    %v1846 = vadd.f32 0.0, %v1845
    %v1847 = vpop.f32.mrf.mxu0
    %1848 = vmatprep.mubr.bf16.mxu0 0
    %1849 = vmatmul.mubr.bf16.gmra.mxu0 %v1717
    %v1850 = vpop.f32.mrf.mxu0
    %v1851 = vadd.f32 0.0, %v1850
    %v1852 = vpop.f32.mrf.mxu0
    %v1853 = vpop.f32.mrf.mxu0
    %v1854 = vadd.f32 0.0, %v1853
    %v1855 = vpop.f32.mrf.mxu0
    %1856 = vmatprep.mubr.bf16.mxu0 0
    %1857 = vmatmul.mubr.bf16.gmra.mxu0 %v1718
    %v1858 = vpop.f32.mrf.mxu0
    %v1859 = vadd.f32 0.0, %v1858
    %v1860 = vpop.f32.mrf.mxu0
    %v1861 = vpop.f32.mrf.mxu0
    %v1862 = vadd.f32 0.0, %v1861
    %v1863 = vpop.f32.mrf.mxu0
    %1864 = vmatprep.mubr.bf16.mxu0 0
    %1865 = vmatmul.mubr.bf16.gmra.mxu0 %v1719
    %v1866 = vpop.f32.mrf.mxu0
    %v1867 = vadd.f32 0.0, %v1866
    %v1868 = vpop.f32.mrf.mxu0
    %v1869 = vpop.f32.mrf.mxu0
    %v1870 = vadd.f32 0.0, %v1869
    %v1871 = vpop.f32.mrf.mxu0
    %1872 = vdwg.mxu0
    %v1873 = vadd.f32 %v1396, %v1811
    %v1874 = vadd.f32 %v1397, %v1814
    %v1875 = vadd.f32 %v1398, %v1819
    %v1876 = vadd.f32 %v1399, %v1822
    %v1877 = vadd.f32 %v1400, %v1827
    %v1878 = vadd.f32 %v1401, %v1830
    %v1879 = vadd.f32 %v1402, %v1835
    %v1880 = vadd.f32 %v1403, %v1838
    %v1881 = vadd.f32 %v1404, %v1843
    %v1882 = vadd.f32 %v1405, %v1846
    %v1883 = vadd.f32 %v1406, %v1851
    %v1884 = vadd.f32 %v1407, %v1854
    %v1885 = vadd.f32 %v1408, %v1859
    %v1886 = vadd.f32 %v1409, %v1862
    %v1887 = vadd.f32 %v1410, %v1867
    %v1888 = vadd.f32 %v1411, %v1870
    %v1890 = vshrl.u32 %v1428, 16
    %v1892 = vrot.slane %v1890, 4
    %v1893 = vshll.u32 %v1428, 16
    %v1895 = vrot.slane %v1893, 5
    %v1896 = vor.u32 %v1892, %v1895
    %v1897 = vrot.slane %v1896, 4
    %v1899 = vshll.u32 %v1429, 16
    %v1901 = vrot.slane %v1899, 5
    %v1902 = vsel %vm1454, %v1897, %v1901
    %v1904 = vshrl.u32 %v1448, 16
    %v1906 = vrot.slane %v1904, 4
    %v1907 = vshll.u32 %v1448, 16
    %v1909 = vrot.slane %v1907, 5
    %v1910 = vor.u32 %v1906, %v1909
    %v1911 = vrot.slane %v1910, 4
    %v1913 = vshll.u32 %v1449, 16
    %v1915 = vrot.slane %v1913, 5
    %v1916 = vsel %vm1454, %v1911, %v1915
    %s1917 = scalar_lea.vmem [#allocation8], 256
    %v1918 = vld [vmem:[%s1917] sm:$0xf]
    %v1919 = vld [vmem:[%s1917 + $0x4] sm:$0xf]
    %v1920 = vld [vmem:[%s1917 + $0x8] sm:$0xf]
    %v1921 = vld [vmem:[%s1917 + $0xc] sm:$0xf]
    %v1922 = vld [vmem:[%s1917 + $0x10] sm:$0xf]
    %v1923 = vld [vmem:[%s1917 + $0x14] sm:$0xf]
    %v1924 = vld [vmem:[%s1917 + $0x18] sm:$0xf]
    %v1925 = vld [vmem:[%s1917 + $0x1c] sm:$0xf]
    %v1926 = vld [vmem:[%s1917 + $0x20] sm:$0xf]
    %v1927 = vld [vmem:[%s1917 + $0x24] sm:$0xf]
    %v1928 = vld [vmem:[%s1917 + $0x28] sm:$0xf]
    %v1929 = vld [vmem:[%s1917 + $0x2c] sm:$0xf]
    %v1930 = vld [vmem:[%s1917 + $0x30] sm:$0xf]
    %v1931 = vld [vmem:[%s1917 + $0x34] sm:$0xf]
    %v1932 = vld [vmem:[%s1917 + $0x38] sm:$0xf]
    %v1933 = vld [vmem:[%s1917 + $0x3c] sm:$0xf]
    %v1934 = vunpack.c.l.b16 %v1902
    %v1935 = vunpack.c.l.b16 %v1916
    %v1936 = vpack.c.b16 %v1698, %v1697
    %v1937 = vpack.c.b16 %v1700, %v1699
    %v1938 = vpack.c.b16 %v1702, %v1701
    %v1939 = vpack.c.b16 %v1934, %v1703
    %v1940 = vpack.c.b16 %v1706, %v1705
    %v1941 = vpack.c.b16 %v1708, %v1707
    %v1942 = vpack.c.b16 %v1710, %v1709
    %v1943 = vpack.c.b16 %v1935, %v1711
    %v1968 = vunpack.c.l.b16 %v1918
    %v1969 = vunpack.c.l.b16 %v1919
    %v1970 = vunpack.c.l.b16 %v1920
    %v1971 = vunpack.c.l.b16 %v1921
    %v1972 = vunpack.c.l.b16 %v1922
    %v1973 = vunpack.c.l.b16 %v1923
    %v1974 = vunpack.c.l.b16 %v1924
    %v1975 = vunpack.c.l.b16 %v1925
    %v1976 = vunpack.c.l.b16 %v1926
    %v1977 = vunpack.c.l.b16 %v1927
    %v1978 = vunpack.c.l.b16 %v1928
    %v1979 = vunpack.c.l.b16 %v1929
    %v1980 = vunpack.c.l.b16 %v1930
    %v1981 = vunpack.c.l.b16 %v1931
    %v1982 = vunpack.c.l.b16 %v1932
    %v1983 = vunpack.c.l.b16 %v1933
    %v1984 = vpack.c.b16 %v1969, %v1968
    %v1985 = vpack.c.b16 %v1971, %v1970
    %v1986 = vpack.c.b16 %v1973, %v1972
    %v1987 = vpack.c.b16 %v1975, %v1974
    %v1988 = vpack.c.b16 %v1977, %v1976
    %v1989 = vpack.c.b16 %v1979, %v1978
    %v1990 = vpack.c.b16 %v1981, %v1980
    %v1991 = vpack.c.b16 %v1983, %v1982
    %2000 = vmatprep.subr.bf16.mxu0 0
    %2001 = vmatpush1.bf16.msra.mxu0 %v1991
    %2002 = vmatprep.subr.bf16.mxu0 0
    %2003 = vmatpush1.bf16.msra.mxu0 %v1990
    %2004 = vmatprep.subr.bf16.mxu0 0
    %2005 = vmatpush1.bf16.msra.mxu0 %v1989
    %2006 = vmatprep.subr.bf16.mxu0 0
    %2007 = vmatpush1.bf16.msra.mxu0 %v1988
    %2008 = vmatprep.subr.bf16.mxu0 0
    %2009 = vmatpush1.bf16.msra.mxu0 %v1987
    %2010 = vmatprep.subr.bf16.mxu0 0
    %2011 = vmatpush1.bf16.msra.mxu0 %v1986
    %2012 = vmatprep.subr.bf16.mxu0 0
    %2013 = vmatpush1.bf16.msra.mxu0 %v1985
    %2014 = vmatprep.subr.bf16.mxu0 0
    %2015 = vmatpush1.bf16.msra.mxu0 %v1984
    %2016 = vmatprep.subr.bf16.mxu0 0
    %2017 = vmatpush2.bf16.msra.mxu0 0
    %2018 = vmatprep.subr.bf16.mxu0 0
    %2019 = vmatpush2.bf16.msra.mxu0 0
    %2020 = vmatprep.subr.bf16.mxu0 0
    %2021 = vmatpush2.bf16.msra.mxu0 0
    %2022 = vmatprep.subr.bf16.mxu0 0
    %2023 = vmatpush2.bf16.msra.mxu0 0
    %2024 = vmatprep.subr.bf16.mxu0 0
    %2025 = vmatpush2.bf16.msra.mxu0 0
    %2026 = vmatprep.subr.bf16.mxu0 0
    %2027 = vmatpush2.bf16.msra.mxu0 0
    %2028 = vmatprep.subr.bf16.mxu0 0
    %2029 = vmatpush2.bf16.msra.mxu0 0
    %2030 = vmatprep.subr.bf16.mxu0 0
    %2031 = vmatpush2.bf16.msra.mxu0 0
    %2032 = vmatprep.mubr.bf16.mxu0 0
    %2033 = vmatmul.mubr.bf16.gmra.mxu0 %v1936
    %v2034 = vpop.f32.mrf.mxu0
    %v2035 = vadd.f32 0.0, %v2034
    %v2036 = vpop.f32.mrf.mxu0
    %v2037 = vpop.f32.mrf.mxu0
    %v2038 = vadd.f32 0.0, %v2037
    %v2039 = vpop.f32.mrf.mxu0
    %2040 = vmatprep.mubr.bf16.mxu0 0
    %2041 = vmatmul.mubr.bf16.gmra.mxu0 %v1937
    %v2042 = vpop.f32.mrf.mxu0
    %v2043 = vadd.f32 0.0, %v2042
    %v2044 = vpop.f32.mrf.mxu0
    %v2045 = vpop.f32.mrf.mxu0
    %v2046 = vadd.f32 0.0, %v2045
    %v2047 = vpop.f32.mrf.mxu0
    %2048 = vmatprep.mubr.bf16.mxu0 0
    %2049 = vmatmul.mubr.bf16.gmra.mxu0 %v1938
    %v2050 = vpop.f32.mrf.mxu0
    %v2051 = vadd.f32 0.0, %v2050
    %v2052 = vpop.f32.mrf.mxu0
    %v2053 = vpop.f32.mrf.mxu0
    %v2054 = vadd.f32 0.0, %v2053
    %v2055 = vpop.f32.mrf.mxu0
    %2056 = vmatprep.mubr.bf16.mxu0 0
    %2057 = vmatmul.mubr.bf16.gmra.mxu0 %v1939
    %v2058 = vpop.f32.mrf.mxu0
    %v2059 = vadd.f32 0.0, %v2058
    %v2060 = vpop.f32.mrf.mxu0
    %v2061 = vpop.f32.mrf.mxu0
    %v2062 = vadd.f32 0.0, %v2061
    %v2063 = vpop.f32.mrf.mxu0
    %2064 = vmatprep.mubr.bf16.mxu0 0
    %2065 = vmatmul.mubr.bf16.gmra.mxu0 %v1940
    %v2066 = vpop.f32.mrf.mxu0
    %v2067 = vadd.f32 0.0, %v2066
    %v2068 = vpop.f32.mrf.mxu0
    %v2069 = vpop.f32.mrf.mxu0
    %v2070 = vadd.f32 0.0, %v2069
    %v2071 = vpop.f32.mrf.mxu0
    %2072 = vmatprep.mubr.bf16.mxu0 0
    %2073 = vmatmul.mubr.bf16.gmra.mxu0 %v1941
    %v2074 = vpop.f32.mrf.mxu0
    %v2075 = vadd.f32 0.0, %v2074
    %v2076 = vpop.f32.mrf.mxu0
    %v2077 = vpop.f32.mrf.mxu0
    %v2078 = vadd.f32 0.0, %v2077
    %v2079 = vpop.f32.mrf.mxu0
    %2080 = vmatprep.mubr.bf16.mxu0 0
    %2081 = vmatmul.mubr.bf16.gmra.mxu0 %v1942
    %v2082 = vpop.f32.mrf.mxu0
    %v2083 = vadd.f32 0.0, %v2082
    %v2084 = vpop.f32.mrf.mxu0
    %v2085 = vpop.f32.mrf.mxu0
    %v2086 = vadd.f32 0.0, %v2085
    %v2087 = vpop.f32.mrf.mxu0
    %2088 = vmatprep.mubr.bf16.mxu0 0
    %2089 = vmatmul.mubr.bf16.gmra.mxu0 %v1943
    %v2090 = vpop.f32.mrf.mxu0
    %v2091 = vadd.f32 0.0, %v2090
    %v2092 = vpop.f32.mrf.mxu0
    %v2093 = vpop.f32.mrf.mxu0
    %v2094 = vadd.f32 0.0, %v2093
    %v2095 = vpop.f32.mrf.mxu0
    %2096 = vdwg.mxu0
    %v2097 = vadd.f32 %v1873, %v2035
    %v2098 = vadd.f32 %v1874, %v2038
    %v2099 = vadd.f32 %v1875, %v2043
    %v2100 = vadd.f32 %v1876, %v2046
    %v2101 = vadd.f32 %v1877, %v2051
    %v2102 = vadd.f32 %v1878, %v2054
    %v2103 = vadd.f32 %v1879, %v2059
    %v2104 = vadd.f32 %v1880, %v2062
    %v2105 = vadd.f32 %v1881, %v2067
    %v2106 = vadd.f32 %v1882, %v2070
    %v2107 = vadd.f32 %v1883, %v2075
    %v2108 = vadd.f32 %v1884, %v2078
    %v2109 = vadd.f32 %v1885, %v2083
    %v2110 = vadd.f32 %v1886, %v2086
    %v2111 = vadd.f32 %v1887, %v2091
    %v2112 = vadd.f32 %v1888, %v2094
    %v2114 = vshrl.u32 %v1430, 16
    %v2116 = vrot.slane %v2114, 4
    %v2117 = vshll.u32 %v1430, 16
    %v2119 = vrot.slane %v2117, 5
    %v2120 = vor.u32 %v2116, %v2119
    %v2121 = vrot.slane %v2120, 4
    %v2123 = vshll.u32 %v1431, 16
    %v2125 = vrot.slane %v2123, 5
    %v2126 = vsel %vm1454, %v2121, %v2125
    %v2128 = vshrl.u32 %v1450, 16
    %v2130 = vrot.slane %v2128, 4
    %v2131 = vshll.u32 %v1450, 16
    %v2133 = vrot.slane %v2131, 5
    %v2134 = vor.u32 %v2130, %v2133
    %v2135 = vrot.slane %v2134, 4
    %v2137 = vshll.u32 %v1451, 16
    %v2139 = vrot.slane %v2137, 5
    %v2140 = vsel %vm1454, %v2135, %v2139
    %s2141 = scalar_lea.vmem [#allocation8], 448
    %v2142 = vld [vmem:[%s2141] sm:$0xf]
    %v2143 = vld [vmem:[%s2141 + $0x4] sm:$0xf]
    %v2144 = vld [vmem:[%s2141 + $0x8] sm:$0xf]
    %v2145 = vld [vmem:[%s2141 + $0xc] sm:$0xf]
    %v2146 = vld [vmem:[%s2141 + $0x10] sm:$0xf]
    %v2147 = vld [vmem:[%s2141 + $0x14] sm:$0xf]
    %v2148 = vld [vmem:[%s2141 + $0x18] sm:$0xf]
    %v2149 = vld [vmem:[%s2141 + $0x1c] sm:$0xf]
    %v2150 = vld [vmem:[%s2141 + $0x20] sm:$0xf]
    %v2151 = vld [vmem:[%s2141 + $0x24] sm:$0xf]
    %v2152 = vld [vmem:[%s2141 + $0x28] sm:$0xf]
    %v2153 = vld [vmem:[%s2141 + $0x2c] sm:$0xf]
    %v2154 = vld [vmem:[%s2141 + $0x30] sm:$0xf]
    %v2155 = vld [vmem:[%s2141 + $0x34] sm:$0xf]
    %v2156 = vld [vmem:[%s2141 + $0x38] sm:$0xf]
    %v2157 = vld [vmem:[%s2141 + $0x3c] sm:$0xf]
    %v2158 = vunpack.c.l.b16 %v2126
    %v2159 = vunpack.c.l.b16 %v2140
    %v2160 = vpack.c.b16 %v2158, %v1934
    %v2161 = vpack.c.b16 %v2159, %v1935
    %v2180 = vunpack.c.l.b16 %v2142
    %v2181 = vunpack.c.l.b16 %v2143
    %v2182 = vunpack.c.l.b16 %v2144
    %v2183 = vunpack.c.l.b16 %v2145
    %v2184 = vunpack.c.l.b16 %v2146
    %v2185 = vunpack.c.l.b16 %v2147
    %v2186 = vunpack.c.l.b16 %v2148
    %v2187 = vunpack.c.l.b16 %v2149
    %v2188 = vunpack.c.l.b16 %v2150
    %v2189 = vunpack.c.l.b16 %v2151
    %v2190 = vunpack.c.l.b16 %v2152
    %v2191 = vunpack.c.l.b16 %v2153
    %v2192 = vunpack.c.l.b16 %v2154
    %v2193 = vunpack.c.l.b16 %v2155
    %v2194 = vunpack.c.l.b16 %v2156
    %v2195 = vunpack.c.l.b16 %v2157
    %v2196 = vpack.c.b16 %v2181, %v2180
    %v2197 = vpack.c.b16 %v2183, %v2182
    %v2198 = vpack.c.b16 %v2185, %v2184
    %v2199 = vpack.c.b16 %v2187, %v2186
    %v2200 = vpack.c.b16 %v2189, %v2188
    %v2201 = vpack.c.b16 %v2191, %v2190
    %v2202 = vpack.c.b16 %v2193, %v2192
    %v2203 = vpack.c.b16 %v2195, %v2194
    %2212 = vmatprep.subr.bf16.mxu0 0
    %2213 = vmatpush1.bf16.msra.mxu0 %v2203
    %2214 = vmatprep.subr.bf16.mxu0 0
    %2215 = vmatpush1.bf16.msra.mxu0 %v2202
    %2216 = vmatprep.subr.bf16.mxu0 0
    %2217 = vmatpush1.bf16.msra.mxu0 %v2201
    %2218 = vmatprep.subr.bf16.mxu0 0
    %2219 = vmatpush1.bf16.msra.mxu0 %v2200
    %2220 = vmatprep.subr.bf16.mxu0 0
    %2221 = vmatpush1.bf16.msra.mxu0 %v2199
    %2222 = vmatprep.subr.bf16.mxu0 0
    %2223 = vmatpush1.bf16.msra.mxu0 %v2198
    %2224 = vmatprep.subr.bf16.mxu0 0
    %2225 = vmatpush1.bf16.msra.mxu0 %v2197
    %2226 = vmatprep.subr.bf16.mxu0 0
    %2227 = vmatpush1.bf16.msra.mxu0 %v2196
    %2228 = vmatprep.subr.bf16.mxu0 0
    %2229 = vmatpush2.bf16.msra.mxu0 0
    %2230 = vmatprep.subr.bf16.mxu0 0
    %2231 = vmatpush2.bf16.msra.mxu0 0
    %2232 = vmatprep.subr.bf16.mxu0 0
    %2233 = vmatpush2.bf16.msra.mxu0 0
    %2234 = vmatprep.subr.bf16.mxu0 0
    %2235 = vmatpush2.bf16.msra.mxu0 0
    %2236 = vmatprep.subr.bf16.mxu0 0
    %2237 = vmatpush2.bf16.msra.mxu0 0
    %2238 = vmatprep.subr.bf16.mxu0 0
    %2239 = vmatpush2.bf16.msra.mxu0 0
    %2240 = vmatprep.subr.bf16.mxu0 0
    %2241 = vmatpush2.bf16.msra.mxu0 0
    %2242 = vmatprep.subr.bf16.mxu0 0
    %2243 = vmatpush2.bf16.msra.mxu0 0
    %2244 = vmatprep.mubr.bf16.mxu0 0
    %2245 = vmatmul.mubr.bf16.gmra.mxu0 %v1713
    %v2246 = vpop.f32.mrf.mxu0
    %v2247 = vadd.f32 0.0, %v2246
    %v2248 = vpop.f32.mrf.mxu0
    %v2249 = vpop.f32.mrf.mxu0
    %v2250 = vadd.f32 0.0, %v2249
    %v2251 = vpop.f32.mrf.mxu0
    %2252 = vmatprep.mubr.bf16.mxu0 0
    %2253 = vmatmul.mubr.bf16.gmra.mxu0 %v1714
    %v2254 = vpop.f32.mrf.mxu0
    %v2255 = vadd.f32 0.0, %v2254
    %v2256 = vpop.f32.mrf.mxu0
    %v2257 = vpop.f32.mrf.mxu0
    %v2258 = vadd.f32 0.0, %v2257
    %v2259 = vpop.f32.mrf.mxu0
    %2260 = vmatprep.mubr.bf16.mxu0 0
    %2261 = vmatmul.mubr.bf16.gmra.mxu0 %v1715
    %v2262 = vpop.f32.mrf.mxu0
    %v2263 = vadd.f32 0.0, %v2262
    %v2264 = vpop.f32.mrf.mxu0
    %v2265 = vpop.f32.mrf.mxu0
    %v2266 = vadd.f32 0.0, %v2265
    %v2267 = vpop.f32.mrf.mxu0
    %2268 = vmatprep.mubr.bf16.mxu0 0
    %2269 = vmatmul.mubr.bf16.gmra.mxu0 %v2160
    %v2270 = vpop.f32.mrf.mxu0
    %v2271 = vadd.f32 0.0, %v2270
    %v2272 = vpop.f32.mrf.mxu0
    %v2273 = vpop.f32.mrf.mxu0
    %v2274 = vadd.f32 0.0, %v2273
    %v2275 = vpop.f32.mrf.mxu0
    %2276 = vmatprep.mubr.bf16.mxu0 0
    %2277 = vmatmul.mubr.bf16.gmra.mxu0 %v1717
    %v2278 = vpop.f32.mrf.mxu0
    %v2279 = vadd.f32 0.0, %v2278
    %v2280 = vpop.f32.mrf.mxu0
    %v2281 = vpop.f32.mrf.mxu0
    %v2282 = vadd.f32 0.0, %v2281
    %v2283 = vpop.f32.mrf.mxu0
    %2284 = vmatprep.mubr.bf16.mxu0 0
    %2285 = vmatmul.mubr.bf16.gmra.mxu0 %v1718
    %v2286 = vpop.f32.mrf.mxu0
    %v2287 = vadd.f32 0.0, %v2286
    %v2288 = vpop.f32.mrf.mxu0
    %v2289 = vpop.f32.mrf.mxu0
    %v2290 = vadd.f32 0.0, %v2289
    %v2291 = vpop.f32.mrf.mxu0
    %2292 = vmatprep.mubr.bf16.mxu0 0
    %2293 = vmatmul.mubr.bf16.gmra.mxu0 %v1719
    %v2294 = vpop.f32.mrf.mxu0
    %v2295 = vadd.f32 0.0, %v2294
    %v2296 = vpop.f32.mrf.mxu0
    %v2297 = vpop.f32.mrf.mxu0
    %v2298 = vadd.f32 0.0, %v2297
    %v2299 = vpop.f32.mrf.mxu0
    %2300 = vmatprep.mubr.bf16.mxu0 0
    %2301 = vmatmul.mubr.bf16.gmra.mxu0 %v2161
    %v2302 = vpop.f32.mrf.mxu0
    %v2303 = vadd.f32 0.0, %v2302
    %v2304 = vpop.f32.mrf.mxu0
    %v2305 = vpop.f32.mrf.mxu0
    %v2306 = vadd.f32 0.0, %v2305
    %v2307 = vpop.f32.mrf.mxu0
    %2308 = vdwg.mxu0
    %v2309 = vadd.f32 %v2097, %v2247
    %v2310 = vadd.f32 %v2098, %v2250
    %v2311 = vadd.f32 %v2099, %v2255
    %v2312 = vadd.f32 %v2100, %v2258
    %v2313 = vadd.f32 %v2101, %v2263
    %v2314 = vadd.f32 %v2102, %v2266
    %v2315 = vadd.f32 %v2103, %v2271
    %v2316 = vadd.f32 %v2104, %v2274
    %v2317 = vadd.f32 %v2105, %v2279
    %v2318 = vadd.f32 %v2106, %v2282
    %v2319 = vadd.f32 %v2107, %v2287
    %v2320 = vadd.f32 %v2108, %v2290
    %v2321 = vadd.f32 %v2109, %v2295
    %v2322 = vadd.f32 %v2110, %v2298
    %v2323 = vadd.f32 %v2111, %v2303
    %v2324 = vadd.f32 %v2112, %v2306
    %v2325 = vld [vmem:[#allocation2] sm:$0xe]
    %v2326 = vld [vmem:[#allocation2 + $0x8] sm:$0xe]
    %v2327 = vld [vmem:[#allocation2 + $0x10] sm:$0xe]
    %v2328 = vld [vmem:[#allocation2 + $0x18] sm:$0xe]
    %v2329 = vld [vmem:[#allocation2 + $0x20] sm:$0xe]
    %v2330 = vld [vmem:[#allocation2 + $0x28] sm:$0xe]
    %v2331 = vld [vmem:[#allocation2 + $0x30] sm:$0xe]
    %v2332 = vld [vmem:[#allocation2 + $0x38] sm:$0xe]
    %v2333 = vld [vmem:[#allocation2 + $0x40] sm:$0xe]
    %v2334 = vld [vmem:[#allocation2 + $0x48] sm:$0xe]
    %v2335 = vld [vmem:[#allocation2 + $0x50] sm:$0xe]
    %v2336 = vld [vmem:[#allocation2 + $0x58] sm:$0xe]
    %v2337 = vld [vmem:[#allocation2 + $0x60] sm:$0xe]
    %v2338 = vld [vmem:[#allocation2 + $0x68] sm:$0xe]
    %v2339 = vld [vmem:[#allocation2 + $0x70] sm:$0xe]
    %v2340 = vld [vmem:[#allocation2 + $0x78] sm:$0xe]
    %v2341 = vld [vmem:[#allocation2 + $0x80] sm:$0xe]
    %v2342 = vld [vmem:[#allocation2 + $0x88] sm:$0xe]
    %v2343 = vld [vmem:[#allocation2 + $0x90] sm:$0xe]
    %v2344 = vld [vmem:[#allocation2 + $0x98] sm:$0xe]
    %vm2377 = vcmask 1042432
    %vm2378 = vcmask 1046532
    %vm2379 = vmor %vm2377, %vm2378
    %v2380 = vrot.slane %v2325, 5
    %v2381 = vrot.slane %v2380, 4
    %v2382 = vrot.slane %v1413, 5
    %v2383 = vsel %vm2379, %v2381, %v2382
    %v2384 = vrot.slane %v2326, 5
    %v2385 = vrot.slane %v2384, 4
    %v2386 = vrot.slane %v1415, 5
    %v2387 = vsel %vm2379, %v2385, %v2386
    %v2388 = vrot.slane %v2327, 5
    %v2389 = vrot.slane %v2388, 4
    %v2390 = vrot.slane %v1417, 5
    %v2391 = vsel %vm2379, %v2389, %v2390
    %v2392 = vrot.slane %v2328, 5
    %v2393 = vrot.slane %v2392, 4
    %v2394 = vrot.slane %v1419, 5
    %v2395 = vsel %vm2379, %v2393, %v2394
    %v2396 = vrot.slane %v2329, 5
    %v2397 = vrot.slane %v2396, 4
    %v2398 = vrot.slane %v1421, 5
    %v2399 = vsel %vm2379, %v2397, %v2398
    %v2400 = vrot.slane %v2330, 5
    %v2401 = vrot.slane %v2400, 4
    %v2402 = vrot.slane %v1423, 5
    %v2403 = vsel %vm2379, %v2401, %v2402
    %v2404 = vrot.slane %v2331, 5
    %v2405 = vrot.slane %v2404, 4
    %v2406 = vrot.slane %v1425, 5
    %v2407 = vsel %vm2379, %v2405, %v2406
    %v2408 = vrot.slane %v2332, 5
    %v2409 = vrot.slane %v2408, 4
    %v2410 = vrot.slane %v1427, 5
    %v2411 = vsel %vm2379, %v2409, %v2410
    %v2412 = vrot.slane %v2335, 5
    %v2413 = vrot.slane %v2412, 4
    %v2414 = vrot.slane %v1433, 5
    %v2415 = vsel %vm2379, %v2413, %v2414
    %v2416 = vrot.slane %v2336, 5
    %v2417 = vrot.slane %v2416, 4
    %v2418 = vrot.slane %v1435, 5
    %v2419 = vsel %vm2379, %v2417, %v2418
    %v2420 = vrot.slane %v2337, 5
    %v2421 = vrot.slane %v2420, 4
    %v2422 = vrot.slane %v1437, 5
    %v2423 = vsel %vm2379, %v2421, %v2422
    %v2424 = vrot.slane %v2338, 5
    %v2425 = vrot.slane %v2424, 4
    %v2426 = vrot.slane %v1439, 5
    %v2427 = vsel %vm2379, %v2425, %v2426
    %v2428 = vrot.slane %v2339, 5
    %v2429 = vrot.slane %v2428, 4
    %v2430 = vrot.slane %v1441, 5
    %v2431 = vsel %vm2379, %v2429, %v2430
    %v2432 = vrot.slane %v2340, 5
    %v2433 = vrot.slane %v2432, 4
    %v2434 = vrot.slane %v1443, 5
    %v2435 = vsel %vm2379, %v2433, %v2434
    %v2436 = vrot.slane %v2341, 5
    %v2437 = vrot.slane %v2436, 4
    %v2438 = vrot.slane %v1445, 5
    %v2439 = vsel %vm2379, %v2437, %v2438
    %v2440 = vrot.slane %v2342, 5
    %v2441 = vrot.slane %v2440, 4
    %v2442 = vrot.slane %v1447, 5
    %v2443 = vsel %vm2379, %v2441, %v2442
    %s2444 = scalar_lea.vmem [#allocation8], 128
    %v2445 = vld [vmem:[%s2444] sm:$0xf]
    %v2446 = vld [vmem:[%s2444 + $0x4] sm:$0xf]
    %v2447 = vld [vmem:[%s2444 + $0x8] sm:$0xf]
    %v2448 = vld [vmem:[%s2444 + $0xc] sm:$0xf]
    %v2449 = vld [vmem:[%s2444 + $0x10] sm:$0xf]
    %v2450 = vld [vmem:[%s2444 + $0x14] sm:$0xf]
    %v2451 = vld [vmem:[%s2444 + $0x18] sm:$0xf]
    %v2452 = vld [vmem:[%s2444 + $0x1c] sm:$0xf]
    %v2453 = vld [vmem:[%s2444 + $0x20] sm:$0xf]
    %v2454 = vld [vmem:[%s2444 + $0x24] sm:$0xf]
    %v2455 = vld [vmem:[%s2444 + $0x28] sm:$0xf]
    %v2456 = vld [vmem:[%s2444 + $0x2c] sm:$0xf]
    %v2457 = vld [vmem:[%s2444 + $0x30] sm:$0xf]
    %v2458 = vld [vmem:[%s2444 + $0x34] sm:$0xf]
    %v2459 = vld [vmem:[%s2444 + $0x38] sm:$0xf]
    %v2460 = vld [vmem:[%s2444 + $0x3c] sm:$0xf]
    %v2461 = vunpack.c.l.b16 %v2383
    %v2462 = vunpack.c.l.b16 %v2387
    %v2463 = vunpack.c.l.b16 %v2391
    %v2464 = vunpack.c.l.b16 %v2395
    %v2465 = vunpack.c.l.b16 %v2399
    %v2466 = vunpack.c.l.b16 %v2403
    %v2467 = vunpack.c.l.b16 %v2407
    %v2468 = vunpack.c.l.b16 %v2411
    %v2469 = vunpack.c.l.b16 %v2415
    %v2470 = vunpack.c.l.b16 %v2419
    %v2471 = vunpack.c.l.b16 %v2423
    %v2472 = vunpack.c.l.b16 %v2427
    %v2473 = vunpack.c.l.b16 %v2431
    %v2474 = vunpack.c.l.b16 %v2435
    %v2475 = vunpack.c.l.b16 %v2439
    %v2476 = vunpack.c.l.b16 %v2443
    %v2477 = vpack.c.b16 %v2462, %v2461
    %v2478 = vpack.c.b16 %v2464, %v2463
    %v2479 = vpack.c.b16 %v2466, %v2465
    %v2480 = vpack.c.b16 %v2468, %v2467
    %v2481 = vpack.c.b16 %v2470, %v2469
    %v2482 = vpack.c.b16 %v2472, %v2471
    %v2483 = vpack.c.b16 %v2474, %v2473
    %v2484 = vpack.c.b16 %v2476, %v2475
    %v2509 = vunpack.c.l.b16 %v2445
    %v2510 = vunpack.c.l.b16 %v2446
    %v2511 = vunpack.c.l.b16 %v2447
    %v2512 = vunpack.c.l.b16 %v2448
    %v2513 = vunpack.c.l.b16 %v2449
    %v2514 = vunpack.c.l.b16 %v2450
    %v2515 = vunpack.c.l.b16 %v2451
    %v2516 = vunpack.c.l.b16 %v2452
    %v2517 = vunpack.c.l.b16 %v2453
    %v2518 = vunpack.c.l.b16 %v2454
    %v2519 = vunpack.c.l.b16 %v2455
    %v2520 = vunpack.c.l.b16 %v2456
    %v2521 = vunpack.c.l.b16 %v2457
    %v2522 = vunpack.c.l.b16 %v2458
    %v2523 = vunpack.c.l.b16 %v2459
    %v2524 = vunpack.c.l.b16 %v2460
    %v2525 = vpack.c.b16 %v2510, %v2509
    %v2526 = vpack.c.b16 %v2512, %v2511
    %v2527 = vpack.c.b16 %v2514, %v2513
    %v2528 = vpack.c.b16 %v2516, %v2515
    %v2529 = vpack.c.b16 %v2518, %v2517
    %v2530 = vpack.c.b16 %v2520, %v2519
    %v2531 = vpack.c.b16 %v2522, %v2521
    %v2532 = vpack.c.b16 %v2524, %v2523
    %2541 = vmatprep.subr.bf16.mxu0 0
    %2542 = vmatpush1.bf16.msra.mxu0 %v2532
    %2543 = vmatprep.subr.bf16.mxu0 0
    %2544 = vmatpush1.bf16.msra.mxu0 %v2531
    %2545 = vmatprep.subr.bf16.mxu0 0
    %2546 = vmatpush1.bf16.msra.mxu0 %v2530
    %2547 = vmatprep.subr.bf16.mxu0 0
    %2548 = vmatpush1.bf16.msra.mxu0 %v2529
    %2549 = vmatprep.subr.bf16.mxu0 0
    %2550 = vmatpush1.bf16.msra.mxu0 %v2528
    %2551 = vmatprep.subr.bf16.mxu0 0
    %2552 = vmatpush1.bf16.msra.mxu0 %v2527
    %2553 = vmatprep.subr.bf16.mxu0 0
    %2554 = vmatpush1.bf16.msra.mxu0 %v2526
    %2555 = vmatprep.subr.bf16.mxu0 0
    %2556 = vmatpush1.bf16.msra.mxu0 %v2525
    %2557 = vmatprep.subr.bf16.mxu0 0
    %2558 = vmatpush2.bf16.msra.mxu0 0
    %2559 = vmatprep.subr.bf16.mxu0 0
    %2560 = vmatpush2.bf16.msra.mxu0 0
    %2561 = vmatprep.subr.bf16.mxu0 0
    %2562 = vmatpush2.bf16.msra.mxu0 0
    %2563 = vmatprep.subr.bf16.mxu0 0
    %2564 = vmatpush2.bf16.msra.mxu0 0
    %2565 = vmatprep.subr.bf16.mxu0 0
    %2566 = vmatpush2.bf16.msra.mxu0 0
    %2567 = vmatprep.subr.bf16.mxu0 0
    %2568 = vmatpush2.bf16.msra.mxu0 0
    %2569 = vmatprep.subr.bf16.mxu0 0
    %2570 = vmatpush2.bf16.msra.mxu0 0
    %2571 = vmatprep.subr.bf16.mxu0 0
    %2572 = vmatpush2.bf16.msra.mxu0 0
    %2573 = vmatprep.mubr.bf16.mxu0 0
    %2574 = vmatmul.mubr.bf16.gmra.mxu0 %v2477
    %v2575 = vpop.f32.mrf.mxu0
    %v2576 = vadd.f32 0.0, %v2575
    %v2577 = vpop.f32.mrf.mxu0
    %v2578 = vpop.f32.mrf.mxu0
    %v2579 = vadd.f32 0.0, %v2578
    %v2580 = vpop.f32.mrf.mxu0
    %2581 = vmatprep.mubr.bf16.mxu0 0
    %2582 = vmatmul.mubr.bf16.gmra.mxu0 %v2478
    %v2583 = vpop.f32.mrf.mxu0
    %v2584 = vadd.f32 0.0, %v2583
    %v2585 = vpop.f32.mrf.mxu0
    %v2586 = vpop.f32.mrf.mxu0
    %v2587 = vadd.f32 0.0, %v2586
    %v2588 = vpop.f32.mrf.mxu0
    %2589 = vmatprep.mubr.bf16.mxu0 0
    %2590 = vmatmul.mubr.bf16.gmra.mxu0 %v2479
    %v2591 = vpop.f32.mrf.mxu0
    %v2592 = vadd.f32 0.0, %v2591
    %v2593 = vpop.f32.mrf.mxu0
    %v2594 = vpop.f32.mrf.mxu0
    %v2595 = vadd.f32 0.0, %v2594
    %v2596 = vpop.f32.mrf.mxu0
    %2597 = vmatprep.mubr.bf16.mxu0 0
    %2598 = vmatmul.mubr.bf16.gmra.mxu0 %v2480
    %v2599 = vpop.f32.mrf.mxu0
    %v2600 = vadd.f32 0.0, %v2599
    %v2601 = vpop.f32.mrf.mxu0
    %v2602 = vpop.f32.mrf.mxu0
    %v2603 = vadd.f32 0.0, %v2602
    %v2604 = vpop.f32.mrf.mxu0
    %2605 = vmatprep.mubr.bf16.mxu0 0
    %2606 = vmatmul.mubr.bf16.gmra.mxu0 %v2481
    %v2607 = vpop.f32.mrf.mxu0
    %v2608 = vadd.f32 0.0, %v2607
    %v2609 = vpop.f32.mrf.mxu0
    %v2610 = vpop.f32.mrf.mxu0
    %v2611 = vadd.f32 0.0, %v2610
    %v2612 = vpop.f32.mrf.mxu0
    %2613 = vmatprep.mubr.bf16.mxu0 0
    %2614 = vmatmul.mubr.bf16.gmra.mxu0 %v2482
    %v2615 = vpop.f32.mrf.mxu0
    %v2616 = vadd.f32 0.0, %v2615
    %v2617 = vpop.f32.mrf.mxu0
    %v2618 = vpop.f32.mrf.mxu0
    %v2619 = vadd.f32 0.0, %v2618
    %v2620 = vpop.f32.mrf.mxu0
    %2621 = vmatprep.mubr.bf16.mxu0 0
    %2622 = vmatmul.mubr.bf16.gmra.mxu0 %v2483
    %v2623 = vpop.f32.mrf.mxu0
    %v2624 = vadd.f32 0.0, %v2623
    %v2625 = vpop.f32.mrf.mxu0
    %v2626 = vpop.f32.mrf.mxu0
    %v2627 = vadd.f32 0.0, %v2626
    %v2628 = vpop.f32.mrf.mxu0
    %2629 = vmatprep.mubr.bf16.mxu0 0
    %2630 = vmatmul.mubr.bf16.gmra.mxu0 %v2484
    %v2631 = vpop.f32.mrf.mxu0
    %v2632 = vadd.f32 0.0, %v2631
    %v2633 = vpop.f32.mrf.mxu0
    %v2634 = vpop.f32.mrf.mxu0
    %v2635 = vadd.f32 0.0, %v2634
    %v2636 = vpop.f32.mrf.mxu0
    %2637 = vdwg.mxu0
    %v2638 = vadd.f32 %v2309, %v2576
    %v2639 = vadd.f32 %v2310, %v2579
    %v2640 = vadd.f32 %v2311, %v2584
    %v2641 = vadd.f32 %v2312, %v2587
    %v2642 = vadd.f32 %v2313, %v2592
    %v2643 = vadd.f32 %v2314, %v2595
    %v2644 = vadd.f32 %v2315, %v2600
    %v2645 = vadd.f32 %v2316, %v2603
    %v2646 = vadd.f32 %v2317, %v2608
    %v2647 = vadd.f32 %v2318, %v2611
    %v2648 = vadd.f32 %v2319, %v2616
    %v2649 = vadd.f32 %v2320, %v2619
    %v2650 = vadd.f32 %v2321, %v2624
    %v2651 = vadd.f32 %v2322, %v2627
    %v2652 = vadd.f32 %v2323, %v2632
    %v2653 = vadd.f32 %v2324, %v2635
    %v2658 = vrot.slane %v2333, 5
    %v2659 = vrot.slane %v2658, 4
    %v2660 = vrot.slane %v1429, 5
    %v2661 = vsel %vm2379, %v2659, %v2660
    %v2662 = vrot.slane %v2343, 5
    %v2663 = vrot.slane %v2662, 4
    %v2664 = vrot.slane %v1449, 5
    %v2665 = vsel %vm2379, %v2663, %v2664
    %s2666 = scalar_lea.vmem [#allocation8], 320
    %v2667 = vld [vmem:[%s2666] sm:$0xf]
    %v2668 = vld [vmem:[%s2666 + $0x4] sm:$0xf]
    %v2669 = vld [vmem:[%s2666 + $0x8] sm:$0xf]
    %v2670 = vld [vmem:[%s2666 + $0xc] sm:$0xf]
    %v2671 = vld [vmem:[%s2666 + $0x10] sm:$0xf]
    %v2672 = vld [vmem:[%s2666 + $0x14] sm:$0xf]
    %v2673 = vld [vmem:[%s2666 + $0x18] sm:$0xf]
    %v2674 = vld [vmem:[%s2666 + $0x1c] sm:$0xf]
    %v2675 = vld [vmem:[%s2666 + $0x20] sm:$0xf]
    %v2676 = vld [vmem:[%s2666 + $0x24] sm:$0xf]
    %v2677 = vld [vmem:[%s2666 + $0x28] sm:$0xf]
    %v2678 = vld [vmem:[%s2666 + $0x2c] sm:$0xf]
    %v2679 = vld [vmem:[%s2666 + $0x30] sm:$0xf]
    %v2680 = vld [vmem:[%s2666 + $0x34] sm:$0xf]
    %v2681 = vld [vmem:[%s2666 + $0x38] sm:$0xf]
    %v2682 = vld [vmem:[%s2666 + $0x3c] sm:$0xf]
    %v2683 = vunpack.c.l.b16 %v2661
    %v2684 = vunpack.c.l.b16 %v2665
    %v2685 = vpack.c.b16 %v2463, %v2462
    %v2686 = vpack.c.b16 %v2465, %v2464
    %v2687 = vpack.c.b16 %v2467, %v2466
    %v2688 = vpack.c.b16 %v2683, %v2468
    %v2689 = vpack.c.b16 %v2471, %v2470
    %v2690 = vpack.c.b16 %v2473, %v2472
    %v2691 = vpack.c.b16 %v2475, %v2474
    %v2692 = vpack.c.b16 %v2684, %v2476
    %v2717 = vunpack.c.l.b16 %v2667
    %v2718 = vunpack.c.l.b16 %v2668
    %v2719 = vunpack.c.l.b16 %v2669
    %v2720 = vunpack.c.l.b16 %v2670
    %v2721 = vunpack.c.l.b16 %v2671
    %v2722 = vunpack.c.l.b16 %v2672
    %v2723 = vunpack.c.l.b16 %v2673
    %v2724 = vunpack.c.l.b16 %v2674
    %v2725 = vunpack.c.l.b16 %v2675
    %v2726 = vunpack.c.l.b16 %v2676
    %v2727 = vunpack.c.l.b16 %v2677
    %v2728 = vunpack.c.l.b16 %v2678
    %v2729 = vunpack.c.l.b16 %v2679
    %v2730 = vunpack.c.l.b16 %v2680
    %v2731 = vunpack.c.l.b16 %v2681
    %v2732 = vunpack.c.l.b16 %v2682
    %v2733 = vpack.c.b16 %v2718, %v2717
    %v2734 = vpack.c.b16 %v2720, %v2719
    %v2735 = vpack.c.b16 %v2722, %v2721
    %v2736 = vpack.c.b16 %v2724, %v2723
    %v2737 = vpack.c.b16 %v2726, %v2725
    %v2738 = vpack.c.b16 %v2728, %v2727
    %v2739 = vpack.c.b16 %v2730, %v2729
    %v2740 = vpack.c.b16 %v2732, %v2731
    %2749 = vmatprep.subr.bf16.mxu0 0
    %2750 = vmatpush1.bf16.msra.mxu0 %v2740
    %2751 = vmatprep.subr.bf16.mxu0 0
    %2752 = vmatpush1.bf16.msra.mxu0 %v2739
    %2753 = vmatprep.subr.bf16.mxu0 0
    %2754 = vmatpush1.bf16.msra.mxu0 %v2738
    %2755 = vmatprep.subr.bf16.mxu0 0
    %2756 = vmatpush1.bf16.msra.mxu0 %v2737
    %2757 = vmatprep.subr.bf16.mxu0 0
    %2758 = vmatpush1.bf16.msra.mxu0 %v2736
    %2759 = vmatprep.subr.bf16.mxu0 0
    %2760 = vmatpush1.bf16.msra.mxu0 %v2735
    %2761 = vmatprep.subr.bf16.mxu0 0
    %2762 = vmatpush1.bf16.msra.mxu0 %v2734
    %2763 = vmatprep.subr.bf16.mxu0 0
    %2764 = vmatpush1.bf16.msra.mxu0 %v2733
    %2765 = vmatprep.subr.bf16.mxu0 0
    %2766 = vmatpush2.bf16.msra.mxu0 0
    %2767 = vmatprep.subr.bf16.mxu0 0
    %2768 = vmatpush2.bf16.msra.mxu0 0
    %2769 = vmatprep.subr.bf16.mxu0 0
    %2770 = vmatpush2.bf16.msra.mxu0 0
    %2771 = vmatprep.subr.bf16.mxu0 0
    %2772 = vmatpush2.bf16.msra.mxu0 0
    %2773 = vmatprep.subr.bf16.mxu0 0
    %2774 = vmatpush2.bf16.msra.mxu0 0
    %2775 = vmatprep.subr.bf16.mxu0 0
    %2776 = vmatpush2.bf16.msra.mxu0 0
    %2777 = vmatprep.subr.bf16.mxu0 0
    %2778 = vmatpush2.bf16.msra.mxu0 0
    %2779 = vmatprep.subr.bf16.mxu0 0
    %2780 = vmatpush2.bf16.msra.mxu0 0
    %2781 = vmatprep.mubr.bf16.mxu0 0
    %2782 = vmatmul.mubr.bf16.gmra.mxu0 %v2685
    %v2783 = vpop.f32.mrf.mxu0
    %v2784 = vadd.f32 0.0, %v2783
    %v2785 = vpop.f32.mrf.mxu0
    %v2786 = vpop.f32.mrf.mxu0
    %v2787 = vadd.f32 0.0, %v2786
    %v2788 = vpop.f32.mrf.mxu0
    %2789 = vmatprep.mubr.bf16.mxu0 0
    %2790 = vmatmul.mubr.bf16.gmra.mxu0 %v2686
    %v2791 = vpop.f32.mrf.mxu0
    %v2792 = vadd.f32 0.0, %v2791
    %v2793 = vpop.f32.mrf.mxu0
    %v2794 = vpop.f32.mrf.mxu0
    %v2795 = vadd.f32 0.0, %v2794
    %v2796 = vpop.f32.mrf.mxu0
    %2797 = vmatprep.mubr.bf16.mxu0 0
    %2798 = vmatmul.mubr.bf16.gmra.mxu0 %v2687
    %v2799 = vpop.f32.mrf.mxu0
    %v2800 = vadd.f32 0.0, %v2799
    %v2801 = vpop.f32.mrf.mxu0
    %v2802 = vpop.f32.mrf.mxu0
    %v2803 = vadd.f32 0.0, %v2802
    %v2804 = vpop.f32.mrf.mxu0
    %2805 = vmatprep.mubr.bf16.mxu0 0
    %2806 = vmatmul.mubr.bf16.gmra.mxu0 %v2688
    %v2807 = vpop.f32.mrf.mxu0
    %v2808 = vadd.f32 0.0, %v2807
    %v2809 = vpop.f32.mrf.mxu0
    %v2810 = vpop.f32.mrf.mxu0
    %v2811 = vadd.f32 0.0, %v2810
    %v2812 = vpop.f32.mrf.mxu0
    %2813 = vmatprep.mubr.bf16.mxu0 0
    %2814 = vmatmul.mubr.bf16.gmra.mxu0 %v2689
    %v2815 = vpop.f32.mrf.mxu0
    %v2816 = vadd.f32 0.0, %v2815
    %v2817 = vpop.f32.mrf.mxu0
    %v2818 = vpop.f32.mrf.mxu0
    %v2819 = vadd.f32 0.0, %v2818
    %v2820 = vpop.f32.mrf.mxu0
    %2821 = vmatprep.mubr.bf16.mxu0 0
    %2822 = vmatmul.mubr.bf16.gmra.mxu0 %v2690
    %v2823 = vpop.f32.mrf.mxu0
    %v2824 = vadd.f32 0.0, %v2823
    %v2825 = vpop.f32.mrf.mxu0
    %v2826 = vpop.f32.mrf.mxu0
    %v2827 = vadd.f32 0.0, %v2826
    %v2828 = vpop.f32.mrf.mxu0
    %2829 = vmatprep.mubr.bf16.mxu0 0
    %2830 = vmatmul.mubr.bf16.gmra.mxu0 %v2691
    %v2831 = vpop.f32.mrf.mxu0
    %v2832 = vadd.f32 0.0, %v2831
    %v2833 = vpop.f32.mrf.mxu0
    %v2834 = vpop.f32.mrf.mxu0
    %v2835 = vadd.f32 0.0, %v2834
    %v2836 = vpop.f32.mrf.mxu0
    %2837 = vmatprep.mubr.bf16.mxu0 0
    %2838 = vmatmul.mubr.bf16.gmra.mxu0 %v2692
    %v2839 = vpop.f32.mrf.mxu0
    %v2840 = vadd.f32 0.0, %v2839
    %v2841 = vpop.f32.mrf.mxu0
    %v2842 = vpop.f32.mrf.mxu0
    %v2843 = vadd.f32 0.0, %v2842
    %v2844 = vpop.f32.mrf.mxu0
    %2845 = vdwg.mxu0
    %v2846 = vadd.f32 %v2638, %v2784
    %v2847 = vadd.f32 %v2639, %v2787
    %v2848 = vadd.f32 %v2640, %v2792
    %v2849 = vadd.f32 %v2641, %v2795
    %v2850 = vadd.f32 %v2642, %v2800
    %v2851 = vadd.f32 %v2643, %v2803
    %v2852 = vadd.f32 %v2644, %v2808
    %v2853 = vadd.f32 %v2645, %v2811
    %v2854 = vadd.f32 %v2646, %v2816
    %v2855 = vadd.f32 %v2647, %v2819
    %v2856 = vadd.f32 %v2648, %v2824
    %v2857 = vadd.f32 %v2649, %v2827
    %v2858 = vadd.f32 %v2650, %v2832
    %v2859 = vadd.f32 %v2651, %v2835
    %v2860 = vadd.f32 %v2652, %v2840
    %v2861 = vadd.f32 %v2653, %v2843
    %v2866 = vrot.slane %v2334, 5
    %v2867 = vrot.slane %v2866, 4
    %v2868 = vrot.slane %v1431, 5
    %v2869 = vsel %vm2379, %v2867, %v2868
    %v2870 = vrot.slane %v2344, 5
    %v2871 = vrot.slane %v2870, 4
    %v2872 = vrot.slane %v1451, 5
    %v2873 = vsel %vm2379, %v2871, %v2872
    %s2874 = scalar_lea.vmem [#allocation8], 512
    %v2875 = vld [vmem:[%s2874] sm:$0xf]
    %v2876 = vld [vmem:[%s2874 + $0x4] sm:$0xf]
    %v2877 = vld [vmem:[%s2874 + $0x8] sm:$0xf]
    %v2878 = vld [vmem:[%s2874 + $0xc] sm:$0xf]
    %v2879 = vld [vmem:[%s2874 + $0x10] sm:$0xf]
    %v2880 = vld [vmem:[%s2874 + $0x14] sm:$0xf]
    %v2881 = vld [vmem:[%s2874 + $0x18] sm:$0xf]
    %v2882 = vld [vmem:[%s2874 + $0x1c] sm:$0xf]
    %v2883 = vld [vmem:[%s2874 + $0x20] sm:$0xf]
    %v2884 = vld [vmem:[%s2874 + $0x24] sm:$0xf]
    %v2885 = vld [vmem:[%s2874 + $0x28] sm:$0xf]
    %v2886 = vld [vmem:[%s2874 + $0x2c] sm:$0xf]
    %v2887 = vld [vmem:[%s2874 + $0x30] sm:$0xf]
    %v2888 = vld [vmem:[%s2874 + $0x34] sm:$0xf]
    %v2889 = vld [vmem:[%s2874 + $0x38] sm:$0xf]
    %v2890 = vld [vmem:[%s2874 + $0x3c] sm:$0xf]
    %v2891 = vunpack.c.l.b16 %v2869
    %v2892 = vunpack.c.l.b16 %v2873
    %v2893 = vpack.c.b16 %v2891, %v2683
    %v2894 = vpack.c.b16 %v2892, %v2684
    %v2913 = vunpack.c.l.b16 %v2875
    %v2914 = vunpack.c.l.b16 %v2876
    %v2915 = vunpack.c.l.b16 %v2877
    %v2916 = vunpack.c.l.b16 %v2878
    %v2917 = vunpack.c.l.b16 %v2879
    %v2918 = vunpack.c.l.b16 %v2880
    %v2919 = vunpack.c.l.b16 %v2881
    %v2920 = vunpack.c.l.b16 %v2882
    %v2921 = vunpack.c.l.b16 %v2883
    %v2922 = vunpack.c.l.b16 %v2884
    %v2923 = vunpack.c.l.b16 %v2885
    %v2924 = vunpack.c.l.b16 %v2886
    %v2925 = vunpack.c.l.b16 %v2887
    %v2926 = vunpack.c.l.b16 %v2888
    %v2927 = vunpack.c.l.b16 %v2889
    %v2928 = vunpack.c.l.b16 %v2890
    %v2929 = vpack.c.b16 %v2914, %v2913
    %v2930 = vpack.c.b16 %v2916, %v2915
    %v2931 = vpack.c.b16 %v2918, %v2917
    %v2932 = vpack.c.b16 %v2920, %v2919
    %v2933 = vpack.c.b16 %v2922, %v2921
    %v2934 = vpack.c.b16 %v2924, %v2923
    %v2935 = vpack.c.b16 %v2926, %v2925
    %v2936 = vpack.c.b16 %v2928, %v2927
    %2945 = vmatprep.subr.bf16.mxu0 0
    %2946 = vmatpush1.bf16.msra.mxu0 %v2936
    %2947 = vmatprep.subr.bf16.mxu0 0
    %2948 = vmatpush1.bf16.msra.mxu0 %v2935
    %2949 = vmatprep.subr.bf16.mxu0 0
    %2950 = vmatpush1.bf16.msra.mxu0 %v2934
    %2951 = vmatprep.subr.bf16.mxu0 0
    %2952 = vmatpush1.bf16.msra.mxu0 %v2933
    %2953 = vmatprep.subr.bf16.mxu0 0
    %2954 = vmatpush1.bf16.msra.mxu0 %v2932
    %2955 = vmatprep.subr.bf16.mxu0 0
    %2956 = vmatpush1.bf16.msra.mxu0 %v2931
    %2957 = vmatprep.subr.bf16.mxu0 0
    %2958 = vmatpush1.bf16.msra.mxu0 %v2930
    %2959 = vmatprep.subr.bf16.mxu0 0
    %2960 = vmatpush1.bf16.msra.mxu0 %v2929
    %2961 = vmatprep.subr.bf16.mxu0 0
    %2962 = vmatpush2.bf16.msra.mxu0 0
    %2963 = vmatprep.subr.bf16.mxu0 0
    %2964 = vmatpush2.bf16.msra.mxu0 0
    %2965 = vmatprep.subr.bf16.mxu0 0
    %2966 = vmatpush2.bf16.msra.mxu0 0
    %2967 = vmatprep.subr.bf16.mxu0 0
    %2968 = vmatpush2.bf16.msra.mxu0 0
    %2969 = vmatprep.subr.bf16.mxu0 0
    %2970 = vmatpush2.bf16.msra.mxu0 0
    %2971 = vmatprep.subr.bf16.mxu0 0
    %2972 = vmatpush2.bf16.msra.mxu0 0
    %2973 = vmatprep.subr.bf16.mxu0 0
    %2974 = vmatpush2.bf16.msra.mxu0 0
    %2975 = vmatprep.subr.bf16.mxu0 0
    %2976 = vmatpush2.bf16.msra.mxu0 0
    %2977 = vmatprep.mubr.bf16.mxu0 0
    %2978 = vmatmul.mubr.bf16.gmra.mxu0 %v2478
    %v2979 = vpop.f32.mrf.mxu0
    %v2980 = vadd.f32 0.0, %v2979
    %v2981 = vpop.f32.mrf.mxu0
    %v2982 = vpop.f32.mrf.mxu0
    %v2983 = vadd.f32 0.0, %v2982
    %v2984 = vpop.f32.mrf.mxu0
    %2985 = vmatprep.mubr.bf16.mxu0 0
    %2986 = vmatmul.mubr.bf16.gmra.mxu0 %v2479
    %v2987 = vpop.f32.mrf.mxu0
    %v2988 = vadd.f32 0.0, %v2987
    %v2989 = vpop.f32.mrf.mxu0
    %v2990 = vpop.f32.mrf.mxu0
    %v2991 = vadd.f32 0.0, %v2990
    %v2992 = vpop.f32.mrf.mxu0
    %2993 = vmatprep.mubr.bf16.mxu0 0
    %2994 = vmatmul.mubr.bf16.gmra.mxu0 %v2480
    %v2995 = vpop.f32.mrf.mxu0
    %v2996 = vadd.f32 0.0, %v2995
    %v2997 = vpop.f32.mrf.mxu0
    %v2998 = vpop.f32.mrf.mxu0
    %v2999 = vadd.f32 0.0, %v2998
    %v3000 = vpop.f32.mrf.mxu0
    %3001 = vmatprep.mubr.bf16.mxu0 0
    %3002 = vmatmul.mubr.bf16.gmra.mxu0 %v2893
    %v3003 = vpop.f32.mrf.mxu0
    %v3004 = vadd.f32 0.0, %v3003
    %v3005 = vpop.f32.mrf.mxu0
    %v3006 = vpop.f32.mrf.mxu0
    %v3007 = vadd.f32 0.0, %v3006
    %v3008 = vpop.f32.mrf.mxu0
    %3009 = vmatprep.mubr.bf16.mxu0 0
    %3010 = vmatmul.mubr.bf16.gmra.mxu0 %v2482
    %v3011 = vpop.f32.mrf.mxu0
    %v3012 = vadd.f32 0.0, %v3011
    %v3013 = vpop.f32.mrf.mxu0
    %v3014 = vpop.f32.mrf.mxu0
    %v3015 = vadd.f32 0.0, %v3014
    %v3016 = vpop.f32.mrf.mxu0
    %3017 = vmatprep.mubr.bf16.mxu0 0
    %3018 = vmatmul.mubr.bf16.gmra.mxu0 %v2483
    %v3019 = vpop.f32.mrf.mxu0
    %v3020 = vadd.f32 0.0, %v3019
    %v3021 = vpop.f32.mrf.mxu0
    %v3022 = vpop.f32.mrf.mxu0
    %v3023 = vadd.f32 0.0, %v3022
    %v3024 = vpop.f32.mrf.mxu0
    %3025 = vmatprep.mubr.bf16.mxu0 0
    %3026 = vmatmul.mubr.bf16.gmra.mxu0 %v2484
    %v3027 = vpop.f32.mrf.mxu0
    %v3028 = vadd.f32 0.0, %v3027
    %v3029 = vpop.f32.mrf.mxu0
    %v3030 = vpop.f32.mrf.mxu0
    %v3031 = vadd.f32 0.0, %v3030
    %v3032 = vpop.f32.mrf.mxu0
    %3033 = vmatprep.mubr.bf16.mxu0 0
    %3034 = vmatmul.mubr.bf16.gmra.mxu0 %v2894
    %v3035 = vpop.f32.mrf.mxu0
    %v3036 = vadd.f32 0.0, %v3035
    %v3037 = vpop.f32.mrf.mxu0
    %v3038 = vpop.f32.mrf.mxu0
    %v3039 = vadd.f32 0.0, %v3038
    %v3040 = vpop.f32.mrf.mxu0
    %3041 = vdwg.mxu0
    %v3042 = vadd.f32 %v2846, %v2980
    %v3043 = vadd.f32 %v2847, %v2983
    %v3044 = vadd.f32 %v2848, %v2988
    %v3045 = vadd.f32 %v2849, %v2991
    %v3046 = vadd.f32 %v2850, %v2996
    %v3047 = vadd.f32 %v2851, %v2999
    %v3048 = vadd.f32 %v2852, %v3004
    %v3049 = vadd.f32 %v2853, %v3007
    %v3050 = vadd.f32 %v2854, %v3012
    %v3051 = vadd.f32 %v2855, %v3015
    %v3052 = vadd.f32 %v2856, %v3020
    %v3053 = vadd.f32 %v2857, %v3023
    %v3054 = vadd.f32 %v2858, %v3028
    %v3055 = vadd.f32 %v2859, %v3031
    %v3056 = vadd.f32 %v2860, %v3036
    %v3057 = vadd.f32 %v2861, %v3039
    %v3058 = vld [vmem:[%s4] sm:$0x1]
    %v3060 = vlaneseq
    %v3061 = vshrl.u32 %v3060, 7
    %v3062 = vsub.s32 0, %v3061
    %v3063 = vrot.slane %v3058, %v3062
    %v3065 = vadd.f32 %v3042, %v3063
    %v3066 = vadd.f32 %v3043, %v3063
    %v3067 = vadd.f32 %v3044, %v3063
    %v3068 = vadd.f32 %v3045, %v3063
    %v3069 = vadd.f32 %v3046, %v3063
    %v3070 = vadd.f32 %v3047, %v3063
    %v3071 = vadd.f32 %v3048, %v3063
    %v3072 = vadd.f32 %v3049, %v3063
    %v3073 = vadd.f32 %v3050, %v3063
    %v3074 = vadd.f32 %v3051, %v3063
    %v3075 = vadd.f32 %v3052, %v3063
    %v3076 = vadd.f32 %v3053, %v3063
    %v3077 = vadd.f32 %v3054, %v3063
    %v3078 = vadd.f32 %v3055, %v3063
    %v3079 = vadd.f32 %v3056, %v3063
    %v3080 = vadd.f32 %v3057, %v3063
    %v3081 = vmax.f32 %v3065, 0.0
    %v3082 = vmax.f32 %v3066, 0.0
    %v3083 = vmax.f32 %v3067, 0.0
    %v3084 = vmax.f32 %v3068, 0.0
    %v3085 = vmax.f32 %v3069, 0.0
    %v3086 = vmax.f32 %v3070, 0.0
    %v3087 = vmax.f32 %v3071, 0.0
    %v3088 = vmax.f32 %v3072, 0.0
    %v3089 = vmax.f32 %v3073, 0.0
    %v3090 = vmax.f32 %v3074, 0.0
    %v3091 = vmax.f32 %v3075, 0.0
    %v3092 = vmax.f32 %v3076, 0.0
    %v3093 = vmax.f32 %v3077, 0.0
    %v3094 = vmax.f32 %v3078, 0.0
    %v3095 = vmax.f32 %v3079, 0.0
    %v3096 = vmax.f32 %v3080, 0.0
    %v3097 = vpack.c.bf16 %v3081, %v3081
    %v3098 = vpack.c.bf16 %v3082, %v3082
    %v3099 = vpack.c.bf16 %v3083, %v3083
    %v3100 = vpack.c.bf16 %v3084, %v3084
    %v3101 = vpack.c.bf16 %v3085, %v3085
    %v3102 = vpack.c.bf16 %v3086, %v3086
    %v3103 = vpack.c.bf16 %v3087, %v3087
    %v3104 = vpack.c.bf16 %v3088, %v3088
    %v3105 = vpack.c.bf16 %v3089, %v3089
    %v3106 = vpack.c.bf16 %v3090, %v3090
    %v3107 = vpack.c.bf16 %v3091, %v3091
    %v3108 = vpack.c.bf16 %v3092, %v3092
    %v3109 = vpack.c.bf16 %v3093, %v3093
    %v3110 = vpack.c.bf16 %v3094, %v3094
    %v3111 = vpack.c.bf16 %v3095, %v3095
    %v3112 = vpack.c.bf16 %v3096, %v3096
    %v3129 = vunpack.c.l.b16 %v3097
    %v3130 = vunpack.c.l.b16 %v3098
    %v3131 = vunpack.c.l.b16 %v3099
    %v3132 = vunpack.c.l.b16 %v3100
    %v3133 = vunpack.c.l.b16 %v3101
    %v3134 = vunpack.c.l.b16 %v3102
    %v3135 = vunpack.c.l.b16 %v3103
    %v3136 = vunpack.c.l.b16 %v3104
    %v3137 = vunpack.c.l.b16 %v3105
    %v3138 = vunpack.c.l.b16 %v3106
    %v3139 = vunpack.c.l.b16 %v3107
    %v3140 = vunpack.c.l.b16 %v3108
    %v3141 = vunpack.c.l.b16 %v3109
    %v3142 = vunpack.c.l.b16 %v3110
    %v3143 = vunpack.c.l.b16 %v3111
    %v3144 = vunpack.c.l.b16 %v3112
    %v3145 = vpack.c.b16 %v3129, %v3129
    %v3146 = vpack.c.b16 %v3130, %v3130
    %v3147 = vpack.c.b16 %v3131, %v3131
    %v3148 = vpack.c.b16 %v3132, %v3132
    %v3149 = vpack.c.b16 %v3133, %v3133
    %v3150 = vpack.c.b16 %v3134, %v3134
    %v3151 = vpack.c.b16 %v3135, %v3135
    %v3152 = vpack.c.b16 %v3136, %v3136
    %v3153 = vpack.c.b16 %v3137, %v3137
    %v3154 = vpack.c.b16 %v3138, %v3138
    %v3155 = vpack.c.b16 %v3139, %v3139
    %v3156 = vpack.c.b16 %v3140, %v3140
    %v3157 = vpack.c.b16 %v3141, %v3141
    %v3158 = vpack.c.b16 %v3142, %v3142
    %v3159 = vpack.c.b16 %v3143, %v3143
    %v3160 = vpack.c.b16 %v3144, %v3144
    %v3162 = vshrl.u32 %v3145, 16
    %v3164 = vrot.slane %v3162, 7
    %v3165 = vshll.u32 %v3145, 16
    %v3167 = vor.u32 %v3164, %v3165
    %v3168 = vrot.slane %v3164, 4
    %v3170 = vshrl.u32 %v3146, 16
    %v3172 = vrot.slane %v3170, 7
    %v3173 = vshll.u32 %v3146, 16
    %v3175 = vor.u32 %v3172, %v3173
    %v3176 = vrot.slane %v3172, 4
    %v3178 = vshrl.u32 %v3147, 16
    %v3180 = vrot.slane %v3178, 7
    %v3181 = vshll.u32 %v3147, 16
    %v3183 = vor.u32 %v3180, %v3181
    %v3184 = vrot.slane %v3180, 4
    %v3186 = vshrl.u32 %v3148, 16
    %v3188 = vrot.slane %v3186, 7
    %v3189 = vshll.u32 %v3148, 16
    %v3191 = vor.u32 %v3188, %v3189
    %v3192 = vrot.slane %v3188, 4
    %v3194 = vshrl.u32 %v3149, 16
    %v3196 = vrot.slane %v3194, 7
    %v3197 = vshll.u32 %v3149, 16
    %v3199 = vor.u32 %v3196, %v3197
    %v3200 = vrot.slane %v3196, 4
    %v3202 = vshrl.u32 %v3150, 16
    %v3204 = vrot.slane %v3202, 7
    %v3205 = vshll.u32 %v3150, 16
    %v3207 = vor.u32 %v3204, %v3205
    %v3208 = vrot.slane %v3204, 4
    %v3210 = vshrl.u32 %v3151, 16
    %v3212 = vrot.slane %v3210, 7
    %v3213 = vshll.u32 %v3151, 16
    %v3215 = vor.u32 %v3212, %v3213
    %v3216 = vrot.slane %v3212, 4
    %v3218 = vshrl.u32 %v3152, 16
    %v3220 = vrot.slane %v3218, 7
    %v3221 = vshll.u32 %v3152, 16
    %v3223 = vor.u32 %v3220, %v3221
    %v3224 = vrot.slane %v3220, 4
    %v3226 = vshrl.u32 %v3153, 16
    %v3228 = vrot.slane %v3226, 7
    %v3229 = vshll.u32 %v3153, 16
    %v3231 = vor.u32 %v3228, %v3229
    %v3232 = vrot.slane %v3228, 4
    %v3234 = vshrl.u32 %v3154, 16
    %v3236 = vrot.slane %v3234, 7
    %v3237 = vshll.u32 %v3154, 16
    %v3239 = vor.u32 %v3236, %v3237
    %v3240 = vrot.slane %v3236, 4
    %v3242 = vshrl.u32 %v3155, 16
    %v3244 = vrot.slane %v3242, 7
    %v3245 = vshll.u32 %v3155, 16
    %v3247 = vor.u32 %v3244, %v3245
    %v3248 = vrot.slane %v3244, 4
    %v3250 = vshrl.u32 %v3156, 16
    %v3252 = vrot.slane %v3250, 7
    %v3253 = vshll.u32 %v3156, 16
    %v3255 = vor.u32 %v3252, %v3253
    %v3256 = vrot.slane %v3252, 4
    %v3258 = vshrl.u32 %v3157, 16
    %v3260 = vrot.slane %v3258, 7
    %v3261 = vshll.u32 %v3157, 16
    %v3263 = vor.u32 %v3260, %v3261
    %v3264 = vrot.slane %v3260, 4
    %v3266 = vshrl.u32 %v3158, 16
    %v3268 = vrot.slane %v3266, 7
    %v3269 = vshll.u32 %v3158, 16
    %v3271 = vor.u32 %v3268, %v3269
    %v3272 = vrot.slane %v3268, 4
    %v3274 = vshrl.u32 %v3159, 16
    %v3276 = vrot.slane %v3274, 7
    %v3277 = vshll.u32 %v3159, 16
    %v3279 = vor.u32 %v3276, %v3277
    %v3280 = vrot.slane %v3276, 4
    %v3282 = vshrl.u32 %v3160, 16
    %v3284 = vrot.slane %v3282, 7
    %v3285 = vshll.u32 %v3160, 16
    %v3287 = vor.u32 %v3284, %v3285
    %v3288 = vrot.slane %v3284, 4
    %v3321 = vld [vmem:[%s716] sm:$0xf]
    %v3322 = vsel %vm718, %v3167, %v3321
    %3323 = vst [vmem:[%s716] sm:$0xf] %v3322
    %v3324 = vld [vmem:[%s716 + $0x4] sm:$0x1]
    %v3325 = vsel %vm152, %v3168, %v3324
    %3326 = vst [vmem:[%s716 + $0x4] sm:$0x1] %v3325
    %v3327 = vld [vmem:[%s716 + $0x8] sm:$0xf]
    %v3328 = vsel %vm718, %v3175, %v3327
    %3329 = vst [vmem:[%s716 + $0x8] sm:$0xf] %v3328
    %v3330 = vld [vmem:[%s716 + $0xc] sm:$0x1]
    %v3331 = vsel %vm152, %v3176, %v3330
    %3332 = vst [vmem:[%s716 + $0xc] sm:$0x1] %v3331
    %v3333 = vld [vmem:[%s716 + $0x10] sm:$0xf]
    %v3334 = vsel %vm718, %v3183, %v3333
    %3335 = vst [vmem:[%s716 + $0x10] sm:$0xf] %v3334
    %v3336 = vld [vmem:[%s716 + $0x14] sm:$0x1]
    %v3337 = vsel %vm152, %v3184, %v3336
    %3338 = vst [vmem:[%s716 + $0x14] sm:$0x1] %v3337
    %v3339 = vld [vmem:[%s716 + $0x18] sm:$0xf]
    %v3340 = vsel %vm718, %v3191, %v3339
    %3341 = vst [vmem:[%s716 + $0x18] sm:$0xf] %v3340
    %v3342 = vld [vmem:[%s716 + $0x1c] sm:$0x1]
    %v3343 = vsel %vm152, %v3192, %v3342
    %3344 = vst [vmem:[%s716 + $0x1c] sm:$0x1] %v3343
    %v3345 = vld [vmem:[%s716 + $0x20] sm:$0xf]
    %v3346 = vsel %vm718, %v3199, %v3345
    %3347 = vst [vmem:[%s716 + $0x20] sm:$0xf] %v3346
    %v3348 = vld [vmem:[%s716 + $0x24] sm:$0x1]
    %v3349 = vsel %vm152, %v3200, %v3348
    %3350 = vst [vmem:[%s716 + $0x24] sm:$0x1] %v3349
    %v3351 = vld [vmem:[%s716 + $0x28] sm:$0xf]
    %v3352 = vsel %vm718, %v3207, %v3351
    %3353 = vst [vmem:[%s716 + $0x28] sm:$0xf] %v3352
    %v3354 = vld [vmem:[%s716 + $0x2c] sm:$0x1]
    %v3355 = vsel %vm152, %v3208, %v3354
    %3356 = vst [vmem:[%s716 + $0x2c] sm:$0x1] %v3355
    %v3357 = vld [vmem:[%s716 + $0x30] sm:$0xf]
    %v3358 = vsel %vm718, %v3215, %v3357
    %3359 = vst [vmem:[%s716 + $0x30] sm:$0xf] %v3358
    %v3360 = vld [vmem:[%s716 + $0x34] sm:$0x1]
    %v3361 = vsel %vm152, %v3216, %v3360
    %3362 = vst [vmem:[%s716 + $0x34] sm:$0x1] %v3361
    %v3363 = vld [vmem:[%s716 + $0x38] sm:$0xf]
    %v3364 = vsel %vm718, %v3223, %v3363
    %3365 = vst [vmem:[%s716 + $0x38] sm:$0xf] %v3364
    %v3366 = vld [vmem:[%s716 + $0x3c] sm:$0x1]
    %v3367 = vsel %vm152, %v3224, %v3366
    %3368 = vst [vmem:[%s716 + $0x3c] sm:$0x1] %v3367
    %v3369 = vld [vmem:[%s716 + $0x50] sm:$0xf]
    %v3370 = vsel %vm718, %v3231, %v3369
    %3371 = vst [vmem:[%s716 + $0x50] sm:$0xf] %v3370
    %v3372 = vld [vmem:[%s716 + $0x54] sm:$0x1]
    %v3373 = vsel %vm152, %v3232, %v3372
    %3374 = vst [vmem:[%s716 + $0x54] sm:$0x1] %v3373
    %v3375 = vld [vmem:[%s716 + $0x58] sm:$0xf]
    %v3376 = vsel %vm718, %v3239, %v3375
    %3377 = vst [vmem:[%s716 + $0x58] sm:$0xf] %v3376
    %v3378 = vld [vmem:[%s716 + $0x5c] sm:$0x1]
    %v3379 = vsel %vm152, %v3240, %v3378
    %3380 = vst [vmem:[%s716 + $0x5c] sm:$0x1] %v3379
    %v3381 = vld [vmem:[%s716 + $0x60] sm:$0xf]
    %v3382 = vsel %vm718, %v3247, %v3381
    %3383 = vst [vmem:[%s716 + $0x60] sm:$0xf] %v3382
    %v3384 = vld [vmem:[%s716 + $0x64] sm:$0x1]
    %v3385 = vsel %vm152, %v3248, %v3384
    %3386 = vst [vmem:[%s716 + $0x64] sm:$0x1] %v3385
    %v3387 = vld [vmem:[%s716 + $0x68] sm:$0xf]
    %v3388 = vsel %vm718, %v3255, %v3387
    %3389 = vst [vmem:[%s716 + $0x68] sm:$0xf] %v3388
    %v3390 = vld [vmem:[%s716 + $0x6c] sm:$0x1]
    %v3391 = vsel %vm152, %v3256, %v3390
    %3392 = vst [vmem:[%s716 + $0x6c] sm:$0x1] %v3391
    %v3393 = vld [vmem:[%s716 + $0x70] sm:$0xf]
    %v3394 = vsel %vm718, %v3263, %v3393
    %3395 = vst [vmem:[%s716 + $0x70] sm:$0xf] %v3394
    %v3396 = vld [vmem:[%s716 + $0x74] sm:$0x1]
    %v3397 = vsel %vm152, %v3264, %v3396
    %3398 = vst [vmem:[%s716 + $0x74] sm:$0x1] %v3397
    %v3399 = vld [vmem:[%s716 + $0x78] sm:$0xf]
    %v3400 = vsel %vm718, %v3271, %v3399
    %3401 = vst [vmem:[%s716 + $0x78] sm:$0xf] %v3400
    %v3402 = vld [vmem:[%s716 + $0x7c] sm:$0x1]
    %v3403 = vsel %vm152, %v3272, %v3402
    %3404 = vst [vmem:[%s716 + $0x7c] sm:$0x1] %v3403
    %v3405 = vld [vmem:[%s716 + $0x80] sm:$0xf]
    %v3406 = vsel %vm718, %v3279, %v3405
    %3407 = vst [vmem:[%s716 + $0x80] sm:$0xf] %v3406
    %v3408 = vld [vmem:[%s716 + $0x84] sm:$0x1]
    %v3409 = vsel %vm152, %v3280, %v3408
    %3410 = vst [vmem:[%s716 + $0x84] sm:$0x1] %v3409
    %v3411 = vld [vmem:[%s716 + $0x88] sm:$0xf]
    %v3412 = vsel %vm718, %v3287, %v3411
    %3413 = vst [vmem:[%s716 + $0x88] sm:$0xf] %v3412
    %v3414 = vld [vmem:[%s716 + $0x8c] sm:$0x1]
    %v3415 = vsel %vm152, %v3288, %v3414
    %3416 = vst [vmem:[%s716 + $0x8c] sm:$0x1] %v3415
    %v3417 = vld [vmem:[#allocation2] sm:$0xf]
    %v3418 = vld [vmem:[#allocation2 + $0x8] sm:$0xf]
    %v3419 = vld [vmem:[#allocation2 + $0x10] sm:$0xf]
    %v3420 = vld [vmem:[#allocation2 + $0x18] sm:$0xf]
    %v3421 = vld [vmem:[#allocation2 + $0x20] sm:$0xf]
    %v3422 = vld [vmem:[#allocation2 + $0x28] sm:$0xf]
    %v3423 = vld [vmem:[#allocation2 + $0x30] sm:$0xf]
    %v3424 = vld [vmem:[#allocation2 + $0x38] sm:$0xf]
    %v3425 = vld [vmem:[#allocation2 + $0x40] sm:$0xf]
    %v3426 = vld [vmem:[#allocation2 + $0x48] sm:$0xf]
    %v3427 = vld [vmem:[#allocation2 + $0x50] sm:$0xf]
    %v3428 = vld [vmem:[#allocation2 + $0x58] sm:$0xf]
    %v3429 = vld [vmem:[#allocation2 + $0x60] sm:$0xf]
    %v3430 = vld [vmem:[#allocation2 + $0x68] sm:$0xf]
    %v3431 = vld [vmem:[#allocation2 + $0x70] sm:$0xf]
    %v3432 = vld [vmem:[#allocation2 + $0x78] sm:$0xf]
    %v3433 = vld [vmem:[#allocation2 + $0x80] sm:$0xf]
    %v3434 = vld [vmem:[#allocation2 + $0x88] sm:$0xf]
    %v3435 = vld [vmem:[#allocation2 + $0x90] sm:$0xf]
    %v3436 = vld [vmem:[#allocation2 + $0x98] sm:$0xf]
    %v3437 = vld [vmem:[#allocation9] sm:$0xf]
    %v3438 = vld [vmem:[#allocation9 + $0x4] sm:$0xf]
    %v3439 = vld [vmem:[#allocation9 + $0x8] sm:$0xf]
    %v3440 = vld [vmem:[#allocation9 + $0xc] sm:$0xf]
    %v3441 = vld [vmem:[#allocation9 + $0x10] sm:$0xf]
    %v3442 = vld [vmem:[#allocation9 + $0x14] sm:$0xf]
    %v3443 = vld [vmem:[#allocation9 + $0x18] sm:$0xf]
    %v3444 = vld [vmem:[#allocation9 + $0x1c] sm:$0xf]
    %v3445 = vld [vmem:[#allocation9 + $0x20] sm:$0xf]
    %v3446 = vld [vmem:[#allocation9 + $0x24] sm:$0xf]
    %v3447 = vld [vmem:[#allocation9 + $0x28] sm:$0xf]
    %v3448 = vld [vmem:[#allocation9 + $0x2c] sm:$0xf]
    %v3449 = vld [vmem:[#allocation9 + $0x30] sm:$0xf]
    %v3450 = vld [vmem:[#allocation9 + $0x34] sm:$0xf]
    %v3451 = vld [vmem:[#allocation9 + $0x38] sm:$0xf]
    %v3452 = vld [vmem:[#allocation9 + $0x3c] sm:$0xf]
    %s3453 = scalar_lea.vmem [#allocation9], 192
    %v3454 = vld [vmem:[%s3453] sm:$0xf]
    %v3455 = vld [vmem:[%s3453 + $0x4] sm:$0xf]
    %v3456 = vld [vmem:[%s3453 + $0x8] sm:$0xf]
    %v3457 = vld [vmem:[%s3453 + $0xc] sm:$0xf]
    %v3458 = vld [vmem:[%s3453 + $0x10] sm:$0xf]
    %v3459 = vld [vmem:[%s3453 + $0x14] sm:$0xf]
    %v3460 = vld [vmem:[%s3453 + $0x18] sm:$0xf]
    %v3461 = vld [vmem:[%s3453 + $0x1c] sm:$0xf]
    %v3462 = vld [vmem:[%s3453 + $0x20] sm:$0xf]
    %v3463 = vld [vmem:[%s3453 + $0x24] sm:$0xf]
    %v3464 = vld [vmem:[%s3453 + $0x28] sm:$0xf]
    %v3465 = vld [vmem:[%s3453 + $0x2c] sm:$0xf]
    %v3466 = vld [vmem:[%s3453 + $0x30] sm:$0xf]
    %v3467 = vld [vmem:[%s3453 + $0x34] sm:$0xf]
    %v3468 = vld [vmem:[%s3453 + $0x38] sm:$0xf]
    %v3469 = vld [vmem:[%s3453 + $0x3c] sm:$0xf]
    %v3486 = vunpack.c.l.b16 %v3418
    %v3487 = vunpack.c.l.b16 %v3419
    %v3488 = vunpack.c.l.b16 %v3420
    %v3489 = vunpack.c.l.b16 %v3421
    %v3490 = vunpack.c.l.b16 %v3422
    %v3491 = vunpack.c.l.b16 %v3423
    %v3492 = vunpack.c.l.b16 %v3424
    %v3493 = vunpack.c.l.b16 %v3425
    %v3494 = vunpack.c.l.b16 %v3428
    %v3495 = vunpack.c.l.b16 %v3429
    %v3496 = vunpack.c.l.b16 %v3430
    %v3497 = vunpack.c.l.b16 %v3431
    %v3498 = vunpack.c.l.b16 %v3432
    %v3499 = vunpack.c.l.b16 %v3433
    %v3500 = vunpack.c.l.b16 %v3434
    %v3501 = vunpack.c.l.b16 %v3435
    %v3502 = vpack.c.b16 %v3487, %v3486
    %v3503 = vpack.c.b16 %v3489, %v3488
    %v3504 = vpack.c.b16 %v3491, %v3490
    %v3505 = vpack.c.b16 %v3493, %v3492
    %v3506 = vpack.c.b16 %v3495, %v3494
    %v3507 = vpack.c.b16 %v3497, %v3496
    %v3508 = vpack.c.b16 %v3499, %v3498
    %v3509 = vpack.c.b16 %v3501, %v3500
    %v3534 = vunpack.c.l.b16 %v3454
    %v3535 = vunpack.c.l.b16 %v3455
    %v3536 = vunpack.c.l.b16 %v3456
    %v3537 = vunpack.c.l.b16 %v3457
    %v3538 = vunpack.c.l.b16 %v3458
    %v3539 = vunpack.c.l.b16 %v3459
    %v3540 = vunpack.c.l.b16 %v3460
    %v3541 = vunpack.c.l.b16 %v3461
    %v3542 = vunpack.c.l.b16 %v3462
    %v3543 = vunpack.c.l.b16 %v3463
    %v3544 = vunpack.c.l.b16 %v3464
    %v3545 = vunpack.c.l.b16 %v3465
    %v3546 = vunpack.c.l.b16 %v3466
    %v3547 = vunpack.c.l.b16 %v3467
    %v3548 = vunpack.c.l.b16 %v3468
    %v3549 = vunpack.c.l.b16 %v3469
    %v3550 = vpack.c.b16 %v3535, %v3534
    %v3551 = vpack.c.b16 %v3537, %v3536
    %v3552 = vpack.c.b16 %v3539, %v3538
    %v3553 = vpack.c.b16 %v3541, %v3540
    %v3554 = vpack.c.b16 %v3543, %v3542
    %v3555 = vpack.c.b16 %v3545, %v3544
    %v3556 = vpack.c.b16 %v3547, %v3546
    %v3557 = vpack.c.b16 %v3549, %v3548
    %3566 = vmatprep.subr.bf16.mxu0 0
    %3567 = vmatpush1.bf16.msra.mxu0 %v3557
    %3568 = vmatprep.subr.bf16.mxu0 0
    %3569 = vmatpush1.bf16.msra.mxu0 %v3556
    %3570 = vmatprep.subr.bf16.mxu0 0
    %3571 = vmatpush1.bf16.msra.mxu0 %v3555
    %3572 = vmatprep.subr.bf16.mxu0 0
    %3573 = vmatpush1.bf16.msra.mxu0 %v3554
    %3574 = vmatprep.subr.bf16.mxu0 0
    %3575 = vmatpush1.bf16.msra.mxu0 %v3553
    %3576 = vmatprep.subr.bf16.mxu0 0
    %3577 = vmatpush1.bf16.msra.mxu0 %v3552
    %3578 = vmatprep.subr.bf16.mxu0 0
    %3579 = vmatpush1.bf16.msra.mxu0 %v3551
    %3580 = vmatprep.subr.bf16.mxu0 0
    %3581 = vmatpush1.bf16.msra.mxu0 %v3550
    %3582 = vmatprep.subr.bf16.mxu0 0
    %3583 = vmatpush2.bf16.msra.mxu0 0
    %3584 = vmatprep.subr.bf16.mxu0 0
    %3585 = vmatpush2.bf16.msra.mxu0 0
    %3586 = vmatprep.subr.bf16.mxu0 0
    %3587 = vmatpush2.bf16.msra.mxu0 0
    %3588 = vmatprep.subr.bf16.mxu0 0
    %3589 = vmatpush2.bf16.msra.mxu0 0
    %3590 = vmatprep.subr.bf16.mxu0 0
    %3591 = vmatpush2.bf16.msra.mxu0 0
    %3592 = vmatprep.subr.bf16.mxu0 0
    %3593 = vmatpush2.bf16.msra.mxu0 0
    %3594 = vmatprep.subr.bf16.mxu0 0
    %3595 = vmatpush2.bf16.msra.mxu0 0
    %3596 = vmatprep.subr.bf16.mxu0 0
    %3597 = vmatpush2.bf16.msra.mxu0 0
    %3598 = vmatprep.mubr.bf16.mxu0 0
    %3599 = vmatmul.mubr.bf16.gmra.mxu0 %v3502
    %v3600 = vpop.f32.mrf.mxu0
    %v3601 = vadd.f32 0.0, %v3600
    %v3602 = vpop.f32.mrf.mxu0
    %v3603 = vpop.f32.mrf.mxu0
    %v3604 = vadd.f32 0.0, %v3603
    %v3605 = vpop.f32.mrf.mxu0
    %3606 = vmatprep.mubr.bf16.mxu0 0
    %3607 = vmatmul.mubr.bf16.gmra.mxu0 %v3503
    %v3608 = vpop.f32.mrf.mxu0
    %v3609 = vadd.f32 0.0, %v3608
    %v3610 = vpop.f32.mrf.mxu0
    %v3611 = vpop.f32.mrf.mxu0
    %v3612 = vadd.f32 0.0, %v3611
    %v3613 = vpop.f32.mrf.mxu0
    %3614 = vmatprep.mubr.bf16.mxu0 0
    %3615 = vmatmul.mubr.bf16.gmra.mxu0 %v3504
    %v3616 = vpop.f32.mrf.mxu0
    %v3617 = vadd.f32 0.0, %v3616
    %v3618 = vpop.f32.mrf.mxu0
    %v3619 = vpop.f32.mrf.mxu0
    %v3620 = vadd.f32 0.0, %v3619
    %v3621 = vpop.f32.mrf.mxu0
    %3622 = vmatprep.mubr.bf16.mxu0 0
    %3623 = vmatmul.mubr.bf16.gmra.mxu0 %v3505
    %v3624 = vpop.f32.mrf.mxu0
    %v3625 = vadd.f32 0.0, %v3624
    %v3626 = vpop.f32.mrf.mxu0
    %v3627 = vpop.f32.mrf.mxu0
    %v3628 = vadd.f32 0.0, %v3627
    %v3629 = vpop.f32.mrf.mxu0
    %3630 = vmatprep.mubr.bf16.mxu0 0
    %3631 = vmatmul.mubr.bf16.gmra.mxu0 %v3506
    %v3632 = vpop.f32.mrf.mxu0
    %v3633 = vadd.f32 0.0, %v3632
    %v3634 = vpop.f32.mrf.mxu0
    %v3635 = vpop.f32.mrf.mxu0
    %v3636 = vadd.f32 0.0, %v3635
    %v3637 = vpop.f32.mrf.mxu0
    %3638 = vmatprep.mubr.bf16.mxu0 0
    %3639 = vmatmul.mubr.bf16.gmra.mxu0 %v3507
    %v3640 = vpop.f32.mrf.mxu0
    %v3641 = vadd.f32 0.0, %v3640
    %v3642 = vpop.f32.mrf.mxu0
    %v3643 = vpop.f32.mrf.mxu0
    %v3644 = vadd.f32 0.0, %v3643
    %v3645 = vpop.f32.mrf.mxu0
    %3646 = vmatprep.mubr.bf16.mxu0 0
    %3647 = vmatmul.mubr.bf16.gmra.mxu0 %v3508
    %v3648 = vpop.f32.mrf.mxu0
    %v3649 = vadd.f32 0.0, %v3648
    %v3650 = vpop.f32.mrf.mxu0
    %v3651 = vpop.f32.mrf.mxu0
    %v3652 = vadd.f32 0.0, %v3651
    %v3653 = vpop.f32.mrf.mxu0
    %3654 = vmatprep.mubr.bf16.mxu0 0
    %3655 = vmatmul.mubr.bf16.gmra.mxu0 %v3509
    %v3656 = vpop.f32.mrf.mxu0
    %v3657 = vadd.f32 0.0, %v3656
    %v3658 = vpop.f32.mrf.mxu0
    %v3659 = vpop.f32.mrf.mxu0
    %v3660 = vadd.f32 0.0, %v3659
    %v3661 = vpop.f32.mrf.mxu0
    %3662 = vdwg.mxu0
    %v3665 = vunpack.c.l.b16 %v3417
    %v3666 = vunpack.c.l.b16 %v3427
    %v3667 = vpack.c.b16 %v3486, %v3665
    %v3668 = vpack.c.b16 %v3488, %v3487
    %v3669 = vpack.c.b16 %v3490, %v3489
    %v3670 = vpack.c.b16 %v3492, %v3491
    %v3671 = vpack.c.b16 %v3494, %v3666
    %v3672 = vpack.c.b16 %v3496, %v3495
    %v3673 = vpack.c.b16 %v3498, %v3497
    %v3674 = vpack.c.b16 %v3500, %v3499
    %v3699 = vunpack.c.l.b16 %v3437
    %v3700 = vunpack.c.l.b16 %v3438
    %v3701 = vunpack.c.l.b16 %v3439
    %v3702 = vunpack.c.l.b16 %v3440
    %v3703 = vunpack.c.l.b16 %v3441
    %v3704 = vunpack.c.l.b16 %v3442
    %v3705 = vunpack.c.l.b16 %v3443
    %v3706 = vunpack.c.l.b16 %v3444
    %v3707 = vunpack.c.l.b16 %v3445
    %v3708 = vunpack.c.l.b16 %v3446
    %v3709 = vunpack.c.l.b16 %v3447
    %v3710 = vunpack.c.l.b16 %v3448
    %v3711 = vunpack.c.l.b16 %v3449
    %v3712 = vunpack.c.l.b16 %v3450
    %v3713 = vunpack.c.l.b16 %v3451
    %v3714 = vunpack.c.l.b16 %v3452
    %v3715 = vpack.c.b16 %v3700, %v3699
    %v3716 = vpack.c.b16 %v3702, %v3701
    %v3717 = vpack.c.b16 %v3704, %v3703
    %v3718 = vpack.c.b16 %v3706, %v3705
    %v3719 = vpack.c.b16 %v3708, %v3707
    %v3720 = vpack.c.b16 %v3710, %v3709
    %v3721 = vpack.c.b16 %v3712, %v3711
    %v3722 = vpack.c.b16 %v3714, %v3713
    %3731 = vmatprep.subr.bf16.mxu0 0
    %3732 = vmatpush1.bf16.msra.mxu0 %v3722
    %3733 = vmatprep.subr.bf16.mxu0 0
    %3734 = vmatpush1.bf16.msra.mxu0 %v3721
    %3735 = vmatprep.subr.bf16.mxu0 0
    %3736 = vmatpush1.bf16.msra.mxu0 %v3720
    %3737 = vmatprep.subr.bf16.mxu0 0
    %3738 = vmatpush1.bf16.msra.mxu0 %v3719
    %3739 = vmatprep.subr.bf16.mxu0 0
    %3740 = vmatpush1.bf16.msra.mxu0 %v3718
    %3741 = vmatprep.subr.bf16.mxu0 0
    %3742 = vmatpush1.bf16.msra.mxu0 %v3717
    %3743 = vmatprep.subr.bf16.mxu0 0
    %3744 = vmatpush1.bf16.msra.mxu0 %v3716
    %3745 = vmatprep.subr.bf16.mxu0 0
    %3746 = vmatpush1.bf16.msra.mxu0 %v3715
    %3747 = vmatprep.subr.bf16.mxu0 0
    %3748 = vmatpush2.bf16.msra.mxu0 0
    %3749 = vmatprep.subr.bf16.mxu0 0
    %3750 = vmatpush2.bf16.msra.mxu0 0
    %3751 = vmatprep.subr.bf16.mxu0 0
    %3752 = vmatpush2.bf16.msra.mxu0 0
    %3753 = vmatprep.subr.bf16.mxu0 0
    %3754 = vmatpush2.bf16.msra.mxu0 0
    %3755 = vmatprep.subr.bf16.mxu0 0
    %3756 = vmatpush2.bf16.msra.mxu0 0
    %3757 = vmatprep.subr.bf16.mxu0 0
    %3758 = vmatpush2.bf16.msra.mxu0 0
    %3759 = vmatprep.subr.bf16.mxu0 0
    %3760 = vmatpush2.bf16.msra.mxu0 0
    %3761 = vmatprep.subr.bf16.mxu0 0
    %3762 = vmatpush2.bf16.msra.mxu0 0
    %3763 = vmatprep.mubr.bf16.mxu0 0
    %3764 = vmatmul.mubr.bf16.gmra.mxu0 %v3667
    %v3765 = vpop.f32.mrf.mxu0
    %v3766 = vadd.f32 %v3601, %v3765
    %v3767 = vpop.f32.mrf.mxu0
    %v3768 = vpop.f32.mrf.mxu0
    %v3769 = vadd.f32 %v3604, %v3768
    %v3770 = vpop.f32.mrf.mxu0
    %3771 = vmatprep.mubr.bf16.mxu0 0
    %3772 = vmatmul.mubr.bf16.gmra.mxu0 %v3668
    %v3773 = vpop.f32.mrf.mxu0
    %v3774 = vadd.f32 %v3609, %v3773
    %v3775 = vpop.f32.mrf.mxu0
    %v3776 = vpop.f32.mrf.mxu0
    %v3777 = vadd.f32 %v3612, %v3776
    %v3778 = vpop.f32.mrf.mxu0
    %3779 = vmatprep.mubr.bf16.mxu0 0
    %3780 = vmatmul.mubr.bf16.gmra.mxu0 %v3669
    %v3781 = vpop.f32.mrf.mxu0
    %v3782 = vadd.f32 %v3617, %v3781
    %v3783 = vpop.f32.mrf.mxu0
    %v3784 = vpop.f32.mrf.mxu0
    %v3785 = vadd.f32 %v3620, %v3784
    %v3786 = vpop.f32.mrf.mxu0
    %3787 = vmatprep.mubr.bf16.mxu0 0
    %3788 = vmatmul.mubr.bf16.gmra.mxu0 %v3670
    %v3789 = vpop.f32.mrf.mxu0
    %v3790 = vadd.f32 %v3625, %v3789
    %v3791 = vpop.f32.mrf.mxu0
    %v3792 = vpop.f32.mrf.mxu0
    %v3793 = vadd.f32 %v3628, %v3792
    %v3794 = vpop.f32.mrf.mxu0
    %3795 = vmatprep.mubr.bf16.mxu0 0
    %3796 = vmatmul.mubr.bf16.gmra.mxu0 %v3671
    %v3797 = vpop.f32.mrf.mxu0
    %v3798 = vadd.f32 %v3633, %v3797
    %v3799 = vpop.f32.mrf.mxu0
    %v3800 = vpop.f32.mrf.mxu0
    %v3801 = vadd.f32 %v3636, %v3800
    %v3802 = vpop.f32.mrf.mxu0
    %3803 = vmatprep.mubr.bf16.mxu0 0
    %3804 = vmatmul.mubr.bf16.gmra.mxu0 %v3672
    %v3805 = vpop.f32.mrf.mxu0
    %v3806 = vadd.f32 %v3641, %v3805
    %v3807 = vpop.f32.mrf.mxu0
    %v3808 = vpop.f32.mrf.mxu0
    %v3809 = vadd.f32 %v3644, %v3808
    %v3810 = vpop.f32.mrf.mxu0
    %3811 = vmatprep.mubr.bf16.mxu0 0
    %3812 = vmatmul.mubr.bf16.gmra.mxu0 %v3673
    %v3813 = vpop.f32.mrf.mxu0
    %v3814 = vadd.f32 %v3649, %v3813
    %v3815 = vpop.f32.mrf.mxu0
    %v3816 = vpop.f32.mrf.mxu0
    %v3817 = vadd.f32 %v3652, %v3816
    %v3818 = vpop.f32.mrf.mxu0
    %3819 = vmatprep.mubr.bf16.mxu0 0
    %3820 = vmatmul.mubr.bf16.gmra.mxu0 %v3674
    %v3821 = vpop.f32.mrf.mxu0
    %v3822 = vadd.f32 %v3657, %v3821
    %v3823 = vpop.f32.mrf.mxu0
    %v3824 = vpop.f32.mrf.mxu0
    %v3825 = vadd.f32 %v3660, %v3824
    %v3826 = vpop.f32.mrf.mxu0
    %3827 = vdwg.mxu0
    %s3828 = scalar_lea.vmem [#allocation9], 384
    %v3829 = vld [vmem:[%s3828] sm:$0xf]
    %v3830 = vld [vmem:[%s3828 + $0x4] sm:$0xf]
    %v3831 = vld [vmem:[%s3828 + $0x8] sm:$0xf]
    %v3832 = vld [vmem:[%s3828 + $0xc] sm:$0xf]
    %v3833 = vld [vmem:[%s3828 + $0x10] sm:$0xf]
    %v3834 = vld [vmem:[%s3828 + $0x14] sm:$0xf]
    %v3835 = vld [vmem:[%s3828 + $0x18] sm:$0xf]
    %v3836 = vld [vmem:[%s3828 + $0x1c] sm:$0xf]
    %v3837 = vld [vmem:[%s3828 + $0x20] sm:$0xf]
    %v3838 = vld [vmem:[%s3828 + $0x24] sm:$0xf]
    %v3839 = vld [vmem:[%s3828 + $0x28] sm:$0xf]
    %v3840 = vld [vmem:[%s3828 + $0x2c] sm:$0xf]
    %v3841 = vld [vmem:[%s3828 + $0x30] sm:$0xf]
    %v3842 = vld [vmem:[%s3828 + $0x34] sm:$0xf]
    %v3843 = vld [vmem:[%s3828 + $0x38] sm:$0xf]
    %v3844 = vld [vmem:[%s3828 + $0x3c] sm:$0xf]
    %v3847 = vunpack.c.l.b16 %v3426
    %v3848 = vunpack.c.l.b16 %v3436
    %v3849 = vpack.c.b16 %v3847, %v3493
    %v3850 = vpack.c.b16 %v3848, %v3501
    %v3869 = vunpack.c.l.b16 %v3829
    %v3870 = vunpack.c.l.b16 %v3830
    %v3871 = vunpack.c.l.b16 %v3831
    %v3872 = vunpack.c.l.b16 %v3832
    %v3873 = vunpack.c.l.b16 %v3833
    %v3874 = vunpack.c.l.b16 %v3834
    %v3875 = vunpack.c.l.b16 %v3835
    %v3876 = vunpack.c.l.b16 %v3836
    %v3877 = vunpack.c.l.b16 %v3837
    %v3878 = vunpack.c.l.b16 %v3838
    %v3879 = vunpack.c.l.b16 %v3839
    %v3880 = vunpack.c.l.b16 %v3840
    %v3881 = vunpack.c.l.b16 %v3841
    %v3882 = vunpack.c.l.b16 %v3842
    %v3883 = vunpack.c.l.b16 %v3843
    %v3884 = vunpack.c.l.b16 %v3844
    %v3885 = vpack.c.b16 %v3870, %v3869
    %v3886 = vpack.c.b16 %v3872, %v3871
    %v3887 = vpack.c.b16 %v3874, %v3873
    %v3888 = vpack.c.b16 %v3876, %v3875
    %v3889 = vpack.c.b16 %v3878, %v3877
    %v3890 = vpack.c.b16 %v3880, %v3879
    %v3891 = vpack.c.b16 %v3882, %v3881
    %v3892 = vpack.c.b16 %v3884, %v3883
    %3901 = vmatprep.subr.bf16.mxu0 0
    %3902 = vmatpush1.bf16.msra.mxu0 %v3892
    %3903 = vmatprep.subr.bf16.mxu0 0
    %3904 = vmatpush1.bf16.msra.mxu0 %v3891
    %3905 = vmatprep.subr.bf16.mxu0 0
    %3906 = vmatpush1.bf16.msra.mxu0 %v3890
    %3907 = vmatprep.subr.bf16.mxu0 0
    %3908 = vmatpush1.bf16.msra.mxu0 %v3889
    %3909 = vmatprep.subr.bf16.mxu0 0
    %3910 = vmatpush1.bf16.msra.mxu0 %v3888
    %3911 = vmatprep.subr.bf16.mxu0 0
    %3912 = vmatpush1.bf16.msra.mxu0 %v3887
    %3913 = vmatprep.subr.bf16.mxu0 0
    %3914 = vmatpush1.bf16.msra.mxu0 %v3886
    %3915 = vmatprep.subr.bf16.mxu0 0
    %3916 = vmatpush1.bf16.msra.mxu0 %v3885
    %3917 = vmatprep.subr.bf16.mxu0 0
    %3918 = vmatpush2.bf16.msra.mxu0 0
    %3919 = vmatprep.subr.bf16.mxu0 0
    %3920 = vmatpush2.bf16.msra.mxu0 0
    %3921 = vmatprep.subr.bf16.mxu0 0
    %3922 = vmatpush2.bf16.msra.mxu0 0
    %3923 = vmatprep.subr.bf16.mxu0 0
    %3924 = vmatpush2.bf16.msra.mxu0 0
    %3925 = vmatprep.subr.bf16.mxu0 0
    %3926 = vmatpush2.bf16.msra.mxu0 0
    %3927 = vmatprep.subr.bf16.mxu0 0
    %3928 = vmatpush2.bf16.msra.mxu0 0
    %3929 = vmatprep.subr.bf16.mxu0 0
    %3930 = vmatpush2.bf16.msra.mxu0 0
    %3931 = vmatprep.subr.bf16.mxu0 0
    %3932 = vmatpush2.bf16.msra.mxu0 0
    %3933 = vmatprep.mubr.bf16.mxu0 0
    %3934 = vmatmul.mubr.bf16.gmra.mxu0 %v3668
    %v3935 = vpop.f32.mrf.mxu0
    %v3936 = vadd.f32 0.0, %v3935
    %v3937 = vpop.f32.mrf.mxu0
    %v3938 = vpop.f32.mrf.mxu0
    %v3939 = vadd.f32 0.0, %v3938
    %v3940 = vpop.f32.mrf.mxu0
    %3941 = vmatprep.mubr.bf16.mxu0 0
    %3942 = vmatmul.mubr.bf16.gmra.mxu0 %v3669
    %v3943 = vpop.f32.mrf.mxu0
    %v3944 = vadd.f32 0.0, %v3943
    %v3945 = vpop.f32.mrf.mxu0
    %v3946 = vpop.f32.mrf.mxu0
    %v3947 = vadd.f32 0.0, %v3946
    %v3948 = vpop.f32.mrf.mxu0
    %3949 = vmatprep.mubr.bf16.mxu0 0
    %3950 = vmatmul.mubr.bf16.gmra.mxu0 %v3670
    %v3951 = vpop.f32.mrf.mxu0
    %v3952 = vadd.f32 0.0, %v3951
    %v3953 = vpop.f32.mrf.mxu0
    %v3954 = vpop.f32.mrf.mxu0
    %v3955 = vadd.f32 0.0, %v3954
    %v3956 = vpop.f32.mrf.mxu0
    %3957 = vmatprep.mubr.bf16.mxu0 0
    %3958 = vmatmul.mubr.bf16.gmra.mxu0 %v3849
    %v3959 = vpop.f32.mrf.mxu0
    %v3960 = vadd.f32 0.0, %v3959
    %v3961 = vpop.f32.mrf.mxu0
    %v3962 = vpop.f32.mrf.mxu0
    %v3963 = vadd.f32 0.0, %v3962
    %v3964 = vpop.f32.mrf.mxu0
    %3965 = vmatprep.mubr.bf16.mxu0 0
    %3966 = vmatmul.mubr.bf16.gmra.mxu0 %v3672
    %v3967 = vpop.f32.mrf.mxu0
    %v3968 = vadd.f32 0.0, %v3967
    %v3969 = vpop.f32.mrf.mxu0
    %v3970 = vpop.f32.mrf.mxu0
    %v3971 = vadd.f32 0.0, %v3970
    %v3972 = vpop.f32.mrf.mxu0
    %3973 = vmatprep.mubr.bf16.mxu0 0
    %3974 = vmatmul.mubr.bf16.gmra.mxu0 %v3673
    %v3975 = vpop.f32.mrf.mxu0
    %v3976 = vadd.f32 0.0, %v3975
    %v3977 = vpop.f32.mrf.mxu0
    %v3978 = vpop.f32.mrf.mxu0
    %v3979 = vadd.f32 0.0, %v3978
    %v3980 = vpop.f32.mrf.mxu0
    %3981 = vmatprep.mubr.bf16.mxu0 0
    %3982 = vmatmul.mubr.bf16.gmra.mxu0 %v3674
    %v3983 = vpop.f32.mrf.mxu0
    %v3984 = vadd.f32 0.0, %v3983
    %v3985 = vpop.f32.mrf.mxu0
    %v3986 = vpop.f32.mrf.mxu0
    %v3987 = vadd.f32 0.0, %v3986
    %v3988 = vpop.f32.mrf.mxu0
    %3989 = vmatprep.mubr.bf16.mxu0 0
    %3990 = vmatmul.mubr.bf16.gmra.mxu0 %v3850
    %v3991 = vpop.f32.mrf.mxu0
    %v3992 = vadd.f32 0.0, %v3991
    %v3993 = vpop.f32.mrf.mxu0
    %v3994 = vpop.f32.mrf.mxu0
    %v3995 = vadd.f32 0.0, %v3994
    %v3996 = vpop.f32.mrf.mxu0
    %3997 = vdwg.mxu0
    %v3998 = vadd.f32 %v3766, %v3936
    %v3999 = vadd.f32 %v3769, %v3939
    %v4000 = vadd.f32 %v3774, %v3944
    %v4001 = vadd.f32 %v3777, %v3947
    %v4002 = vadd.f32 %v3782, %v3952
    %v4003 = vadd.f32 %v3785, %v3955
    %v4004 = vadd.f32 %v3790, %v3960
    %v4005 = vadd.f32 %v3793, %v3963
    %v4006 = vadd.f32 %v3798, %v3968
    %v4007 = vadd.f32 %v3801, %v3971
    %v4008 = vadd.f32 %v3806, %v3976
    %v4009 = vadd.f32 %v3809, %v3979
    %v4010 = vadd.f32 %v3814, %v3984
    %v4011 = vadd.f32 %v3817, %v3987
    %v4012 = vadd.f32 %v3822, %v3992
    %v4013 = vadd.f32 %v3825, %v3995
    %v4014 = vld [vmem:[#allocation2] sm:$0xf]
    %v4015 = vld [vmem:[#allocation2 + $0x4] sm:$0x1]
    %v4016 = vld [vmem:[#allocation2 + $0x8] sm:$0xf]
    %v4017 = vld [vmem:[#allocation2 + $0xc] sm:$0x1]
    %v4018 = vld [vmem:[#allocation2 + $0x10] sm:$0xf]
    %v4019 = vld [vmem:[#allocation2 + $0x14] sm:$0x1]
    %v4020 = vld [vmem:[#allocation2 + $0x18] sm:$0xf]
    %v4021 = vld [vmem:[#allocation2 + $0x1c] sm:$0x1]
    %v4022 = vld [vmem:[#allocation2 + $0x20] sm:$0xf]
    %v4023 = vld [vmem:[#allocation2 + $0x24] sm:$0x1]
    %v4024 = vld [vmem:[#allocation2 + $0x28] sm:$0xf]
    %v4025 = vld [vmem:[#allocation2 + $0x2c] sm:$0x1]
    %v4026 = vld [vmem:[#allocation2 + $0x30] sm:$0xf]
    %v4027 = vld [vmem:[#allocation2 + $0x34] sm:$0x1]
    %v4028 = vld [vmem:[#allocation2 + $0x38] sm:$0xf]
    %v4029 = vld [vmem:[#allocation2 + $0x3c] sm:$0x1]
    %v4030 = vld [vmem:[#allocation2 + $0x40] sm:$0xf]
    %v4031 = vld [vmem:[#allocation2 + $0x44] sm:$0x1]
    %v4032 = vld [vmem:[#allocation2 + $0x48] sm:$0xf]
    %v4033 = vld [vmem:[#allocation2 + $0x4c] sm:$0x1]
    %v4034 = vld [vmem:[#allocation2 + $0x50] sm:$0xf]
    %v4035 = vld [vmem:[#allocation2 + $0x54] sm:$0x1]
    %v4036 = vld [vmem:[#allocation2 + $0x58] sm:$0xf]
    %v4037 = vld [vmem:[#allocation2 + $0x5c] sm:$0x1]
    %v4038 = vld [vmem:[#allocation2 + $0x60] sm:$0xf]
    %v4039 = vld [vmem:[#allocation2 + $0x64] sm:$0x1]
    %v4040 = vld [vmem:[#allocation2 + $0x68] sm:$0xf]
    %v4041 = vld [vmem:[#allocation2 + $0x6c] sm:$0x1]
    %v4042 = vld [vmem:[#allocation2 + $0x70] sm:$0xf]
    %v4043 = vld [vmem:[#allocation2 + $0x74] sm:$0x1]
    %v4044 = vld [vmem:[#allocation2 + $0x78] sm:$0xf]
    %v4045 = vld [vmem:[#allocation2 + $0x7c] sm:$0x1]
    %v4046 = vld [vmem:[#allocation2 + $0x80] sm:$0xf]
    %v4047 = vld [vmem:[#allocation2 + $0x84] sm:$0x1]
    %v4048 = vld [vmem:[#allocation2 + $0x88] sm:$0xf]
    %v4049 = vld [vmem:[#allocation2 + $0x8c] sm:$0x1]
    %v4050 = vld [vmem:[#allocation2 + $0x90] sm:$0xf]
    %v4051 = vld [vmem:[#allocation2 + $0x94] sm:$0x1]
    %v4052 = vld [vmem:[#allocation2 + $0x98] sm:$0xf]
    %v4053 = vld [vmem:[#allocation2 + $0x9c] sm:$0x1]
    %v4055 = vshrl.u32 %v4014, 16
    %v4057 = vrot.slane %v4055, 4
    %v4058 = vshll.u32 %v4014, 16
    %v4060 = vrot.slane %v4058, 5
    %v4061 = vor.u32 %v4057, %v4060
    %v4062 = vrot.slane %v4061, 4
    %v4064 = vshll.u32 %v4015, 16
    %v4066 = vrot.slane %v4064, 5
    %v4067 = vsel %vm1454, %v4062, %v4066
    %v4069 = vshrl.u32 %v4016, 16
    %v4071 = vrot.slane %v4069, 4
    %v4072 = vshll.u32 %v4016, 16
    %v4074 = vrot.slane %v4072, 5
    %v4075 = vor.u32 %v4071, %v4074
    %v4076 = vrot.slane %v4075, 4
    %v4078 = vshll.u32 %v4017, 16
    %v4080 = vrot.slane %v4078, 5
    %v4081 = vsel %vm1454, %v4076, %v4080
    %v4083 = vshrl.u32 %v4018, 16
    %v4085 = vrot.slane %v4083, 4
    %v4086 = vshll.u32 %v4018, 16
    %v4088 = vrot.slane %v4086, 5
    %v4089 = vor.u32 %v4085, %v4088
    %v4090 = vrot.slane %v4089, 4
    %v4092 = vshll.u32 %v4019, 16
    %v4094 = vrot.slane %v4092, 5
    %v4095 = vsel %vm1454, %v4090, %v4094
    %v4097 = vshrl.u32 %v4020, 16
    %v4099 = vrot.slane %v4097, 4
    %v4100 = vshll.u32 %v4020, 16
    %v4102 = vrot.slane %v4100, 5
    %v4103 = vor.u32 %v4099, %v4102
    %v4104 = vrot.slane %v4103, 4
    %v4106 = vshll.u32 %v4021, 16
    %v4108 = vrot.slane %v4106, 5
    %v4109 = vsel %vm1454, %v4104, %v4108
    %v4111 = vshrl.u32 %v4022, 16
    %v4113 = vrot.slane %v4111, 4
    %v4114 = vshll.u32 %v4022, 16
    %v4116 = vrot.slane %v4114, 5
    %v4117 = vor.u32 %v4113, %v4116
    %v4118 = vrot.slane %v4117, 4
    %v4120 = vshll.u32 %v4023, 16
    %v4122 = vrot.slane %v4120, 5
    %v4123 = vsel %vm1454, %v4118, %v4122
    %v4125 = vshrl.u32 %v4024, 16
    %v4127 = vrot.slane %v4125, 4
    %v4128 = vshll.u32 %v4024, 16
    %v4130 = vrot.slane %v4128, 5
    %v4131 = vor.u32 %v4127, %v4130
    %v4132 = vrot.slane %v4131, 4
    %v4134 = vshll.u32 %v4025, 16
    %v4136 = vrot.slane %v4134, 5
    %v4137 = vsel %vm1454, %v4132, %v4136
    %v4139 = vshrl.u32 %v4026, 16
    %v4141 = vrot.slane %v4139, 4
    %v4142 = vshll.u32 %v4026, 16
    %v4144 = vrot.slane %v4142, 5
    %v4145 = vor.u32 %v4141, %v4144
    %v4146 = vrot.slane %v4145, 4
    %v4148 = vshll.u32 %v4027, 16
    %v4150 = vrot.slane %v4148, 5
    %v4151 = vsel %vm1454, %v4146, %v4150
    %v4153 = vshrl.u32 %v4028, 16
    %v4155 = vrot.slane %v4153, 4
    %v4156 = vshll.u32 %v4028, 16
    %v4158 = vrot.slane %v4156, 5
    %v4159 = vor.u32 %v4155, %v4158
    %v4160 = vrot.slane %v4159, 4
    %v4162 = vshll.u32 %v4029, 16
    %v4164 = vrot.slane %v4162, 5
    %v4165 = vsel %vm1454, %v4160, %v4164
    %v4167 = vshrl.u32 %v4034, 16
    %v4169 = vrot.slane %v4167, 4
    %v4170 = vshll.u32 %v4034, 16
    %v4172 = vrot.slane %v4170, 5
    %v4173 = vor.u32 %v4169, %v4172
    %v4174 = vrot.slane %v4173, 4
    %v4176 = vshll.u32 %v4035, 16
    %v4178 = vrot.slane %v4176, 5
    %v4179 = vsel %vm1454, %v4174, %v4178
    %v4181 = vshrl.u32 %v4036, 16
    %v4183 = vrot.slane %v4181, 4
    %v4184 = vshll.u32 %v4036, 16
    %v4186 = vrot.slane %v4184, 5
    %v4187 = vor.u32 %v4183, %v4186
    %v4188 = vrot.slane %v4187, 4
    %v4190 = vshll.u32 %v4037, 16
    %v4192 = vrot.slane %v4190, 5
    %v4193 = vsel %vm1454, %v4188, %v4192
    %v4195 = vshrl.u32 %v4038, 16
    %v4197 = vrot.slane %v4195, 4
    %v4198 = vshll.u32 %v4038, 16
    %v4200 = vrot.slane %v4198, 5
    %v4201 = vor.u32 %v4197, %v4200
    %v4202 = vrot.slane %v4201, 4
    %v4204 = vshll.u32 %v4039, 16
    %v4206 = vrot.slane %v4204, 5
    %v4207 = vsel %vm1454, %v4202, %v4206
    %v4209 = vshrl.u32 %v4040, 16
    %v4211 = vrot.slane %v4209, 4
    %v4212 = vshll.u32 %v4040, 16
    %v4214 = vrot.slane %v4212, 5
    %v4215 = vor.u32 %v4211, %v4214
    %v4216 = vrot.slane %v4215, 4
    %v4218 = vshll.u32 %v4041, 16
    %v4220 = vrot.slane %v4218, 5
    %v4221 = vsel %vm1454, %v4216, %v4220
    %v4223 = vshrl.u32 %v4042, 16
    %v4225 = vrot.slane %v4223, 4
    %v4226 = vshll.u32 %v4042, 16
    %v4228 = vrot.slane %v4226, 5
    %v4229 = vor.u32 %v4225, %v4228
    %v4230 = vrot.slane %v4229, 4
    %v4232 = vshll.u32 %v4043, 16
    %v4234 = vrot.slane %v4232, 5
    %v4235 = vsel %vm1454, %v4230, %v4234
    %v4237 = vshrl.u32 %v4044, 16
    %v4239 = vrot.slane %v4237, 4
    %v4240 = vshll.u32 %v4044, 16
    %v4242 = vrot.slane %v4240, 5
    %v4243 = vor.u32 %v4239, %v4242
    %v4244 = vrot.slane %v4243, 4
    %v4246 = vshll.u32 %v4045, 16
    %v4248 = vrot.slane %v4246, 5
    %v4249 = vsel %vm1454, %v4244, %v4248
    %v4251 = vshrl.u32 %v4046, 16
    %v4253 = vrot.slane %v4251, 4
    %v4254 = vshll.u32 %v4046, 16
    %v4256 = vrot.slane %v4254, 5
    %v4257 = vor.u32 %v4253, %v4256
    %v4258 = vrot.slane %v4257, 4
    %v4260 = vshll.u32 %v4047, 16
    %v4262 = vrot.slane %v4260, 5
    %v4263 = vsel %vm1454, %v4258, %v4262
    %v4265 = vshrl.u32 %v4048, 16
    %v4267 = vrot.slane %v4265, 4
    %v4268 = vshll.u32 %v4048, 16
    %v4270 = vrot.slane %v4268, 5
    %v4271 = vor.u32 %v4267, %v4270
    %v4272 = vrot.slane %v4271, 4
    %v4274 = vshll.u32 %v4049, 16
    %v4276 = vrot.slane %v4274, 5
    %v4277 = vsel %vm1454, %v4272, %v4276
    %s4278 = scalar_lea.vmem [#allocation9], 64
    %v4279 = vld [vmem:[%s4278] sm:$0xf]
    %v4280 = vld [vmem:[%s4278 + $0x4] sm:$0xf]
    %v4281 = vld [vmem:[%s4278 + $0x8] sm:$0xf]
    %v4282 = vld [vmem:[%s4278 + $0xc] sm:$0xf]
    %v4283 = vld [vmem:[%s4278 + $0x10] sm:$0xf]
    %v4284 = vld [vmem:[%s4278 + $0x14] sm:$0xf]
    %v4285 = vld [vmem:[%s4278 + $0x18] sm:$0xf]
    %v4286 = vld [vmem:[%s4278 + $0x1c] sm:$0xf]
    %v4287 = vld [vmem:[%s4278 + $0x20] sm:$0xf]
    %v4288 = vld [vmem:[%s4278 + $0x24] sm:$0xf]
    %v4289 = vld [vmem:[%s4278 + $0x28] sm:$0xf]
    %v4290 = vld [vmem:[%s4278 + $0x2c] sm:$0xf]
    %v4291 = vld [vmem:[%s4278 + $0x30] sm:$0xf]
    %v4292 = vld [vmem:[%s4278 + $0x34] sm:$0xf]
    %v4293 = vld [vmem:[%s4278 + $0x38] sm:$0xf]
    %v4294 = vld [vmem:[%s4278 + $0x3c] sm:$0xf]
    %v4295 = vunpack.c.l.b16 %v4067
    %v4296 = vunpack.c.l.b16 %v4081
    %v4297 = vunpack.c.l.b16 %v4095
    %v4298 = vunpack.c.l.b16 %v4109
    %v4299 = vunpack.c.l.b16 %v4123
    %v4300 = vunpack.c.l.b16 %v4137
    %v4301 = vunpack.c.l.b16 %v4151
    %v4302 = vunpack.c.l.b16 %v4165
    %v4303 = vunpack.c.l.b16 %v4179
    %v4304 = vunpack.c.l.b16 %v4193
    %v4305 = vunpack.c.l.b16 %v4207
    %v4306 = vunpack.c.l.b16 %v4221
    %v4307 = vunpack.c.l.b16 %v4235
    %v4308 = vunpack.c.l.b16 %v4249
    %v4309 = vunpack.c.l.b16 %v4263
    %v4310 = vunpack.c.l.b16 %v4277
    %v4311 = vpack.c.b16 %v4296, %v4295
    %v4312 = vpack.c.b16 %v4298, %v4297
    %v4313 = vpack.c.b16 %v4300, %v4299
    %v4314 = vpack.c.b16 %v4302, %v4301
    %v4315 = vpack.c.b16 %v4304, %v4303
    %v4316 = vpack.c.b16 %v4306, %v4305
    %v4317 = vpack.c.b16 %v4308, %v4307
    %v4318 = vpack.c.b16 %v4310, %v4309
    %v4343 = vunpack.c.l.b16 %v4279
    %v4344 = vunpack.c.l.b16 %v4280
    %v4345 = vunpack.c.l.b16 %v4281
    %v4346 = vunpack.c.l.b16 %v4282
    %v4347 = vunpack.c.l.b16 %v4283
    %v4348 = vunpack.c.l.b16 %v4284
    %v4349 = vunpack.c.l.b16 %v4285
    %v4350 = vunpack.c.l.b16 %v4286
    %v4351 = vunpack.c.l.b16 %v4287
    %v4352 = vunpack.c.l.b16 %v4288
    %v4353 = vunpack.c.l.b16 %v4289
    %v4354 = vunpack.c.l.b16 %v4290
    %v4355 = vunpack.c.l.b16 %v4291
    %v4356 = vunpack.c.l.b16 %v4292
    %v4357 = vunpack.c.l.b16 %v4293
    %v4358 = vunpack.c.l.b16 %v4294
    %v4359 = vpack.c.b16 %v4344, %v4343
    %v4360 = vpack.c.b16 %v4346, %v4345
    %v4361 = vpack.c.b16 %v4348, %v4347
    %v4362 = vpack.c.b16 %v4350, %v4349
    %v4363 = vpack.c.b16 %v4352, %v4351
    %v4364 = vpack.c.b16 %v4354, %v4353
    %v4365 = vpack.c.b16 %v4356, %v4355
    %v4366 = vpack.c.b16 %v4358, %v4357
    %4375 = vmatprep.subr.bf16.mxu0 0
    %4376 = vmatpush1.bf16.msra.mxu0 %v4366
    %4377 = vmatprep.subr.bf16.mxu0 0
    %4378 = vmatpush1.bf16.msra.mxu0 %v4365
    %4379 = vmatprep.subr.bf16.mxu0 0
    %4380 = vmatpush1.bf16.msra.mxu0 %v4364
    %4381 = vmatprep.subr.bf16.mxu0 0
    %4382 = vmatpush1.bf16.msra.mxu0 %v4363
    %4383 = vmatprep.subr.bf16.mxu0 0
    %4384 = vmatpush1.bf16.msra.mxu0 %v4362
    %4385 = vmatprep.subr.bf16.mxu0 0
    %4386 = vmatpush1.bf16.msra.mxu0 %v4361
    %4387 = vmatprep.subr.bf16.mxu0 0
    %4388 = vmatpush1.bf16.msra.mxu0 %v4360
    %4389 = vmatprep.subr.bf16.mxu0 0
    %4390 = vmatpush1.bf16.msra.mxu0 %v4359
    %4391 = vmatprep.subr.bf16.mxu0 0
    %4392 = vmatpush2.bf16.msra.mxu0 0
    %4393 = vmatprep.subr.bf16.mxu0 0
    %4394 = vmatpush2.bf16.msra.mxu0 0
    %4395 = vmatprep.subr.bf16.mxu0 0
    %4396 = vmatpush2.bf16.msra.mxu0 0
    %4397 = vmatprep.subr.bf16.mxu0 0
    %4398 = vmatpush2.bf16.msra.mxu0 0
    %4399 = vmatprep.subr.bf16.mxu0 0
    %4400 = vmatpush2.bf16.msra.mxu0 0
    %4401 = vmatprep.subr.bf16.mxu0 0
    %4402 = vmatpush2.bf16.msra.mxu0 0
    %4403 = vmatprep.subr.bf16.mxu0 0
    %4404 = vmatpush2.bf16.msra.mxu0 0
    %4405 = vmatprep.subr.bf16.mxu0 0
    %4406 = vmatpush2.bf16.msra.mxu0 0
    %4407 = vmatprep.mubr.bf16.mxu0 0
    %4408 = vmatmul.mubr.bf16.gmra.mxu0 %v4311
    %v4409 = vpop.f32.mrf.mxu0
    %v4410 = vadd.f32 0.0, %v4409
    %v4411 = vpop.f32.mrf.mxu0
    %v4412 = vpop.f32.mrf.mxu0
    %v4413 = vadd.f32 0.0, %v4412
    %v4414 = vpop.f32.mrf.mxu0
    %4415 = vmatprep.mubr.bf16.mxu0 0
    %4416 = vmatmul.mubr.bf16.gmra.mxu0 %v4312
    %v4417 = vpop.f32.mrf.mxu0
    %v4418 = vadd.f32 0.0, %v4417
    %v4419 = vpop.f32.mrf.mxu0
    %v4420 = vpop.f32.mrf.mxu0
    %v4421 = vadd.f32 0.0, %v4420
    %v4422 = vpop.f32.mrf.mxu0
    %4423 = vmatprep.mubr.bf16.mxu0 0
    %4424 = vmatmul.mubr.bf16.gmra.mxu0 %v4313
    %v4425 = vpop.f32.mrf.mxu0
    %v4426 = vadd.f32 0.0, %v4425
    %v4427 = vpop.f32.mrf.mxu0
    %v4428 = vpop.f32.mrf.mxu0
    %v4429 = vadd.f32 0.0, %v4428
    %v4430 = vpop.f32.mrf.mxu0
    %4431 = vmatprep.mubr.bf16.mxu0 0
    %4432 = vmatmul.mubr.bf16.gmra.mxu0 %v4314
    %v4433 = vpop.f32.mrf.mxu0
    %v4434 = vadd.f32 0.0, %v4433
    %v4435 = vpop.f32.mrf.mxu0
    %v4436 = vpop.f32.mrf.mxu0
    %v4437 = vadd.f32 0.0, %v4436
    %v4438 = vpop.f32.mrf.mxu0
    %4439 = vmatprep.mubr.bf16.mxu0 0
    %4440 = vmatmul.mubr.bf16.gmra.mxu0 %v4315
    %v4441 = vpop.f32.mrf.mxu0
    %v4442 = vadd.f32 0.0, %v4441
    %v4443 = vpop.f32.mrf.mxu0
    %v4444 = vpop.f32.mrf.mxu0
    %v4445 = vadd.f32 0.0, %v4444
    %v4446 = vpop.f32.mrf.mxu0
    %4447 = vmatprep.mubr.bf16.mxu0 0
    %4448 = vmatmul.mubr.bf16.gmra.mxu0 %v4316
    %v4449 = vpop.f32.mrf.mxu0
    %v4450 = vadd.f32 0.0, %v4449
    %v4451 = vpop.f32.mrf.mxu0
    %v4452 = vpop.f32.mrf.mxu0
    %v4453 = vadd.f32 0.0, %v4452
    %v4454 = vpop.f32.mrf.mxu0
    %4455 = vmatprep.mubr.bf16.mxu0 0
    %4456 = vmatmul.mubr.bf16.gmra.mxu0 %v4317
    %v4457 = vpop.f32.mrf.mxu0
    %v4458 = vadd.f32 0.0, %v4457
    %v4459 = vpop.f32.mrf.mxu0
    %v4460 = vpop.f32.mrf.mxu0
    %v4461 = vadd.f32 0.0, %v4460
    %v4462 = vpop.f32.mrf.mxu0
    %4463 = vmatprep.mubr.bf16.mxu0 0
    %4464 = vmatmul.mubr.bf16.gmra.mxu0 %v4318
    %v4465 = vpop.f32.mrf.mxu0
    %v4466 = vadd.f32 0.0, %v4465
    %v4467 = vpop.f32.mrf.mxu0
    %v4468 = vpop.f32.mrf.mxu0
    %v4469 = vadd.f32 0.0, %v4468
    %v4470 = vpop.f32.mrf.mxu0
    %4471 = vdwg.mxu0
    %v4472 = vadd.f32 %v3998, %v4410
    %v4473 = vadd.f32 %v3999, %v4413
    %v4474 = vadd.f32 %v4000, %v4418
    %v4475 = vadd.f32 %v4001, %v4421
    %v4476 = vadd.f32 %v4002, %v4426
    %v4477 = vadd.f32 %v4003, %v4429
    %v4478 = vadd.f32 %v4004, %v4434
    %v4479 = vadd.f32 %v4005, %v4437
    %v4480 = vadd.f32 %v4006, %v4442
    %v4481 = vadd.f32 %v4007, %v4445
    %v4482 = vadd.f32 %v4008, %v4450
    %v4483 = vadd.f32 %v4009, %v4453
    %v4484 = vadd.f32 %v4010, %v4458
    %v4485 = vadd.f32 %v4011, %v4461
    %v4486 = vadd.f32 %v4012, %v4466
    %v4487 = vadd.f32 %v4013, %v4469
    %v4489 = vshrl.u32 %v4030, 16
    %v4491 = vrot.slane %v4489, 4
    %v4492 = vshll.u32 %v4030, 16
    %v4494 = vrot.slane %v4492, 5
    %v4495 = vor.u32 %v4491, %v4494
    %v4496 = vrot.slane %v4495, 4
    %v4498 = vshll.u32 %v4031, 16
    %v4500 = vrot.slane %v4498, 5
    %v4501 = vsel %vm1454, %v4496, %v4500
    %v4503 = vshrl.u32 %v4050, 16
    %v4505 = vrot.slane %v4503, 4
    %v4506 = vshll.u32 %v4050, 16
    %v4508 = vrot.slane %v4506, 5
    %v4509 = vor.u32 %v4505, %v4508
    %v4510 = vrot.slane %v4509, 4
    %v4512 = vshll.u32 %v4051, 16
    %v4514 = vrot.slane %v4512, 5
    %v4515 = vsel %vm1454, %v4510, %v4514
    %s4516 = scalar_lea.vmem [#allocation9], 256
    %v4517 = vld [vmem:[%s4516] sm:$0xf]
    %v4518 = vld [vmem:[%s4516 + $0x4] sm:$0xf]
    %v4519 = vld [vmem:[%s4516 + $0x8] sm:$0xf]
    %v4520 = vld [vmem:[%s4516 + $0xc] sm:$0xf]
    %v4521 = vld [vmem:[%s4516 + $0x10] sm:$0xf]
    %v4522 = vld [vmem:[%s4516 + $0x14] sm:$0xf]
    %v4523 = vld [vmem:[%s4516 + $0x18] sm:$0xf]
    %v4524 = vld [vmem:[%s4516 + $0x1c] sm:$0xf]
    %v4525 = vld [vmem:[%s4516 + $0x20] sm:$0xf]
    %v4526 = vld [vmem:[%s4516 + $0x24] sm:$0xf]
    %v4527 = vld [vmem:[%s4516 + $0x28] sm:$0xf]
    %v4528 = vld [vmem:[%s4516 + $0x2c] sm:$0xf]
    %v4529 = vld [vmem:[%s4516 + $0x30] sm:$0xf]
    %v4530 = vld [vmem:[%s4516 + $0x34] sm:$0xf]
    %v4531 = vld [vmem:[%s4516 + $0x38] sm:$0xf]
    %v4532 = vld [vmem:[%s4516 + $0x3c] sm:$0xf]
    %v4533 = vunpack.c.l.b16 %v4501
    %v4534 = vunpack.c.l.b16 %v4515
    %v4535 = vpack.c.b16 %v4297, %v4296
    %v4536 = vpack.c.b16 %v4299, %v4298
    %v4537 = vpack.c.b16 %v4301, %v4300
    %v4538 = vpack.c.b16 %v4533, %v4302
    %v4539 = vpack.c.b16 %v4305, %v4304
    %v4540 = vpack.c.b16 %v4307, %v4306
    %v4541 = vpack.c.b16 %v4309, %v4308
    %v4542 = vpack.c.b16 %v4534, %v4310
    %v4567 = vunpack.c.l.b16 %v4517
    %v4568 = vunpack.c.l.b16 %v4518
    %v4569 = vunpack.c.l.b16 %v4519
    %v4570 = vunpack.c.l.b16 %v4520
    %v4571 = vunpack.c.l.b16 %v4521
    %v4572 = vunpack.c.l.b16 %v4522
    %v4573 = vunpack.c.l.b16 %v4523
    %v4574 = vunpack.c.l.b16 %v4524
    %v4575 = vunpack.c.l.b16 %v4525
    %v4576 = vunpack.c.l.b16 %v4526
    %v4577 = vunpack.c.l.b16 %v4527
    %v4578 = vunpack.c.l.b16 %v4528
    %v4579 = vunpack.c.l.b16 %v4529
    %v4580 = vunpack.c.l.b16 %v4530
    %v4581 = vunpack.c.l.b16 %v4531
    %v4582 = vunpack.c.l.b16 %v4532
    %v4583 = vpack.c.b16 %v4568, %v4567
    %v4584 = vpack.c.b16 %v4570, %v4569
    %v4585 = vpack.c.b16 %v4572, %v4571
    %v4586 = vpack.c.b16 %v4574, %v4573
    %v4587 = vpack.c.b16 %v4576, %v4575
    %v4588 = vpack.c.b16 %v4578, %v4577
    %v4589 = vpack.c.b16 %v4580, %v4579
    %v4590 = vpack.c.b16 %v4582, %v4581
    %4599 = vmatprep.subr.bf16.mxu0 0
    %4600 = vmatpush1.bf16.msra.mxu0 %v4590
    %4601 = vmatprep.subr.bf16.mxu0 0
    %4602 = vmatpush1.bf16.msra.mxu0 %v4589
    %4603 = vmatprep.subr.bf16.mxu0 0
    %4604 = vmatpush1.bf16.msra.mxu0 %v4588
    %4605 = vmatprep.subr.bf16.mxu0 0
    %4606 = vmatpush1.bf16.msra.mxu0 %v4587
    %4607 = vmatprep.subr.bf16.mxu0 0
    %4608 = vmatpush1.bf16.msra.mxu0 %v4586
    %4609 = vmatprep.subr.bf16.mxu0 0
    %4610 = vmatpush1.bf16.msra.mxu0 %v4585
    %4611 = vmatprep.subr.bf16.mxu0 0
    %4612 = vmatpush1.bf16.msra.mxu0 %v4584
    %4613 = vmatprep.subr.bf16.mxu0 0
    %4614 = vmatpush1.bf16.msra.mxu0 %v4583
    %4615 = vmatprep.subr.bf16.mxu0 0
    %4616 = vmatpush2.bf16.msra.mxu0 0
    %4617 = vmatprep.subr.bf16.mxu0 0
    %4618 = vmatpush2.bf16.msra.mxu0 0
    %4619 = vmatprep.subr.bf16.mxu0 0
    %4620 = vmatpush2.bf16.msra.mxu0 0
    %4621 = vmatprep.subr.bf16.mxu0 0
    %4622 = vmatpush2.bf16.msra.mxu0 0
    %4623 = vmatprep.subr.bf16.mxu0 0
    %4624 = vmatpush2.bf16.msra.mxu0 0
    %4625 = vmatprep.subr.bf16.mxu0 0
    %4626 = vmatpush2.bf16.msra.mxu0 0
    %4627 = vmatprep.subr.bf16.mxu0 0
    %4628 = vmatpush2.bf16.msra.mxu0 0
    %4629 = vmatprep.subr.bf16.mxu0 0
    %4630 = vmatpush2.bf16.msra.mxu0 0
    %4631 = vmatprep.mubr.bf16.mxu0 0
    %4632 = vmatmul.mubr.bf16.gmra.mxu0 %v4535
    %v4633 = vpop.f32.mrf.mxu0
    %v4634 = vadd.f32 0.0, %v4633
    %v4635 = vpop.f32.mrf.mxu0
    %v4636 = vpop.f32.mrf.mxu0
    %v4637 = vadd.f32 0.0, %v4636
    %v4638 = vpop.f32.mrf.mxu0
    %4639 = vmatprep.mubr.bf16.mxu0 0
    %4640 = vmatmul.mubr.bf16.gmra.mxu0 %v4536
    %v4641 = vpop.f32.mrf.mxu0
    %v4642 = vadd.f32 0.0, %v4641
    %v4643 = vpop.f32.mrf.mxu0
    %v4644 = vpop.f32.mrf.mxu0
    %v4645 = vadd.f32 0.0, %v4644
    %v4646 = vpop.f32.mrf.mxu0
    %4647 = vmatprep.mubr.bf16.mxu0 0
    %4648 = vmatmul.mubr.bf16.gmra.mxu0 %v4537
    %v4649 = vpop.f32.mrf.mxu0
    %v4650 = vadd.f32 0.0, %v4649
    %v4651 = vpop.f32.mrf.mxu0
    %v4652 = vpop.f32.mrf.mxu0
    %v4653 = vadd.f32 0.0, %v4652
    %v4654 = vpop.f32.mrf.mxu0
    %4655 = vmatprep.mubr.bf16.mxu0 0
    %4656 = vmatmul.mubr.bf16.gmra.mxu0 %v4538
    %v4657 = vpop.f32.mrf.mxu0
    %v4658 = vadd.f32 0.0, %v4657
    %v4659 = vpop.f32.mrf.mxu0
    %v4660 = vpop.f32.mrf.mxu0
    %v4661 = vadd.f32 0.0, %v4660
    %v4662 = vpop.f32.mrf.mxu0
    %4663 = vmatprep.mubr.bf16.mxu0 0
    %4664 = vmatmul.mubr.bf16.gmra.mxu0 %v4539
    %v4665 = vpop.f32.mrf.mxu0
    %v4666 = vadd.f32 0.0, %v4665
    %v4667 = vpop.f32.mrf.mxu0
    %v4668 = vpop.f32.mrf.mxu0
    %v4669 = vadd.f32 0.0, %v4668
    %v4670 = vpop.f32.mrf.mxu0
    %4671 = vmatprep.mubr.bf16.mxu0 0
    %4672 = vmatmul.mubr.bf16.gmra.mxu0 %v4540
    %v4673 = vpop.f32.mrf.mxu0
    %v4674 = vadd.f32 0.0, %v4673
    %v4675 = vpop.f32.mrf.mxu0
    %v4676 = vpop.f32.mrf.mxu0
    %v4677 = vadd.f32 0.0, %v4676
    %v4678 = vpop.f32.mrf.mxu0
    %4679 = vmatprep.mubr.bf16.mxu0 0
    %4680 = vmatmul.mubr.bf16.gmra.mxu0 %v4541
    %v4681 = vpop.f32.mrf.mxu0
    %v4682 = vadd.f32 0.0, %v4681
    %v4683 = vpop.f32.mrf.mxu0
    %v4684 = vpop.f32.mrf.mxu0
    %v4685 = vadd.f32 0.0, %v4684
    %v4686 = vpop.f32.mrf.mxu0
    %4687 = vmatprep.mubr.bf16.mxu0 0
    %4688 = vmatmul.mubr.bf16.gmra.mxu0 %v4542
    %v4689 = vpop.f32.mrf.mxu0
    %v4690 = vadd.f32 0.0, %v4689
    %v4691 = vpop.f32.mrf.mxu0
    %v4692 = vpop.f32.mrf.mxu0
    %v4693 = vadd.f32 0.0, %v4692
    %v4694 = vpop.f32.mrf.mxu0
    %4695 = vdwg.mxu0
    %v4696 = vadd.f32 %v4472, %v4634
    %v4697 = vadd.f32 %v4473, %v4637
    %v4698 = vadd.f32 %v4474, %v4642
    %v4699 = vadd.f32 %v4475, %v4645
    %v4700 = vadd.f32 %v4476, %v4650
    %v4701 = vadd.f32 %v4477, %v4653
    %v4702 = vadd.f32 %v4478, %v4658
    %v4703 = vadd.f32 %v4479, %v4661
    %v4704 = vadd.f32 %v4480, %v4666
    %v4705 = vadd.f32 %v4481, %v4669
    %v4706 = vadd.f32 %v4482, %v4674
    %v4707 = vadd.f32 %v4483, %v4677
    %v4708 = vadd.f32 %v4484, %v4682
    %v4709 = vadd.f32 %v4485, %v4685
    %v4710 = vadd.f32 %v4486, %v4690
    %v4711 = vadd.f32 %v4487, %v4693
    %v4713 = vshrl.u32 %v4032, 16
    %v4715 = vrot.slane %v4713, 4
    %v4716 = vshll.u32 %v4032, 16
    %v4718 = vrot.slane %v4716, 5
    %v4719 = vor.u32 %v4715, %v4718
    %v4720 = vrot.slane %v4719, 4
    %v4722 = vshll.u32 %v4033, 16
    %v4724 = vrot.slane %v4722, 5
    %v4725 = vsel %vm1454, %v4720, %v4724
    %v4727 = vshrl.u32 %v4052, 16
    %v4729 = vrot.slane %v4727, 4
    %v4730 = vshll.u32 %v4052, 16
    %v4732 = vrot.slane %v4730, 5
    %v4733 = vor.u32 %v4729, %v4732
    %v4734 = vrot.slane %v4733, 4
    %v4736 = vshll.u32 %v4053, 16
    %v4738 = vrot.slane %v4736, 5
    %v4739 = vsel %vm1454, %v4734, %v4738
    %s4740 = scalar_lea.vmem [#allocation9], 448
    %v4741 = vld [vmem:[%s4740] sm:$0xf]
    %v4742 = vld [vmem:[%s4740 + $0x4] sm:$0xf]
    %v4743 = vld [vmem:[%s4740 + $0x8] sm:$0xf]
    %v4744 = vld [vmem:[%s4740 + $0xc] sm:$0xf]
    %v4745 = vld [vmem:[%s4740 + $0x10] sm:$0xf]
    %v4746 = vld [vmem:[%s4740 + $0x14] sm:$0xf]
    %v4747 = vld [vmem:[%s4740 + $0x18] sm:$0xf]
    %v4748 = vld [vmem:[%s4740 + $0x1c] sm:$0xf]
    %v4749 = vld [vmem:[%s4740 + $0x20] sm:$0xf]
    %v4750 = vld [vmem:[%s4740 + $0x24] sm:$0xf]
    %v4751 = vld [vmem:[%s4740 + $0x28] sm:$0xf]
    %v4752 = vld [vmem:[%s4740 + $0x2c] sm:$0xf]
    %v4753 = vld [vmem:[%s4740 + $0x30] sm:$0xf]
    %v4754 = vld [vmem:[%s4740 + $0x34] sm:$0xf]
    %v4755 = vld [vmem:[%s4740 + $0x38] sm:$0xf]
    %v4756 = vld [vmem:[%s4740 + $0x3c] sm:$0xf]
    %v4757 = vunpack.c.l.b16 %v4725
    %v4758 = vunpack.c.l.b16 %v4739
    %v4759 = vpack.c.b16 %v4757, %v4533
    %v4760 = vpack.c.b16 %v4758, %v4534
    %v4779 = vunpack.c.l.b16 %v4741
    %v4780 = vunpack.c.l.b16 %v4742
    %v4781 = vunpack.c.l.b16 %v4743
    %v4782 = vunpack.c.l.b16 %v4744
    %v4783 = vunpack.c.l.b16 %v4745
    %v4784 = vunpack.c.l.b16 %v4746
    %v4785 = vunpack.c.l.b16 %v4747
    %v4786 = vunpack.c.l.b16 %v4748
    %v4787 = vunpack.c.l.b16 %v4749
    %v4788 = vunpack.c.l.b16 %v4750
    %v4789 = vunpack.c.l.b16 %v4751
    %v4790 = vunpack.c.l.b16 %v4752
    %v4791 = vunpack.c.l.b16 %v4753
    %v4792 = vunpack.c.l.b16 %v4754
    %v4793 = vunpack.c.l.b16 %v4755
    %v4794 = vunpack.c.l.b16 %v4756
    %v4795 = vpack.c.b16 %v4780, %v4779
    %v4796 = vpack.c.b16 %v4782, %v4781
    %v4797 = vpack.c.b16 %v4784, %v4783
    %v4798 = vpack.c.b16 %v4786, %v4785
    %v4799 = vpack.c.b16 %v4788, %v4787
    %v4800 = vpack.c.b16 %v4790, %v4789
    %v4801 = vpack.c.b16 %v4792, %v4791
    %v4802 = vpack.c.b16 %v4794, %v4793
    %4811 = vmatprep.subr.bf16.mxu0 0
    %4812 = vmatpush1.bf16.msra.mxu0 %v4802
    %4813 = vmatprep.subr.bf16.mxu0 0
    %4814 = vmatpush1.bf16.msra.mxu0 %v4801
    %4815 = vmatprep.subr.bf16.mxu0 0
    %4816 = vmatpush1.bf16.msra.mxu0 %v4800
    %4817 = vmatprep.subr.bf16.mxu0 0
    %4818 = vmatpush1.bf16.msra.mxu0 %v4799
    %4819 = vmatprep.subr.bf16.mxu0 0
    %4820 = vmatpush1.bf16.msra.mxu0 %v4798
    %4821 = vmatprep.subr.bf16.mxu0 0
    %4822 = vmatpush1.bf16.msra.mxu0 %v4797
    %4823 = vmatprep.subr.bf16.mxu0 0
    %4824 = vmatpush1.bf16.msra.mxu0 %v4796
    %4825 = vmatprep.subr.bf16.mxu0 0
    %4826 = vmatpush1.bf16.msra.mxu0 %v4795
    %4827 = vmatprep.subr.bf16.mxu0 0
    %4828 = vmatpush2.bf16.msra.mxu0 0
    %4829 = vmatprep.subr.bf16.mxu0 0
    %4830 = vmatpush2.bf16.msra.mxu0 0
    %4831 = vmatprep.subr.bf16.mxu0 0
    %4832 = vmatpush2.bf16.msra.mxu0 0
    %4833 = vmatprep.subr.bf16.mxu0 0
    %4834 = vmatpush2.bf16.msra.mxu0 0
    %4835 = vmatprep.subr.bf16.mxu0 0
    %4836 = vmatpush2.bf16.msra.mxu0 0
    %4837 = vmatprep.subr.bf16.mxu0 0
    %4838 = vmatpush2.bf16.msra.mxu0 0
    %4839 = vmatprep.subr.bf16.mxu0 0
    %4840 = vmatpush2.bf16.msra.mxu0 0
    %4841 = vmatprep.subr.bf16.mxu0 0
    %4842 = vmatpush2.bf16.msra.mxu0 0
    %4843 = vmatprep.mubr.bf16.mxu0 0
    %4844 = vmatmul.mubr.bf16.gmra.mxu0 %v4312
    %v4845 = vpop.f32.mrf.mxu0
    %v4846 = vadd.f32 0.0, %v4845
    %v4847 = vpop.f32.mrf.mxu0
    %v4848 = vpop.f32.mrf.mxu0
    %v4849 = vadd.f32 0.0, %v4848
    %v4850 = vpop.f32.mrf.mxu0
    %4851 = vmatprep.mubr.bf16.mxu0 0
    %4852 = vmatmul.mubr.bf16.gmra.mxu0 %v4313
    %v4853 = vpop.f32.mrf.mxu0
    %v4854 = vadd.f32 0.0, %v4853
    %v4855 = vpop.f32.mrf.mxu0
    %v4856 = vpop.f32.mrf.mxu0
    %v4857 = vadd.f32 0.0, %v4856
    %v4858 = vpop.f32.mrf.mxu0
    %4859 = vmatprep.mubr.bf16.mxu0 0
    %4860 = vmatmul.mubr.bf16.gmra.mxu0 %v4314
    %v4861 = vpop.f32.mrf.mxu0
    %v4862 = vadd.f32 0.0, %v4861
    %v4863 = vpop.f32.mrf.mxu0
    %v4864 = vpop.f32.mrf.mxu0
    %v4865 = vadd.f32 0.0, %v4864
    %v4866 = vpop.f32.mrf.mxu0
    %4867 = vmatprep.mubr.bf16.mxu0 0
    %4868 = vmatmul.mubr.bf16.gmra.mxu0 %v4759
    %v4869 = vpop.f32.mrf.mxu0
    %v4870 = vadd.f32 0.0, %v4869
    %v4871 = vpop.f32.mrf.mxu0
    %v4872 = vpop.f32.mrf.mxu0
    %v4873 = vadd.f32 0.0, %v4872
    %v4874 = vpop.f32.mrf.mxu0
    %4875 = vmatprep.mubr.bf16.mxu0 0
    %4876 = vmatmul.mubr.bf16.gmra.mxu0 %v4316
    %v4877 = vpop.f32.mrf.mxu0
    %v4878 = vadd.f32 0.0, %v4877
    %v4879 = vpop.f32.mrf.mxu0
    %v4880 = vpop.f32.mrf.mxu0
    %v4881 = vadd.f32 0.0, %v4880
    %v4882 = vpop.f32.mrf.mxu0
    %4883 = vmatprep.mubr.bf16.mxu0 0
    %4884 = vmatmul.mubr.bf16.gmra.mxu0 %v4317
    %v4885 = vpop.f32.mrf.mxu0
    %v4886 = vadd.f32 0.0, %v4885
    %v4887 = vpop.f32.mrf.mxu0
    %v4888 = vpop.f32.mrf.mxu0
    %v4889 = vadd.f32 0.0, %v4888
    %v4890 = vpop.f32.mrf.mxu0
    %4891 = vmatprep.mubr.bf16.mxu0 0
    %4892 = vmatmul.mubr.bf16.gmra.mxu0 %v4318
    %v4893 = vpop.f32.mrf.mxu0
    %v4894 = vadd.f32 0.0, %v4893
    %v4895 = vpop.f32.mrf.mxu0
    %v4896 = vpop.f32.mrf.mxu0
    %v4897 = vadd.f32 0.0, %v4896
    %v4898 = vpop.f32.mrf.mxu0
    %4899 = vmatprep.mubr.bf16.mxu0 0
    %4900 = vmatmul.mubr.bf16.gmra.mxu0 %v4760
    %v4901 = vpop.f32.mrf.mxu0
    %v4902 = vadd.f32 0.0, %v4901
    %v4903 = vpop.f32.mrf.mxu0
    %v4904 = vpop.f32.mrf.mxu0
    %v4905 = vadd.f32 0.0, %v4904
    %v4906 = vpop.f32.mrf.mxu0
    %4907 = vdwg.mxu0
    %v4908 = vadd.f32 %v4696, %v4846
    %v4909 = vadd.f32 %v4697, %v4849
    %v4910 = vadd.f32 %v4698, %v4854
    %v4911 = vadd.f32 %v4699, %v4857
    %v4912 = vadd.f32 %v4700, %v4862
    %v4913 = vadd.f32 %v4701, %v4865
    %v4914 = vadd.f32 %v4702, %v4870
    %v4915 = vadd.f32 %v4703, %v4873
    %v4916 = vadd.f32 %v4704, %v4878
    %v4917 = vadd.f32 %v4705, %v4881
    %v4918 = vadd.f32 %v4706, %v4886
    %v4919 = vadd.f32 %v4707, %v4889
    %v4920 = vadd.f32 %v4708, %v4894
    %v4921 = vadd.f32 %v4709, %v4897
    %v4922 = vadd.f32 %v4710, %v4902
    %v4923 = vadd.f32 %v4711, %v4905
    %v4924 = vld [vmem:[#allocation2] sm:$0xe]
    %v4925 = vld [vmem:[#allocation2 + $0x8] sm:$0xe]
    %v4926 = vld [vmem:[#allocation2 + $0x10] sm:$0xe]
    %v4927 = vld [vmem:[#allocation2 + $0x18] sm:$0xe]
    %v4928 = vld [vmem:[#allocation2 + $0x20] sm:$0xe]
    %v4929 = vld [vmem:[#allocation2 + $0x28] sm:$0xe]
    %v4930 = vld [vmem:[#allocation2 + $0x30] sm:$0xe]
    %v4931 = vld [vmem:[#allocation2 + $0x38] sm:$0xe]
    %v4932 = vld [vmem:[#allocation2 + $0x40] sm:$0xe]
    %v4933 = vld [vmem:[#allocation2 + $0x48] sm:$0xe]
    %v4934 = vld [vmem:[#allocation2 + $0x50] sm:$0xe]
    %v4935 = vld [vmem:[#allocation2 + $0x58] sm:$0xe]
    %v4936 = vld [vmem:[#allocation2 + $0x60] sm:$0xe]
    %v4937 = vld [vmem:[#allocation2 + $0x68] sm:$0xe]
    %v4938 = vld [vmem:[#allocation2 + $0x70] sm:$0xe]
    %v4939 = vld [vmem:[#allocation2 + $0x78] sm:$0xe]
    %v4940 = vld [vmem:[#allocation2 + $0x80] sm:$0xe]
    %v4941 = vld [vmem:[#allocation2 + $0x88] sm:$0xe]
    %v4942 = vld [vmem:[#allocation2 + $0x90] sm:$0xe]
    %v4943 = vld [vmem:[#allocation2 + $0x98] sm:$0xe]
    %v4976 = vrot.slane %v4924, 5
    %v4977 = vrot.slane %v4976, 4
    %v4978 = vrot.slane %v4015, 5
    %v4979 = vsel %vm2379, %v4977, %v4978
    %v4980 = vrot.slane %v4925, 5
    %v4981 = vrot.slane %v4980, 4
    %v4982 = vrot.slane %v4017, 5
    %v4983 = vsel %vm2379, %v4981, %v4982
    %v4984 = vrot.slane %v4926, 5
    %v4985 = vrot.slane %v4984, 4
    %v4986 = vrot.slane %v4019, 5
    %v4987 = vsel %vm2379, %v4985, %v4986
    %v4988 = vrot.slane %v4927, 5
    %v4989 = vrot.slane %v4988, 4
    %v4990 = vrot.slane %v4021, 5
    %v4991 = vsel %vm2379, %v4989, %v4990
    %v4992 = vrot.slane %v4928, 5
    %v4993 = vrot.slane %v4992, 4
    %v4994 = vrot.slane %v4023, 5
    %v4995 = vsel %vm2379, %v4993, %v4994
    %v4996 = vrot.slane %v4929, 5
    %v4997 = vrot.slane %v4996, 4
    %v4998 = vrot.slane %v4025, 5
    %v4999 = vsel %vm2379, %v4997, %v4998
    %v5000 = vrot.slane %v4930, 5
    %v5001 = vrot.slane %v5000, 4
    %v5002 = vrot.slane %v4027, 5
    %v5003 = vsel %vm2379, %v5001, %v5002
    %v5004 = vrot.slane %v4931, 5
    %v5005 = vrot.slane %v5004, 4
    %v5006 = vrot.slane %v4029, 5
    %v5007 = vsel %vm2379, %v5005, %v5006
    %v5008 = vrot.slane %v4934, 5
    %v5009 = vrot.slane %v5008, 4
    %v5010 = vrot.slane %v4035, 5
    %v5011 = vsel %vm2379, %v5009, %v5010
    %v5012 = vrot.slane %v4935, 5
    %v5013 = vrot.slane %v5012, 4
    %v5014 = vrot.slane %v4037, 5
    %v5015 = vsel %vm2379, %v5013, %v5014
    %v5016 = vrot.slane %v4936, 5
    %v5017 = vrot.slane %v5016, 4
    %v5018 = vrot.slane %v4039, 5
    %v5019 = vsel %vm2379, %v5017, %v5018
    %v5020 = vrot.slane %v4937, 5
    %v5021 = vrot.slane %v5020, 4
    %v5022 = vrot.slane %v4041, 5
    %v5023 = vsel %vm2379, %v5021, %v5022
    %v5024 = vrot.slane %v4938, 5
    %v5025 = vrot.slane %v5024, 4
    %v5026 = vrot.slane %v4043, 5
    %v5027 = vsel %vm2379, %v5025, %v5026
    %v5028 = vrot.slane %v4939, 5
    %v5029 = vrot.slane %v5028, 4
    %v5030 = vrot.slane %v4045, 5
    %v5031 = vsel %vm2379, %v5029, %v5030
    %v5032 = vrot.slane %v4940, 5
    %v5033 = vrot.slane %v5032, 4
    %v5034 = vrot.slane %v4047, 5
    %v5035 = vsel %vm2379, %v5033, %v5034
    %v5036 = vrot.slane %v4941, 5
    %v5037 = vrot.slane %v5036, 4
    %v5038 = vrot.slane %v4049, 5
    %v5039 = vsel %vm2379, %v5037, %v5038
    %s5040 = scalar_lea.vmem [#allocation9], 128
    %v5041 = vld [vmem:[%s5040] sm:$0xf]
    %v5042 = vld [vmem:[%s5040 + $0x4] sm:$0xf]
    %v5043 = vld [vmem:[%s5040 + $0x8] sm:$0xf]
    %v5044 = vld [vmem:[%s5040 + $0xc] sm:$0xf]
    %v5045 = vld [vmem:[%s5040 + $0x10] sm:$0xf]
    %v5046 = vld [vmem:[%s5040 + $0x14] sm:$0xf]
    %v5047 = vld [vmem:[%s5040 + $0x18] sm:$0xf]
    %v5048 = vld [vmem:[%s5040 + $0x1c] sm:$0xf]
    %v5049 = vld [vmem:[%s5040 + $0x20] sm:$0xf]
    %v5050 = vld [vmem:[%s5040 + $0x24] sm:$0xf]
    %v5051 = vld [vmem:[%s5040 + $0x28] sm:$0xf]
    %v5052 = vld [vmem:[%s5040 + $0x2c] sm:$0xf]
    %v5053 = vld [vmem:[%s5040 + $0x30] sm:$0xf]
    %v5054 = vld [vmem:[%s5040 + $0x34] sm:$0xf]
    %v5055 = vld [vmem:[%s5040 + $0x38] sm:$0xf]
    %v5056 = vld [vmem:[%s5040 + $0x3c] sm:$0xf]
    %v5057 = vunpack.c.l.b16 %v4979
    %v5058 = vunpack.c.l.b16 %v4983
    %v5059 = vunpack.c.l.b16 %v4987
    %v5060 = vunpack.c.l.b16 %v4991
    %v5061 = vunpack.c.l.b16 %v4995
    %v5062 = vunpack.c.l.b16 %v4999
    %v5063 = vunpack.c.l.b16 %v5003
    %v5064 = vunpack.c.l.b16 %v5007
    %v5065 = vunpack.c.l.b16 %v5011
    %v5066 = vunpack.c.l.b16 %v5015
    %v5067 = vunpack.c.l.b16 %v5019
    %v5068 = vunpack.c.l.b16 %v5023
    %v5069 = vunpack.c.l.b16 %v5027
    %v5070 = vunpack.c.l.b16 %v5031
    %v5071 = vunpack.c.l.b16 %v5035
    %v5072 = vunpack.c.l.b16 %v5039
    %v5073 = vpack.c.b16 %v5058, %v5057
    %v5074 = vpack.c.b16 %v5060, %v5059
    %v5075 = vpack.c.b16 %v5062, %v5061
    %v5076 = vpack.c.b16 %v5064, %v5063
    %v5077 = vpack.c.b16 %v5066, %v5065
    %v5078 = vpack.c.b16 %v5068, %v5067
    %v5079 = vpack.c.b16 %v5070, %v5069
    %v5080 = vpack.c.b16 %v5072, %v5071
    %v5105 = vunpack.c.l.b16 %v5041
    %v5106 = vunpack.c.l.b16 %v5042
    %v5107 = vunpack.c.l.b16 %v5043
    %v5108 = vunpack.c.l.b16 %v5044
    %v5109 = vunpack.c.l.b16 %v5045
    %v5110 = vunpack.c.l.b16 %v5046
    %v5111 = vunpack.c.l.b16 %v5047
    %v5112 = vunpack.c.l.b16 %v5048
    %v5113 = vunpack.c.l.b16 %v5049
    %v5114 = vunpack.c.l.b16 %v5050
    %v5115 = vunpack.c.l.b16 %v5051
    %v5116 = vunpack.c.l.b16 %v5052
    %v5117 = vunpack.c.l.b16 %v5053
    %v5118 = vunpack.c.l.b16 %v5054
    %v5119 = vunpack.c.l.b16 %v5055
    %v5120 = vunpack.c.l.b16 %v5056
    %v5121 = vpack.c.b16 %v5106, %v5105
    %v5122 = vpack.c.b16 %v5108, %v5107
    %v5123 = vpack.c.b16 %v5110, %v5109
    %v5124 = vpack.c.b16 %v5112, %v5111
    %v5125 = vpack.c.b16 %v5114, %v5113
    %v5126 = vpack.c.b16 %v5116, %v5115
    %v5127 = vpack.c.b16 %v5118, %v5117
    %v5128 = vpack.c.b16 %v5120, %v5119
    %5137 = vmatprep.subr.bf16.mxu0 0
    %5138 = vmatpush1.bf16.msra.mxu0 %v5128
    %5139 = vmatprep.subr.bf16.mxu0 0
    %5140 = vmatpush1.bf16.msra.mxu0 %v5127
    %5141 = vmatprep.subr.bf16.mxu0 0
    %5142 = vmatpush1.bf16.msra.mxu0 %v5126
    %5143 = vmatprep.subr.bf16.mxu0 0
    %5144 = vmatpush1.bf16.msra.mxu0 %v5125
    %5145 = vmatprep.subr.bf16.mxu0 0
    %5146 = vmatpush1.bf16.msra.mxu0 %v5124
    %5147 = vmatprep.subr.bf16.mxu0 0
    %5148 = vmatpush1.bf16.msra.mxu0 %v5123
    %5149 = vmatprep.subr.bf16.mxu0 0
    %5150 = vmatpush1.bf16.msra.mxu0 %v5122
    %5151 = vmatprep.subr.bf16.mxu0 0
    %5152 = vmatpush1.bf16.msra.mxu0 %v5121
    %5153 = vmatprep.subr.bf16.mxu0 0
    %5154 = vmatpush2.bf16.msra.mxu0 0
    %5155 = vmatprep.subr.bf16.mxu0 0
    %5156 = vmatpush2.bf16.msra.mxu0 0
    %5157 = vmatprep.subr.bf16.mxu0 0
    %5158 = vmatpush2.bf16.msra.mxu0 0
    %5159 = vmatprep.subr.bf16.mxu0 0
    %5160 = vmatpush2.bf16.msra.mxu0 0
    %5161 = vmatprep.subr.bf16.mxu0 0
    %5162 = vmatpush2.bf16.msra.mxu0 0
    %5163 = vmatprep.subr.bf16.mxu0 0
    %5164 = vmatpush2.bf16.msra.mxu0 0
    %5165 = vmatprep.subr.bf16.mxu0 0
    %5166 = vmatpush2.bf16.msra.mxu0 0
    %5167 = vmatprep.subr.bf16.mxu0 0
    %5168 = vmatpush2.bf16.msra.mxu0 0
    %5169 = vmatprep.mubr.bf16.mxu0 0
    %5170 = vmatmul.mubr.bf16.gmra.mxu0 %v5073
    %v5171 = vpop.f32.mrf.mxu0
    %v5172 = vadd.f32 0.0, %v5171
    %v5173 = vpop.f32.mrf.mxu0
    %v5174 = vpop.f32.mrf.mxu0
    %v5175 = vadd.f32 0.0, %v5174
    %v5176 = vpop.f32.mrf.mxu0
    %5177 = vmatprep.mubr.bf16.mxu0 0
    %5178 = vmatmul.mubr.bf16.gmra.mxu0 %v5074
    %v5179 = vpop.f32.mrf.mxu0
    %v5180 = vadd.f32 0.0, %v5179
    %v5181 = vpop.f32.mrf.mxu0
    %v5182 = vpop.f32.mrf.mxu0
    %v5183 = vadd.f32 0.0, %v5182
    %v5184 = vpop.f32.mrf.mxu0
    %5185 = vmatprep.mubr.bf16.mxu0 0
    %5186 = vmatmul.mubr.bf16.gmra.mxu0 %v5075
    %v5187 = vpop.f32.mrf.mxu0
    %v5188 = vadd.f32 0.0, %v5187
    %v5189 = vpop.f32.mrf.mxu0
    %v5190 = vpop.f32.mrf.mxu0
    %v5191 = vadd.f32 0.0, %v5190
    %v5192 = vpop.f32.mrf.mxu0
    %5193 = vmatprep.mubr.bf16.mxu0 0
    %5194 = vmatmul.mubr.bf16.gmra.mxu0 %v5076
    %v5195 = vpop.f32.mrf.mxu0
    %v5196 = vadd.f32 0.0, %v5195
    %v5197 = vpop.f32.mrf.mxu0
    %v5198 = vpop.f32.mrf.mxu0
    %v5199 = vadd.f32 0.0, %v5198
    %v5200 = vpop.f32.mrf.mxu0
    %5201 = vmatprep.mubr.bf16.mxu0 0
    %5202 = vmatmul.mubr.bf16.gmra.mxu0 %v5077
    %v5203 = vpop.f32.mrf.mxu0
    %v5204 = vadd.f32 0.0, %v5203
    %v5205 = vpop.f32.mrf.mxu0
    %v5206 = vpop.f32.mrf.mxu0
    %v5207 = vadd.f32 0.0, %v5206
    %v5208 = vpop.f32.mrf.mxu0
    %5209 = vmatprep.mubr.bf16.mxu0 0
    %5210 = vmatmul.mubr.bf16.gmra.mxu0 %v5078
    %v5211 = vpop.f32.mrf.mxu0
    %v5212 = vadd.f32 0.0, %v5211
    %v5213 = vpop.f32.mrf.mxu0
    %v5214 = vpop.f32.mrf.mxu0
    %v5215 = vadd.f32 0.0, %v5214
    %v5216 = vpop.f32.mrf.mxu0
    %5217 = vmatprep.mubr.bf16.mxu0 0
    %5218 = vmatmul.mubr.bf16.gmra.mxu0 %v5079
    %v5219 = vpop.f32.mrf.mxu0
    %v5220 = vadd.f32 0.0, %v5219
    %v5221 = vpop.f32.mrf.mxu0
    %v5222 = vpop.f32.mrf.mxu0
    %v5223 = vadd.f32 0.0, %v5222
    %v5224 = vpop.f32.mrf.mxu0
    %5225 = vmatprep.mubr.bf16.mxu0 0
    %5226 = vmatmul.mubr.bf16.gmra.mxu0 %v5080
    %v5227 = vpop.f32.mrf.mxu0
    %v5228 = vadd.f32 0.0, %v5227
    %v5229 = vpop.f32.mrf.mxu0
    %v5230 = vpop.f32.mrf.mxu0
    %v5231 = vadd.f32 0.0, %v5230
    %v5232 = vpop.f32.mrf.mxu0
    %5233 = vdwg.mxu0
    %v5234 = vadd.f32 %v4908, %v5172
    %v5235 = vadd.f32 %v4909, %v5175
    %v5236 = vadd.f32 %v4910, %v5180
    %v5237 = vadd.f32 %v4911, %v5183
    %v5238 = vadd.f32 %v4912, %v5188
    %v5239 = vadd.f32 %v4913, %v5191
    %v5240 = vadd.f32 %v4914, %v5196
    %v5241 = vadd.f32 %v4915, %v5199
    %v5242 = vadd.f32 %v4916, %v5204
    %v5243 = vadd.f32 %v4917, %v5207
    %v5244 = vadd.f32 %v4918, %v5212
    %v5245 = vadd.f32 %v4919, %v5215
    %v5246 = vadd.f32 %v4920, %v5220
    %v5247 = vadd.f32 %v4921, %v5223
    %v5248 = vadd.f32 %v4922, %v5228
    %v5249 = vadd.f32 %v4923, %v5231
    %v5254 = vrot.slane %v4932, 5
    %v5255 = vrot.slane %v5254, 4
    %v5256 = vrot.slane %v4031, 5
    %v5257 = vsel %vm2379, %v5255, %v5256
    %v5258 = vrot.slane %v4942, 5
    %v5259 = vrot.slane %v5258, 4
    %v5260 = vrot.slane %v4051, 5
    %v5261 = vsel %vm2379, %v5259, %v5260
    %s5262 = scalar_lea.vmem [#allocation9], 320
    %v5263 = vld [vmem:[%s5262] sm:$0xf]
    %v5264 = vld [vmem:[%s5262 + $0x4] sm:$0xf]
    %v5265 = vld [vmem:[%s5262 + $0x8] sm:$0xf]
    %v5266 = vld [vmem:[%s5262 + $0xc] sm:$0xf]
    %v5267 = vld [vmem:[%s5262 + $0x10] sm:$0xf]
    %v5268 = vld [vmem:[%s5262 + $0x14] sm:$0xf]
    %v5269 = vld [vmem:[%s5262 + $0x18] sm:$0xf]
    %v5270 = vld [vmem:[%s5262 + $0x1c] sm:$0xf]
    %v5271 = vld [vmem:[%s5262 + $0x20] sm:$0xf]
    %v5272 = vld [vmem:[%s5262 + $0x24] sm:$0xf]
    %v5273 = vld [vmem:[%s5262 + $0x28] sm:$0xf]
    %v5274 = vld [vmem:[%s5262 + $0x2c] sm:$0xf]
    %v5275 = vld [vmem:[%s5262 + $0x30] sm:$0xf]
    %v5276 = vld [vmem:[%s5262 + $0x34] sm:$0xf]
    %v5277 = vld [vmem:[%s5262 + $0x38] sm:$0xf]
    %v5278 = vld [vmem:[%s5262 + $0x3c] sm:$0xf]
    %v5279 = vunpack.c.l.b16 %v5257
    %v5280 = vunpack.c.l.b16 %v5261
    %v5281 = vpack.c.b16 %v5059, %v5058
    %v5282 = vpack.c.b16 %v5061, %v5060
    %v5283 = vpack.c.b16 %v5063, %v5062
    %v5284 = vpack.c.b16 %v5279, %v5064
    %v5285 = vpack.c.b16 %v5067, %v5066
    %v5286 = vpack.c.b16 %v5069, %v5068
    %v5287 = vpack.c.b16 %v5071, %v5070
    %v5288 = vpack.c.b16 %v5280, %v5072
    %v5313 = vunpack.c.l.b16 %v5263
    %v5314 = vunpack.c.l.b16 %v5264
    %v5315 = vunpack.c.l.b16 %v5265
    %v5316 = vunpack.c.l.b16 %v5266
    %v5317 = vunpack.c.l.b16 %v5267
    %v5318 = vunpack.c.l.b16 %v5268
    %v5319 = vunpack.c.l.b16 %v5269
    %v5320 = vunpack.c.l.b16 %v5270
    %v5321 = vunpack.c.l.b16 %v5271
    %v5322 = vunpack.c.l.b16 %v5272
    %v5323 = vunpack.c.l.b16 %v5273
    %v5324 = vunpack.c.l.b16 %v5274
    %v5325 = vunpack.c.l.b16 %v5275
    %v5326 = vunpack.c.l.b16 %v5276
    %v5327 = vunpack.c.l.b16 %v5277
    %v5328 = vunpack.c.l.b16 %v5278
    %v5329 = vpack.c.b16 %v5314, %v5313
    %v5330 = vpack.c.b16 %v5316, %v5315
    %v5331 = vpack.c.b16 %v5318, %v5317
    %v5332 = vpack.c.b16 %v5320, %v5319
    %v5333 = vpack.c.b16 %v5322, %v5321
    %v5334 = vpack.c.b16 %v5324, %v5323
    %v5335 = vpack.c.b16 %v5326, %v5325
    %v5336 = vpack.c.b16 %v5328, %v5327
    %5345 = vmatprep.subr.bf16.mxu0 0
    %5346 = vmatpush1.bf16.msra.mxu0 %v5336
    %5347 = vmatprep.subr.bf16.mxu0 0
    %5348 = vmatpush1.bf16.msra.mxu0 %v5335
    %5349 = vmatprep.subr.bf16.mxu0 0
    %5350 = vmatpush1.bf16.msra.mxu0 %v5334
    %5351 = vmatprep.subr.bf16.mxu0 0
    %5352 = vmatpush1.bf16.msra.mxu0 %v5333
    %5353 = vmatprep.subr.bf16.mxu0 0
    %5354 = vmatpush1.bf16.msra.mxu0 %v5332
    %5355 = vmatprep.subr.bf16.mxu0 0
    %5356 = vmatpush1.bf16.msra.mxu0 %v5331
    %5357 = vmatprep.subr.bf16.mxu0 0
    %5358 = vmatpush1.bf16.msra.mxu0 %v5330
    %5359 = vmatprep.subr.bf16.mxu0 0
    %5360 = vmatpush1.bf16.msra.mxu0 %v5329
    %5361 = vmatprep.subr.bf16.mxu0 0
    %5362 = vmatpush2.bf16.msra.mxu0 0
    %5363 = vmatprep.subr.bf16.mxu0 0
    %5364 = vmatpush2.bf16.msra.mxu0 0
    %5365 = vmatprep.subr.bf16.mxu0 0
    %5366 = vmatpush2.bf16.msra.mxu0 0
    %5367 = vmatprep.subr.bf16.mxu0 0
    %5368 = vmatpush2.bf16.msra.mxu0 0
    %5369 = vmatprep.subr.bf16.mxu0 0
    %5370 = vmatpush2.bf16.msra.mxu0 0
    %5371 = vmatprep.subr.bf16.mxu0 0
    %5372 = vmatpush2.bf16.msra.mxu0 0
    %5373 = vmatprep.subr.bf16.mxu0 0
    %5374 = vmatpush2.bf16.msra.mxu0 0
    %5375 = vmatprep.subr.bf16.mxu0 0
    %5376 = vmatpush2.bf16.msra.mxu0 0
    %5377 = vmatprep.mubr.bf16.mxu0 0
    %5378 = vmatmul.mubr.bf16.gmra.mxu0 %v5281
    %v5379 = vpop.f32.mrf.mxu0
    %v5380 = vadd.f32 0.0, %v5379
    %v5381 = vpop.f32.mrf.mxu0
    %v5382 = vpop.f32.mrf.mxu0
    %v5383 = vadd.f32 0.0, %v5382
    %v5384 = vpop.f32.mrf.mxu0
    %5385 = vmatprep.mubr.bf16.mxu0 0
    %5386 = vmatmul.mubr.bf16.gmra.mxu0 %v5282
    %v5387 = vpop.f32.mrf.mxu0
    %v5388 = vadd.f32 0.0, %v5387
    %v5389 = vpop.f32.mrf.mxu0
    %v5390 = vpop.f32.mrf.mxu0
    %v5391 = vadd.f32 0.0, %v5390
    %v5392 = vpop.f32.mrf.mxu0
    %5393 = vmatprep.mubr.bf16.mxu0 0
    %5394 = vmatmul.mubr.bf16.gmra.mxu0 %v5283
    %v5395 = vpop.f32.mrf.mxu0
    %v5396 = vadd.f32 0.0, %v5395
    %v5397 = vpop.f32.mrf.mxu0
    %v5398 = vpop.f32.mrf.mxu0
    %v5399 = vadd.f32 0.0, %v5398
    %v5400 = vpop.f32.mrf.mxu0
    %5401 = vmatprep.mubr.bf16.mxu0 0
    %5402 = vmatmul.mubr.bf16.gmra.mxu0 %v5284
    %v5403 = vpop.f32.mrf.mxu0
    %v5404 = vadd.f32 0.0, %v5403
    %v5405 = vpop.f32.mrf.mxu0
    %v5406 = vpop.f32.mrf.mxu0
    %v5407 = vadd.f32 0.0, %v5406
    %v5408 = vpop.f32.mrf.mxu0
    %5409 = vmatprep.mubr.bf16.mxu0 0
    %5410 = vmatmul.mubr.bf16.gmra.mxu0 %v5285
    %v5411 = vpop.f32.mrf.mxu0
    %v5412 = vadd.f32 0.0, %v5411
    %v5413 = vpop.f32.mrf.mxu0
    %v5414 = vpop.f32.mrf.mxu0
    %v5415 = vadd.f32 0.0, %v5414
    %v5416 = vpop.f32.mrf.mxu0
    %5417 = vmatprep.mubr.bf16.mxu0 0
    %5418 = vmatmul.mubr.bf16.gmra.mxu0 %v5286
    %v5419 = vpop.f32.mrf.mxu0
    %v5420 = vadd.f32 0.0, %v5419
    %v5421 = vpop.f32.mrf.mxu0
    %v5422 = vpop.f32.mrf.mxu0
    %v5423 = vadd.f32 0.0, %v5422
    %v5424 = vpop.f32.mrf.mxu0
    %5425 = vmatprep.mubr.bf16.mxu0 0
    %5426 = vmatmul.mubr.bf16.gmra.mxu0 %v5287
    %v5427 = vpop.f32.mrf.mxu0
    %v5428 = vadd.f32 0.0, %v5427
    %v5429 = vpop.f32.mrf.mxu0
    %v5430 = vpop.f32.mrf.mxu0
    %v5431 = vadd.f32 0.0, %v5430
    %v5432 = vpop.f32.mrf.mxu0
    %5433 = vmatprep.mubr.bf16.mxu0 0
    %5434 = vmatmul.mubr.bf16.gmra.mxu0 %v5288
    %v5435 = vpop.f32.mrf.mxu0
    %v5436 = vadd.f32 0.0, %v5435
    %v5437 = vpop.f32.mrf.mxu0
    %v5438 = vpop.f32.mrf.mxu0
    %v5439 = vadd.f32 0.0, %v5438
    %v5440 = vpop.f32.mrf.mxu0
    %5441 = vdwg.mxu0
    %v5442 = vadd.f32 %v5234, %v5380
    %v5443 = vadd.f32 %v5235, %v5383
    %v5444 = vadd.f32 %v5236, %v5388
    %v5445 = vadd.f32 %v5237, %v5391
    %v5446 = vadd.f32 %v5238, %v5396
    %v5447 = vadd.f32 %v5239, %v5399
    %v5448 = vadd.f32 %v5240, %v5404
    %v5449 = vadd.f32 %v5241, %v5407
    %v5450 = vadd.f32 %v5242, %v5412
    %v5451 = vadd.f32 %v5243, %v5415
    %v5452 = vadd.f32 %v5244, %v5420
    %v5453 = vadd.f32 %v5245, %v5423
    %v5454 = vadd.f32 %v5246, %v5428
    %v5455 = vadd.f32 %v5247, %v5431
    %v5456 = vadd.f32 %v5248, %v5436
    %v5457 = vadd.f32 %v5249, %v5439
    %v5462 = vrot.slane %v4933, 5
    %v5463 = vrot.slane %v5462, 4
    %v5464 = vrot.slane %v4033, 5
    %v5465 = vsel %vm2379, %v5463, %v5464
    %v5466 = vrot.slane %v4943, 5
    %v5467 = vrot.slane %v5466, 4
    %v5468 = vrot.slane %v4053, 5
    %v5469 = vsel %vm2379, %v5467, %v5468
    %s5470 = scalar_lea.vmem [#allocation9], 512
    %v5471 = vld [vmem:[%s5470] sm:$0xf]
    %v5472 = vld [vmem:[%s5470 + $0x4] sm:$0xf]
    %v5473 = vld [vmem:[%s5470 + $0x8] sm:$0xf]
    %v5474 = vld [vmem:[%s5470 + $0xc] sm:$0xf]
    %v5475 = vld [vmem:[%s5470 + $0x10] sm:$0xf]
    %v5476 = vld [vmem:[%s5470 + $0x14] sm:$0xf]
    %v5477 = vld [vmem:[%s5470 + $0x18] sm:$0xf]
    %v5478 = vld [vmem:[%s5470 + $0x1c] sm:$0xf]
    %v5479 = vld [vmem:[%s5470 + $0x20] sm:$0xf]
    %v5480 = vld [vmem:[%s5470 + $0x24] sm:$0xf]
    %v5481 = vld [vmem:[%s5470 + $0x28] sm:$0xf]
    %v5482 = vld [vmem:[%s5470 + $0x2c] sm:$0xf]
    %v5483 = vld [vmem:[%s5470 + $0x30] sm:$0xf]
    %v5484 = vld [vmem:[%s5470 + $0x34] sm:$0xf]
    %v5485 = vld [vmem:[%s5470 + $0x38] sm:$0xf]
    %v5486 = vld [vmem:[%s5470 + $0x3c] sm:$0xf]
    %v5487 = vunpack.c.l.b16 %v5465
    %v5488 = vunpack.c.l.b16 %v5469
    %v5489 = vpack.c.b16 %v5487, %v5279
    %v5490 = vpack.c.b16 %v5488, %v5280
    %v5509 = vunpack.c.l.b16 %v5471
    %v5510 = vunpack.c.l.b16 %v5472
    %v5511 = vunpack.c.l.b16 %v5473
    %v5512 = vunpack.c.l.b16 %v5474
    %v5513 = vunpack.c.l.b16 %v5475
    %v5514 = vunpack.c.l.b16 %v5476
    %v5515 = vunpack.c.l.b16 %v5477
    %v5516 = vunpack.c.l.b16 %v5478
    %v5517 = vunpack.c.l.b16 %v5479
    %v5518 = vunpack.c.l.b16 %v5480
    %v5519 = vunpack.c.l.b16 %v5481
    %v5520 = vunpack.c.l.b16 %v5482
    %v5521 = vunpack.c.l.b16 %v5483
    %v5522 = vunpack.c.l.b16 %v5484
    %v5523 = vunpack.c.l.b16 %v5485
    %v5524 = vunpack.c.l.b16 %v5486
    %v5525 = vpack.c.b16 %v5510, %v5509
    %v5526 = vpack.c.b16 %v5512, %v5511
    %v5527 = vpack.c.b16 %v5514, %v5513
    %v5528 = vpack.c.b16 %v5516, %v5515
    %v5529 = vpack.c.b16 %v5518, %v5517
    %v5530 = vpack.c.b16 %v5520, %v5519
    %v5531 = vpack.c.b16 %v5522, %v5521
    %v5532 = vpack.c.b16 %v5524, %v5523
    %5541 = vmatprep.subr.bf16.mxu0 0
    %5542 = vmatpush1.bf16.msra.mxu0 %v5532
    %5543 = vmatprep.subr.bf16.mxu0 0
    %5544 = vmatpush1.bf16.msra.mxu0 %v5531
    %5545 = vmatprep.subr.bf16.mxu0 0
    %5546 = vmatpush1.bf16.msra.mxu0 %v5530
    %5547 = vmatprep.subr.bf16.mxu0 0
    %5548 = vmatpush1.bf16.msra.mxu0 %v5529
    %5549 = vmatprep.subr.bf16.mxu0 0
    %5550 = vmatpush1.bf16.msra.mxu0 %v5528
    %5551 = vmatprep.subr.bf16.mxu0 0
    %5552 = vmatpush1.bf16.msra.mxu0 %v5527
    %5553 = vmatprep.subr.bf16.mxu0 0
    %5554 = vmatpush1.bf16.msra.mxu0 %v5526
    %5555 = vmatprep.subr.bf16.mxu0 0
    %5556 = vmatpush1.bf16.msra.mxu0 %v5525
    %5557 = vmatprep.subr.bf16.mxu0 0
    %5558 = vmatpush2.bf16.msra.mxu0 0
    %5559 = vmatprep.subr.bf16.mxu0 0
    %5560 = vmatpush2.bf16.msra.mxu0 0
    %5561 = vmatprep.subr.bf16.mxu0 0
    %5562 = vmatpush2.bf16.msra.mxu0 0
    %5563 = vmatprep.subr.bf16.mxu0 0
    %5564 = vmatpush2.bf16.msra.mxu0 0
    %5565 = vmatprep.subr.bf16.mxu0 0
    %5566 = vmatpush2.bf16.msra.mxu0 0
    %5567 = vmatprep.subr.bf16.mxu0 0
    %5568 = vmatpush2.bf16.msra.mxu0 0
    %5569 = vmatprep.subr.bf16.mxu0 0
    %5570 = vmatpush2.bf16.msra.mxu0 0
    %5571 = vmatprep.subr.bf16.mxu0 0
    %5572 = vmatpush2.bf16.msra.mxu0 0
    %5573 = vmatprep.mubr.bf16.mxu0 0
    %5574 = vmatmul.mubr.bf16.gmra.mxu0 %v5074
    %v5575 = vpop.f32.mrf.mxu0
    %v5576 = vadd.f32 0.0, %v5575
    %v5577 = vpop.f32.mrf.mxu0
    %v5578 = vpop.f32.mrf.mxu0
    %v5579 = vadd.f32 0.0, %v5578
    %v5580 = vpop.f32.mrf.mxu0
    %5581 = vmatprep.mubr.bf16.mxu0 0
    %5582 = vmatmul.mubr.bf16.gmra.mxu0 %v5075
    %v5583 = vpop.f32.mrf.mxu0
    %v5584 = vadd.f32 0.0, %v5583
    %v5585 = vpop.f32.mrf.mxu0
    %v5586 = vpop.f32.mrf.mxu0
    %v5587 = vadd.f32 0.0, %v5586
    %v5588 = vpop.f32.mrf.mxu0
    %5589 = vmatprep.mubr.bf16.mxu0 0
    %5590 = vmatmul.mubr.bf16.gmra.mxu0 %v5076
    %v5591 = vpop.f32.mrf.mxu0
    %v5592 = vadd.f32 0.0, %v5591
    %v5593 = vpop.f32.mrf.mxu0
    %v5594 = vpop.f32.mrf.mxu0
    %v5595 = vadd.f32 0.0, %v5594
    %v5596 = vpop.f32.mrf.mxu0
    %5597 = vmatprep.mubr.bf16.mxu0 0
    %5598 = vmatmul.mubr.bf16.gmra.mxu0 %v5489
    %v5599 = vpop.f32.mrf.mxu0
    %v5600 = vadd.f32 0.0, %v5599
    %v5601 = vpop.f32.mrf.mxu0
    %v5602 = vpop.f32.mrf.mxu0
    %v5603 = vadd.f32 0.0, %v5602
    %v5604 = vpop.f32.mrf.mxu0
    %5605 = vmatprep.mubr.bf16.mxu0 0
    %5606 = vmatmul.mubr.bf16.gmra.mxu0 %v5078
    %v5607 = vpop.f32.mrf.mxu0
    %v5608 = vadd.f32 0.0, %v5607
    %v5609 = vpop.f32.mrf.mxu0
    %v5610 = vpop.f32.mrf.mxu0
    %v5611 = vadd.f32 0.0, %v5610
    %v5612 = vpop.f32.mrf.mxu0
    %5613 = vmatprep.mubr.bf16.mxu0 0
    %5614 = vmatmul.mubr.bf16.gmra.mxu0 %v5079
    %v5615 = vpop.f32.mrf.mxu0
    %v5616 = vadd.f32 0.0, %v5615
    %v5617 = vpop.f32.mrf.mxu0
    %v5618 = vpop.f32.mrf.mxu0
    %v5619 = vadd.f32 0.0, %v5618
    %v5620 = vpop.f32.mrf.mxu0
    %5621 = vmatprep.mubr.bf16.mxu0 0
    %5622 = vmatmul.mubr.bf16.gmra.mxu0 %v5080
    %v5623 = vpop.f32.mrf.mxu0
    %v5624 = vadd.f32 0.0, %v5623
    %v5625 = vpop.f32.mrf.mxu0
    %v5626 = vpop.f32.mrf.mxu0
    %v5627 = vadd.f32 0.0, %v5626
    %v5628 = vpop.f32.mrf.mxu0
    %5629 = vmatprep.mubr.bf16.mxu0 0
    %5630 = vmatmul.mubr.bf16.gmra.mxu0 %v5490
    %v5631 = vpop.f32.mrf.mxu0
    %v5632 = vadd.f32 0.0, %v5631
    %v5633 = vpop.f32.mrf.mxu0
    %v5634 = vpop.f32.mrf.mxu0
    %v5635 = vadd.f32 0.0, %v5634
    %v5636 = vpop.f32.mrf.mxu0
    %5637 = vdwg.mxu0
    %v5638 = vadd.f32 %v5442, %v5576
    %v5639 = vadd.f32 %v5443, %v5579
    %v5640 = vadd.f32 %v5444, %v5584
    %v5641 = vadd.f32 %v5445, %v5587
    %v5642 = vadd.f32 %v5446, %v5592
    %v5643 = vadd.f32 %v5447, %v5595
    %v5644 = vadd.f32 %v5448, %v5600
    %v5645 = vadd.f32 %v5449, %v5603
    %v5646 = vadd.f32 %v5450, %v5608
    %v5647 = vadd.f32 %v5451, %v5611
    %v5648 = vadd.f32 %v5452, %v5616
    %v5649 = vadd.f32 %v5453, %v5619
    %v5650 = vadd.f32 %v5454, %v5624
    %v5651 = vadd.f32 %v5455, %v5627
    %v5652 = vadd.f32 %v5456, %v5632
    %v5653 = vadd.f32 %v5457, %v5635
    %v5654 = vld [vmem:[%s6] sm:$0x1]
    %v5656 = vlaneseq
    %v5657 = vshrl.u32 %v5656, 7
    %v5658 = vsub.s32 0, %v5657
    %v5659 = vrot.slane %v5654, %v5658
    %v5661 = vadd.f32 %v5638, %v5659
    %v5662 = vadd.f32 %v5639, %v5659
    %v5663 = vadd.f32 %v5640, %v5659
    %v5664 = vadd.f32 %v5641, %v5659
    %v5665 = vadd.f32 %v5642, %v5659
    %v5666 = vadd.f32 %v5643, %v5659
    %v5667 = vadd.f32 %v5644, %v5659
    %v5668 = vadd.f32 %v5645, %v5659
    %v5669 = vadd.f32 %v5646, %v5659
    %v5670 = vadd.f32 %v5647, %v5659
    %v5671 = vadd.f32 %v5648, %v5659
    %v5672 = vadd.f32 %v5649, %v5659
    %v5673 = vadd.f32 %v5650, %v5659
    %v5674 = vadd.f32 %v5651, %v5659
    %v5675 = vadd.f32 %v5652, %v5659
    %v5676 = vadd.f32 %v5653, %v5659
    %v5677 = vadd.f32 %v5661, %v430
    %v5678 = vadd.f32 %v5662, %v433
    %v5679 = vadd.f32 %v5663, %v438
    %v5680 = vadd.f32 %v5664, %v441
    %v5681 = vadd.f32 %v5665, %v446
    %v5682 = vadd.f32 %v5666, %v449
    %v5683 = vadd.f32 %v5667, %v454
    %v5684 = vadd.f32 %v5668, %v457
    %v5685 = vadd.f32 %v5669, %v462
    %v5686 = vadd.f32 %v5670, %v465
    %v5687 = vadd.f32 %v5671, %v470
    %v5688 = vadd.f32 %v5672, %v473
    %v5689 = vadd.f32 %v5673, %v478
    %v5690 = vadd.f32 %v5674, %v481
    %v5691 = vadd.f32 %v5675, %v486
    %v5692 = vadd.f32 %v5676, %v489
    %v5693 = vpack.c.bf16 %v5677, %v5677
    %v5694 = vpack.c.bf16 %v5678, %v5678
    %v5695 = vpack.c.bf16 %v5679, %v5679
    %v5696 = vpack.c.bf16 %v5680, %v5680
    %v5697 = vpack.c.bf16 %v5681, %v5681
    %v5698 = vpack.c.bf16 %v5682, %v5682
    %v5699 = vpack.c.bf16 %v5683, %v5683
    %v5700 = vpack.c.bf16 %v5684, %v5684
    %v5701 = vpack.c.bf16 %v5685, %v5685
    %v5702 = vpack.c.bf16 %v5686, %v5686
    %v5703 = vpack.c.bf16 %v5687, %v5687
    %v5704 = vpack.c.bf16 %v5688, %v5688
    %v5705 = vpack.c.bf16 %v5689, %v5689
    %v5706 = vpack.c.bf16 %v5690, %v5690
    %v5707 = vpack.c.bf16 %v5691, %v5691
    %v5708 = vpack.c.bf16 %v5692, %v5692
    %v5725 = vunpack.c.l.b16 %v5693
    %v5726 = vunpack.c.l.b16 %v5694
    %v5727 = vunpack.c.l.b16 %v5695
    %v5728 = vunpack.c.l.b16 %v5696
    %v5729 = vunpack.c.l.b16 %v5697
    %v5730 = vunpack.c.l.b16 %v5698
    %v5731 = vunpack.c.l.b16 %v5699
    %v5732 = vunpack.c.l.b16 %v5700
    %v5733 = vunpack.c.l.b16 %v5701
    %v5734 = vunpack.c.l.b16 %v5702
    %v5735 = vunpack.c.l.b16 %v5703
    %v5736 = vunpack.c.l.b16 %v5704
    %v5737 = vunpack.c.l.b16 %v5705
    %v5738 = vunpack.c.l.b16 %v5706
    %v5739 = vunpack.c.l.b16 %v5707
    %v5740 = vunpack.c.l.b16 %v5708
    %v5741 = vpack.c.b16 %v5725, %v5725
    %v5742 = vpack.c.b16 %v5726, %v5726
    %v5743 = vpack.c.b16 %v5727, %v5727
    %v5744 = vpack.c.b16 %v5728, %v5728
    %v5745 = vpack.c.b16 %v5729, %v5729
    %v5746 = vpack.c.b16 %v5730, %v5730
    %v5747 = vpack.c.b16 %v5731, %v5731
    %v5748 = vpack.c.b16 %v5732, %v5732
    %v5749 = vpack.c.b16 %v5733, %v5733
    %v5750 = vpack.c.b16 %v5734, %v5734
    %v5751 = vpack.c.b16 %v5735, %v5735
    %v5752 = vpack.c.b16 %v5736, %v5736
    %v5753 = vpack.c.b16 %v5737, %v5737
    %v5754 = vpack.c.b16 %v5738, %v5738
    %v5755 = vpack.c.b16 %v5739, %v5739
    %v5756 = vpack.c.b16 %v5740, %v5740
    %v5758 = vshrl.u32 %v5741, 16
    %v5760 = vrot.slane %v5758, 7
    %v5761 = vshll.u32 %v5741, 16
    %v5763 = vor.u32 %v5760, %v5761
    %v5764 = vrot.slane %v5760, 4
    %v5766 = vshrl.u32 %v5742, 16
    %v5768 = vrot.slane %v5766, 7
    %v5769 = vshll.u32 %v5742, 16
    %v5771 = vor.u32 %v5768, %v5769
    %v5772 = vrot.slane %v5768, 4
    %v5774 = vshrl.u32 %v5743, 16
    %v5776 = vrot.slane %v5774, 7
    %v5777 = vshll.u32 %v5743, 16
    %v5779 = vor.u32 %v5776, %v5777
    %v5780 = vrot.slane %v5776, 4
    %v5782 = vshrl.u32 %v5744, 16
    %v5784 = vrot.slane %v5782, 7
    %v5785 = vshll.u32 %v5744, 16
    %v5787 = vor.u32 %v5784, %v5785
    %v5788 = vrot.slane %v5784, 4
    %v5790 = vshrl.u32 %v5745, 16
    %v5792 = vrot.slane %v5790, 7
    %v5793 = vshll.u32 %v5745, 16
    %v5795 = vor.u32 %v5792, %v5793
    %v5796 = vrot.slane %v5792, 4
    %v5798 = vshrl.u32 %v5746, 16
    %v5800 = vrot.slane %v5798, 7
    %v5801 = vshll.u32 %v5746, 16
    %v5803 = vor.u32 %v5800, %v5801
    %v5804 = vrot.slane %v5800, 4
    %v5806 = vshrl.u32 %v5747, 16
    %v5808 = vrot.slane %v5806, 7
    %v5809 = vshll.u32 %v5747, 16
    %v5811 = vor.u32 %v5808, %v5809
    %v5812 = vrot.slane %v5808, 4
    %v5814 = vshrl.u32 %v5748, 16
    %v5816 = vrot.slane %v5814, 7
    %v5817 = vshll.u32 %v5748, 16
    %v5819 = vor.u32 %v5816, %v5817
    %v5820 = vrot.slane %v5816, 4
    %v5822 = vshrl.u32 %v5749, 16
    %v5824 = vrot.slane %v5822, 7
    %v5825 = vshll.u32 %v5749, 16
    %v5827 = vor.u32 %v5824, %v5825
    %v5828 = vrot.slane %v5824, 4
    %v5830 = vshrl.u32 %v5750, 16
    %v5832 = vrot.slane %v5830, 7
    %v5833 = vshll.u32 %v5750, 16
    %v5835 = vor.u32 %v5832, %v5833
    %v5836 = vrot.slane %v5832, 4
    %v5838 = vshrl.u32 %v5751, 16
    %v5840 = vrot.slane %v5838, 7
    %v5841 = vshll.u32 %v5751, 16
    %v5843 = vor.u32 %v5840, %v5841
    %v5844 = vrot.slane %v5840, 4
    %v5846 = vshrl.u32 %v5752, 16
    %v5848 = vrot.slane %v5846, 7
    %v5849 = vshll.u32 %v5752, 16
    %v5851 = vor.u32 %v5848, %v5849
    %v5852 = vrot.slane %v5848, 4
    %v5854 = vshrl.u32 %v5753, 16
    %v5856 = vrot.slane %v5854, 7
    %v5857 = vshll.u32 %v5753, 16
    %v5859 = vor.u32 %v5856, %v5857
    %v5860 = vrot.slane %v5856, 4
    %v5862 = vshrl.u32 %v5754, 16
    %v5864 = vrot.slane %v5862, 7
    %v5865 = vshll.u32 %v5754, 16
    %v5867 = vor.u32 %v5864, %v5865
    %v5868 = vrot.slane %v5864, 4
    %v5870 = vshrl.u32 %v5755, 16
    %v5872 = vrot.slane %v5870, 7
    %v5873 = vshll.u32 %v5755, 16
    %v5875 = vor.u32 %v5872, %v5873
    %v5876 = vrot.slane %v5872, 4
    %v5878 = vshrl.u32 %v5756, 16
    %v5880 = vrot.slane %v5878, 7
    %v5881 = vshll.u32 %v5756, 16
    %v5883 = vor.u32 %v5880, %v5881
    %v5884 = vrot.slane %v5880, 4
    %v5917 = vld [vmem:[%s716] sm:$0xf]
    %v5918 = vsel %vm718, %v5763, %v5917
    %5919 = vst [vmem:[%s716] sm:$0xf] %v5918
    %v5920 = vld [vmem:[%s716 + $0x4] sm:$0x1]
    %v5921 = vsel %vm152, %v5764, %v5920
    %5922 = vst [vmem:[%s716 + $0x4] sm:$0x1] %v5921
    %v5923 = vld [vmem:[%s716 + $0x8] sm:$0xf]
    %v5924 = vsel %vm718, %v5771, %v5923
    %5925 = vst [vmem:[%s716 + $0x8] sm:$0xf] %v5924
    %v5926 = vld [vmem:[%s716 + $0xc] sm:$0x1]
    %v5927 = vsel %vm152, %v5772, %v5926
    %5928 = vst [vmem:[%s716 + $0xc] sm:$0x1] %v5927
    %v5929 = vld [vmem:[%s716 + $0x10] sm:$0xf]
    %v5930 = vsel %vm718, %v5779, %v5929
    %5931 = vst [vmem:[%s716 + $0x10] sm:$0xf] %v5930
    %v5932 = vld [vmem:[%s716 + $0x14] sm:$0x1]
    %v5933 = vsel %vm152, %v5780, %v5932
    %5934 = vst [vmem:[%s716 + $0x14] sm:$0x1] %v5933
    %v5935 = vld [vmem:[%s716 + $0x18] sm:$0xf]
    %v5936 = vsel %vm718, %v5787, %v5935
    %5937 = vst [vmem:[%s716 + $0x18] sm:$0xf] %v5936
    %v5938 = vld [vmem:[%s716 + $0x1c] sm:$0x1]
    %v5939 = vsel %vm152, %v5788, %v5938
    %5940 = vst [vmem:[%s716 + $0x1c] sm:$0x1] %v5939
    %v5941 = vld [vmem:[%s716 + $0x20] sm:$0xf]
    %v5942 = vsel %vm718, %v5795, %v5941
    %5943 = vst [vmem:[%s716 + $0x20] sm:$0xf] %v5942
    %v5944 = vld [vmem:[%s716 + $0x24] sm:$0x1]
    %v5945 = vsel %vm152, %v5796, %v5944
    %5946 = vst [vmem:[%s716 + $0x24] sm:$0x1] %v5945
    %v5947 = vld [vmem:[%s716 + $0x28] sm:$0xf]
    %v5948 = vsel %vm718, %v5803, %v5947
    %5949 = vst [vmem:[%s716 + $0x28] sm:$0xf] %v5948
    %v5950 = vld [vmem:[%s716 + $0x2c] sm:$0x1]
    %v5951 = vsel %vm152, %v5804, %v5950
    %5952 = vst [vmem:[%s716 + $0x2c] sm:$0x1] %v5951
    %v5953 = vld [vmem:[%s716 + $0x30] sm:$0xf]
    %v5954 = vsel %vm718, %v5811, %v5953
    %5955 = vst [vmem:[%s716 + $0x30] sm:$0xf] %v5954
    %v5956 = vld [vmem:[%s716 + $0x34] sm:$0x1]
    %v5957 = vsel %vm152, %v5812, %v5956
    %5958 = vst [vmem:[%s716 + $0x34] sm:$0x1] %v5957
    %v5959 = vld [vmem:[%s716 + $0x38] sm:$0xf]
    %v5960 = vsel %vm718, %v5819, %v5959
    %5961 = vst [vmem:[%s716 + $0x38] sm:$0xf] %v5960
    %v5962 = vld [vmem:[%s716 + $0x3c] sm:$0x1]
    %v5963 = vsel %vm152, %v5820, %v5962
    %5964 = vst [vmem:[%s716 + $0x3c] sm:$0x1] %v5963
    %v5965 = vld [vmem:[%s716 + $0x50] sm:$0xf]
    %v5966 = vsel %vm718, %v5827, %v5965
    %5967 = vst [vmem:[%s716 + $0x50] sm:$0xf] %v5966
    %v5968 = vld [vmem:[%s716 + $0x54] sm:$0x1]
    %v5969 = vsel %vm152, %v5828, %v5968
    %5970 = vst [vmem:[%s716 + $0x54] sm:$0x1] %v5969
    %v5971 = vld [vmem:[%s716 + $0x58] sm:$0xf]
    %v5972 = vsel %vm718, %v5835, %v5971
    %5973 = vst [vmem:[%s716 + $0x58] sm:$0xf] %v5972
    %v5974 = vld [vmem:[%s716 + $0x5c] sm:$0x1]
    %v5975 = vsel %vm152, %v5836, %v5974
    %5976 = vst [vmem:[%s716 + $0x5c] sm:$0x1] %v5975
    %v5977 = vld [vmem:[%s716 + $0x60] sm:$0xf]
    %v5978 = vsel %vm718, %v5843, %v5977
    %5979 = vst [vmem:[%s716 + $0x60] sm:$0xf] %v5978
    %v5980 = vld [vmem:[%s716 + $0x64] sm:$0x1]
    %v5981 = vsel %vm152, %v5844, %v5980
    %5982 = vst [vmem:[%s716 + $0x64] sm:$0x1] %v5981
    %v5983 = vld [vmem:[%s716 + $0x68] sm:$0xf]
    %v5984 = vsel %vm718, %v5851, %v5983
    %5985 = vst [vmem:[%s716 + $0x68] sm:$0xf] %v5984
    %v5986 = vld [vmem:[%s716 + $0x6c] sm:$0x1]
    %v5987 = vsel %vm152, %v5852, %v5986
    %5988 = vst [vmem:[%s716 + $0x6c] sm:$0x1] %v5987
    %v5989 = vld [vmem:[%s716 + $0x70] sm:$0xf]
    %v5990 = vsel %vm718, %v5859, %v5989
    %5991 = vst [vmem:[%s716 + $0x70] sm:$0xf] %v5990
    %v5992 = vld [vmem:[%s716 + $0x74] sm:$0x1]
    %v5993 = vsel %vm152, %v5860, %v5992
    %5994 = vst [vmem:[%s716 + $0x74] sm:$0x1] %v5993
    %v5995 = vld [vmem:[%s716 + $0x78] sm:$0xf]
    %v5996 = vsel %vm718, %v5867, %v5995
    %5997 = vst [vmem:[%s716 + $0x78] sm:$0xf] %v5996
    %v5998 = vld [vmem:[%s716 + $0x7c] sm:$0x1]
    %v5999 = vsel %vm152, %v5868, %v5998
    %6000 = vst [vmem:[%s716 + $0x7c] sm:$0x1] %v5999
    %v6001 = vld [vmem:[%s716 + $0x80] sm:$0xf]
    %v6002 = vsel %vm718, %v5875, %v6001
    %6003 = vst [vmem:[%s716 + $0x80] sm:$0xf] %v6002
    %v6004 = vld [vmem:[%s716 + $0x84] sm:$0x1]
    %v6005 = vsel %vm152, %v5876, %v6004
    %6006 = vst [vmem:[%s716 + $0x84] sm:$0x1] %v6005
    %v6007 = vld [vmem:[%s716 + $0x88] sm:$0xf]
    %v6008 = vsel %vm718, %v5883, %v6007
    %6009 = vst [vmem:[%s716 + $0x88] sm:$0xf] %v6008
    %v6010 = vld [vmem:[%s716 + $0x8c] sm:$0x1]
    %v6011 = vsel %vm152, %v5884, %v6010
    %6012 = vst [vmem:[%s716 + $0x8c] sm:$0x1] %v6011
    %v6013 = vld [vmem:[#allocation2] sm:$0xf]
    %v6014 = vld [vmem:[#allocation2 + $0x8] sm:$0xf]
    %v6015 = vld [vmem:[#allocation2 + $0x10] sm:$0xf]
    %v6016 = vld [vmem:[#allocation2 + $0x18] sm:$0xf]
    %v6017 = vld [vmem:[#allocation2 + $0x20] sm:$0xf]
    %v6018 = vld [vmem:[#allocation2 + $0x28] sm:$0xf]
    %v6019 = vld [vmem:[#allocation2 + $0x30] sm:$0xf]
    %v6020 = vld [vmem:[#allocation2 + $0x38] sm:$0xf]
    %v6021 = vld [vmem:[#allocation2 + $0x40] sm:$0xf]
    %v6022 = vld [vmem:[#allocation2 + $0x48] sm:$0xf]
    %v6023 = vld [vmem:[#allocation2 + $0x50] sm:$0xf]
    %v6024 = vld [vmem:[#allocation2 + $0x58] sm:$0xf]
    %v6025 = vld [vmem:[#allocation2 + $0x60] sm:$0xf]
    %v6026 = vld [vmem:[#allocation2 + $0x68] sm:$0xf]
    %v6027 = vld [vmem:[#allocation2 + $0x70] sm:$0xf]
    %v6028 = vld [vmem:[#allocation2 + $0x78] sm:$0xf]
    %v6029 = vld [vmem:[#allocation2 + $0x80] sm:$0xf]
    %v6030 = vld [vmem:[#allocation2 + $0x88] sm:$0xf]
    %v6031 = vld [vmem:[#allocation2 + $0x90] sm:$0xf]
    %v6032 = vld [vmem:[#allocation2 + $0x98] sm:$0xf]
    %v6033 = vld [vmem:[#allocation11] sm:$0xf]
    %v6034 = vld [vmem:[#allocation11 + $0x4] sm:$0xf]
    %v6035 = vld [vmem:[#allocation11 + $0x8] sm:$0xf]
    %v6036 = vld [vmem:[#allocation11 + $0xc] sm:$0xf]
    %v6037 = vld [vmem:[#allocation11 + $0x10] sm:$0xf]
    %v6038 = vld [vmem:[#allocation11 + $0x14] sm:$0xf]
    %v6039 = vld [vmem:[#allocation11 + $0x18] sm:$0xf]
    %v6040 = vld [vmem:[#allocation11 + $0x1c] sm:$0xf]
    %v6041 = vld [vmem:[#allocation11 + $0x20] sm:$0xf]
    %v6042 = vld [vmem:[#allocation11 + $0x24] sm:$0xf]
    %v6043 = vld [vmem:[#allocation11 + $0x28] sm:$0xf]
    %v6044 = vld [vmem:[#allocation11 + $0x2c] sm:$0xf]
    %v6045 = vld [vmem:[#allocation11 + $0x30] sm:$0xf]
    %v6046 = vld [vmem:[#allocation11 + $0x34] sm:$0xf]
    %v6047 = vld [vmem:[#allocation11 + $0x38] sm:$0xf]
    %v6048 = vld [vmem:[#allocation11 + $0x3c] sm:$0xf]
    %s6049 = scalar_lea.vmem [#allocation11], 192
    %v6050 = vld [vmem:[%s6049] sm:$0xf]
    %v6051 = vld [vmem:[%s6049 + $0x4] sm:$0xf]
    %v6052 = vld [vmem:[%s6049 + $0x8] sm:$0xf]
    %v6053 = vld [vmem:[%s6049 + $0xc] sm:$0xf]
    %v6054 = vld [vmem:[%s6049 + $0x10] sm:$0xf]
    %v6055 = vld [vmem:[%s6049 + $0x14] sm:$0xf]
    %v6056 = vld [vmem:[%s6049 + $0x18] sm:$0xf]
    %v6057 = vld [vmem:[%s6049 + $0x1c] sm:$0xf]
    %v6058 = vld [vmem:[%s6049 + $0x20] sm:$0xf]
    %v6059 = vld [vmem:[%s6049 + $0x24] sm:$0xf]
    %v6060 = vld [vmem:[%s6049 + $0x28] sm:$0xf]
    %v6061 = vld [vmem:[%s6049 + $0x2c] sm:$0xf]
    %v6062 = vld [vmem:[%s6049 + $0x30] sm:$0xf]
    %v6063 = vld [vmem:[%s6049 + $0x34] sm:$0xf]
    %v6064 = vld [vmem:[%s6049 + $0x38] sm:$0xf]
    %v6065 = vld [vmem:[%s6049 + $0x3c] sm:$0xf]
    %v6082 = vunpack.c.l.b16 %v6014
    %v6083 = vunpack.c.l.b16 %v6015
    %v6084 = vunpack.c.l.b16 %v6016
    %v6085 = vunpack.c.l.b16 %v6017
    %v6086 = vunpack.c.l.b16 %v6018
    %v6087 = vunpack.c.l.b16 %v6019
    %v6088 = vunpack.c.l.b16 %v6020
    %v6089 = vunpack.c.l.b16 %v6021
    %v6090 = vunpack.c.l.b16 %v6024
    %v6091 = vunpack.c.l.b16 %v6025
    %v6092 = vunpack.c.l.b16 %v6026
    %v6093 = vunpack.c.l.b16 %v6027
    %v6094 = vunpack.c.l.b16 %v6028
    %v6095 = vunpack.c.l.b16 %v6029
    %v6096 = vunpack.c.l.b16 %v6030
    %v6097 = vunpack.c.l.b16 %v6031
    %v6098 = vpack.c.b16 %v6083, %v6082
    %v6099 = vpack.c.b16 %v6085, %v6084
    %v6100 = vpack.c.b16 %v6087, %v6086
    %v6101 = vpack.c.b16 %v6089, %v6088
    %v6102 = vpack.c.b16 %v6091, %v6090
    %v6103 = vpack.c.b16 %v6093, %v6092
    %v6104 = vpack.c.b16 %v6095, %v6094
    %v6105 = vpack.c.b16 %v6097, %v6096
    %v6130 = vunpack.c.l.b16 %v6050
    %v6131 = vunpack.c.l.b16 %v6051
    %v6132 = vunpack.c.l.b16 %v6052
    %v6133 = vunpack.c.l.b16 %v6053
    %v6134 = vunpack.c.l.b16 %v6054
    %v6135 = vunpack.c.l.b16 %v6055
    %v6136 = vunpack.c.l.b16 %v6056
    %v6137 = vunpack.c.l.b16 %v6057
    %v6138 = vunpack.c.l.b16 %v6058
    %v6139 = vunpack.c.l.b16 %v6059
    %v6140 = vunpack.c.l.b16 %v6060
    %v6141 = vunpack.c.l.b16 %v6061
    %v6142 = vunpack.c.l.b16 %v6062
    %v6143 = vunpack.c.l.b16 %v6063
    %v6144 = vunpack.c.l.b16 %v6064
    %v6145 = vunpack.c.l.b16 %v6065
    %v6146 = vpack.c.b16 %v6131, %v6130
    %v6147 = vpack.c.b16 %v6133, %v6132
    %v6148 = vpack.c.b16 %v6135, %v6134
    %v6149 = vpack.c.b16 %v6137, %v6136
    %v6150 = vpack.c.b16 %v6139, %v6138
    %v6151 = vpack.c.b16 %v6141, %v6140
    %v6152 = vpack.c.b16 %v6143, %v6142
    %v6153 = vpack.c.b16 %v6145, %v6144
    %6162 = vmatprep.subr.bf16.mxu0 0
    %6163 = vmatpush1.bf16.msra.mxu0 %v6153
    %6164 = vmatprep.subr.bf16.mxu0 0
    %6165 = vmatpush1.bf16.msra.mxu0 %v6152
    %6166 = vmatprep.subr.bf16.mxu0 0
    %6167 = vmatpush1.bf16.msra.mxu0 %v6151
    %6168 = vmatprep.subr.bf16.mxu0 0
    %6169 = vmatpush1.bf16.msra.mxu0 %v6150
    %6170 = vmatprep.subr.bf16.mxu0 0
    %6171 = vmatpush1.bf16.msra.mxu0 %v6149
    %6172 = vmatprep.subr.bf16.mxu0 0
    %6173 = vmatpush1.bf16.msra.mxu0 %v6148
    %6174 = vmatprep.subr.bf16.mxu0 0
    %6175 = vmatpush1.bf16.msra.mxu0 %v6147
    %6176 = vmatprep.subr.bf16.mxu0 0
    %6177 = vmatpush1.bf16.msra.mxu0 %v6146
    %6178 = vmatprep.subr.bf16.mxu0 0
    %6179 = vmatpush2.bf16.msra.mxu0 0
    %6180 = vmatprep.subr.bf16.mxu0 0
    %6181 = vmatpush2.bf16.msra.mxu0 0
    %6182 = vmatprep.subr.bf16.mxu0 0
    %6183 = vmatpush2.bf16.msra.mxu0 0
    %6184 = vmatprep.subr.bf16.mxu0 0
    %6185 = vmatpush2.bf16.msra.mxu0 0
    %6186 = vmatprep.subr.bf16.mxu0 0
    %6187 = vmatpush2.bf16.msra.mxu0 0
    %6188 = vmatprep.subr.bf16.mxu0 0
    %6189 = vmatpush2.bf16.msra.mxu0 0
    %6190 = vmatprep.subr.bf16.mxu0 0
    %6191 = vmatpush2.bf16.msra.mxu0 0
    %6192 = vmatprep.subr.bf16.mxu0 0
    %6193 = vmatpush2.bf16.msra.mxu0 0
    %6194 = vmatprep.mubr.bf16.mxu0 0
    %6195 = vmatmul.mubr.bf16.gmra.mxu0 %v6098
    %v6196 = vpop.f32.mrf.mxu0
    %v6197 = vadd.f32 0.0, %v6196
    %v6198 = vpop.f32.mrf.mxu0
    %v6199 = vpop.f32.mrf.mxu0
    %v6200 = vadd.f32 0.0, %v6199
    %v6201 = vpop.f32.mrf.mxu0
    %6202 = vmatprep.mubr.bf16.mxu0 0
    %6203 = vmatmul.mubr.bf16.gmra.mxu0 %v6099
    %v6204 = vpop.f32.mrf.mxu0
    %v6205 = vadd.f32 0.0, %v6204
    %v6206 = vpop.f32.mrf.mxu0
    %v6207 = vpop.f32.mrf.mxu0
    %v6208 = vadd.f32 0.0, %v6207
    %v6209 = vpop.f32.mrf.mxu0
    %6210 = vmatprep.mubr.bf16.mxu0 0
    %6211 = vmatmul.mubr.bf16.gmra.mxu0 %v6100
    %v6212 = vpop.f32.mrf.mxu0
    %v6213 = vadd.f32 0.0, %v6212
    %v6214 = vpop.f32.mrf.mxu0
    %v6215 = vpop.f32.mrf.mxu0
    %v6216 = vadd.f32 0.0, %v6215
    %v6217 = vpop.f32.mrf.mxu0
    %6218 = vmatprep.mubr.bf16.mxu0 0
    %6219 = vmatmul.mubr.bf16.gmra.mxu0 %v6101
    %v6220 = vpop.f32.mrf.mxu0
    %v6221 = vadd.f32 0.0, %v6220
    %v6222 = vpop.f32.mrf.mxu0
    %v6223 = vpop.f32.mrf.mxu0
    %v6224 = vadd.f32 0.0, %v6223
    %v6225 = vpop.f32.mrf.mxu0
    %6226 = vmatprep.mubr.bf16.mxu0 0
    %6227 = vmatmul.mubr.bf16.gmra.mxu0 %v6102
    %v6228 = vpop.f32.mrf.mxu0
    %v6229 = vadd.f32 0.0, %v6228
    %v6230 = vpop.f32.mrf.mxu0
    %v6231 = vpop.f32.mrf.mxu0
    %v6232 = vadd.f32 0.0, %v6231
    %v6233 = vpop.f32.mrf.mxu0
    %6234 = vmatprep.mubr.bf16.mxu0 0
    %6235 = vmatmul.mubr.bf16.gmra.mxu0 %v6103
    %v6236 = vpop.f32.mrf.mxu0
    %v6237 = vadd.f32 0.0, %v6236
    %v6238 = vpop.f32.mrf.mxu0
    %v6239 = vpop.f32.mrf.mxu0
    %v6240 = vadd.f32 0.0, %v6239
    %v6241 = vpop.f32.mrf.mxu0
    %6242 = vmatprep.mubr.bf16.mxu0 0
    %6243 = vmatmul.mubr.bf16.gmra.mxu0 %v6104
    %v6244 = vpop.f32.mrf.mxu0
    %v6245 = vadd.f32 0.0, %v6244
    %v6246 = vpop.f32.mrf.mxu0
    %v6247 = vpop.f32.mrf.mxu0
    %v6248 = vadd.f32 0.0, %v6247
    %v6249 = vpop.f32.mrf.mxu0
    %6250 = vmatprep.mubr.bf16.mxu0 0
    %6251 = vmatmul.mubr.bf16.gmra.mxu0 %v6105
    %v6252 = vpop.f32.mrf.mxu0
    %v6253 = vadd.f32 0.0, %v6252
    %v6254 = vpop.f32.mrf.mxu0
    %v6255 = vpop.f32.mrf.mxu0
    %v6256 = vadd.f32 0.0, %v6255
    %v6257 = vpop.f32.mrf.mxu0
    %6258 = vdwg.mxu0
    %v6261 = vunpack.c.l.b16 %v6013
    %v6262 = vunpack.c.l.b16 %v6023
    %v6263 = vpack.c.b16 %v6082, %v6261
    %v6264 = vpack.c.b16 %v6084, %v6083
    %v6265 = vpack.c.b16 %v6086, %v6085
    %v6266 = vpack.c.b16 %v6088, %v6087
    %v6267 = vpack.c.b16 %v6090, %v6262
    %v6268 = vpack.c.b16 %v6092, %v6091
    %v6269 = vpack.c.b16 %v6094, %v6093
    %v6270 = vpack.c.b16 %v6096, %v6095
    %v6295 = vunpack.c.l.b16 %v6033
    %v6296 = vunpack.c.l.b16 %v6034
    %v6297 = vunpack.c.l.b16 %v6035
    %v6298 = vunpack.c.l.b16 %v6036
    %v6299 = vunpack.c.l.b16 %v6037
    %v6300 = vunpack.c.l.b16 %v6038
    %v6301 = vunpack.c.l.b16 %v6039
    %v6302 = vunpack.c.l.b16 %v6040
    %v6303 = vunpack.c.l.b16 %v6041
    %v6304 = vunpack.c.l.b16 %v6042
    %v6305 = vunpack.c.l.b16 %v6043
    %v6306 = vunpack.c.l.b16 %v6044
    %v6307 = vunpack.c.l.b16 %v6045
    %v6308 = vunpack.c.l.b16 %v6046
    %v6309 = vunpack.c.l.b16 %v6047
    %v6310 = vunpack.c.l.b16 %v6048
    %v6311 = vpack.c.b16 %v6296, %v6295
    %v6312 = vpack.c.b16 %v6298, %v6297
    %v6313 = vpack.c.b16 %v6300, %v6299
    %v6314 = vpack.c.b16 %v6302, %v6301
    %v6315 = vpack.c.b16 %v6304, %v6303
    %v6316 = vpack.c.b16 %v6306, %v6305
    %v6317 = vpack.c.b16 %v6308, %v6307
    %v6318 = vpack.c.b16 %v6310, %v6309
    %6327 = vmatprep.subr.bf16.mxu0 0
    %6328 = vmatpush1.bf16.msra.mxu0 %v6318
    %6329 = vmatprep.subr.bf16.mxu0 0
    %6330 = vmatpush1.bf16.msra.mxu0 %v6317
    %6331 = vmatprep.subr.bf16.mxu0 0
    %6332 = vmatpush1.bf16.msra.mxu0 %v6316
    %6333 = vmatprep.subr.bf16.mxu0 0
    %6334 = vmatpush1.bf16.msra.mxu0 %v6315
    %6335 = vmatprep.subr.bf16.mxu0 0
    %6336 = vmatpush1.bf16.msra.mxu0 %v6314
    %6337 = vmatprep.subr.bf16.mxu0 0
    %6338 = vmatpush1.bf16.msra.mxu0 %v6313
    %6339 = vmatprep.subr.bf16.mxu0 0
    %6340 = vmatpush1.bf16.msra.mxu0 %v6312
    %6341 = vmatprep.subr.bf16.mxu0 0
    %6342 = vmatpush1.bf16.msra.mxu0 %v6311
    %6343 = vmatprep.subr.bf16.mxu0 0
    %6344 = vmatpush2.bf16.msra.mxu0 0
    %6345 = vmatprep.subr.bf16.mxu0 0
    %6346 = vmatpush2.bf16.msra.mxu0 0
    %6347 = vmatprep.subr.bf16.mxu0 0
    %6348 = vmatpush2.bf16.msra.mxu0 0
    %6349 = vmatprep.subr.bf16.mxu0 0
    %6350 = vmatpush2.bf16.msra.mxu0 0
    %6351 = vmatprep.subr.bf16.mxu0 0
    %6352 = vmatpush2.bf16.msra.mxu0 0
    %6353 = vmatprep.subr.bf16.mxu0 0
    %6354 = vmatpush2.bf16.msra.mxu0 0
    %6355 = vmatprep.subr.bf16.mxu0 0
    %6356 = vmatpush2.bf16.msra.mxu0 0
    %6357 = vmatprep.subr.bf16.mxu0 0
    %6358 = vmatpush2.bf16.msra.mxu0 0
    %6359 = vmatprep.mubr.bf16.mxu0 0
    %6360 = vmatmul.mubr.bf16.gmra.mxu0 %v6263
    %v6361 = vpop.f32.mrf.mxu0
    %v6362 = vadd.f32 %v6197, %v6361
    %v6363 = vpop.f32.mrf.mxu0
    %v6364 = vpop.f32.mrf.mxu0
    %v6365 = vadd.f32 %v6200, %v6364
    %v6366 = vpop.f32.mrf.mxu0
    %6367 = vmatprep.mubr.bf16.mxu0 0
    %6368 = vmatmul.mubr.bf16.gmra.mxu0 %v6264
    %v6369 = vpop.f32.mrf.mxu0
    %v6370 = vadd.f32 %v6205, %v6369
    %v6371 = vpop.f32.mrf.mxu0
    %v6372 = vpop.f32.mrf.mxu0
    %v6373 = vadd.f32 %v6208, %v6372
    %v6374 = vpop.f32.mrf.mxu0
    %6375 = vmatprep.mubr.bf16.mxu0 0
    %6376 = vmatmul.mubr.bf16.gmra.mxu0 %v6265
    %v6377 = vpop.f32.mrf.mxu0
    %v6378 = vadd.f32 %v6213, %v6377
    %v6379 = vpop.f32.mrf.mxu0
    %v6380 = vpop.f32.mrf.mxu0
    %v6381 = vadd.f32 %v6216, %v6380
    %v6382 = vpop.f32.mrf.mxu0
    %6383 = vmatprep.mubr.bf16.mxu0 0
    %6384 = vmatmul.mubr.bf16.gmra.mxu0 %v6266
    %v6385 = vpop.f32.mrf.mxu0
    %v6386 = vadd.f32 %v6221, %v6385
    %v6387 = vpop.f32.mrf.mxu0
    %v6388 = vpop.f32.mrf.mxu0
    %v6389 = vadd.f32 %v6224, %v6388
    %v6390 = vpop.f32.mrf.mxu0
    %6391 = vmatprep.mubr.bf16.mxu0 0
    %6392 = vmatmul.mubr.bf16.gmra.mxu0 %v6267
    %v6393 = vpop.f32.mrf.mxu0
    %v6394 = vadd.f32 %v6229, %v6393
    %v6395 = vpop.f32.mrf.mxu0
    %v6396 = vpop.f32.mrf.mxu0
    %v6397 = vadd.f32 %v6232, %v6396
    %v6398 = vpop.f32.mrf.mxu0
    %6399 = vmatprep.mubr.bf16.mxu0 0
    %6400 = vmatmul.mubr.bf16.gmra.mxu0 %v6268
    %v6401 = vpop.f32.mrf.mxu0
    %v6402 = vadd.f32 %v6237, %v6401
    %v6403 = vpop.f32.mrf.mxu0
    %v6404 = vpop.f32.mrf.mxu0
    %v6405 = vadd.f32 %v6240, %v6404
    %v6406 = vpop.f32.mrf.mxu0
    %6407 = vmatprep.mubr.bf16.mxu0 0
    %6408 = vmatmul.mubr.bf16.gmra.mxu0 %v6269
    %v6409 = vpop.f32.mrf.mxu0
    %v6410 = vadd.f32 %v6245, %v6409
    %v6411 = vpop.f32.mrf.mxu0
    %v6412 = vpop.f32.mrf.mxu0
    %v6413 = vadd.f32 %v6248, %v6412
    %v6414 = vpop.f32.mrf.mxu0
    %6415 = vmatprep.mubr.bf16.mxu0 0
    %6416 = vmatmul.mubr.bf16.gmra.mxu0 %v6270
    %v6417 = vpop.f32.mrf.mxu0
    %v6418 = vadd.f32 %v6253, %v6417
    %v6419 = vpop.f32.mrf.mxu0
    %v6420 = vpop.f32.mrf.mxu0
    %v6421 = vadd.f32 %v6256, %v6420
    %v6422 = vpop.f32.mrf.mxu0
    %6423 = vdwg.mxu0
    %s6424 = scalar_lea.vmem [#allocation11], 384
    %v6425 = vld [vmem:[%s6424] sm:$0xf]
    %v6426 = vld [vmem:[%s6424 + $0x4] sm:$0xf]
    %v6427 = vld [vmem:[%s6424 + $0x8] sm:$0xf]
    %v6428 = vld [vmem:[%s6424 + $0xc] sm:$0xf]
    %v6429 = vld [vmem:[%s6424 + $0x10] sm:$0xf]
    %v6430 = vld [vmem:[%s6424 + $0x14] sm:$0xf]
    %v6431 = vld [vmem:[%s6424 + $0x18] sm:$0xf]
    %v6432 = vld [vmem:[%s6424 + $0x1c] sm:$0xf]
    %v6433 = vld [vmem:[%s6424 + $0x20] sm:$0xf]
    %v6434 = vld [vmem:[%s6424 + $0x24] sm:$0xf]
    %v6435 = vld [vmem:[%s6424 + $0x28] sm:$0xf]
    %v6436 = vld [vmem:[%s6424 + $0x2c] sm:$0xf]
    %v6437 = vld [vmem:[%s6424 + $0x30] sm:$0xf]
    %v6438 = vld [vmem:[%s6424 + $0x34] sm:$0xf]
    %v6439 = vld [vmem:[%s6424 + $0x38] sm:$0xf]
    %v6440 = vld [vmem:[%s6424 + $0x3c] sm:$0xf]
    %v6443 = vunpack.c.l.b16 %v6022
    %v6444 = vunpack.c.l.b16 %v6032
    %v6445 = vpack.c.b16 %v6443, %v6089
    %v6446 = vpack.c.b16 %v6444, %v6097
    %v6465 = vunpack.c.l.b16 %v6425
    %v6466 = vunpack.c.l.b16 %v6426
    %v6467 = vunpack.c.l.b16 %v6427
    %v6468 = vunpack.c.l.b16 %v6428
    %v6469 = vunpack.c.l.b16 %v6429
    %v6470 = vunpack.c.l.b16 %v6430
    %v6471 = vunpack.c.l.b16 %v6431
    %v6472 = vunpack.c.l.b16 %v6432
    %v6473 = vunpack.c.l.b16 %v6433
    %v6474 = vunpack.c.l.b16 %v6434
    %v6475 = vunpack.c.l.b16 %v6435
    %v6476 = vunpack.c.l.b16 %v6436
    %v6477 = vunpack.c.l.b16 %v6437
    %v6478 = vunpack.c.l.b16 %v6438
    %v6479 = vunpack.c.l.b16 %v6439
    %v6480 = vunpack.c.l.b16 %v6440
    %v6481 = vpack.c.b16 %v6466, %v6465
    %v6482 = vpack.c.b16 %v6468, %v6467
    %v6483 = vpack.c.b16 %v6470, %v6469
    %v6484 = vpack.c.b16 %v6472, %v6471
    %v6485 = vpack.c.b16 %v6474, %v6473
    %v6486 = vpack.c.b16 %v6476, %v6475
    %v6487 = vpack.c.b16 %v6478, %v6477
    %v6488 = vpack.c.b16 %v6480, %v6479
    %6497 = vmatprep.subr.bf16.mxu0 0
    %6498 = vmatpush1.bf16.msra.mxu0 %v6488
    %6499 = vmatprep.subr.bf16.mxu0 0
    %6500 = vmatpush1.bf16.msra.mxu0 %v6487
    %6501 = vmatprep.subr.bf16.mxu0 0
    %6502 = vmatpush1.bf16.msra.mxu0 %v6486
    %6503 = vmatprep.subr.bf16.mxu0 0
    %6504 = vmatpush1.bf16.msra.mxu0 %v6485
    %6505 = vmatprep.subr.bf16.mxu0 0
    %6506 = vmatpush1.bf16.msra.mxu0 %v6484
    %6507 = vmatprep.subr.bf16.mxu0 0
    %6508 = vmatpush1.bf16.msra.mxu0 %v6483
    %6509 = vmatprep.subr.bf16.mxu0 0
    %6510 = vmatpush1.bf16.msra.mxu0 %v6482
    %6511 = vmatprep.subr.bf16.mxu0 0
    %6512 = vmatpush1.bf16.msra.mxu0 %v6481
    %6513 = vmatprep.subr.bf16.mxu0 0
    %6514 = vmatpush2.bf16.msra.mxu0 0
    %6515 = vmatprep.subr.bf16.mxu0 0
    %6516 = vmatpush2.bf16.msra.mxu0 0
    %6517 = vmatprep.subr.bf16.mxu0 0
    %6518 = vmatpush2.bf16.msra.mxu0 0
    %6519 = vmatprep.subr.bf16.mxu0 0
    %6520 = vmatpush2.bf16.msra.mxu0 0
    %6521 = vmatprep.subr.bf16.mxu0 0
    %6522 = vmatpush2.bf16.msra.mxu0 0
    %6523 = vmatprep.subr.bf16.mxu0 0
    %6524 = vmatpush2.bf16.msra.mxu0 0
    %6525 = vmatprep.subr.bf16.mxu0 0
    %6526 = vmatpush2.bf16.msra.mxu0 0
    %6527 = vmatprep.subr.bf16.mxu0 0
    %6528 = vmatpush2.bf16.msra.mxu0 0
    %6529 = vmatprep.mubr.bf16.mxu0 0
    %6530 = vmatmul.mubr.bf16.gmra.mxu0 %v6264
    %v6531 = vpop.f32.mrf.mxu0
    %v6532 = vadd.f32 0.0, %v6531
    %v6533 = vpop.f32.mrf.mxu0
    %v6534 = vpop.f32.mrf.mxu0
    %v6535 = vadd.f32 0.0, %v6534
    %v6536 = vpop.f32.mrf.mxu0
    %6537 = vmatprep.mubr.bf16.mxu0 0
    %6538 = vmatmul.mubr.bf16.gmra.mxu0 %v6265
    %v6539 = vpop.f32.mrf.mxu0
    %v6540 = vadd.f32 0.0, %v6539
    %v6541 = vpop.f32.mrf.mxu0
    %v6542 = vpop.f32.mrf.mxu0
    %v6543 = vadd.f32 0.0, %v6542
    %v6544 = vpop.f32.mrf.mxu0
    %6545 = vmatprep.mubr.bf16.mxu0 0
    %6546 = vmatmul.mubr.bf16.gmra.mxu0 %v6266
    %v6547 = vpop.f32.mrf.mxu0
    %v6548 = vadd.f32 0.0, %v6547
    %v6549 = vpop.f32.mrf.mxu0
    %v6550 = vpop.f32.mrf.mxu0
    %v6551 = vadd.f32 0.0, %v6550
    %v6552 = vpop.f32.mrf.mxu0
    %6553 = vmatprep.mubr.bf16.mxu0 0
    %6554 = vmatmul.mubr.bf16.gmra.mxu0 %v6445
    %v6555 = vpop.f32.mrf.mxu0
    %v6556 = vadd.f32 0.0, %v6555
    %v6557 = vpop.f32.mrf.mxu0
    %v6558 = vpop.f32.mrf.mxu0
    %v6559 = vadd.f32 0.0, %v6558
    %v6560 = vpop.f32.mrf.mxu0
    %6561 = vmatprep.mubr.bf16.mxu0 0
    %6562 = vmatmul.mubr.bf16.gmra.mxu0 %v6268
    %v6563 = vpop.f32.mrf.mxu0
    %v6564 = vadd.f32 0.0, %v6563
    %v6565 = vpop.f32.mrf.mxu0
    %v6566 = vpop.f32.mrf.mxu0
    %v6567 = vadd.f32 0.0, %v6566
    %v6568 = vpop.f32.mrf.mxu0
    %6569 = vmatprep.mubr.bf16.mxu0 0
    %6570 = vmatmul.mubr.bf16.gmra.mxu0 %v6269
    %v6571 = vpop.f32.mrf.mxu0
    %v6572 = vadd.f32 0.0, %v6571
    %v6573 = vpop.f32.mrf.mxu0
    %v6574 = vpop.f32.mrf.mxu0
    %v6575 = vadd.f32 0.0, %v6574
    %v6576 = vpop.f32.mrf.mxu0
    %6577 = vmatprep.mubr.bf16.mxu0 0
    %6578 = vmatmul.mubr.bf16.gmra.mxu0 %v6270
    %v6579 = vpop.f32.mrf.mxu0
    %v6580 = vadd.f32 0.0, %v6579
    %v6581 = vpop.f32.mrf.mxu0
    %v6582 = vpop.f32.mrf.mxu0
    %v6583 = vadd.f32 0.0, %v6582
    %v6584 = vpop.f32.mrf.mxu0
    %6585 = vmatprep.mubr.bf16.mxu0 0
    %6586 = vmatmul.mubr.bf16.gmra.mxu0 %v6446
    %v6587 = vpop.f32.mrf.mxu0
    %v6588 = vadd.f32 0.0, %v6587
    %v6589 = vpop.f32.mrf.mxu0
    %v6590 = vpop.f32.mrf.mxu0
    %v6591 = vadd.f32 0.0, %v6590
    %v6592 = vpop.f32.mrf.mxu0
    %6593 = vdwg.mxu0
    %v6594 = vadd.f32 %v6362, %v6532
    %v6595 = vadd.f32 %v6365, %v6535
    %v6596 = vadd.f32 %v6370, %v6540
    %v6597 = vadd.f32 %v6373, %v6543
    %v6598 = vadd.f32 %v6378, %v6548
    %v6599 = vadd.f32 %v6381, %v6551
    %v6600 = vadd.f32 %v6386, %v6556
    %v6601 = vadd.f32 %v6389, %v6559
    %v6602 = vadd.f32 %v6394, %v6564
    %v6603 = vadd.f32 %v6397, %v6567
    %v6604 = vadd.f32 %v6402, %v6572
    %v6605 = vadd.f32 %v6405, %v6575
    %v6606 = vadd.f32 %v6410, %v6580
    %v6607 = vadd.f32 %v6413, %v6583
    %v6608 = vadd.f32 %v6418, %v6588
    %v6609 = vadd.f32 %v6421, %v6591
    %v6610 = vld [vmem:[#allocation2] sm:$0xf]
    %v6611 = vld [vmem:[#allocation2 + $0x4] sm:$0x1]
    %v6612 = vld [vmem:[#allocation2 + $0x8] sm:$0xf]
    %v6613 = vld [vmem:[#allocation2 + $0xc] sm:$0x1]
    %v6614 = vld [vmem:[#allocation2 + $0x10] sm:$0xf]
    %v6615 = vld [vmem:[#allocation2 + $0x14] sm:$0x1]
    %v6616 = vld [vmem:[#allocation2 + $0x18] sm:$0xf]
    %v6617 = vld [vmem:[#allocation2 + $0x1c] sm:$0x1]
    %v6618 = vld [vmem:[#allocation2 + $0x20] sm:$0xf]
    %v6619 = vld [vmem:[#allocation2 + $0x24] sm:$0x1]
    %v6620 = vld [vmem:[#allocation2 + $0x28] sm:$0xf]
    %v6621 = vld [vmem:[#allocation2 + $0x2c] sm:$0x1]
    %v6622 = vld [vmem:[#allocation2 + $0x30] sm:$0xf]
    %v6623 = vld [vmem:[#allocation2 + $0x34] sm:$0x1]
    %v6624 = vld [vmem:[#allocation2 + $0x38] sm:$0xf]
    %v6625 = vld [vmem:[#allocation2 + $0x3c] sm:$0x1]
    %v6626 = vld [vmem:[#allocation2 + $0x40] sm:$0xf]
    %v6627 = vld [vmem:[#allocation2 + $0x44] sm:$0x1]
    %v6628 = vld [vmem:[#allocation2 + $0x48] sm:$0xf]
    %v6629 = vld [vmem:[#allocation2 + $0x4c] sm:$0x1]
    %v6630 = vld [vmem:[#allocation2 + $0x50] sm:$0xf]
    %v6631 = vld [vmem:[#allocation2 + $0x54] sm:$0x1]
    %v6632 = vld [vmem:[#allocation2 + $0x58] sm:$0xf]
    %v6633 = vld [vmem:[#allocation2 + $0x5c] sm:$0x1]
    %v6634 = vld [vmem:[#allocation2 + $0x60] sm:$0xf]
    %v6635 = vld [vmem:[#allocation2 + $0x64] sm:$0x1]
    %v6636 = vld [vmem:[#allocation2 + $0x68] sm:$0xf]
    %v6637 = vld [vmem:[#allocation2 + $0x6c] sm:$0x1]
    %v6638 = vld [vmem:[#allocation2 + $0x70] sm:$0xf]
    %v6639 = vld [vmem:[#allocation2 + $0x74] sm:$0x1]
    %v6640 = vld [vmem:[#allocation2 + $0x78] sm:$0xf]
    %v6641 = vld [vmem:[#allocation2 + $0x7c] sm:$0x1]
    %v6642 = vld [vmem:[#allocation2 + $0x80] sm:$0xf]
    %v6643 = vld [vmem:[#allocation2 + $0x84] sm:$0x1]
    %v6644 = vld [vmem:[#allocation2 + $0x88] sm:$0xf]
    %v6645 = vld [vmem:[#allocation2 + $0x8c] sm:$0x1]
    %v6646 = vld [vmem:[#allocation2 + $0x90] sm:$0xf]
    %v6647 = vld [vmem:[#allocation2 + $0x94] sm:$0x1]
    %v6648 = vld [vmem:[#allocation2 + $0x98] sm:$0xf]
    %v6649 = vld [vmem:[#allocation2 + $0x9c] sm:$0x1]
    %v6651 = vshrl.u32 %v6610, 16
    %v6653 = vrot.slane %v6651, 4
    %v6654 = vshll.u32 %v6610, 16
    %v6656 = vrot.slane %v6654, 5
    %v6657 = vor.u32 %v6653, %v6656
    %v6658 = vrot.slane %v6657, 4
    %v6660 = vshll.u32 %v6611, 16
    %v6662 = vrot.slane %v6660, 5
    %v6663 = vsel %vm1454, %v6658, %v6662
    %v6665 = vshrl.u32 %v6612, 16
    %v6667 = vrot.slane %v6665, 4
    %v6668 = vshll.u32 %v6612, 16
    %v6670 = vrot.slane %v6668, 5
    %v6671 = vor.u32 %v6667, %v6670
    %v6672 = vrot.slane %v6671, 4
    %v6674 = vshll.u32 %v6613, 16
    %v6676 = vrot.slane %v6674, 5
    %v6677 = vsel %vm1454, %v6672, %v6676
    %v6679 = vshrl.u32 %v6614, 16
    %v6681 = vrot.slane %v6679, 4
    %v6682 = vshll.u32 %v6614, 16
    %v6684 = vrot.slane %v6682, 5
    %v6685 = vor.u32 %v6681, %v6684
    %v6686 = vrot.slane %v6685, 4
    %v6688 = vshll.u32 %v6615, 16
    %v6690 = vrot.slane %v6688, 5
    %v6691 = vsel %vm1454, %v6686, %v6690
    %v6693 = vshrl.u32 %v6616, 16
    %v6695 = vrot.slane %v6693, 4
    %v6696 = vshll.u32 %v6616, 16
    %v6698 = vrot.slane %v6696, 5
    %v6699 = vor.u32 %v6695, %v6698
    %v6700 = vrot.slane %v6699, 4
    %v6702 = vshll.u32 %v6617, 16
    %v6704 = vrot.slane %v6702, 5
    %v6705 = vsel %vm1454, %v6700, %v6704
    %v6707 = vshrl.u32 %v6618, 16
    %v6709 = vrot.slane %v6707, 4
    %v6710 = vshll.u32 %v6618, 16
    %v6712 = vrot.slane %v6710, 5
    %v6713 = vor.u32 %v6709, %v6712
    %v6714 = vrot.slane %v6713, 4
    %v6716 = vshll.u32 %v6619, 16
    %v6718 = vrot.slane %v6716, 5
    %v6719 = vsel %vm1454, %v6714, %v6718
    %v6721 = vshrl.u32 %v6620, 16
    %v6723 = vrot.slane %v6721, 4
    %v6724 = vshll.u32 %v6620, 16
    %v6726 = vrot.slane %v6724, 5
    %v6727 = vor.u32 %v6723, %v6726
    %v6728 = vrot.slane %v6727, 4
    %v6730 = vshll.u32 %v6621, 16
    %v6732 = vrot.slane %v6730, 5
    %v6733 = vsel %vm1454, %v6728, %v6732
    %v6735 = vshrl.u32 %v6622, 16
    %v6737 = vrot.slane %v6735, 4
    %v6738 = vshll.u32 %v6622, 16
    %v6740 = vrot.slane %v6738, 5
    %v6741 = vor.u32 %v6737, %v6740
    %v6742 = vrot.slane %v6741, 4
    %v6744 = vshll.u32 %v6623, 16
    %v6746 = vrot.slane %v6744, 5
    %v6747 = vsel %vm1454, %v6742, %v6746
    %v6749 = vshrl.u32 %v6624, 16
    %v6751 = vrot.slane %v6749, 4
    %v6752 = vshll.u32 %v6624, 16
    %v6754 = vrot.slane %v6752, 5
    %v6755 = vor.u32 %v6751, %v6754
    %v6756 = vrot.slane %v6755, 4
    %v6758 = vshll.u32 %v6625, 16
    %v6760 = vrot.slane %v6758, 5
    %v6761 = vsel %vm1454, %v6756, %v6760
    %v6763 = vshrl.u32 %v6630, 16
    %v6765 = vrot.slane %v6763, 4
    %v6766 = vshll.u32 %v6630, 16
    %v6768 = vrot.slane %v6766, 5
    %v6769 = vor.u32 %v6765, %v6768
    %v6770 = vrot.slane %v6769, 4
    %v6772 = vshll.u32 %v6631, 16
    %v6774 = vrot.slane %v6772, 5
    %v6775 = vsel %vm1454, %v6770, %v6774
    %v6777 = vshrl.u32 %v6632, 16
    %v6779 = vrot.slane %v6777, 4
    %v6780 = vshll.u32 %v6632, 16
    %v6782 = vrot.slane %v6780, 5
    %v6783 = vor.u32 %v6779, %v6782
    %v6784 = vrot.slane %v6783, 4
    %v6786 = vshll.u32 %v6633, 16
    %v6788 = vrot.slane %v6786, 5
    %v6789 = vsel %vm1454, %v6784, %v6788
    %v6791 = vshrl.u32 %v6634, 16
    %v6793 = vrot.slane %v6791, 4
    %v6794 = vshll.u32 %v6634, 16
    %v6796 = vrot.slane %v6794, 5
    %v6797 = vor.u32 %v6793, %v6796
    %v6798 = vrot.slane %v6797, 4
    %v6800 = vshll.u32 %v6635, 16
    %v6802 = vrot.slane %v6800, 5
    %v6803 = vsel %vm1454, %v6798, %v6802
    %v6805 = vshrl.u32 %v6636, 16
    %v6807 = vrot.slane %v6805, 4
    %v6808 = vshll.u32 %v6636, 16
    %v6810 = vrot.slane %v6808, 5
    %v6811 = vor.u32 %v6807, %v6810
    %v6812 = vrot.slane %v6811, 4
    %v6814 = vshll.u32 %v6637, 16
    %v6816 = vrot.slane %v6814, 5
    %v6817 = vsel %vm1454, %v6812, %v6816
    %v6819 = vshrl.u32 %v6638, 16
    %v6821 = vrot.slane %v6819, 4
    %v6822 = vshll.u32 %v6638, 16
    %v6824 = vrot.slane %v6822, 5
    %v6825 = vor.u32 %v6821, %v6824
    %v6826 = vrot.slane %v6825, 4
    %v6828 = vshll.u32 %v6639, 16
    %v6830 = vrot.slane %v6828, 5
    %v6831 = vsel %vm1454, %v6826, %v6830
    %v6833 = vshrl.u32 %v6640, 16
    %v6835 = vrot.slane %v6833, 4
    %v6836 = vshll.u32 %v6640, 16
    %v6838 = vrot.slane %v6836, 5
    %v6839 = vor.u32 %v6835, %v6838
    %v6840 = vrot.slane %v6839, 4
    %v6842 = vshll.u32 %v6641, 16
    %v6844 = vrot.slane %v6842, 5
    %v6845 = vsel %vm1454, %v6840, %v6844
    %v6847 = vshrl.u32 %v6642, 16
    %v6849 = vrot.slane %v6847, 4
    %v6850 = vshll.u32 %v6642, 16
    %v6852 = vrot.slane %v6850, 5
    %v6853 = vor.u32 %v6849, %v6852
    %v6854 = vrot.slane %v6853, 4
    %v6856 = vshll.u32 %v6643, 16
    %v6858 = vrot.slane %v6856, 5
    %v6859 = vsel %vm1454, %v6854, %v6858
    %v6861 = vshrl.u32 %v6644, 16
    %v6863 = vrot.slane %v6861, 4
    %v6864 = vshll.u32 %v6644, 16
    %v6866 = vrot.slane %v6864, 5
    %v6867 = vor.u32 %v6863, %v6866
    %v6868 = vrot.slane %v6867, 4
    %v6870 = vshll.u32 %v6645, 16
    %v6872 = vrot.slane %v6870, 5
    %v6873 = vsel %vm1454, %v6868, %v6872
    %s6874 = scalar_lea.vmem [#allocation11], 64
    %v6875 = vld [vmem:[%s6874] sm:$0xf]
    %v6876 = vld [vmem:[%s6874 + $0x4] sm:$0xf]
    %v6877 = vld [vmem:[%s6874 + $0x8] sm:$0xf]
    %v6878 = vld [vmem:[%s6874 + $0xc] sm:$0xf]
    %v6879 = vld [vmem:[%s6874 + $0x10] sm:$0xf]
    %v6880 = vld [vmem:[%s6874 + $0x14] sm:$0xf]
    %v6881 = vld [vmem:[%s6874 + $0x18] sm:$0xf]
    %v6882 = vld [vmem:[%s6874 + $0x1c] sm:$0xf]
    %v6883 = vld [vmem:[%s6874 + $0x20] sm:$0xf]
    %v6884 = vld [vmem:[%s6874 + $0x24] sm:$0xf]
    %v6885 = vld [vmem:[%s6874 + $0x28] sm:$0xf]
    %v6886 = vld [vmem:[%s6874 + $0x2c] sm:$0xf]
    %v6887 = vld [vmem:[%s6874 + $0x30] sm:$0xf]
    %v6888 = vld [vmem:[%s6874 + $0x34] sm:$0xf]
    %v6889 = vld [vmem:[%s6874 + $0x38] sm:$0xf]
    %v6890 = vld [vmem:[%s6874 + $0x3c] sm:$0xf]
    %v6891 = vunpack.c.l.b16 %v6663
    %v6892 = vunpack.c.l.b16 %v6677
    %v6893 = vunpack.c.l.b16 %v6691
    %v6894 = vunpack.c.l.b16 %v6705
    %v6895 = vunpack.c.l.b16 %v6719
    %v6896 = vunpack.c.l.b16 %v6733
    %v6897 = vunpack.c.l.b16 %v6747
    %v6898 = vunpack.c.l.b16 %v6761
    %v6899 = vunpack.c.l.b16 %v6775
    %v6900 = vunpack.c.l.b16 %v6789
    %v6901 = vunpack.c.l.b16 %v6803
    %v6902 = vunpack.c.l.b16 %v6817
    %v6903 = vunpack.c.l.b16 %v6831
    %v6904 = vunpack.c.l.b16 %v6845
    %v6905 = vunpack.c.l.b16 %v6859
    %v6906 = vunpack.c.l.b16 %v6873
    %v6907 = vpack.c.b16 %v6892, %v6891
    %v6908 = vpack.c.b16 %v6894, %v6893
    %v6909 = vpack.c.b16 %v6896, %v6895
    %v6910 = vpack.c.b16 %v6898, %v6897
    %v6911 = vpack.c.b16 %v6900, %v6899
    %v6912 = vpack.c.b16 %v6902, %v6901
    %v6913 = vpack.c.b16 %v6904, %v6903
    %v6914 = vpack.c.b16 %v6906, %v6905
    %v6939 = vunpack.c.l.b16 %v6875
    %v6940 = vunpack.c.l.b16 %v6876
    %v6941 = vunpack.c.l.b16 %v6877
    %v6942 = vunpack.c.l.b16 %v6878
    %v6943 = vunpack.c.l.b16 %v6879
    %v6944 = vunpack.c.l.b16 %v6880
    %v6945 = vunpack.c.l.b16 %v6881
    %v6946 = vunpack.c.l.b16 %v6882
    %v6947 = vunpack.c.l.b16 %v6883
    %v6948 = vunpack.c.l.b16 %v6884
    %v6949 = vunpack.c.l.b16 %v6885
    %v6950 = vunpack.c.l.b16 %v6886
    %v6951 = vunpack.c.l.b16 %v6887
    %v6952 = vunpack.c.l.b16 %v6888
    %v6953 = vunpack.c.l.b16 %v6889
    %v6954 = vunpack.c.l.b16 %v6890
    %v6955 = vpack.c.b16 %v6940, %v6939
    %v6956 = vpack.c.b16 %v6942, %v6941
    %v6957 = vpack.c.b16 %v6944, %v6943
    %v6958 = vpack.c.b16 %v6946, %v6945
    %v6959 = vpack.c.b16 %v6948, %v6947
    %v6960 = vpack.c.b16 %v6950, %v6949
    %v6961 = vpack.c.b16 %v6952, %v6951
    %v6962 = vpack.c.b16 %v6954, %v6953
    %6971 = vmatprep.subr.bf16.mxu0 0
    %6972 = vmatpush1.bf16.msra.mxu0 %v6962
    %6973 = vmatprep.subr.bf16.mxu0 0
    %6974 = vmatpush1.bf16.msra.mxu0 %v6961
    %6975 = vmatprep.subr.bf16.mxu0 0
    %6976 = vmatpush1.bf16.msra.mxu0 %v6960
    %6977 = vmatprep.subr.bf16.mxu0 0
    %6978 = vmatpush1.bf16.msra.mxu0 %v6959
    %6979 = vmatprep.subr.bf16.mxu0 0
    %6980 = vmatpush1.bf16.msra.mxu0 %v6958
    %6981 = vmatprep.subr.bf16.mxu0 0
    %6982 = vmatpush1.bf16.msra.mxu0 %v6957
    %6983 = vmatprep.subr.bf16.mxu0 0
    %6984 = vmatpush1.bf16.msra.mxu0 %v6956
    %6985 = vmatprep.subr.bf16.mxu0 0
    %6986 = vmatpush1.bf16.msra.mxu0 %v6955
    %6987 = vmatprep.subr.bf16.mxu0 0
    %6988 = vmatpush2.bf16.msra.mxu0 0
    %6989 = vmatprep.subr.bf16.mxu0 0
    %6990 = vmatpush2.bf16.msra.mxu0 0
    %6991 = vmatprep.subr.bf16.mxu0 0
    %6992 = vmatpush2.bf16.msra.mxu0 0
    %6993 = vmatprep.subr.bf16.mxu0 0
    %6994 = vmatpush2.bf16.msra.mxu0 0
    %6995 = vmatprep.subr.bf16.mxu0 0
    %6996 = vmatpush2.bf16.msra.mxu0 0
    %6997 = vmatprep.subr.bf16.mxu0 0
    %6998 = vmatpush2.bf16.msra.mxu0 0
    %6999 = vmatprep.subr.bf16.mxu0 0
    %7000 = vmatpush2.bf16.msra.mxu0 0
    %7001 = vmatprep.subr.bf16.mxu0 0
    %7002 = vmatpush2.bf16.msra.mxu0 0
    %7003 = vmatprep.mubr.bf16.mxu0 0
    %7004 = vmatmul.mubr.bf16.gmra.mxu0 %v6907
    %v7005 = vpop.f32.mrf.mxu0
    %v7006 = vadd.f32 0.0, %v7005
    %v7007 = vpop.f32.mrf.mxu0
    %v7008 = vpop.f32.mrf.mxu0
    %v7009 = vadd.f32 0.0, %v7008
    %v7010 = vpop.f32.mrf.mxu0
    %7011 = vmatprep.mubr.bf16.mxu0 0
    %7012 = vmatmul.mubr.bf16.gmra.mxu0 %v6908
    %v7013 = vpop.f32.mrf.mxu0
    %v7014 = vadd.f32 0.0, %v7013
    %v7015 = vpop.f32.mrf.mxu0
    %v7016 = vpop.f32.mrf.mxu0
    %v7017 = vadd.f32 0.0, %v7016
    %v7018 = vpop.f32.mrf.mxu0
    %7019 = vmatprep.mubr.bf16.mxu0 0
    %7020 = vmatmul.mubr.bf16.gmra.mxu0 %v6909
    %v7021 = vpop.f32.mrf.mxu0
    %v7022 = vadd.f32 0.0, %v7021
    %v7023 = vpop.f32.mrf.mxu0
    %v7024 = vpop.f32.mrf.mxu0
    %v7025 = vadd.f32 0.0, %v7024
    %v7026 = vpop.f32.mrf.mxu0
    %7027 = vmatprep.mubr.bf16.mxu0 0
    %7028 = vmatmul.mubr.bf16.gmra.mxu0 %v6910
    %v7029 = vpop.f32.mrf.mxu0
    %v7030 = vadd.f32 0.0, %v7029
    %v7031 = vpop.f32.mrf.mxu0
    %v7032 = vpop.f32.mrf.mxu0
    %v7033 = vadd.f32 0.0, %v7032
    %v7034 = vpop.f32.mrf.mxu0
    %7035 = vmatprep.mubr.bf16.mxu0 0
    %7036 = vmatmul.mubr.bf16.gmra.mxu0 %v6911
    %v7037 = vpop.f32.mrf.mxu0
    %v7038 = vadd.f32 0.0, %v7037
    %v7039 = vpop.f32.mrf.mxu0
    %v7040 = vpop.f32.mrf.mxu0
    %v7041 = vadd.f32 0.0, %v7040
    %v7042 = vpop.f32.mrf.mxu0
    %7043 = vmatprep.mubr.bf16.mxu0 0
    %7044 = vmatmul.mubr.bf16.gmra.mxu0 %v6912
    %v7045 = vpop.f32.mrf.mxu0
    %v7046 = vadd.f32 0.0, %v7045
    %v7047 = vpop.f32.mrf.mxu0
    %v7048 = vpop.f32.mrf.mxu0
    %v7049 = vadd.f32 0.0, %v7048
    %v7050 = vpop.f32.mrf.mxu0
    %7051 = vmatprep.mubr.bf16.mxu0 0
    %7052 = vmatmul.mubr.bf16.gmra.mxu0 %v6913
    %v7053 = vpop.f32.mrf.mxu0
    %v7054 = vadd.f32 0.0, %v7053
    %v7055 = vpop.f32.mrf.mxu0
    %v7056 = vpop.f32.mrf.mxu0
    %v7057 = vadd.f32 0.0, %v7056
    %v7058 = vpop.f32.mrf.mxu0
    %7059 = vmatprep.mubr.bf16.mxu0 0
    %7060 = vmatmul.mubr.bf16.gmra.mxu0 %v6914
    %v7061 = vpop.f32.mrf.mxu0
    %v7062 = vadd.f32 0.0, %v7061
    %v7063 = vpop.f32.mrf.mxu0
    %v7064 = vpop.f32.mrf.mxu0
    %v7065 = vadd.f32 0.0, %v7064
    %v7066 = vpop.f32.mrf.mxu0
    %7067 = vdwg.mxu0
    %v7068 = vadd.f32 %v6594, %v7006
    %v7069 = vadd.f32 %v6595, %v7009
    %v7070 = vadd.f32 %v6596, %v7014
    %v7071 = vadd.f32 %v6597, %v7017
    %v7072 = vadd.f32 %v6598, %v7022
    %v7073 = vadd.f32 %v6599, %v7025
    %v7074 = vadd.f32 %v6600, %v7030
    %v7075 = vadd.f32 %v6601, %v7033
    %v7076 = vadd.f32 %v6602, %v7038
    %v7077 = vadd.f32 %v6603, %v7041
    %v7078 = vadd.f32 %v6604, %v7046
    %v7079 = vadd.f32 %v6605, %v7049
    %v7080 = vadd.f32 %v6606, %v7054
    %v7081 = vadd.f32 %v6607, %v7057
    %v7082 = vadd.f32 %v6608, %v7062
    %v7083 = vadd.f32 %v6609, %v7065
    %v7085 = vshrl.u32 %v6626, 16
    %v7087 = vrot.slane %v7085, 4
    %v7088 = vshll.u32 %v6626, 16
    %v7090 = vrot.slane %v7088, 5
    %v7091 = vor.u32 %v7087, %v7090
    %v7092 = vrot.slane %v7091, 4
    %v7094 = vshll.u32 %v6627, 16
    %v7096 = vrot.slane %v7094, 5
    %v7097 = vsel %vm1454, %v7092, %v7096
    %v7099 = vshrl.u32 %v6646, 16
    %v7101 = vrot.slane %v7099, 4
    %v7102 = vshll.u32 %v6646, 16
    %v7104 = vrot.slane %v7102, 5
    %v7105 = vor.u32 %v7101, %v7104
    %v7106 = vrot.slane %v7105, 4
    %v7108 = vshll.u32 %v6647, 16
    %v7110 = vrot.slane %v7108, 5
    %v7111 = vsel %vm1454, %v7106, %v7110
    %s7112 = scalar_lea.vmem [#allocation11], 256
    %v7113 = vld [vmem:[%s7112] sm:$0xf]
    %v7114 = vld [vmem:[%s7112 + $0x4] sm:$0xf]
    %v7115 = vld [vmem:[%s7112 + $0x8] sm:$0xf]
    %v7116 = vld [vmem:[%s7112 + $0xc] sm:$0xf]
    %v7117 = vld [vmem:[%s7112 + $0x10] sm:$0xf]
    %v7118 = vld [vmem:[%s7112 + $0x14] sm:$0xf]
    %v7119 = vld [vmem:[%s7112 + $0x18] sm:$0xf]
    %v7120 = vld [vmem:[%s7112 + $0x1c] sm:$0xf]
    %v7121 = vld [vmem:[%s7112 + $0x20] sm:$0xf]
    %v7122 = vld [vmem:[%s7112 + $0x24] sm:$0xf]
    %v7123 = vld [vmem:[%s7112 + $0x28] sm:$0xf]
    %v7124 = vld [vmem:[%s7112 + $0x2c] sm:$0xf]
    %v7125 = vld [vmem:[%s7112 + $0x30] sm:$0xf]
    %v7126 = vld [vmem:[%s7112 + $0x34] sm:$0xf]
    %v7127 = vld [vmem:[%s7112 + $0x38] sm:$0xf]
    %v7128 = vld [vmem:[%s7112 + $0x3c] sm:$0xf]
    %v7129 = vunpack.c.l.b16 %v7097
    %v7130 = vunpack.c.l.b16 %v7111
    %v7131 = vpack.c.b16 %v6893, %v6892
    %v7132 = vpack.c.b16 %v6895, %v6894
    %v7133 = vpack.c.b16 %v6897, %v6896
    %v7134 = vpack.c.b16 %v7129, %v6898
    %v7135 = vpack.c.b16 %v6901, %v6900
    %v7136 = vpack.c.b16 %v6903, %v6902
    %v7137 = vpack.c.b16 %v6905, %v6904
    %v7138 = vpack.c.b16 %v7130, %v6906
    %v7163 = vunpack.c.l.b16 %v7113
    %v7164 = vunpack.c.l.b16 %v7114
    %v7165 = vunpack.c.l.b16 %v7115
    %v7166 = vunpack.c.l.b16 %v7116
    %v7167 = vunpack.c.l.b16 %v7117
    %v7168 = vunpack.c.l.b16 %v7118
    %v7169 = vunpack.c.l.b16 %v7119
    %v7170 = vunpack.c.l.b16 %v7120
    %v7171 = vunpack.c.l.b16 %v7121
    %v7172 = vunpack.c.l.b16 %v7122
    %v7173 = vunpack.c.l.b16 %v7123
    %v7174 = vunpack.c.l.b16 %v7124
    %v7175 = vunpack.c.l.b16 %v7125
    %v7176 = vunpack.c.l.b16 %v7126
    %v7177 = vunpack.c.l.b16 %v7127
    %v7178 = vunpack.c.l.b16 %v7128
    %v7179 = vpack.c.b16 %v7164, %v7163
    %v7180 = vpack.c.b16 %v7166, %v7165
    %v7181 = vpack.c.b16 %v7168, %v7167
    %v7182 = vpack.c.b16 %v7170, %v7169
    %v7183 = vpack.c.b16 %v7172, %v7171
    %v7184 = vpack.c.b16 %v7174, %v7173
    %v7185 = vpack.c.b16 %v7176, %v7175
    %v7186 = vpack.c.b16 %v7178, %v7177
    %7195 = vmatprep.subr.bf16.mxu0 0
    %7196 = vmatpush1.bf16.msra.mxu0 %v7186
    %7197 = vmatprep.subr.bf16.mxu0 0
    %7198 = vmatpush1.bf16.msra.mxu0 %v7185
    %7199 = vmatprep.subr.bf16.mxu0 0
    %7200 = vmatpush1.bf16.msra.mxu0 %v7184
    %7201 = vmatprep.subr.bf16.mxu0 0
    %7202 = vmatpush1.bf16.msra.mxu0 %v7183
    %7203 = vmatprep.subr.bf16.mxu0 0
    %7204 = vmatpush1.bf16.msra.mxu0 %v7182
    %7205 = vmatprep.subr.bf16.mxu0 0
    %7206 = vmatpush1.bf16.msra.mxu0 %v7181
    %7207 = vmatprep.subr.bf16.mxu0 0
    %7208 = vmatpush1.bf16.msra.mxu0 %v7180
    %7209 = vmatprep.subr.bf16.mxu0 0
    %7210 = vmatpush1.bf16.msra.mxu0 %v7179
    %7211 = vmatprep.subr.bf16.mxu0 0
    %7212 = vmatpush2.bf16.msra.mxu0 0
    %7213 = vmatprep.subr.bf16.mxu0 0
    %7214 = vmatpush2.bf16.msra.mxu0 0
    %7215 = vmatprep.subr.bf16.mxu0 0
    %7216 = vmatpush2.bf16.msra.mxu0 0
    %7217 = vmatprep.subr.bf16.mxu0 0
    %7218 = vmatpush2.bf16.msra.mxu0 0
    %7219 = vmatprep.subr.bf16.mxu0 0
    %7220 = vmatpush2.bf16.msra.mxu0 0
    %7221 = vmatprep.subr.bf16.mxu0 0
    %7222 = vmatpush2.bf16.msra.mxu0 0
    %7223 = vmatprep.subr.bf16.mxu0 0
    %7224 = vmatpush2.bf16.msra.mxu0 0
    %7225 = vmatprep.subr.bf16.mxu0 0
    %7226 = vmatpush2.bf16.msra.mxu0 0
    %7227 = vmatprep.mubr.bf16.mxu0 0
    %7228 = vmatmul.mubr.bf16.gmra.mxu0 %v7131
    %v7229 = vpop.f32.mrf.mxu0
    %v7230 = vadd.f32 0.0, %v7229
    %v7231 = vpop.f32.mrf.mxu0
    %v7232 = vpop.f32.mrf.mxu0
    %v7233 = vadd.f32 0.0, %v7232
    %v7234 = vpop.f32.mrf.mxu0
    %7235 = vmatprep.mubr.bf16.mxu0 0
    %7236 = vmatmul.mubr.bf16.gmra.mxu0 %v7132
    %v7237 = vpop.f32.mrf.mxu0
    %v7238 = vadd.f32 0.0, %v7237
    %v7239 = vpop.f32.mrf.mxu0
    %v7240 = vpop.f32.mrf.mxu0
    %v7241 = vadd.f32 0.0, %v7240
    %v7242 = vpop.f32.mrf.mxu0
    %7243 = vmatprep.mubr.bf16.mxu0 0
    %7244 = vmatmul.mubr.bf16.gmra.mxu0 %v7133
    %v7245 = vpop.f32.mrf.mxu0
    %v7246 = vadd.f32 0.0, %v7245
    %v7247 = vpop.f32.mrf.mxu0
    %v7248 = vpop.f32.mrf.mxu0
    %v7249 = vadd.f32 0.0, %v7248
    %v7250 = vpop.f32.mrf.mxu0
    %7251 = vmatprep.mubr.bf16.mxu0 0
    %7252 = vmatmul.mubr.bf16.gmra.mxu0 %v7134
    %v7253 = vpop.f32.mrf.mxu0
    %v7254 = vadd.f32 0.0, %v7253
    %v7255 = vpop.f32.mrf.mxu0
    %v7256 = vpop.f32.mrf.mxu0
    %v7257 = vadd.f32 0.0, %v7256
    %v7258 = vpop.f32.mrf.mxu0
    %7259 = vmatprep.mubr.bf16.mxu0 0
    %7260 = vmatmul.mubr.bf16.gmra.mxu0 %v7135
    %v7261 = vpop.f32.mrf.mxu0
    %v7262 = vadd.f32 0.0, %v7261
    %v7263 = vpop.f32.mrf.mxu0
    %v7264 = vpop.f32.mrf.mxu0
    %v7265 = vadd.f32 0.0, %v7264
    %v7266 = vpop.f32.mrf.mxu0
    %7267 = vmatprep.mubr.bf16.mxu0 0
    %7268 = vmatmul.mubr.bf16.gmra.mxu0 %v7136
    %v7269 = vpop.f32.mrf.mxu0
    %v7270 = vadd.f32 0.0, %v7269
    %v7271 = vpop.f32.mrf.mxu0
    %v7272 = vpop.f32.mrf.mxu0
    %v7273 = vadd.f32 0.0, %v7272
    %v7274 = vpop.f32.mrf.mxu0
    %7275 = vmatprep.mubr.bf16.mxu0 0
    %7276 = vmatmul.mubr.bf16.gmra.mxu0 %v7137
    %v7277 = vpop.f32.mrf.mxu0
    %v7278 = vadd.f32 0.0, %v7277
    %v7279 = vpop.f32.mrf.mxu0
    %v7280 = vpop.f32.mrf.mxu0
    %v7281 = vadd.f32 0.0, %v7280
    %v7282 = vpop.f32.mrf.mxu0
    %7283 = vmatprep.mubr.bf16.mxu0 0
    %7284 = vmatmul.mubr.bf16.gmra.mxu0 %v7138
    %v7285 = vpop.f32.mrf.mxu0
    %v7286 = vadd.f32 0.0, %v7285
    %v7287 = vpop.f32.mrf.mxu0
    %v7288 = vpop.f32.mrf.mxu0
    %v7289 = vadd.f32 0.0, %v7288
    %v7290 = vpop.f32.mrf.mxu0
    %7291 = vdwg.mxu0
    %v7292 = vadd.f32 %v7068, %v7230
    %v7293 = vadd.f32 %v7069, %v7233
    %v7294 = vadd.f32 %v7070, %v7238
    %v7295 = vadd.f32 %v7071, %v7241
    %v7296 = vadd.f32 %v7072, %v7246
    %v7297 = vadd.f32 %v7073, %v7249
    %v7298 = vadd.f32 %v7074, %v7254
    %v7299 = vadd.f32 %v7075, %v7257
    %v7300 = vadd.f32 %v7076, %v7262
    %v7301 = vadd.f32 %v7077, %v7265
    %v7302 = vadd.f32 %v7078, %v7270
    %v7303 = vadd.f32 %v7079, %v7273
    %v7304 = vadd.f32 %v7080, %v7278
    %v7305 = vadd.f32 %v7081, %v7281
    %v7306 = vadd.f32 %v7082, %v7286
    %v7307 = vadd.f32 %v7083, %v7289
    %v7309 = vshrl.u32 %v6628, 16
    %v7311 = vrot.slane %v7309, 4
    %v7312 = vshll.u32 %v6628, 16
    %v7314 = vrot.slane %v7312, 5
    %v7315 = vor.u32 %v7311, %v7314
    %v7316 = vrot.slane %v7315, 4
    %v7318 = vshll.u32 %v6629, 16
    %v7320 = vrot.slane %v7318, 5
    %v7321 = vsel %vm1454, %v7316, %v7320
    %v7323 = vshrl.u32 %v6648, 16
    %v7325 = vrot.slane %v7323, 4
    %v7326 = vshll.u32 %v6648, 16
    %v7328 = vrot.slane %v7326, 5
    %v7329 = vor.u32 %v7325, %v7328
    %v7330 = vrot.slane %v7329, 4
    %v7332 = vshll.u32 %v6649, 16
    %v7334 = vrot.slane %v7332, 5
    %v7335 = vsel %vm1454, %v7330, %v7334
    %s7336 = scalar_lea.vmem [#allocation11], 448
    %v7337 = vld [vmem:[%s7336] sm:$0xf]
    %v7338 = vld [vmem:[%s7336 + $0x4] sm:$0xf]
    %v7339 = vld [vmem:[%s7336 + $0x8] sm:$0xf]
    %v7340 = vld [vmem:[%s7336 + $0xc] sm:$0xf]
    %v7341 = vld [vmem:[%s7336 + $0x10] sm:$0xf]
    %v7342 = vld [vmem:[%s7336 + $0x14] sm:$0xf]
    %v7343 = vld [vmem:[%s7336 + $0x18] sm:$0xf]
    %v7344 = vld [vmem:[%s7336 + $0x1c] sm:$0xf]
    %v7345 = vld [vmem:[%s7336 + $0x20] sm:$0xf]
    %v7346 = vld [vmem:[%s7336 + $0x24] sm:$0xf]
    %v7347 = vld [vmem:[%s7336 + $0x28] sm:$0xf]
    %v7348 = vld [vmem:[%s7336 + $0x2c] sm:$0xf]
    %v7349 = vld [vmem:[%s7336 + $0x30] sm:$0xf]
    %v7350 = vld [vmem:[%s7336 + $0x34] sm:$0xf]
    %v7351 = vld [vmem:[%s7336 + $0x38] sm:$0xf]
    %v7352 = vld [vmem:[%s7336 + $0x3c] sm:$0xf]
    %v7353 = vunpack.c.l.b16 %v7321
    %v7354 = vunpack.c.l.b16 %v7335
    %v7355 = vpack.c.b16 %v7353, %v7129
    %v7356 = vpack.c.b16 %v7354, %v7130
    %v7375 = vunpack.c.l.b16 %v7337
    %v7376 = vunpack.c.l.b16 %v7338
    %v7377 = vunpack.c.l.b16 %v7339
    %v7378 = vunpack.c.l.b16 %v7340
    %v7379 = vunpack.c.l.b16 %v7341
    %v7380 = vunpack.c.l.b16 %v7342
    %v7381 = vunpack.c.l.b16 %v7343
    %v7382 = vunpack.c.l.b16 %v7344
    %v7383 = vunpack.c.l.b16 %v7345
    %v7384 = vunpack.c.l.b16 %v7346
    %v7385 = vunpack.c.l.b16 %v7347
    %v7386 = vunpack.c.l.b16 %v7348
    %v7387 = vunpack.c.l.b16 %v7349
    %v7388 = vunpack.c.l.b16 %v7350
    %v7389 = vunpack.c.l.b16 %v7351
    %v7390 = vunpack.c.l.b16 %v7352
    %v7391 = vpack.c.b16 %v7376, %v7375
    %v7392 = vpack.c.b16 %v7378, %v7377
    %v7393 = vpack.c.b16 %v7380, %v7379
    %v7394 = vpack.c.b16 %v7382, %v7381
    %v7395 = vpack.c.b16 %v7384, %v7383
    %v7396 = vpack.c.b16 %v7386, %v7385
    %v7397 = vpack.c.b16 %v7388, %v7387
    %v7398 = vpack.c.b16 %v7390, %v7389
    %7407 = vmatprep.subr.bf16.mxu0 0
    %7408 = vmatpush1.bf16.msra.mxu0 %v7398
    %7409 = vmatprep.subr.bf16.mxu0 0
    %7410 = vmatpush1.bf16.msra.mxu0 %v7397
    %7411 = vmatprep.subr.bf16.mxu0 0
    %7412 = vmatpush1.bf16.msra.mxu0 %v7396
    %7413 = vmatprep.subr.bf16.mxu0 0
    %7414 = vmatpush1.bf16.msra.mxu0 %v7395
    %7415 = vmatprep.subr.bf16.mxu0 0
    %7416 = vmatpush1.bf16.msra.mxu0 %v7394
    %7417 = vmatprep.subr.bf16.mxu0 0
    %7418 = vmatpush1.bf16.msra.mxu0 %v7393
    %7419 = vmatprep.subr.bf16.mxu0 0
    %7420 = vmatpush1.bf16.msra.mxu0 %v7392
    %7421 = vmatprep.subr.bf16.mxu0 0
    %7422 = vmatpush1.bf16.msra.mxu0 %v7391
    %7423 = vmatprep.subr.bf16.mxu0 0
    %7424 = vmatpush2.bf16.msra.mxu0 0
    %7425 = vmatprep.subr.bf16.mxu0 0
    %7426 = vmatpush2.bf16.msra.mxu0 0
    %7427 = vmatprep.subr.bf16.mxu0 0
    %7428 = vmatpush2.bf16.msra.mxu0 0
    %7429 = vmatprep.subr.bf16.mxu0 0
    %7430 = vmatpush2.bf16.msra.mxu0 0
    %7431 = vmatprep.subr.bf16.mxu0 0
    %7432 = vmatpush2.bf16.msra.mxu0 0
    %7433 = vmatprep.subr.bf16.mxu0 0
    %7434 = vmatpush2.bf16.msra.mxu0 0
    %7435 = vmatprep.subr.bf16.mxu0 0
    %7436 = vmatpush2.bf16.msra.mxu0 0
    %7437 = vmatprep.subr.bf16.mxu0 0
    %7438 = vmatpush2.bf16.msra.mxu0 0
    %7439 = vmatprep.mubr.bf16.mxu0 0
    %7440 = vmatmul.mubr.bf16.gmra.mxu0 %v6908
    %v7441 = vpop.f32.mrf.mxu0
    %v7442 = vadd.f32 0.0, %v7441
    %v7443 = vpop.f32.mrf.mxu0
    %v7444 = vpop.f32.mrf.mxu0
    %v7445 = vadd.f32 0.0, %v7444
    %v7446 = vpop.f32.mrf.mxu0
    %7447 = vmatprep.mubr.bf16.mxu0 0
    %7448 = vmatmul.mubr.bf16.gmra.mxu0 %v6909
    %v7449 = vpop.f32.mrf.mxu0
    %v7450 = vadd.f32 0.0, %v7449
    %v7451 = vpop.f32.mrf.mxu0
    %v7452 = vpop.f32.mrf.mxu0
    %v7453 = vadd.f32 0.0, %v7452
    %v7454 = vpop.f32.mrf.mxu0
    %7455 = vmatprep.mubr.bf16.mxu0 0
    %7456 = vmatmul.mubr.bf16.gmra.mxu0 %v6910
    %v7457 = vpop.f32.mrf.mxu0
    %v7458 = vadd.f32 0.0, %v7457
    %v7459 = vpop.f32.mrf.mxu0
    %v7460 = vpop.f32.mrf.mxu0
    %v7461 = vadd.f32 0.0, %v7460
    %v7462 = vpop.f32.mrf.mxu0
    %7463 = vmatprep.mubr.bf16.mxu0 0
    %7464 = vmatmul.mubr.bf16.gmra.mxu0 %v7355
    %v7465 = vpop.f32.mrf.mxu0
    %v7466 = vadd.f32 0.0, %v7465
    %v7467 = vpop.f32.mrf.mxu0
    %v7468 = vpop.f32.mrf.mxu0
    %v7469 = vadd.f32 0.0, %v7468
    %v7470 = vpop.f32.mrf.mxu0
    %7471 = vmatprep.mubr.bf16.mxu0 0
    %7472 = vmatmul.mubr.bf16.gmra.mxu0 %v6912
    %v7473 = vpop.f32.mrf.mxu0
    %v7474 = vadd.f32 0.0, %v7473
    %v7475 = vpop.f32.mrf.mxu0
    %v7476 = vpop.f32.mrf.mxu0
    %v7477 = vadd.f32 0.0, %v7476
    %v7478 = vpop.f32.mrf.mxu0
    %7479 = vmatprep.mubr.bf16.mxu0 0
    %7480 = vmatmul.mubr.bf16.gmra.mxu0 %v6913
    %v7481 = vpop.f32.mrf.mxu0
    %v7482 = vadd.f32 0.0, %v7481
    %v7483 = vpop.f32.mrf.mxu0
    %v7484 = vpop.f32.mrf.mxu0
    %v7485 = vadd.f32 0.0, %v7484
    %v7486 = vpop.f32.mrf.mxu0
    %7487 = vmatprep.mubr.bf16.mxu0 0
    %7488 = vmatmul.mubr.bf16.gmra.mxu0 %v6914
    %v7489 = vpop.f32.mrf.mxu0
    %v7490 = vadd.f32 0.0, %v7489
    %v7491 = vpop.f32.mrf.mxu0
    %v7492 = vpop.f32.mrf.mxu0
    %v7493 = vadd.f32 0.0, %v7492
    %v7494 = vpop.f32.mrf.mxu0
    %7495 = vmatprep.mubr.bf16.mxu0 0
    %7496 = vmatmul.mubr.bf16.gmra.mxu0 %v7356
    %v7497 = vpop.f32.mrf.mxu0
    %v7498 = vadd.f32 0.0, %v7497
    %v7499 = vpop.f32.mrf.mxu0
    %v7500 = vpop.f32.mrf.mxu0
    %v7501 = vadd.f32 0.0, %v7500
    %v7502 = vpop.f32.mrf.mxu0
    %7503 = vdwg.mxu0
    %v7504 = vadd.f32 %v7292, %v7442
    %v7505 = vadd.f32 %v7293, %v7445
    %v7506 = vadd.f32 %v7294, %v7450
    %v7507 = vadd.f32 %v7295, %v7453
    %v7508 = vadd.f32 %v7296, %v7458
    %v7509 = vadd.f32 %v7297, %v7461
    %v7510 = vadd.f32 %v7298, %v7466
    %v7511 = vadd.f32 %v7299, %v7469
    %v7512 = vadd.f32 %v7300, %v7474
    %v7513 = vadd.f32 %v7301, %v7477
    %v7514 = vadd.f32 %v7302, %v7482
    %v7515 = vadd.f32 %v7303, %v7485
    %v7516 = vadd.f32 %v7304, %v7490
    %v7517 = vadd.f32 %v7305, %v7493
    %v7518 = vadd.f32 %v7306, %v7498
    %v7519 = vadd.f32 %v7307, %v7501
    %v7520 = vld [vmem:[#allocation2] sm:$0xe]
    %v7521 = vld [vmem:[#allocation2 + $0x8] sm:$0xe]
    %v7522 = vld [vmem:[#allocation2 + $0x10] sm:$0xe]
    %v7523 = vld [vmem:[#allocation2 + $0x18] sm:$0xe]
    %v7524 = vld [vmem:[#allocation2 + $0x20] sm:$0xe]
    %v7525 = vld [vmem:[#allocation2 + $0x28] sm:$0xe]
    %v7526 = vld [vmem:[#allocation2 + $0x30] sm:$0xe]
    %v7527 = vld [vmem:[#allocation2 + $0x38] sm:$0xe]
    %v7528 = vld [vmem:[#allocation2 + $0x40] sm:$0xe]
    %v7529 = vld [vmem:[#allocation2 + $0x48] sm:$0xe]
    %v7530 = vld [vmem:[#allocation2 + $0x50] sm:$0xe]
    %v7531 = vld [vmem:[#allocation2 + $0x58] sm:$0xe]
    %v7532 = vld [vmem:[#allocation2 + $0x60] sm:$0xe]
    %v7533 = vld [vmem:[#allocation2 + $0x68] sm:$0xe]
    %v7534 = vld [vmem:[#allocation2 + $0x70] sm:$0xe]
    %v7535 = vld [vmem:[#allocation2 + $0x78] sm:$0xe]
    %v7536 = vld [vmem:[#allocation2 + $0x80] sm:$0xe]
    %v7537 = vld [vmem:[#allocation2 + $0x88] sm:$0xe]
    %v7538 = vld [vmem:[#allocation2 + $0x90] sm:$0xe]
    %v7539 = vld [vmem:[#allocation2 + $0x98] sm:$0xe]
    %v7572 = vrot.slane %v7520, 5
    %v7573 = vrot.slane %v7572, 4
    %v7574 = vrot.slane %v6611, 5
    %v7575 = vsel %vm2379, %v7573, %v7574
    %v7576 = vrot.slane %v7521, 5
    %v7577 = vrot.slane %v7576, 4
    %v7578 = vrot.slane %v6613, 5
    %v7579 = vsel %vm2379, %v7577, %v7578
    %v7580 = vrot.slane %v7522, 5
    %v7581 = vrot.slane %v7580, 4
    %v7582 = vrot.slane %v6615, 5
    %v7583 = vsel %vm2379, %v7581, %v7582
    %v7584 = vrot.slane %v7523, 5
    %v7585 = vrot.slane %v7584, 4
    %v7586 = vrot.slane %v6617, 5
    %v7587 = vsel %vm2379, %v7585, %v7586
    %v7588 = vrot.slane %v7524, 5
    %v7589 = vrot.slane %v7588, 4
    %v7590 = vrot.slane %v6619, 5
    %v7591 = vsel %vm2379, %v7589, %v7590
    %v7592 = vrot.slane %v7525, 5
    %v7593 = vrot.slane %v7592, 4
    %v7594 = vrot.slane %v6621, 5
    %v7595 = vsel %vm2379, %v7593, %v7594
    %v7596 = vrot.slane %v7526, 5
    %v7597 = vrot.slane %v7596, 4
    %v7598 = vrot.slane %v6623, 5
    %v7599 = vsel %vm2379, %v7597, %v7598
    %v7600 = vrot.slane %v7527, 5
    %v7601 = vrot.slane %v7600, 4
    %v7602 = vrot.slane %v6625, 5
    %v7603 = vsel %vm2379, %v7601, %v7602
    %v7604 = vrot.slane %v7530, 5
    %v7605 = vrot.slane %v7604, 4
    %v7606 = vrot.slane %v6631, 5
    %v7607 = vsel %vm2379, %v7605, %v7606
    %v7608 = vrot.slane %v7531, 5
    %v7609 = vrot.slane %v7608, 4
    %v7610 = vrot.slane %v6633, 5
    %v7611 = vsel %vm2379, %v7609, %v7610
    %v7612 = vrot.slane %v7532, 5
    %v7613 = vrot.slane %v7612, 4
    %v7614 = vrot.slane %v6635, 5
    %v7615 = vsel %vm2379, %v7613, %v7614
    %v7616 = vrot.slane %v7533, 5
    %v7617 = vrot.slane %v7616, 4
    %v7618 = vrot.slane %v6637, 5
    %v7619 = vsel %vm2379, %v7617, %v7618
    %v7620 = vrot.slane %v7534, 5
    %v7621 = vrot.slane %v7620, 4
    %v7622 = vrot.slane %v6639, 5
    %v7623 = vsel %vm2379, %v7621, %v7622
    %v7624 = vrot.slane %v7535, 5
    %v7625 = vrot.slane %v7624, 4
    %v7626 = vrot.slane %v6641, 5
    %v7627 = vsel %vm2379, %v7625, %v7626
    %v7628 = vrot.slane %v7536, 5
    %v7629 = vrot.slane %v7628, 4
    %v7630 = vrot.slane %v6643, 5
    %v7631 = vsel %vm2379, %v7629, %v7630
    %v7632 = vrot.slane %v7537, 5
    %v7633 = vrot.slane %v7632, 4
    %v7634 = vrot.slane %v6645, 5
    %v7635 = vsel %vm2379, %v7633, %v7634
    %s7636 = scalar_lea.vmem [#allocation11], 128
    %v7637 = vld [vmem:[%s7636] sm:$0xf]
    %v7638 = vld [vmem:[%s7636 + $0x4] sm:$0xf]
    %v7639 = vld [vmem:[%s7636 + $0x8] sm:$0xf]
    %v7640 = vld [vmem:[%s7636 + $0xc] sm:$0xf]
    %v7641 = vld [vmem:[%s7636 + $0x10] sm:$0xf]
    %v7642 = vld [vmem:[%s7636 + $0x14] sm:$0xf]
    %v7643 = vld [vmem:[%s7636 + $0x18] sm:$0xf]
    %v7644 = vld [vmem:[%s7636 + $0x1c] sm:$0xf]
    %v7645 = vld [vmem:[%s7636 + $0x20] sm:$0xf]
    %v7646 = vld [vmem:[%s7636 + $0x24] sm:$0xf]
    %v7647 = vld [vmem:[%s7636 + $0x28] sm:$0xf]
    %v7648 = vld [vmem:[%s7636 + $0x2c] sm:$0xf]
    %v7649 = vld [vmem:[%s7636 + $0x30] sm:$0xf]
    %v7650 = vld [vmem:[%s7636 + $0x34] sm:$0xf]
    %v7651 = vld [vmem:[%s7636 + $0x38] sm:$0xf]
    %v7652 = vld [vmem:[%s7636 + $0x3c] sm:$0xf]
    %v7653 = vunpack.c.l.b16 %v7575
    %v7654 = vunpack.c.l.b16 %v7579
    %v7655 = vunpack.c.l.b16 %v7583
    %v7656 = vunpack.c.l.b16 %v7587
    %v7657 = vunpack.c.l.b16 %v7591
    %v7658 = vunpack.c.l.b16 %v7595
    %v7659 = vunpack.c.l.b16 %v7599
    %v7660 = vunpack.c.l.b16 %v7603
    %v7661 = vunpack.c.l.b16 %v7607
    %v7662 = vunpack.c.l.b16 %v7611
    %v7663 = vunpack.c.l.b16 %v7615
    %v7664 = vunpack.c.l.b16 %v7619
    %v7665 = vunpack.c.l.b16 %v7623
    %v7666 = vunpack.c.l.b16 %v7627
    %v7667 = vunpack.c.l.b16 %v7631
    %v7668 = vunpack.c.l.b16 %v7635
    %v7669 = vpack.c.b16 %v7654, %v7653
    %v7670 = vpack.c.b16 %v7656, %v7655
    %v7671 = vpack.c.b16 %v7658, %v7657
    %v7672 = vpack.c.b16 %v7660, %v7659
    %v7673 = vpack.c.b16 %v7662, %v7661
    %v7674 = vpack.c.b16 %v7664, %v7663
    %v7675 = vpack.c.b16 %v7666, %v7665
    %v7676 = vpack.c.b16 %v7668, %v7667
    %v7701 = vunpack.c.l.b16 %v7637
    %v7702 = vunpack.c.l.b16 %v7638
    %v7703 = vunpack.c.l.b16 %v7639
    %v7704 = vunpack.c.l.b16 %v7640
    %v7705 = vunpack.c.l.b16 %v7641
    %v7706 = vunpack.c.l.b16 %v7642
    %v7707 = vunpack.c.l.b16 %v7643
    %v7708 = vunpack.c.l.b16 %v7644
    %v7709 = vunpack.c.l.b16 %v7645
    %v7710 = vunpack.c.l.b16 %v7646
    %v7711 = vunpack.c.l.b16 %v7647
    %v7712 = vunpack.c.l.b16 %v7648
    %v7713 = vunpack.c.l.b16 %v7649
    %v7714 = vunpack.c.l.b16 %v7650
    %v7715 = vunpack.c.l.b16 %v7651
    %v7716 = vunpack.c.l.b16 %v7652
    %v7717 = vpack.c.b16 %v7702, %v7701
    %v7718 = vpack.c.b16 %v7704, %v7703
    %v7719 = vpack.c.b16 %v7706, %v7705
    %v7720 = vpack.c.b16 %v7708, %v7707
    %v7721 = vpack.c.b16 %v7710, %v7709
    %v7722 = vpack.c.b16 %v7712, %v7711
    %v7723 = vpack.c.b16 %v7714, %v7713
    %v7724 = vpack.c.b16 %v7716, %v7715
    %7733 = vmatprep.subr.bf16.mxu0 0
    %7734 = vmatpush1.bf16.msra.mxu0 %v7724
    %7735 = vmatprep.subr.bf16.mxu0 0
    %7736 = vmatpush1.bf16.msra.mxu0 %v7723
    %7737 = vmatprep.subr.bf16.mxu0 0
    %7738 = vmatpush1.bf16.msra.mxu0 %v7722
    %7739 = vmatprep.subr.bf16.mxu0 0
    %7740 = vmatpush1.bf16.msra.mxu0 %v7721
    %7741 = vmatprep.subr.bf16.mxu0 0
    %7742 = vmatpush1.bf16.msra.mxu0 %v7720
    %7743 = vmatprep.subr.bf16.mxu0 0
    %7744 = vmatpush1.bf16.msra.mxu0 %v7719
    %7745 = vmatprep.subr.bf16.mxu0 0
    %7746 = vmatpush1.bf16.msra.mxu0 %v7718
    %7747 = vmatprep.subr.bf16.mxu0 0
    %7748 = vmatpush1.bf16.msra.mxu0 %v7717
    %7749 = vmatprep.subr.bf16.mxu0 0
    %7750 = vmatpush2.bf16.msra.mxu0 0
    %7751 = vmatprep.subr.bf16.mxu0 0
    %7752 = vmatpush2.bf16.msra.mxu0 0
    %7753 = vmatprep.subr.bf16.mxu0 0
    %7754 = vmatpush2.bf16.msra.mxu0 0
    %7755 = vmatprep.subr.bf16.mxu0 0
    %7756 = vmatpush2.bf16.msra.mxu0 0
    %7757 = vmatprep.subr.bf16.mxu0 0
    %7758 = vmatpush2.bf16.msra.mxu0 0
    %7759 = vmatprep.subr.bf16.mxu0 0
    %7760 = vmatpush2.bf16.msra.mxu0 0
    %7761 = vmatprep.subr.bf16.mxu0 0
    %7762 = vmatpush2.bf16.msra.mxu0 0
    %7763 = vmatprep.subr.bf16.mxu0 0
    %7764 = vmatpush2.bf16.msra.mxu0 0
    %7765 = vmatprep.mubr.bf16.mxu0 0
    %7766 = vmatmul.mubr.bf16.gmra.mxu0 %v7669
    %v7767 = vpop.f32.mrf.mxu0
    %v7768 = vadd.f32 0.0, %v7767
    %v7769 = vpop.f32.mrf.mxu0
    %v7770 = vpop.f32.mrf.mxu0
    %v7771 = vadd.f32 0.0, %v7770
    %v7772 = vpop.f32.mrf.mxu0
    %7773 = vmatprep.mubr.bf16.mxu0 0
    %7774 = vmatmul.mubr.bf16.gmra.mxu0 %v7670
    %v7775 = vpop.f32.mrf.mxu0
    %v7776 = vadd.f32 0.0, %v7775
    %v7777 = vpop.f32.mrf.mxu0
    %v7778 = vpop.f32.mrf.mxu0
    %v7779 = vadd.f32 0.0, %v7778
    %v7780 = vpop.f32.mrf.mxu0
    %7781 = vmatprep.mubr.bf16.mxu0 0
    %7782 = vmatmul.mubr.bf16.gmra.mxu0 %v7671
    %v7783 = vpop.f32.mrf.mxu0
    %v7784 = vadd.f32 0.0, %v7783
    %v7785 = vpop.f32.mrf.mxu0
    %v7786 = vpop.f32.mrf.mxu0
    %v7787 = vadd.f32 0.0, %v7786
    %v7788 = vpop.f32.mrf.mxu0
    %7789 = vmatprep.mubr.bf16.mxu0 0
    %7790 = vmatmul.mubr.bf16.gmra.mxu0 %v7672
    %v7791 = vpop.f32.mrf.mxu0
    %v7792 = vadd.f32 0.0, %v7791
    %v7793 = vpop.f32.mrf.mxu0
    %v7794 = vpop.f32.mrf.mxu0
    %v7795 = vadd.f32 0.0, %v7794
    %v7796 = vpop.f32.mrf.mxu0
    %7797 = vmatprep.mubr.bf16.mxu0 0
    %7798 = vmatmul.mubr.bf16.gmra.mxu0 %v7673
    %v7799 = vpop.f32.mrf.mxu0
    %v7800 = vadd.f32 0.0, %v7799
    %v7801 = vpop.f32.mrf.mxu0
    %v7802 = vpop.f32.mrf.mxu0
    %v7803 = vadd.f32 0.0, %v7802
    %v7804 = vpop.f32.mrf.mxu0
    %7805 = vmatprep.mubr.bf16.mxu0 0
    %7806 = vmatmul.mubr.bf16.gmra.mxu0 %v7674
    %v7807 = vpop.f32.mrf.mxu0
    %v7808 = vadd.f32 0.0, %v7807
    %v7809 = vpop.f32.mrf.mxu0
    %v7810 = vpop.f32.mrf.mxu0
    %v7811 = vadd.f32 0.0, %v7810
    %v7812 = vpop.f32.mrf.mxu0
    %7813 = vmatprep.mubr.bf16.mxu0 0
    %7814 = vmatmul.mubr.bf16.gmra.mxu0 %v7675
    %v7815 = vpop.f32.mrf.mxu0
    %v7816 = vadd.f32 0.0, %v7815
    %v7817 = vpop.f32.mrf.mxu0
    %v7818 = vpop.f32.mrf.mxu0
    %v7819 = vadd.f32 0.0, %v7818
    %v7820 = vpop.f32.mrf.mxu0
    %7821 = vmatprep.mubr.bf16.mxu0 0
    %7822 = vmatmul.mubr.bf16.gmra.mxu0 %v7676
    %v7823 = vpop.f32.mrf.mxu0
    %v7824 = vadd.f32 0.0, %v7823
    %v7825 = vpop.f32.mrf.mxu0
    %v7826 = vpop.f32.mrf.mxu0
    %v7827 = vadd.f32 0.0, %v7826
    %v7828 = vpop.f32.mrf.mxu0
    %7829 = vdwg.mxu0
    %v7830 = vadd.f32 %v7504, %v7768
    %v7831 = vadd.f32 %v7505, %v7771
    %v7832 = vadd.f32 %v7506, %v7776
    %v7833 = vadd.f32 %v7507, %v7779
    %v7834 = vadd.f32 %v7508, %v7784
    %v7835 = vadd.f32 %v7509, %v7787
    %v7836 = vadd.f32 %v7510, %v7792
    %v7837 = vadd.f32 %v7511, %v7795
    %v7838 = vadd.f32 %v7512, %v7800
    %v7839 = vadd.f32 %v7513, %v7803
    %v7840 = vadd.f32 %v7514, %v7808
    %v7841 = vadd.f32 %v7515, %v7811
    %v7842 = vadd.f32 %v7516, %v7816
    %v7843 = vadd.f32 %v7517, %v7819
    %v7844 = vadd.f32 %v7518, %v7824
    %v7845 = vadd.f32 %v7519, %v7827
    %v7850 = vrot.slane %v7528, 5
    %v7851 = vrot.slane %v7850, 4
    %v7852 = vrot.slane %v6627, 5
    %v7853 = vsel %vm2379, %v7851, %v7852
    %v7854 = vrot.slane %v7538, 5
    %v7855 = vrot.slane %v7854, 4
    %v7856 = vrot.slane %v6647, 5
    %v7857 = vsel %vm2379, %v7855, %v7856
    %s7858 = scalar_lea.vmem [#allocation11], 320
    %v7859 = vld [vmem:[%s7858] sm:$0xf]
    %v7860 = vld [vmem:[%s7858 + $0x4] sm:$0xf]
    %v7861 = vld [vmem:[%s7858 + $0x8] sm:$0xf]
    %v7862 = vld [vmem:[%s7858 + $0xc] sm:$0xf]
    %v7863 = vld [vmem:[%s7858 + $0x10] sm:$0xf]
    %v7864 = vld [vmem:[%s7858 + $0x14] sm:$0xf]
    %v7865 = vld [vmem:[%s7858 + $0x18] sm:$0xf]
    %v7866 = vld [vmem:[%s7858 + $0x1c] sm:$0xf]
    %v7867 = vld [vmem:[%s7858 + $0x20] sm:$0xf]
    %v7868 = vld [vmem:[%s7858 + $0x24] sm:$0xf]
    %v7869 = vld [vmem:[%s7858 + $0x28] sm:$0xf]
    %v7870 = vld [vmem:[%s7858 + $0x2c] sm:$0xf]
    %v7871 = vld [vmem:[%s7858 + $0x30] sm:$0xf]
    %v7872 = vld [vmem:[%s7858 + $0x34] sm:$0xf]
    %v7873 = vld [vmem:[%s7858 + $0x38] sm:$0xf]
    %v7874 = vld [vmem:[%s7858 + $0x3c] sm:$0xf]
    %v7875 = vunpack.c.l.b16 %v7853
    %v7876 = vunpack.c.l.b16 %v7857
    %v7877 = vpack.c.b16 %v7655, %v7654
    %v7878 = vpack.c.b16 %v7657, %v7656
    %v7879 = vpack.c.b16 %v7659, %v7658
    %v7880 = vpack.c.b16 %v7875, %v7660
    %v7881 = vpack.c.b16 %v7663, %v7662
    %v7882 = vpack.c.b16 %v7665, %v7664
    %v7883 = vpack.c.b16 %v7667, %v7666
    %v7884 = vpack.c.b16 %v7876, %v7668
    %v7909 = vunpack.c.l.b16 %v7859
    %v7910 = vunpack.c.l.b16 %v7860
    %v7911 = vunpack.c.l.b16 %v7861
    %v7912 = vunpack.c.l.b16 %v7862
    %v7913 = vunpack.c.l.b16 %v7863
    %v7914 = vunpack.c.l.b16 %v7864
    %v7915 = vunpack.c.l.b16 %v7865
    %v7916 = vunpack.c.l.b16 %v7866
    %v7917 = vunpack.c.l.b16 %v7867
    %v7918 = vunpack.c.l.b16 %v7868
    %v7919 = vunpack.c.l.b16 %v7869
    %v7920 = vunpack.c.l.b16 %v7870
    %v7921 = vunpack.c.l.b16 %v7871
    %v7922 = vunpack.c.l.b16 %v7872
    %v7923 = vunpack.c.l.b16 %v7873
    %v7924 = vunpack.c.l.b16 %v7874
    %v7925 = vpack.c.b16 %v7910, %v7909
    %v7926 = vpack.c.b16 %v7912, %v7911
    %v7927 = vpack.c.b16 %v7914, %v7913
    %v7928 = vpack.c.b16 %v7916, %v7915
    %v7929 = vpack.c.b16 %v7918, %v7917
    %v7930 = vpack.c.b16 %v7920, %v7919
    %v7931 = vpack.c.b16 %v7922, %v7921
    %v7932 = vpack.c.b16 %v7924, %v7923
    %7941 = vmatprep.subr.bf16.mxu0 0
    %7942 = vmatpush1.bf16.msra.mxu0 %v7932
    %7943 = vmatprep.subr.bf16.mxu0 0
    %7944 = vmatpush1.bf16.msra.mxu0 %v7931
    %7945 = vmatprep.subr.bf16.mxu0 0
    %7946 = vmatpush1.bf16.msra.mxu0 %v7930
    %7947 = vmatprep.subr.bf16.mxu0 0
    %7948 = vmatpush1.bf16.msra.mxu0 %v7929
    %7949 = vmatprep.subr.bf16.mxu0 0
    %7950 = vmatpush1.bf16.msra.mxu0 %v7928
    %7951 = vmatprep.subr.bf16.mxu0 0
    %7952 = vmatpush1.bf16.msra.mxu0 %v7927
    %7953 = vmatprep.subr.bf16.mxu0 0
    %7954 = vmatpush1.bf16.msra.mxu0 %v7926
    %7955 = vmatprep.subr.bf16.mxu0 0
    %7956 = vmatpush1.bf16.msra.mxu0 %v7925
    %7957 = vmatprep.subr.bf16.mxu0 0
    %7958 = vmatpush2.bf16.msra.mxu0 0
    %7959 = vmatprep.subr.bf16.mxu0 0
    %7960 = vmatpush2.bf16.msra.mxu0 0
    %7961 = vmatprep.subr.bf16.mxu0 0
    %7962 = vmatpush2.bf16.msra.mxu0 0
    %7963 = vmatprep.subr.bf16.mxu0 0
    %7964 = vmatpush2.bf16.msra.mxu0 0
    %7965 = vmatprep.subr.bf16.mxu0 0
    %7966 = vmatpush2.bf16.msra.mxu0 0
    %7967 = vmatprep.subr.bf16.mxu0 0
    %7968 = vmatpush2.bf16.msra.mxu0 0
    %7969 = vmatprep.subr.bf16.mxu0 0
    %7970 = vmatpush2.bf16.msra.mxu0 0
    %7971 = vmatprep.subr.bf16.mxu0 0
    %7972 = vmatpush2.bf16.msra.mxu0 0
    %7973 = vmatprep.mubr.bf16.mxu0 0
    %7974 = vmatmul.mubr.bf16.gmra.mxu0 %v7877
    %v7975 = vpop.f32.mrf.mxu0
    %v7976 = vadd.f32 0.0, %v7975
    %v7977 = vpop.f32.mrf.mxu0
    %v7978 = vpop.f32.mrf.mxu0
    %v7979 = vadd.f32 0.0, %v7978
    %v7980 = vpop.f32.mrf.mxu0
    %7981 = vmatprep.mubr.bf16.mxu0 0
    %7982 = vmatmul.mubr.bf16.gmra.mxu0 %v7878
    %v7983 = vpop.f32.mrf.mxu0
    %v7984 = vadd.f32 0.0, %v7983
    %v7985 = vpop.f32.mrf.mxu0
    %v7986 = vpop.f32.mrf.mxu0
    %v7987 = vadd.f32 0.0, %v7986
    %v7988 = vpop.f32.mrf.mxu0
    %7989 = vmatprep.mubr.bf16.mxu0 0
    %7990 = vmatmul.mubr.bf16.gmra.mxu0 %v7879
    %v7991 = vpop.f32.mrf.mxu0
    %v7992 = vadd.f32 0.0, %v7991
    %v7993 = vpop.f32.mrf.mxu0
    %v7994 = vpop.f32.mrf.mxu0
    %v7995 = vadd.f32 0.0, %v7994
    %v7996 = vpop.f32.mrf.mxu0
    %7997 = vmatprep.mubr.bf16.mxu0 0
    %7998 = vmatmul.mubr.bf16.gmra.mxu0 %v7880
    %v7999 = vpop.f32.mrf.mxu0
    %v8000 = vadd.f32 0.0, %v7999
    %v8001 = vpop.f32.mrf.mxu0
    %v8002 = vpop.f32.mrf.mxu0
    %v8003 = vadd.f32 0.0, %v8002
    %v8004 = vpop.f32.mrf.mxu0
    %8005 = vmatprep.mubr.bf16.mxu0 0
    %8006 = vmatmul.mubr.bf16.gmra.mxu0 %v7881
    %v8007 = vpop.f32.mrf.mxu0
    %v8008 = vadd.f32 0.0, %v8007
    %v8009 = vpop.f32.mrf.mxu0
    %v8010 = vpop.f32.mrf.mxu0
    %v8011 = vadd.f32 0.0, %v8010
    %v8012 = vpop.f32.mrf.mxu0
    %8013 = vmatprep.mubr.bf16.mxu0 0
    %8014 = vmatmul.mubr.bf16.gmra.mxu0 %v7882
    %v8015 = vpop.f32.mrf.mxu0
    %v8016 = vadd.f32 0.0, %v8015
    %v8017 = vpop.f32.mrf.mxu0
    %v8018 = vpop.f32.mrf.mxu0
    %v8019 = vadd.f32 0.0, %v8018
    %v8020 = vpop.f32.mrf.mxu0
    %8021 = vmatprep.mubr.bf16.mxu0 0
    %8022 = vmatmul.mubr.bf16.gmra.mxu0 %v7883
    %v8023 = vpop.f32.mrf.mxu0
    %v8024 = vadd.f32 0.0, %v8023
    %v8025 = vpop.f32.mrf.mxu0
    %v8026 = vpop.f32.mrf.mxu0
    %v8027 = vadd.f32 0.0, %v8026
    %v8028 = vpop.f32.mrf.mxu0
    %8029 = vmatprep.mubr.bf16.mxu0 0
    %8030 = vmatmul.mubr.bf16.gmra.mxu0 %v7884
    %v8031 = vpop.f32.mrf.mxu0
    %v8032 = vadd.f32 0.0, %v8031
    %v8033 = vpop.f32.mrf.mxu0
    %v8034 = vpop.f32.mrf.mxu0
    %v8035 = vadd.f32 0.0, %v8034
    %v8036 = vpop.f32.mrf.mxu0
    %8037 = vdwg.mxu0
    %v8038 = vadd.f32 %v7830, %v7976
    %v8039 = vadd.f32 %v7831, %v7979
    %v8040 = vadd.f32 %v7832, %v7984
    %v8041 = vadd.f32 %v7833, %v7987
    %v8042 = vadd.f32 %v7834, %v7992
    %v8043 = vadd.f32 %v7835, %v7995
    %v8044 = vadd.f32 %v7836, %v8000
    %v8045 = vadd.f32 %v7837, %v8003
    %v8046 = vadd.f32 %v7838, %v8008
    %v8047 = vadd.f32 %v7839, %v8011
    %v8048 = vadd.f32 %v7840, %v8016
    %v8049 = vadd.f32 %v7841, %v8019
    %v8050 = vadd.f32 %v7842, %v8024
    %v8051 = vadd.f32 %v7843, %v8027
    %v8052 = vadd.f32 %v7844, %v8032
    %v8053 = vadd.f32 %v7845, %v8035
    %v8058 = vrot.slane %v7529, 5
    %v8059 = vrot.slane %v8058, 4
    %v8060 = vrot.slane %v6629, 5
    %v8061 = vsel %vm2379, %v8059, %v8060
    %v8062 = vrot.slane %v7539, 5
    %v8063 = vrot.slane %v8062, 4
    %v8064 = vrot.slane %v6649, 5
    %v8065 = vsel %vm2379, %v8063, %v8064
    %s8066 = scalar_lea.vmem [#allocation11], 512
    %v8067 = vld [vmem:[%s8066] sm:$0xf]
    %v8068 = vld [vmem:[%s8066 + $0x4] sm:$0xf]
    %v8069 = vld [vmem:[%s8066 + $0x8] sm:$0xf]
    %v8070 = vld [vmem:[%s8066 + $0xc] sm:$0xf]
    %v8071 = vld [vmem:[%s8066 + $0x10] sm:$0xf]
    %v8072 = vld [vmem:[%s8066 + $0x14] sm:$0xf]
    %v8073 = vld [vmem:[%s8066 + $0x18] sm:$0xf]
    %v8074 = vld [vmem:[%s8066 + $0x1c] sm:$0xf]
    %v8075 = vld [vmem:[%s8066 + $0x20] sm:$0xf]
    %v8076 = vld [vmem:[%s8066 + $0x24] sm:$0xf]
    %v8077 = vld [vmem:[%s8066 + $0x28] sm:$0xf]
    %v8078 = vld [vmem:[%s8066 + $0x2c] sm:$0xf]
    %v8079 = vld [vmem:[%s8066 + $0x30] sm:$0xf]
    %v8080 = vld [vmem:[%s8066 + $0x34] sm:$0xf]
    %v8081 = vld [vmem:[%s8066 + $0x38] sm:$0xf]
    %v8082 = vld [vmem:[%s8066 + $0x3c] sm:$0xf]
    %v8083 = vunpack.c.l.b16 %v8061
    %v8084 = vunpack.c.l.b16 %v8065
    %v8085 = vpack.c.b16 %v8083, %v7875
    %v8086 = vpack.c.b16 %v8084, %v7876
    %v8105 = vunpack.c.l.b16 %v8067
    %v8106 = vunpack.c.l.b16 %v8068
    %v8107 = vunpack.c.l.b16 %v8069
    %v8108 = vunpack.c.l.b16 %v8070
    %v8109 = vunpack.c.l.b16 %v8071
    %v8110 = vunpack.c.l.b16 %v8072
    %v8111 = vunpack.c.l.b16 %v8073
    %v8112 = vunpack.c.l.b16 %v8074
    %v8113 = vunpack.c.l.b16 %v8075
    %v8114 = vunpack.c.l.b16 %v8076
    %v8115 = vunpack.c.l.b16 %v8077
    %v8116 = vunpack.c.l.b16 %v8078
    %v8117 = vunpack.c.l.b16 %v8079
    %v8118 = vunpack.c.l.b16 %v8080
    %v8119 = vunpack.c.l.b16 %v8081
    %v8120 = vunpack.c.l.b16 %v8082
    %v8121 = vpack.c.b16 %v8106, %v8105
    %v8122 = vpack.c.b16 %v8108, %v8107
    %v8123 = vpack.c.b16 %v8110, %v8109
    %v8124 = vpack.c.b16 %v8112, %v8111
    %v8125 = vpack.c.b16 %v8114, %v8113
    %v8126 = vpack.c.b16 %v8116, %v8115
    %v8127 = vpack.c.b16 %v8118, %v8117
    %v8128 = vpack.c.b16 %v8120, %v8119
    %8137 = vmatprep.subr.bf16.mxu0 0
    %8138 = vmatpush1.bf16.msra.mxu0 %v8128
    %8139 = vmatprep.subr.bf16.mxu0 0
    %8140 = vmatpush1.bf16.msra.mxu0 %v8127
    %8141 = vmatprep.subr.bf16.mxu0 0
    %8142 = vmatpush1.bf16.msra.mxu0 %v8126
    %8143 = vmatprep.subr.bf16.mxu0 0
    %8144 = vmatpush1.bf16.msra.mxu0 %v8125
    %8145 = vmatprep.subr.bf16.mxu0 0
    %8146 = vmatpush1.bf16.msra.mxu0 %v8124
    %8147 = vmatprep.subr.bf16.mxu0 0
    %8148 = vmatpush1.bf16.msra.mxu0 %v8123
    %8149 = vmatprep.subr.bf16.mxu0 0
    %8150 = vmatpush1.bf16.msra.mxu0 %v8122
    %8151 = vmatprep.subr.bf16.mxu0 0
    %8152 = vmatpush1.bf16.msra.mxu0 %v8121
    %8153 = vmatprep.subr.bf16.mxu0 0
    %8154 = vmatpush2.bf16.msra.mxu0 0
    %8155 = vmatprep.subr.bf16.mxu0 0
    %8156 = vmatpush2.bf16.msra.mxu0 0
    %8157 = vmatprep.subr.bf16.mxu0 0
    %8158 = vmatpush2.bf16.msra.mxu0 0
    %8159 = vmatprep.subr.bf16.mxu0 0
    %8160 = vmatpush2.bf16.msra.mxu0 0
    %8161 = vmatprep.subr.bf16.mxu0 0
    %8162 = vmatpush2.bf16.msra.mxu0 0
    %8163 = vmatprep.subr.bf16.mxu0 0
    %8164 = vmatpush2.bf16.msra.mxu0 0
    %8165 = vmatprep.subr.bf16.mxu0 0
    %8166 = vmatpush2.bf16.msra.mxu0 0
    %8167 = vmatprep.subr.bf16.mxu0 0
    %8168 = vmatpush2.bf16.msra.mxu0 0
    %8169 = vmatprep.mubr.bf16.mxu0 0
    %8170 = vmatmul.mubr.bf16.gmra.mxu0 %v7670
    %v8171 = vpop.f32.mrf.mxu0
    %v8172 = vadd.f32 0.0, %v8171
    %v8173 = vpop.f32.mrf.mxu0
    %v8174 = vpop.f32.mrf.mxu0
    %v8175 = vadd.f32 0.0, %v8174
    %v8176 = vpop.f32.mrf.mxu0
    %8177 = vmatprep.mubr.bf16.mxu0 0
    %8178 = vmatmul.mubr.bf16.gmra.mxu0 %v7671
    %v8179 = vpop.f32.mrf.mxu0
    %v8180 = vadd.f32 0.0, %v8179
    %v8181 = vpop.f32.mrf.mxu0
    %v8182 = vpop.f32.mrf.mxu0
    %v8183 = vadd.f32 0.0, %v8182
    %v8184 = vpop.f32.mrf.mxu0
    %8185 = vmatprep.mubr.bf16.mxu0 0
    %8186 = vmatmul.mubr.bf16.gmra.mxu0 %v7672
    %v8187 = vpop.f32.mrf.mxu0
    %v8188 = vadd.f32 0.0, %v8187
    %v8189 = vpop.f32.mrf.mxu0
    %v8190 = vpop.f32.mrf.mxu0
    %v8191 = vadd.f32 0.0, %v8190
    %v8192 = vpop.f32.mrf.mxu0
    %8193 = vmatprep.mubr.bf16.mxu0 0
    %8194 = vmatmul.mubr.bf16.gmra.mxu0 %v8085
    %v8195 = vpop.f32.mrf.mxu0
    %v8196 = vadd.f32 0.0, %v8195
    %v8197 = vpop.f32.mrf.mxu0
    %v8198 = vpop.f32.mrf.mxu0
    %v8199 = vadd.f32 0.0, %v8198
    %v8200 = vpop.f32.mrf.mxu0
    %8201 = vmatprep.mubr.bf16.mxu0 0
    %8202 = vmatmul.mubr.bf16.gmra.mxu0 %v7674
    %v8203 = vpop.f32.mrf.mxu0
    %v8204 = vadd.f32 0.0, %v8203
    %v8205 = vpop.f32.mrf.mxu0
    %v8206 = vpop.f32.mrf.mxu0
    %v8207 = vadd.f32 0.0, %v8206
    %v8208 = vpop.f32.mrf.mxu0
    %8209 = vmatprep.mubr.bf16.mxu0 0
    %8210 = vmatmul.mubr.bf16.gmra.mxu0 %v7675
    %v8211 = vpop.f32.mrf.mxu0
    %v8212 = vadd.f32 0.0, %v8211
    %v8213 = vpop.f32.mrf.mxu0
    %v8214 = vpop.f32.mrf.mxu0
    %v8215 = vadd.f32 0.0, %v8214
    %v8216 = vpop.f32.mrf.mxu0
    %8217 = vmatprep.mubr.bf16.mxu0 0
    %8218 = vmatmul.mubr.bf16.gmra.mxu0 %v7676
    %v8219 = vpop.f32.mrf.mxu0
    %v8220 = vadd.f32 0.0, %v8219
    %v8221 = vpop.f32.mrf.mxu0
    %v8222 = vpop.f32.mrf.mxu0
    %v8223 = vadd.f32 0.0, %v8222
    %v8224 = vpop.f32.mrf.mxu0
    %8225 = vmatprep.mubr.bf16.mxu0 0
    %8226 = vmatmul.mubr.bf16.gmra.mxu0 %v8086
    %v8227 = vpop.f32.mrf.mxu0
    %v8228 = vadd.f32 0.0, %v8227
    %v8229 = vpop.f32.mrf.mxu0
    %v8230 = vpop.f32.mrf.mxu0
    %v8231 = vadd.f32 0.0, %v8230
    %v8232 = vpop.f32.mrf.mxu0
    %8233 = vdwg.mxu0
    %v8234 = vadd.f32 %v8038, %v8172
    %v8235 = vadd.f32 %v8039, %v8175
    %v8236 = vadd.f32 %v8040, %v8180
    %v8237 = vadd.f32 %v8041, %v8183
    %v8238 = vadd.f32 %v8042, %v8188
    %v8239 = vadd.f32 %v8043, %v8191
    %v8240 = vadd.f32 %v8044, %v8196
    %v8241 = vadd.f32 %v8045, %v8199
    %v8242 = vadd.f32 %v8046, %v8204
    %v8243 = vadd.f32 %v8047, %v8207
    %v8244 = vadd.f32 %v8048, %v8212
    %v8245 = vadd.f32 %v8049, %v8215
    %v8246 = vadd.f32 %v8050, %v8220
    %v8247 = vadd.f32 %v8051, %v8223
    %v8248 = vadd.f32 %v8052, %v8228
    %v8249 = vadd.f32 %v8053, %v8231
    %v8250 = vld [vmem:[%s8] sm:$0x1]
    %v8252 = vlaneseq
    %v8253 = vshrl.u32 %v8252, 7
    %v8254 = vsub.s32 0, %v8253
    %v8255 = vrot.slane %v8250, %v8254
    %v8257 = vadd.f32 %v8234, %v8255
    %v8258 = vadd.f32 %v8235, %v8255
    %v8259 = vadd.f32 %v8236, %v8255
    %v8260 = vadd.f32 %v8237, %v8255
    %v8261 = vadd.f32 %v8238, %v8255
    %v8262 = vadd.f32 %v8239, %v8255
    %v8263 = vadd.f32 %v8240, %v8255
    %v8264 = vadd.f32 %v8241, %v8255
    %v8265 = vadd.f32 %v8242, %v8255
    %v8266 = vadd.f32 %v8243, %v8255
    %v8267 = vadd.f32 %v8244, %v8255
    %v8268 = vadd.f32 %v8245, %v8255
    %v8269 = vadd.f32 %v8246, %v8255
    %v8270 = vadd.f32 %v8247, %v8255
    %v8271 = vadd.f32 %v8248, %v8255
    %v8272 = vadd.f32 %v8249, %v8255
    %v8273 = vmax.f32 %v8257, 0.0
    %v8274 = vmax.f32 %v8258, 0.0
    %v8275 = vmax.f32 %v8259, 0.0
    %v8276 = vmax.f32 %v8260, 0.0
    %v8277 = vmax.f32 %v8261, 0.0
    %v8278 = vmax.f32 %v8262, 0.0
    %v8279 = vmax.f32 %v8263, 0.0
    %v8280 = vmax.f32 %v8264, 0.0
    %v8281 = vmax.f32 %v8265, 0.0
    %v8282 = vmax.f32 %v8266, 0.0
    %v8283 = vmax.f32 %v8267, 0.0
    %v8284 = vmax.f32 %v8268, 0.0
    %v8285 = vmax.f32 %v8269, 0.0
    %v8286 = vmax.f32 %v8270, 0.0
    %v8287 = vmax.f32 %v8271, 0.0
    %v8288 = vmax.f32 %v8272, 0.0
    %v8289 = vpack.c.bf16 %v8273, %v8273
    %v8290 = vpack.c.bf16 %v8274, %v8274
    %v8291 = vpack.c.bf16 %v8275, %v8275
    %v8292 = vpack.c.bf16 %v8276, %v8276
    %v8293 = vpack.c.bf16 %v8277, %v8277
    %v8294 = vpack.c.bf16 %v8278, %v8278
    %v8295 = vpack.c.bf16 %v8279, %v8279
    %v8296 = vpack.c.bf16 %v8280, %v8280
    %v8297 = vpack.c.bf16 %v8281, %v8281
    %v8298 = vpack.c.bf16 %v8282, %v8282
    %v8299 = vpack.c.bf16 %v8283, %v8283
    %v8300 = vpack.c.bf16 %v8284, %v8284
    %v8301 = vpack.c.bf16 %v8285, %v8285
    %v8302 = vpack.c.bf16 %v8286, %v8286
    %v8303 = vpack.c.bf16 %v8287, %v8287
    %v8304 = vpack.c.bf16 %v8288, %v8288
    %v8321 = vunpack.c.l.b16 %v8289
    %v8322 = vunpack.c.l.b16 %v8290
    %v8323 = vunpack.c.l.b16 %v8291
    %v8324 = vunpack.c.l.b16 %v8292
    %v8325 = vunpack.c.l.b16 %v8293
    %v8326 = vunpack.c.l.b16 %v8294
    %v8327 = vunpack.c.l.b16 %v8295
    %v8328 = vunpack.c.l.b16 %v8296
    %v8329 = vunpack.c.l.b16 %v8297
    %v8330 = vunpack.c.l.b16 %v8298
    %v8331 = vunpack.c.l.b16 %v8299
    %v8332 = vunpack.c.l.b16 %v8300
    %v8333 = vunpack.c.l.b16 %v8301
    %v8334 = vunpack.c.l.b16 %v8302
    %v8335 = vunpack.c.l.b16 %v8303
    %v8336 = vunpack.c.l.b16 %v8304
    %v8337 = vpack.c.b16 %v8321, %v8321
    %v8338 = vpack.c.b16 %v8322, %v8322
    %v8339 = vpack.c.b16 %v8323, %v8323
    %v8340 = vpack.c.b16 %v8324, %v8324
    %v8341 = vpack.c.b16 %v8325, %v8325
    %v8342 = vpack.c.b16 %v8326, %v8326
    %v8343 = vpack.c.b16 %v8327, %v8327
    %v8344 = vpack.c.b16 %v8328, %v8328
    %v8345 = vpack.c.b16 %v8329, %v8329
    %v8346 = vpack.c.b16 %v8330, %v8330
    %v8347 = vpack.c.b16 %v8331, %v8331
    %v8348 = vpack.c.b16 %v8332, %v8332
    %v8349 = vpack.c.b16 %v8333, %v8333
    %v8350 = vpack.c.b16 %v8334, %v8334
    %v8351 = vpack.c.b16 %v8335, %v8335
    %v8352 = vpack.c.b16 %v8336, %v8336
    %v8354 = vshrl.u32 %v8337, 16
    %v8356 = vrot.slane %v8354, 7
    %v8357 = vshll.u32 %v8337, 16
    %v8359 = vor.u32 %v8356, %v8357
    %v8360 = vrot.slane %v8356, 4
    %v8362 = vshrl.u32 %v8338, 16
    %v8364 = vrot.slane %v8362, 7
    %v8365 = vshll.u32 %v8338, 16
    %v8367 = vor.u32 %v8364, %v8365
    %v8368 = vrot.slane %v8364, 4
    %v8370 = vshrl.u32 %v8339, 16
    %v8372 = vrot.slane %v8370, 7
    %v8373 = vshll.u32 %v8339, 16
    %v8375 = vor.u32 %v8372, %v8373
    %v8376 = vrot.slane %v8372, 4
    %v8378 = vshrl.u32 %v8340, 16
    %v8380 = vrot.slane %v8378, 7
    %v8381 = vshll.u32 %v8340, 16
    %v8383 = vor.u32 %v8380, %v8381
    %v8384 = vrot.slane %v8380, 4
    %v8386 = vshrl.u32 %v8341, 16
    %v8388 = vrot.slane %v8386, 7
    %v8389 = vshll.u32 %v8341, 16
    %v8391 = vor.u32 %v8388, %v8389
    %v8392 = vrot.slane %v8388, 4
    %v8394 = vshrl.u32 %v8342, 16
    %v8396 = vrot.slane %v8394, 7
    %v8397 = vshll.u32 %v8342, 16
    %v8399 = vor.u32 %v8396, %v8397
    %v8400 = vrot.slane %v8396, 4
    %v8402 = vshrl.u32 %v8343, 16
    %v8404 = vrot.slane %v8402, 7
    %v8405 = vshll.u32 %v8343, 16
    %v8407 = vor.u32 %v8404, %v8405
    %v8408 = vrot.slane %v8404, 4
    %v8410 = vshrl.u32 %v8344, 16
    %v8412 = vrot.slane %v8410, 7
    %v8413 = vshll.u32 %v8344, 16
    %v8415 = vor.u32 %v8412, %v8413
    %v8416 = vrot.slane %v8412, 4
    %v8418 = vshrl.u32 %v8345, 16
    %v8420 = vrot.slane %v8418, 7
    %v8421 = vshll.u32 %v8345, 16
    %v8423 = vor.u32 %v8420, %v8421
    %v8424 = vrot.slane %v8420, 4
    %v8426 = vshrl.u32 %v8346, 16
    %v8428 = vrot.slane %v8426, 7
    %v8429 = vshll.u32 %v8346, 16
    %v8431 = vor.u32 %v8428, %v8429
    %v8432 = vrot.slane %v8428, 4
    %v8434 = vshrl.u32 %v8347, 16
    %v8436 = vrot.slane %v8434, 7
    %v8437 = vshll.u32 %v8347, 16
    %v8439 = vor.u32 %v8436, %v8437
    %v8440 = vrot.slane %v8436, 4
    %v8442 = vshrl.u32 %v8348, 16
    %v8444 = vrot.slane %v8442, 7
    %v8445 = vshll.u32 %v8348, 16
    %v8447 = vor.u32 %v8444, %v8445
    %v8448 = vrot.slane %v8444, 4
    %v8450 = vshrl.u32 %v8349, 16
    %v8452 = vrot.slane %v8450, 7
    %v8453 = vshll.u32 %v8349, 16
    %v8455 = vor.u32 %v8452, %v8453
    %v8456 = vrot.slane %v8452, 4
    %v8458 = vshrl.u32 %v8350, 16
    %v8460 = vrot.slane %v8458, 7
    %v8461 = vshll.u32 %v8350, 16
    %v8463 = vor.u32 %v8460, %v8461
    %v8464 = vrot.slane %v8460, 4
    %v8466 = vshrl.u32 %v8351, 16
    %v8468 = vrot.slane %v8466, 7
    %v8469 = vshll.u32 %v8351, 16
    %v8471 = vor.u32 %v8468, %v8469
    %v8472 = vrot.slane %v8468, 4
    %v8474 = vshrl.u32 %v8352, 16
    %v8476 = vrot.slane %v8474, 7
    %v8477 = vshll.u32 %v8352, 16
    %v8479 = vor.u32 %v8476, %v8477
    %v8480 = vrot.slane %v8476, 4
    %v8513 = vld [vmem:[%s716] sm:$0xf]
    %v8514 = vsel %vm718, %v8359, %v8513
    %8515 = vst [vmem:[%s716] sm:$0xf] %v8514
    %v8516 = vld [vmem:[%s716 + $0x4] sm:$0x1]
    %v8517 = vsel %vm152, %v8360, %v8516
    %8518 = vst [vmem:[%s716 + $0x4] sm:$0x1] %v8517
    %v8519 = vld [vmem:[%s716 + $0x8] sm:$0xf]
    %v8520 = vsel %vm718, %v8367, %v8519
    %8521 = vst [vmem:[%s716 + $0x8] sm:$0xf] %v8520
    %v8522 = vld [vmem:[%s716 + $0xc] sm:$0x1]
    %v8523 = vsel %vm152, %v8368, %v8522
    %8524 = vst [vmem:[%s716 + $0xc] sm:$0x1] %v8523
    %v8525 = vld [vmem:[%s716 + $0x10] sm:$0xf]
    %v8526 = vsel %vm718, %v8375, %v8525
    %8527 = vst [vmem:[%s716 + $0x10] sm:$0xf] %v8526
    %v8528 = vld [vmem:[%s716 + $0x14] sm:$0x1]
    %v8529 = vsel %vm152, %v8376, %v8528
    %8530 = vst [vmem:[%s716 + $0x14] sm:$0x1] %v8529
    %v8531 = vld [vmem:[%s716 + $0x18] sm:$0xf]
    %v8532 = vsel %vm718, %v8383, %v8531
    %8533 = vst [vmem:[%s716 + $0x18] sm:$0xf] %v8532
    %v8534 = vld [vmem:[%s716 + $0x1c] sm:$0x1]
    %v8535 = vsel %vm152, %v8384, %v8534
    %8536 = vst [vmem:[%s716 + $0x1c] sm:$0x1] %v8535
    %v8537 = vld [vmem:[%s716 + $0x20] sm:$0xf]
    %v8538 = vsel %vm718, %v8391, %v8537
    %8539 = vst [vmem:[%s716 + $0x20] sm:$0xf] %v8538
    %v8540 = vld [vmem:[%s716 + $0x24] sm:$0x1]
    %v8541 = vsel %vm152, %v8392, %v8540
    %8542 = vst [vmem:[%s716 + $0x24] sm:$0x1] %v8541
    %v8543 = vld [vmem:[%s716 + $0x28] sm:$0xf]
    %v8544 = vsel %vm718, %v8399, %v8543
    %8545 = vst [vmem:[%s716 + $0x28] sm:$0xf] %v8544
    %v8546 = vld [vmem:[%s716 + $0x2c] sm:$0x1]
    %v8547 = vsel %vm152, %v8400, %v8546
    %8548 = vst [vmem:[%s716 + $0x2c] sm:$0x1] %v8547
    %v8549 = vld [vmem:[%s716 + $0x30] sm:$0xf]
    %v8550 = vsel %vm718, %v8407, %v8549
    %8551 = vst [vmem:[%s716 + $0x30] sm:$0xf] %v8550
    %v8552 = vld [vmem:[%s716 + $0x34] sm:$0x1]
    %v8553 = vsel %vm152, %v8408, %v8552
    %8554 = vst [vmem:[%s716 + $0x34] sm:$0x1] %v8553
    %v8555 = vld [vmem:[%s716 + $0x38] sm:$0xf]
    %v8556 = vsel %vm718, %v8415, %v8555
    %8557 = vst [vmem:[%s716 + $0x38] sm:$0xf] %v8556
    %v8558 = vld [vmem:[%s716 + $0x3c] sm:$0x1]
    %v8559 = vsel %vm152, %v8416, %v8558
    %8560 = vst [vmem:[%s716 + $0x3c] sm:$0x1] %v8559
    %v8561 = vld [vmem:[%s716 + $0x50] sm:$0xf]
    %v8562 = vsel %vm718, %v8423, %v8561
    %8563 = vst [vmem:[%s716 + $0x50] sm:$0xf] %v8562
    %v8564 = vld [vmem:[%s716 + $0x54] sm:$0x1]
    %v8565 = vsel %vm152, %v8424, %v8564
    %8566 = vst [vmem:[%s716 + $0x54] sm:$0x1] %v8565
    %v8567 = vld [vmem:[%s716 + $0x58] sm:$0xf]
    %v8568 = vsel %vm718, %v8431, %v8567
    %8569 = vst [vmem:[%s716 + $0x58] sm:$0xf] %v8568
    %v8570 = vld [vmem:[%s716 + $0x5c] sm:$0x1]
    %v8571 = vsel %vm152, %v8432, %v8570
    %8572 = vst [vmem:[%s716 + $0x5c] sm:$0x1] %v8571
    %v8573 = vld [vmem:[%s716 + $0x60] sm:$0xf]
    %v8574 = vsel %vm718, %v8439, %v8573
    %8575 = vst [vmem:[%s716 + $0x60] sm:$0xf] %v8574
    %v8576 = vld [vmem:[%s716 + $0x64] sm:$0x1]
    %v8577 = vsel %vm152, %v8440, %v8576
    %8578 = vst [vmem:[%s716 + $0x64] sm:$0x1] %v8577
    %v8579 = vld [vmem:[%s716 + $0x68] sm:$0xf]
    %v8580 = vsel %vm718, %v8447, %v8579
    %8581 = vst [vmem:[%s716 + $0x68] sm:$0xf] %v8580
    %v8582 = vld [vmem:[%s716 + $0x6c] sm:$0x1]
    %v8583 = vsel %vm152, %v8448, %v8582
    %8584 = vst [vmem:[%s716 + $0x6c] sm:$0x1] %v8583
    %v8585 = vld [vmem:[%s716 + $0x70] sm:$0xf]
    %v8586 = vsel %vm718, %v8455, %v8585
    %8587 = vst [vmem:[%s716 + $0x70] sm:$0xf] %v8586
    %v8588 = vld [vmem:[%s716 + $0x74] sm:$0x1]
    %v8589 = vsel %vm152, %v8456, %v8588
    %8590 = vst [vmem:[%s716 + $0x74] sm:$0x1] %v8589
    %v8591 = vld [vmem:[%s716 + $0x78] sm:$0xf]
    %v8592 = vsel %vm718, %v8463, %v8591
    %8593 = vst [vmem:[%s716 + $0x78] sm:$0xf] %v8592
    %v8594 = vld [vmem:[%s716 + $0x7c] sm:$0x1]
    %v8595 = vsel %vm152, %v8464, %v8594
    %8596 = vst [vmem:[%s716 + $0x7c] sm:$0x1] %v8595
    %v8597 = vld [vmem:[%s716 + $0x80] sm:$0xf]
    %v8598 = vsel %vm718, %v8471, %v8597
    %8599 = vst [vmem:[%s716 + $0x80] sm:$0xf] %v8598
    %v8600 = vld [vmem:[%s716 + $0x84] sm:$0x1]
    %v8601 = vsel %vm152, %v8472, %v8600
    %8602 = vst [vmem:[%s716 + $0x84] sm:$0x1] %v8601
    %v8603 = vld [vmem:[%s716 + $0x88] sm:$0xf]
    %v8604 = vsel %vm718, %v8479, %v8603
    %8605 = vst [vmem:[%s716 + $0x88] sm:$0xf] %v8604
    %v8606 = vld [vmem:[%s716 + $0x8c] sm:$0x1]
    %v8607 = vsel %vm152, %v8480, %v8606
    %8608 = vst [vmem:[%s716 + $0x8c] sm:$0x1] %v8607
    %v8609 = vld [vmem:[#allocation2] sm:$0xf]
    %v8610 = vld [vmem:[#allocation2 + $0x8] sm:$0xf]
    %v8611 = vld [vmem:[#allocation2 + $0x10] sm:$0xf]
    %v8612 = vld [vmem:[#allocation2 + $0x18] sm:$0xf]
    %v8613 = vld [vmem:[#allocation2 + $0x20] sm:$0xf]
    %v8614 = vld [vmem:[#allocation2 + $0x28] sm:$0xf]
    %v8615 = vld [vmem:[#allocation2 + $0x30] sm:$0xf]
    %v8616 = vld [vmem:[#allocation2 + $0x38] sm:$0xf]
    %v8617 = vld [vmem:[#allocation2 + $0x40] sm:$0xf]
    %v8618 = vld [vmem:[#allocation2 + $0x48] sm:$0xf]
    %v8619 = vld [vmem:[#allocation2 + $0x50] sm:$0xf]
    %v8620 = vld [vmem:[#allocation2 + $0x58] sm:$0xf]
    %v8621 = vld [vmem:[#allocation2 + $0x60] sm:$0xf]
    %v8622 = vld [vmem:[#allocation2 + $0x68] sm:$0xf]
    %v8623 = vld [vmem:[#allocation2 + $0x70] sm:$0xf]
    %v8624 = vld [vmem:[#allocation2 + $0x78] sm:$0xf]
    %v8625 = vld [vmem:[#allocation2 + $0x80] sm:$0xf]
    %v8626 = vld [vmem:[#allocation2 + $0x88] sm:$0xf]
    %v8627 = vld [vmem:[#allocation2 + $0x90] sm:$0xf]
    %v8628 = vld [vmem:[#allocation2 + $0x98] sm:$0xf]
    %v8629 = vld [vmem:[#allocation12] sm:$0xf]
    %v8630 = vld [vmem:[#allocation12 + $0x4] sm:$0xf]
    %v8631 = vld [vmem:[#allocation12 + $0x8] sm:$0xf]
    %v8632 = vld [vmem:[#allocation12 + $0xc] sm:$0xf]
    %v8633 = vld [vmem:[#allocation12 + $0x10] sm:$0xf]
    %v8634 = vld [vmem:[#allocation12 + $0x14] sm:$0xf]
    %v8635 = vld [vmem:[#allocation12 + $0x18] sm:$0xf]
    %v8636 = vld [vmem:[#allocation12 + $0x1c] sm:$0xf]
    %v8637 = vld [vmem:[#allocation12 + $0x20] sm:$0xf]
    %v8638 = vld [vmem:[#allocation12 + $0x24] sm:$0xf]
    %v8639 = vld [vmem:[#allocation12 + $0x28] sm:$0xf]
    %v8640 = vld [vmem:[#allocation12 + $0x2c] sm:$0xf]
    %v8641 = vld [vmem:[#allocation12 + $0x30] sm:$0xf]
    %v8642 = vld [vmem:[#allocation12 + $0x34] sm:$0xf]
    %v8643 = vld [vmem:[#allocation12 + $0x38] sm:$0xf]
    %v8644 = vld [vmem:[#allocation12 + $0x3c] sm:$0xf]
    %s8645 = scalar_lea.vmem [#allocation12], 192
    %v8646 = vld [vmem:[%s8645] sm:$0xf]
    %v8647 = vld [vmem:[%s8645 + $0x4] sm:$0xf]
    %v8648 = vld [vmem:[%s8645 + $0x8] sm:$0xf]
    %v8649 = vld [vmem:[%s8645 + $0xc] sm:$0xf]
    %v8650 = vld [vmem:[%s8645 + $0x10] sm:$0xf]
    %v8651 = vld [vmem:[%s8645 + $0x14] sm:$0xf]
    %v8652 = vld [vmem:[%s8645 + $0x18] sm:$0xf]
    %v8653 = vld [vmem:[%s8645 + $0x1c] sm:$0xf]
    %v8654 = vld [vmem:[%s8645 + $0x20] sm:$0xf]
    %v8655 = vld [vmem:[%s8645 + $0x24] sm:$0xf]
    %v8656 = vld [vmem:[%s8645 + $0x28] sm:$0xf]
    %v8657 = vld [vmem:[%s8645 + $0x2c] sm:$0xf]
    %v8658 = vld [vmem:[%s8645 + $0x30] sm:$0xf]
    %v8659 = vld [vmem:[%s8645 + $0x34] sm:$0xf]
    %v8660 = vld [vmem:[%s8645 + $0x38] sm:$0xf]
    %v8661 = vld [vmem:[%s8645 + $0x3c] sm:$0xf]
    %v8678 = vunpack.c.l.b16 %v8610
    %v8679 = vunpack.c.l.b16 %v8611
    %v8680 = vunpack.c.l.b16 %v8612
    %v8681 = vunpack.c.l.b16 %v8613
    %v8682 = vunpack.c.l.b16 %v8614
    %v8683 = vunpack.c.l.b16 %v8615
    %v8684 = vunpack.c.l.b16 %v8616
    %v8685 = vunpack.c.l.b16 %v8617
    %v8686 = vunpack.c.l.b16 %v8620
    %v8687 = vunpack.c.l.b16 %v8621
    %v8688 = vunpack.c.l.b16 %v8622
    %v8689 = vunpack.c.l.b16 %v8623
    %v8690 = vunpack.c.l.b16 %v8624
    %v8691 = vunpack.c.l.b16 %v8625
    %v8692 = vunpack.c.l.b16 %v8626
    %v8693 = vunpack.c.l.b16 %v8627
    %v8694 = vpack.c.b16 %v8679, %v8678
    %v8695 = vpack.c.b16 %v8681, %v8680
    %v8696 = vpack.c.b16 %v8683, %v8682
    %v8697 = vpack.c.b16 %v8685, %v8684
    %v8698 = vpack.c.b16 %v8687, %v8686
    %v8699 = vpack.c.b16 %v8689, %v8688
    %v8700 = vpack.c.b16 %v8691, %v8690
    %v8701 = vpack.c.b16 %v8693, %v8692
    %v8726 = vunpack.c.l.b16 %v8646
    %v8727 = vunpack.c.l.b16 %v8647
    %v8728 = vunpack.c.l.b16 %v8648
    %v8729 = vunpack.c.l.b16 %v8649
    %v8730 = vunpack.c.l.b16 %v8650
    %v8731 = vunpack.c.l.b16 %v8651
    %v8732 = vunpack.c.l.b16 %v8652
    %v8733 = vunpack.c.l.b16 %v8653
    %v8734 = vunpack.c.l.b16 %v8654
    %v8735 = vunpack.c.l.b16 %v8655
    %v8736 = vunpack.c.l.b16 %v8656
    %v8737 = vunpack.c.l.b16 %v8657
    %v8738 = vunpack.c.l.b16 %v8658
    %v8739 = vunpack.c.l.b16 %v8659
    %v8740 = vunpack.c.l.b16 %v8660
    %v8741 = vunpack.c.l.b16 %v8661
    %v8742 = vpack.c.b16 %v8727, %v8726
    %v8743 = vpack.c.b16 %v8729, %v8728
    %v8744 = vpack.c.b16 %v8731, %v8730
    %v8745 = vpack.c.b16 %v8733, %v8732
    %v8746 = vpack.c.b16 %v8735, %v8734
    %v8747 = vpack.c.b16 %v8737, %v8736
    %v8748 = vpack.c.b16 %v8739, %v8738
    %v8749 = vpack.c.b16 %v8741, %v8740
    %8758 = vmatprep.subr.bf16.mxu0 0
    %8759 = vmatpush1.bf16.msra.mxu0 %v8749
    %8760 = vmatprep.subr.bf16.mxu0 0
    %8761 = vmatpush1.bf16.msra.mxu0 %v8748
    %8762 = vmatprep.subr.bf16.mxu0 0
    %8763 = vmatpush1.bf16.msra.mxu0 %v8747
    %8764 = vmatprep.subr.bf16.mxu0 0
    %8765 = vmatpush1.bf16.msra.mxu0 %v8746
    %8766 = vmatprep.subr.bf16.mxu0 0
    %8767 = vmatpush1.bf16.msra.mxu0 %v8745
    %8768 = vmatprep.subr.bf16.mxu0 0
    %8769 = vmatpush1.bf16.msra.mxu0 %v8744
    %8770 = vmatprep.subr.bf16.mxu0 0
    %8771 = vmatpush1.bf16.msra.mxu0 %v8743
    %8772 = vmatprep.subr.bf16.mxu0 0
    %8773 = vmatpush1.bf16.msra.mxu0 %v8742
    %8774 = vmatprep.subr.bf16.mxu0 0
    %8775 = vmatpush2.bf16.msra.mxu0 0
    %8776 = vmatprep.subr.bf16.mxu0 0
    %8777 = vmatpush2.bf16.msra.mxu0 0
    %8778 = vmatprep.subr.bf16.mxu0 0
    %8779 = vmatpush2.bf16.msra.mxu0 0
    %8780 = vmatprep.subr.bf16.mxu0 0
    %8781 = vmatpush2.bf16.msra.mxu0 0
    %8782 = vmatprep.subr.bf16.mxu0 0
    %8783 = vmatpush2.bf16.msra.mxu0 0
    %8784 = vmatprep.subr.bf16.mxu0 0
    %8785 = vmatpush2.bf16.msra.mxu0 0
    %8786 = vmatprep.subr.bf16.mxu0 0
    %8787 = vmatpush2.bf16.msra.mxu0 0
    %8788 = vmatprep.subr.bf16.mxu0 0
    %8789 = vmatpush2.bf16.msra.mxu0 0
    %8790 = vmatprep.mubr.bf16.mxu0 0
    %8791 = vmatmul.mubr.bf16.gmra.mxu0 %v8694
    %v8792 = vpop.f32.mrf.mxu0
    %v8793 = vadd.f32 0.0, %v8792
    %v8794 = vpop.f32.mrf.mxu0
    %v8795 = vpop.f32.mrf.mxu0
    %v8796 = vadd.f32 0.0, %v8795
    %v8797 = vpop.f32.mrf.mxu0
    %8798 = vmatprep.mubr.bf16.mxu0 0
    %8799 = vmatmul.mubr.bf16.gmra.mxu0 %v8695
    %v8800 = vpop.f32.mrf.mxu0
    %v8801 = vadd.f32 0.0, %v8800
    %v8802 = vpop.f32.mrf.mxu0
    %v8803 = vpop.f32.mrf.mxu0
    %v8804 = vadd.f32 0.0, %v8803
    %v8805 = vpop.f32.mrf.mxu0
    %8806 = vmatprep.mubr.bf16.mxu0 0
    %8807 = vmatmul.mubr.bf16.gmra.mxu0 %v8696
    %v8808 = vpop.f32.mrf.mxu0
    %v8809 = vadd.f32 0.0, %v8808
    %v8810 = vpop.f32.mrf.mxu0
    %v8811 = vpop.f32.mrf.mxu0
    %v8812 = vadd.f32 0.0, %v8811
    %v8813 = vpop.f32.mrf.mxu0
    %8814 = vmatprep.mubr.bf16.mxu0 0
    %8815 = vmatmul.mubr.bf16.gmra.mxu0 %v8697
    %v8816 = vpop.f32.mrf.mxu0
    %v8817 = vadd.f32 0.0, %v8816
    %v8818 = vpop.f32.mrf.mxu0
    %v8819 = vpop.f32.mrf.mxu0
    %v8820 = vadd.f32 0.0, %v8819
    %v8821 = vpop.f32.mrf.mxu0
    %8822 = vmatprep.mubr.bf16.mxu0 0
    %8823 = vmatmul.mubr.bf16.gmra.mxu0 %v8698
    %v8824 = vpop.f32.mrf.mxu0
    %v8825 = vadd.f32 0.0, %v8824
    %v8826 = vpop.f32.mrf.mxu0
    %v8827 = vpop.f32.mrf.mxu0
    %v8828 = vadd.f32 0.0, %v8827
    %v8829 = vpop.f32.mrf.mxu0
    %8830 = vmatprep.mubr.bf16.mxu0 0
    %8831 = vmatmul.mubr.bf16.gmra.mxu0 %v8699
    %v8832 = vpop.f32.mrf.mxu0
    %v8833 = vadd.f32 0.0, %v8832
    %v8834 = vpop.f32.mrf.mxu0
    %v8835 = vpop.f32.mrf.mxu0
    %v8836 = vadd.f32 0.0, %v8835
    %v8837 = vpop.f32.mrf.mxu0
    %8838 = vmatprep.mubr.bf16.mxu0 0
    %8839 = vmatmul.mubr.bf16.gmra.mxu0 %v8700
    %v8840 = vpop.f32.mrf.mxu0
    %v8841 = vadd.f32 0.0, %v8840
    %v8842 = vpop.f32.mrf.mxu0
    %v8843 = vpop.f32.mrf.mxu0
    %v8844 = vadd.f32 0.0, %v8843
    %v8845 = vpop.f32.mrf.mxu0
    %8846 = vmatprep.mubr.bf16.mxu0 0
    %8847 = vmatmul.mubr.bf16.gmra.mxu0 %v8701
    %v8848 = vpop.f32.mrf.mxu0
    %v8849 = vadd.f32 0.0, %v8848
    %v8850 = vpop.f32.mrf.mxu0
    %v8851 = vpop.f32.mrf.mxu0
    %v8852 = vadd.f32 0.0, %v8851
    %v8853 = vpop.f32.mrf.mxu0
    %8854 = vdwg.mxu0
    %v8857 = vunpack.c.l.b16 %v8609
    %v8858 = vunpack.c.l.b16 %v8619
    %v8859 = vpack.c.b16 %v8678, %v8857
    %v8860 = vpack.c.b16 %v8680, %v8679
    %v8861 = vpack.c.b16 %v8682, %v8681
    %v8862 = vpack.c.b16 %v8684, %v8683
    %v8863 = vpack.c.b16 %v8686, %v8858
    %v8864 = vpack.c.b16 %v8688, %v8687
    %v8865 = vpack.c.b16 %v8690, %v8689
    %v8866 = vpack.c.b16 %v8692, %v8691
    %v8891 = vunpack.c.l.b16 %v8629
    %v8892 = vunpack.c.l.b16 %v8630
    %v8893 = vunpack.c.l.b16 %v8631
    %v8894 = vunpack.c.l.b16 %v8632
    %v8895 = vunpack.c.l.b16 %v8633
    %v8896 = vunpack.c.l.b16 %v8634
    %v8897 = vunpack.c.l.b16 %v8635
    %v8898 = vunpack.c.l.b16 %v8636
    %v8899 = vunpack.c.l.b16 %v8637
    %v8900 = vunpack.c.l.b16 %v8638
    %v8901 = vunpack.c.l.b16 %v8639
    %v8902 = vunpack.c.l.b16 %v8640
    %v8903 = vunpack.c.l.b16 %v8641
    %v8904 = vunpack.c.l.b16 %v8642
    %v8905 = vunpack.c.l.b16 %v8643
    %v8906 = vunpack.c.l.b16 %v8644
    %v8907 = vpack.c.b16 %v8892, %v8891
    %v8908 = vpack.c.b16 %v8894, %v8893
    %v8909 = vpack.c.b16 %v8896, %v8895
    %v8910 = vpack.c.b16 %v8898, %v8897
    %v8911 = vpack.c.b16 %v8900, %v8899
    %v8912 = vpack.c.b16 %v8902, %v8901
    %v8913 = vpack.c.b16 %v8904, %v8903
    %v8914 = vpack.c.b16 %v8906, %v8905
    %8923 = vmatprep.subr.bf16.mxu0 0
    %8924 = vmatpush1.bf16.msra.mxu0 %v8914
    %8925 = vmatprep.subr.bf16.mxu0 0
    %8926 = vmatpush1.bf16.msra.mxu0 %v8913
    %8927 = vmatprep.subr.bf16.mxu0 0
    %8928 = vmatpush1.bf16.msra.mxu0 %v8912
    %8929 = vmatprep.subr.bf16.mxu0 0
    %8930 = vmatpush1.bf16.msra.mxu0 %v8911
    %8931 = vmatprep.subr.bf16.mxu0 0
    %8932 = vmatpush1.bf16.msra.mxu0 %v8910
    %8933 = vmatprep.subr.bf16.mxu0 0
    %8934 = vmatpush1.bf16.msra.mxu0 %v8909
    %8935 = vmatprep.subr.bf16.mxu0 0
    %8936 = vmatpush1.bf16.msra.mxu0 %v8908
    %8937 = vmatprep.subr.bf16.mxu0 0
    %8938 = vmatpush1.bf16.msra.mxu0 %v8907
    %8939 = vmatprep.subr.bf16.mxu0 0
    %8940 = vmatpush2.bf16.msra.mxu0 0
    %8941 = vmatprep.subr.bf16.mxu0 0
    %8942 = vmatpush2.bf16.msra.mxu0 0
    %8943 = vmatprep.subr.bf16.mxu0 0
    %8944 = vmatpush2.bf16.msra.mxu0 0
    %8945 = vmatprep.subr.bf16.mxu0 0
    %8946 = vmatpush2.bf16.msra.mxu0 0
    %8947 = vmatprep.subr.bf16.mxu0 0
    %8948 = vmatpush2.bf16.msra.mxu0 0
    %8949 = vmatprep.subr.bf16.mxu0 0
    %8950 = vmatpush2.bf16.msra.mxu0 0
    %8951 = vmatprep.subr.bf16.mxu0 0
    %8952 = vmatpush2.bf16.msra.mxu0 0
    %8953 = vmatprep.subr.bf16.mxu0 0
    %8954 = vmatpush2.bf16.msra.mxu0 0
    %8955 = vmatprep.mubr.bf16.mxu0 0
    %8956 = vmatmul.mubr.bf16.gmra.mxu0 %v8859
    %v8957 = vpop.f32.mrf.mxu0
    %v8958 = vadd.f32 %v8793, %v8957
    %v8959 = vpop.f32.mrf.mxu0
    %v8960 = vpop.f32.mrf.mxu0
    %v8961 = vadd.f32 %v8796, %v8960
    %v8962 = vpop.f32.mrf.mxu0
    %8963 = vmatprep.mubr.bf16.mxu0 0
    %8964 = vmatmul.mubr.bf16.gmra.mxu0 %v8860
    %v8965 = vpop.f32.mrf.mxu0
    %v8966 = vadd.f32 %v8801, %v8965
    %v8967 = vpop.f32.mrf.mxu0
    %v8968 = vpop.f32.mrf.mxu0
    %v8969 = vadd.f32 %v8804, %v8968
    %v8970 = vpop.f32.mrf.mxu0
    %8971 = vmatprep.mubr.bf16.mxu0 0
    %8972 = vmatmul.mubr.bf16.gmra.mxu0 %v8861
    %v8973 = vpop.f32.mrf.mxu0
    %v8974 = vadd.f32 %v8809, %v8973
    %v8975 = vpop.f32.mrf.mxu0
    %v8976 = vpop.f32.mrf.mxu0
    %v8977 = vadd.f32 %v8812, %v8976
    %v8978 = vpop.f32.mrf.mxu0
    %8979 = vmatprep.mubr.bf16.mxu0 0
    %8980 = vmatmul.mubr.bf16.gmra.mxu0 %v8862
    %v8981 = vpop.f32.mrf.mxu0
    %v8982 = vadd.f32 %v8817, %v8981
    %v8983 = vpop.f32.mrf.mxu0
    %v8984 = vpop.f32.mrf.mxu0
    %v8985 = vadd.f32 %v8820, %v8984
    %v8986 = vpop.f32.mrf.mxu0
    %8987 = vmatprep.mubr.bf16.mxu0 0
    %8988 = vmatmul.mubr.bf16.gmra.mxu0 %v8863
    %v8989 = vpop.f32.mrf.mxu0
    %v8990 = vadd.f32 %v8825, %v8989
    %v8991 = vpop.f32.mrf.mxu0
    %v8992 = vpop.f32.mrf.mxu0
    %v8993 = vadd.f32 %v8828, %v8992
    %v8994 = vpop.f32.mrf.mxu0
    %8995 = vmatprep.mubr.bf16.mxu0 0
    %8996 = vmatmul.mubr.bf16.gmra.mxu0 %v8864
    %v8997 = vpop.f32.mrf.mxu0
    %v8998 = vadd.f32 %v8833, %v8997
    %v8999 = vpop.f32.mrf.mxu0
    %v9000 = vpop.f32.mrf.mxu0
    %v9001 = vadd.f32 %v8836, %v9000
    %v9002 = vpop.f32.mrf.mxu0
    %9003 = vmatprep.mubr.bf16.mxu0 0
    %9004 = vmatmul.mubr.bf16.gmra.mxu0 %v8865
    %v9005 = vpop.f32.mrf.mxu0
    %v9006 = vadd.f32 %v8841, %v9005
    %v9007 = vpop.f32.mrf.mxu0
    %v9008 = vpop.f32.mrf.mxu0
    %v9009 = vadd.f32 %v8844, %v9008
    %v9010 = vpop.f32.mrf.mxu0
    %9011 = vmatprep.mubr.bf16.mxu0 0
    %9012 = vmatmul.mubr.bf16.gmra.mxu0 %v8866
    %v9013 = vpop.f32.mrf.mxu0
    %v9014 = vadd.f32 %v8849, %v9013
    %v9015 = vpop.f32.mrf.mxu0
    %v9016 = vpop.f32.mrf.mxu0
    %v9017 = vadd.f32 %v8852, %v9016
    %v9018 = vpop.f32.mrf.mxu0
    %9019 = vdwg.mxu0
    %s9020 = scalar_lea.vmem [#allocation12], 384
    %v9021 = vld [vmem:[%s9020] sm:$0xf]
    %v9022 = vld [vmem:[%s9020 + $0x4] sm:$0xf]
    %v9023 = vld [vmem:[%s9020 + $0x8] sm:$0xf]
    %v9024 = vld [vmem:[%s9020 + $0xc] sm:$0xf]
    %v9025 = vld [vmem:[%s9020 + $0x10] sm:$0xf]
    %v9026 = vld [vmem:[%s9020 + $0x14] sm:$0xf]
    %v9027 = vld [vmem:[%s9020 + $0x18] sm:$0xf]
    %v9028 = vld [vmem:[%s9020 + $0x1c] sm:$0xf]
    %v9029 = vld [vmem:[%s9020 + $0x20] sm:$0xf]
    %v9030 = vld [vmem:[%s9020 + $0x24] sm:$0xf]
    %v9031 = vld [vmem:[%s9020 + $0x28] sm:$0xf]
    %v9032 = vld [vmem:[%s9020 + $0x2c] sm:$0xf]
    %v9033 = vld [vmem:[%s9020 + $0x30] sm:$0xf]
    %v9034 = vld [vmem:[%s9020 + $0x34] sm:$0xf]
    %v9035 = vld [vmem:[%s9020 + $0x38] sm:$0xf]
    %v9036 = vld [vmem:[%s9020 + $0x3c] sm:$0xf]
    %v9039 = vunpack.c.l.b16 %v8618
    %v9040 = vunpack.c.l.b16 %v8628
    %v9041 = vpack.c.b16 %v9039, %v8685
    %v9042 = vpack.c.b16 %v9040, %v8693
    %v9061 = vunpack.c.l.b16 %v9021
    %v9062 = vunpack.c.l.b16 %v9022
    %v9063 = vunpack.c.l.b16 %v9023
    %v9064 = vunpack.c.l.b16 %v9024
    %v9065 = vunpack.c.l.b16 %v9025
    %v9066 = vunpack.c.l.b16 %v9026
    %v9067 = vunpack.c.l.b16 %v9027
    %v9068 = vunpack.c.l.b16 %v9028
    %v9069 = vunpack.c.l.b16 %v9029
    %v9070 = vunpack.c.l.b16 %v9030
    %v9071 = vunpack.c.l.b16 %v9031
    %v9072 = vunpack.c.l.b16 %v9032
    %v9073 = vunpack.c.l.b16 %v9033
    %v9074 = vunpack.c.l.b16 %v9034
    %v9075 = vunpack.c.l.b16 %v9035
    %v9076 = vunpack.c.l.b16 %v9036
    %v9077 = vpack.c.b16 %v9062, %v9061
    %v9078 = vpack.c.b16 %v9064, %v9063
    %v9079 = vpack.c.b16 %v9066, %v9065
    %v9080 = vpack.c.b16 %v9068, %v9067
    %v9081 = vpack.c.b16 %v9070, %v9069
    %v9082 = vpack.c.b16 %v9072, %v9071
    %v9083 = vpack.c.b16 %v9074, %v9073
    %v9084 = vpack.c.b16 %v9076, %v9075
    %9093 = vmatprep.subr.bf16.mxu0 0
    %9094 = vmatpush1.bf16.msra.mxu0 %v9084
    %9095 = vmatprep.subr.bf16.mxu0 0
    %9096 = vmatpush1.bf16.msra.mxu0 %v9083
    %9097 = vmatprep.subr.bf16.mxu0 0
    %9098 = vmatpush1.bf16.msra.mxu0 %v9082
    %9099 = vmatprep.subr.bf16.mxu0 0
    %9100 = vmatpush1.bf16.msra.mxu0 %v9081
    %9101 = vmatprep.subr.bf16.mxu0 0
    %9102 = vmatpush1.bf16.msra.mxu0 %v9080
    %9103 = vmatprep.subr.bf16.mxu0 0
    %9104 = vmatpush1.bf16.msra.mxu0 %v9079
    %9105 = vmatprep.subr.bf16.mxu0 0
    %9106 = vmatpush1.bf16.msra.mxu0 %v9078
    %9107 = vmatprep.subr.bf16.mxu0 0
    %9108 = vmatpush1.bf16.msra.mxu0 %v9077
    %9109 = vmatprep.subr.bf16.mxu0 0
    %9110 = vmatpush2.bf16.msra.mxu0 0
    %9111 = vmatprep.subr.bf16.mxu0 0
    %9112 = vmatpush2.bf16.msra.mxu0 0
    %9113 = vmatprep.subr.bf16.mxu0 0
    %9114 = vmatpush2.bf16.msra.mxu0 0
    %9115 = vmatprep.subr.bf16.mxu0 0
    %9116 = vmatpush2.bf16.msra.mxu0 0
    %9117 = vmatprep.subr.bf16.mxu0 0
    %9118 = vmatpush2.bf16.msra.mxu0 0
    %9119 = vmatprep.subr.bf16.mxu0 0
    %9120 = vmatpush2.bf16.msra.mxu0 0
    %9121 = vmatprep.subr.bf16.mxu0 0
    %9122 = vmatpush2.bf16.msra.mxu0 0
    %9123 = vmatprep.subr.bf16.mxu0 0
    %9124 = vmatpush2.bf16.msra.mxu0 0
    %9125 = vmatprep.mubr.bf16.mxu0 0
    %9126 = vmatmul.mubr.bf16.gmra.mxu0 %v8860
    %v9127 = vpop.f32.mrf.mxu0
    %v9128 = vadd.f32 0.0, %v9127
    %v9129 = vpop.f32.mrf.mxu0
    %v9130 = vpop.f32.mrf.mxu0
    %v9131 = vadd.f32 0.0, %v9130
    %v9132 = vpop.f32.mrf.mxu0
    %9133 = vmatprep.mubr.bf16.mxu0 0
    %9134 = vmatmul.mubr.bf16.gmra.mxu0 %v8861
    %v9135 = vpop.f32.mrf.mxu0
    %v9136 = vadd.f32 0.0, %v9135
    %v9137 = vpop.f32.mrf.mxu0
    %v9138 = vpop.f32.mrf.mxu0
    %v9139 = vadd.f32 0.0, %v9138
    %v9140 = vpop.f32.mrf.mxu0
    %9141 = vmatprep.mubr.bf16.mxu0 0
    %9142 = vmatmul.mubr.bf16.gmra.mxu0 %v8862
    %v9143 = vpop.f32.mrf.mxu0
    %v9144 = vadd.f32 0.0, %v9143
    %v9145 = vpop.f32.mrf.mxu0
    %v9146 = vpop.f32.mrf.mxu0
    %v9147 = vadd.f32 0.0, %v9146
    %v9148 = vpop.f32.mrf.mxu0
    %9149 = vmatprep.mubr.bf16.mxu0 0
    %9150 = vmatmul.mubr.bf16.gmra.mxu0 %v9041
    %v9151 = vpop.f32.mrf.mxu0
    %v9152 = vadd.f32 0.0, %v9151
    %v9153 = vpop.f32.mrf.mxu0
    %v9154 = vpop.f32.mrf.mxu0
    %v9155 = vadd.f32 0.0, %v9154
    %v9156 = vpop.f32.mrf.mxu0
    %9157 = vmatprep.mubr.bf16.mxu0 0
    %9158 = vmatmul.mubr.bf16.gmra.mxu0 %v8864
    %v9159 = vpop.f32.mrf.mxu0
    %v9160 = vadd.f32 0.0, %v9159
    %v9161 = vpop.f32.mrf.mxu0
    %v9162 = vpop.f32.mrf.mxu0
    %v9163 = vadd.f32 0.0, %v9162
    %v9164 = vpop.f32.mrf.mxu0
    %9165 = vmatprep.mubr.bf16.mxu0 0
    %9166 = vmatmul.mubr.bf16.gmra.mxu0 %v8865
    %v9167 = vpop.f32.mrf.mxu0
    %v9168 = vadd.f32 0.0, %v9167
    %v9169 = vpop.f32.mrf.mxu0
    %v9170 = vpop.f32.mrf.mxu0
    %v9171 = vadd.f32 0.0, %v9170
    %v9172 = vpop.f32.mrf.mxu0
    %9173 = vmatprep.mubr.bf16.mxu0 0
    %9174 = vmatmul.mubr.bf16.gmra.mxu0 %v8866
    %v9175 = vpop.f32.mrf.mxu0
    %v9176 = vadd.f32 0.0, %v9175
    %v9177 = vpop.f32.mrf.mxu0
    %v9178 = vpop.f32.mrf.mxu0
    %v9179 = vadd.f32 0.0, %v9178
    %v9180 = vpop.f32.mrf.mxu0
    %9181 = vmatprep.mubr.bf16.mxu0 0
    %9182 = vmatmul.mubr.bf16.gmra.mxu0 %v9042
    %v9183 = vpop.f32.mrf.mxu0
    %v9184 = vadd.f32 0.0, %v9183
    %v9185 = vpop.f32.mrf.mxu0
    %v9186 = vpop.f32.mrf.mxu0
    %v9187 = vadd.f32 0.0, %v9186
    %v9188 = vpop.f32.mrf.mxu0
    %9189 = vdwg.mxu0
    %v9190 = vadd.f32 %v8958, %v9128
    %v9191 = vadd.f32 %v8961, %v9131
    %v9192 = vadd.f32 %v8966, %v9136
    %v9193 = vadd.f32 %v8969, %v9139
    %v9194 = vadd.f32 %v8974, %v9144
    %v9195 = vadd.f32 %v8977, %v9147
    %v9196 = vadd.f32 %v8982, %v9152
    %v9197 = vadd.f32 %v8985, %v9155
    %v9198 = vadd.f32 %v8990, %v9160
    %v9199 = vadd.f32 %v8993, %v9163
    %v9200 = vadd.f32 %v8998, %v9168
    %v9201 = vadd.f32 %v9001, %v9171
    %v9202 = vadd.f32 %v9006, %v9176
    %v9203 = vadd.f32 %v9009, %v9179
    %v9204 = vadd.f32 %v9014, %v9184
    %v9205 = vadd.f32 %v9017, %v9187
    %v9206 = vld [vmem:[#allocation2] sm:$0xf]
    %v9207 = vld [vmem:[#allocation2 + $0x4] sm:$0x1]
    %v9208 = vld [vmem:[#allocation2 + $0x8] sm:$0xf]
    %v9209 = vld [vmem:[#allocation2 + $0xc] sm:$0x1]
    %v9210 = vld [vmem:[#allocation2 + $0x10] sm:$0xf]
    %v9211 = vld [vmem:[#allocation2 + $0x14] sm:$0x1]
    %v9212 = vld [vmem:[#allocation2 + $0x18] sm:$0xf]
    %v9213 = vld [vmem:[#allocation2 + $0x1c] sm:$0x1]
    %v9214 = vld [vmem:[#allocation2 + $0x20] sm:$0xf]
    %v9215 = vld [vmem:[#allocation2 + $0x24] sm:$0x1]
    %v9216 = vld [vmem:[#allocation2 + $0x28] sm:$0xf]
    %v9217 = vld [vmem:[#allocation2 + $0x2c] sm:$0x1]
    %v9218 = vld [vmem:[#allocation2 + $0x30] sm:$0xf]
    %v9219 = vld [vmem:[#allocation2 + $0x34] sm:$0x1]
    %v9220 = vld [vmem:[#allocation2 + $0x38] sm:$0xf]
    %v9221 = vld [vmem:[#allocation2 + $0x3c] sm:$0x1]
    %v9222 = vld [vmem:[#allocation2 + $0x40] sm:$0xf]
    %v9223 = vld [vmem:[#allocation2 + $0x44] sm:$0x1]
    %v9224 = vld [vmem:[#allocation2 + $0x48] sm:$0xf]
    %v9225 = vld [vmem:[#allocation2 + $0x4c] sm:$0x1]
    %v9226 = vld [vmem:[#allocation2 + $0x50] sm:$0xf]
    %v9227 = vld [vmem:[#allocation2 + $0x54] sm:$0x1]
    %v9228 = vld [vmem:[#allocation2 + $0x58] sm:$0xf]
    %v9229 = vld [vmem:[#allocation2 + $0x5c] sm:$0x1]
    %v9230 = vld [vmem:[#allocation2 + $0x60] sm:$0xf]
    %v9231 = vld [vmem:[#allocation2 + $0x64] sm:$0x1]
    %v9232 = vld [vmem:[#allocation2 + $0x68] sm:$0xf]
    %v9233 = vld [vmem:[#allocation2 + $0x6c] sm:$0x1]
    %v9234 = vld [vmem:[#allocation2 + $0x70] sm:$0xf]
    %v9235 = vld [vmem:[#allocation2 + $0x74] sm:$0x1]
    %v9236 = vld [vmem:[#allocation2 + $0x78] sm:$0xf]
    %v9237 = vld [vmem:[#allocation2 + $0x7c] sm:$0x1]
    %v9238 = vld [vmem:[#allocation2 + $0x80] sm:$0xf]
    %v9239 = vld [vmem:[#allocation2 + $0x84] sm:$0x1]
    %v9240 = vld [vmem:[#allocation2 + $0x88] sm:$0xf]
    %v9241 = vld [vmem:[#allocation2 + $0x8c] sm:$0x1]
    %v9242 = vld [vmem:[#allocation2 + $0x90] sm:$0xf]
    %v9243 = vld [vmem:[#allocation2 + $0x94] sm:$0x1]
    %v9244 = vld [vmem:[#allocation2 + $0x98] sm:$0xf]
    %v9245 = vld [vmem:[#allocation2 + $0x9c] sm:$0x1]
    %v9247 = vshrl.u32 %v9206, 16
    %v9249 = vrot.slane %v9247, 4
    %v9250 = vshll.u32 %v9206, 16
    %v9252 = vrot.slane %v9250, 5
    %v9253 = vor.u32 %v9249, %v9252
    %v9254 = vrot.slane %v9253, 4
    %v9256 = vshll.u32 %v9207, 16
    %v9258 = vrot.slane %v9256, 5
    %v9259 = vsel %vm1454, %v9254, %v9258
    %v9261 = vshrl.u32 %v9208, 16
    %v9263 = vrot.slane %v9261, 4
    %v9264 = vshll.u32 %v9208, 16
    %v9266 = vrot.slane %v9264, 5
    %v9267 = vor.u32 %v9263, %v9266
    %v9268 = vrot.slane %v9267, 4
    %v9270 = vshll.u32 %v9209, 16
    %v9272 = vrot.slane %v9270, 5
    %v9273 = vsel %vm1454, %v9268, %v9272
    %v9275 = vshrl.u32 %v9210, 16
    %v9277 = vrot.slane %v9275, 4
    %v9278 = vshll.u32 %v9210, 16
    %v9280 = vrot.slane %v9278, 5
    %v9281 = vor.u32 %v9277, %v9280
    %v9282 = vrot.slane %v9281, 4
    %v9284 = vshll.u32 %v9211, 16
    %v9286 = vrot.slane %v9284, 5
    %v9287 = vsel %vm1454, %v9282, %v9286
    %v9289 = vshrl.u32 %v9212, 16
    %v9291 = vrot.slane %v9289, 4
    %v9292 = vshll.u32 %v9212, 16
    %v9294 = vrot.slane %v9292, 5
    %v9295 = vor.u32 %v9291, %v9294
    %v9296 = vrot.slane %v9295, 4
    %v9298 = vshll.u32 %v9213, 16
    %v9300 = vrot.slane %v9298, 5
    %v9301 = vsel %vm1454, %v9296, %v9300
    %v9303 = vshrl.u32 %v9214, 16
    %v9305 = vrot.slane %v9303, 4
    %v9306 = vshll.u32 %v9214, 16
    %v9308 = vrot.slane %v9306, 5
    %v9309 = vor.u32 %v9305, %v9308
    %v9310 = vrot.slane %v9309, 4
    %v9312 = vshll.u32 %v9215, 16
    %v9314 = vrot.slane %v9312, 5
    %v9315 = vsel %vm1454, %v9310, %v9314
    %v9317 = vshrl.u32 %v9216, 16
    %v9319 = vrot.slane %v9317, 4
    %v9320 = vshll.u32 %v9216, 16
    %v9322 = vrot.slane %v9320, 5
    %v9323 = vor.u32 %v9319, %v9322
    %v9324 = vrot.slane %v9323, 4
    %v9326 = vshll.u32 %v9217, 16
    %v9328 = vrot.slane %v9326, 5
    %v9329 = vsel %vm1454, %v9324, %v9328
    %v9331 = vshrl.u32 %v9218, 16
    %v9333 = vrot.slane %v9331, 4
    %v9334 = vshll.u32 %v9218, 16
    %v9336 = vrot.slane %v9334, 5
    %v9337 = vor.u32 %v9333, %v9336
    %v9338 = vrot.slane %v9337, 4
    %v9340 = vshll.u32 %v9219, 16
    %v9342 = vrot.slane %v9340, 5
    %v9343 = vsel %vm1454, %v9338, %v9342
    %v9345 = vshrl.u32 %v9220, 16
    %v9347 = vrot.slane %v9345, 4
    %v9348 = vshll.u32 %v9220, 16
    %v9350 = vrot.slane %v9348, 5
    %v9351 = vor.u32 %v9347, %v9350
    %v9352 = vrot.slane %v9351, 4
    %v9354 = vshll.u32 %v9221, 16
    %v9356 = vrot.slane %v9354, 5
    %v9357 = vsel %vm1454, %v9352, %v9356
    %v9359 = vshrl.u32 %v9226, 16
    %v9361 = vrot.slane %v9359, 4
    %v9362 = vshll.u32 %v9226, 16
    %v9364 = vrot.slane %v9362, 5
    %v9365 = vor.u32 %v9361, %v9364
    %v9366 = vrot.slane %v9365, 4
    %v9368 = vshll.u32 %v9227, 16
    %v9370 = vrot.slane %v9368, 5
    %v9371 = vsel %vm1454, %v9366, %v9370
    %v9373 = vshrl.u32 %v9228, 16
    %v9375 = vrot.slane %v9373, 4
    %v9376 = vshll.u32 %v9228, 16
    %v9378 = vrot.slane %v9376, 5
    %v9379 = vor.u32 %v9375, %v9378
    %v9380 = vrot.slane %v9379, 4
    %v9382 = vshll.u32 %v9229, 16
    %v9384 = vrot.slane %v9382, 5
    %v9385 = vsel %vm1454, %v9380, %v9384
    %v9387 = vshrl.u32 %v9230, 16
    %v9389 = vrot.slane %v9387, 4
    %v9390 = vshll.u32 %v9230, 16
    %v9392 = vrot.slane %v9390, 5
    %v9393 = vor.u32 %v9389, %v9392
    %v9394 = vrot.slane %v9393, 4
    %v9396 = vshll.u32 %v9231, 16
    %v9398 = vrot.slane %v9396, 5
    %v9399 = vsel %vm1454, %v9394, %v9398
    %v9401 = vshrl.u32 %v9232, 16
    %v9403 = vrot.slane %v9401, 4
    %v9404 = vshll.u32 %v9232, 16
    %v9406 = vrot.slane %v9404, 5
    %v9407 = vor.u32 %v9403, %v9406
    %v9408 = vrot.slane %v9407, 4
    %v9410 = vshll.u32 %v9233, 16
    %v9412 = vrot.slane %v9410, 5
    %v9413 = vsel %vm1454, %v9408, %v9412
    %v9415 = vshrl.u32 %v9234, 16
    %v9417 = vrot.slane %v9415, 4
    %v9418 = vshll.u32 %v9234, 16
    %v9420 = vrot.slane %v9418, 5
    %v9421 = vor.u32 %v9417, %v9420
    %v9422 = vrot.slane %v9421, 4
    %v9424 = vshll.u32 %v9235, 16
    %v9426 = vrot.slane %v9424, 5
    %v9427 = vsel %vm1454, %v9422, %v9426
    %v9429 = vshrl.u32 %v9236, 16
    %v9431 = vrot.slane %v9429, 4
    %v9432 = vshll.u32 %v9236, 16
    %v9434 = vrot.slane %v9432, 5
    %v9435 = vor.u32 %v9431, %v9434
    %v9436 = vrot.slane %v9435, 4
    %v9438 = vshll.u32 %v9237, 16
    %v9440 = vrot.slane %v9438, 5
    %v9441 = vsel %vm1454, %v9436, %v9440
    %v9443 = vshrl.u32 %v9238, 16
    %v9445 = vrot.slane %v9443, 4
    %v9446 = vshll.u32 %v9238, 16
    %v9448 = vrot.slane %v9446, 5
    %v9449 = vor.u32 %v9445, %v9448
    %v9450 = vrot.slane %v9449, 4
    %v9452 = vshll.u32 %v9239, 16
    %v9454 = vrot.slane %v9452, 5
    %v9455 = vsel %vm1454, %v9450, %v9454
    %v9457 = vshrl.u32 %v9240, 16
    %v9459 = vrot.slane %v9457, 4
    %v9460 = vshll.u32 %v9240, 16
    %v9462 = vrot.slane %v9460, 5
    %v9463 = vor.u32 %v9459, %v9462
    %v9464 = vrot.slane %v9463, 4
    %v9466 = vshll.u32 %v9241, 16
    %v9468 = vrot.slane %v9466, 5
    %v9469 = vsel %vm1454, %v9464, %v9468
    %s9470 = scalar_lea.vmem [#allocation12], 64
    %v9471 = vld [vmem:[%s9470] sm:$0xf]
    %v9472 = vld [vmem:[%s9470 + $0x4] sm:$0xf]
    %v9473 = vld [vmem:[%s9470 + $0x8] sm:$0xf]
    %v9474 = vld [vmem:[%s9470 + $0xc] sm:$0xf]
    %v9475 = vld [vmem:[%s9470 + $0x10] sm:$0xf]
    %v9476 = vld [vmem:[%s9470 + $0x14] sm:$0xf]
    %v9477 = vld [vmem:[%s9470 + $0x18] sm:$0xf]
    %v9478 = vld [vmem:[%s9470 + $0x1c] sm:$0xf]
    %v9479 = vld [vmem:[%s9470 + $0x20] sm:$0xf]
    %v9480 = vld [vmem:[%s9470 + $0x24] sm:$0xf]
    %v9481 = vld [vmem:[%s9470 + $0x28] sm:$0xf]
    %v9482 = vld [vmem:[%s9470 + $0x2c] sm:$0xf]
    %v9483 = vld [vmem:[%s9470 + $0x30] sm:$0xf]
    %v9484 = vld [vmem:[%s9470 + $0x34] sm:$0xf]
    %v9485 = vld [vmem:[%s9470 + $0x38] sm:$0xf]
    %v9486 = vld [vmem:[%s9470 + $0x3c] sm:$0xf]
    %v9487 = vunpack.c.l.b16 %v9259
    %v9488 = vunpack.c.l.b16 %v9273
    %v9489 = vunpack.c.l.b16 %v9287
    %v9490 = vunpack.c.l.b16 %v9301
    %v9491 = vunpack.c.l.b16 %v9315
    %v9492 = vunpack.c.l.b16 %v9329
    %v9493 = vunpack.c.l.b16 %v9343
    %v9494 = vunpack.c.l.b16 %v9357
    %v9495 = vunpack.c.l.b16 %v9371
    %v9496 = vunpack.c.l.b16 %v9385
    %v9497 = vunpack.c.l.b16 %v9399
    %v9498 = vunpack.c.l.b16 %v9413
    %v9499 = vunpack.c.l.b16 %v9427
    %v9500 = vunpack.c.l.b16 %v9441
    %v9501 = vunpack.c.l.b16 %v9455
    %v9502 = vunpack.c.l.b16 %v9469
    %v9503 = vpack.c.b16 %v9488, %v9487
    %v9504 = vpack.c.b16 %v9490, %v9489
    %v9505 = vpack.c.b16 %v9492, %v9491
    %v9506 = vpack.c.b16 %v9494, %v9493
    %v9507 = vpack.c.b16 %v9496, %v9495
    %v9508 = vpack.c.b16 %v9498, %v9497
    %v9509 = vpack.c.b16 %v9500, %v9499
    %v9510 = vpack.c.b16 %v9502, %v9501
    %v9535 = vunpack.c.l.b16 %v9471
    %v9536 = vunpack.c.l.b16 %v9472
    %v9537 = vunpack.c.l.b16 %v9473
    %v9538 = vunpack.c.l.b16 %v9474
    %v9539 = vunpack.c.l.b16 %v9475
    %v9540 = vunpack.c.l.b16 %v9476
    %v9541 = vunpack.c.l.b16 %v9477
    %v9542 = vunpack.c.l.b16 %v9478
    %v9543 = vunpack.c.l.b16 %v9479
    %v9544 = vunpack.c.l.b16 %v9480
    %v9545 = vunpack.c.l.b16 %v9481
    %v9546 = vunpack.c.l.b16 %v9482
    %v9547 = vunpack.c.l.b16 %v9483
    %v9548 = vunpack.c.l.b16 %v9484
    %v9549 = vunpack.c.l.b16 %v9485
    %v9550 = vunpack.c.l.b16 %v9486
    %v9551 = vpack.c.b16 %v9536, %v9535
    %v9552 = vpack.c.b16 %v9538, %v9537
    %v9553 = vpack.c.b16 %v9540, %v9539
    %v9554 = vpack.c.b16 %v9542, %v9541
    %v9555 = vpack.c.b16 %v9544, %v9543
    %v9556 = vpack.c.b16 %v9546, %v9545
    %v9557 = vpack.c.b16 %v9548, %v9547
    %v9558 = vpack.c.b16 %v9550, %v9549
    %9567 = vmatprep.subr.bf16.mxu0 0
    %9568 = vmatpush1.bf16.msra.mxu0 %v9558
    %9569 = vmatprep.subr.bf16.mxu0 0
    %9570 = vmatpush1.bf16.msra.mxu0 %v9557
    %9571 = vmatprep.subr.bf16.mxu0 0
    %9572 = vmatpush1.bf16.msra.mxu0 %v9556
    %9573 = vmatprep.subr.bf16.mxu0 0
    %9574 = vmatpush1.bf16.msra.mxu0 %v9555
    %9575 = vmatprep.subr.bf16.mxu0 0
    %9576 = vmatpush1.bf16.msra.mxu0 %v9554
    %9577 = vmatprep.subr.bf16.mxu0 0
    %9578 = vmatpush1.bf16.msra.mxu0 %v9553
    %9579 = vmatprep.subr.bf16.mxu0 0
    %9580 = vmatpush1.bf16.msra.mxu0 %v9552
    %9581 = vmatprep.subr.bf16.mxu0 0
    %9582 = vmatpush1.bf16.msra.mxu0 %v9551
    %9583 = vmatprep.subr.bf16.mxu0 0
    %9584 = vmatpush2.bf16.msra.mxu0 0
    %9585 = vmatprep.subr.bf16.mxu0 0
    %9586 = vmatpush2.bf16.msra.mxu0 0
    %9587 = vmatprep.subr.bf16.mxu0 0
    %9588 = vmatpush2.bf16.msra.mxu0 0
    %9589 = vmatprep.subr.bf16.mxu0 0
    %9590 = vmatpush2.bf16.msra.mxu0 0
    %9591 = vmatprep.subr.bf16.mxu0 0
    %9592 = vmatpush2.bf16.msra.mxu0 0
    %9593 = vmatprep.subr.bf16.mxu0 0
    %9594 = vmatpush2.bf16.msra.mxu0 0
    %9595 = vmatprep.subr.bf16.mxu0 0
    %9596 = vmatpush2.bf16.msra.mxu0 0
    %9597 = vmatprep.subr.bf16.mxu0 0
    %9598 = vmatpush2.bf16.msra.mxu0 0
    %9599 = vmatprep.mubr.bf16.mxu0 0
    %9600 = vmatmul.mubr.bf16.gmra.mxu0 %v9503
    %v9601 = vpop.f32.mrf.mxu0
    %v9602 = vadd.f32 0.0, %v9601
    %v9603 = vpop.f32.mrf.mxu0
    %v9604 = vpop.f32.mrf.mxu0
    %v9605 = vadd.f32 0.0, %v9604
    %v9606 = vpop.f32.mrf.mxu0
    %9607 = vmatprep.mubr.bf16.mxu0 0
    %9608 = vmatmul.mubr.bf16.gmra.mxu0 %v9504
    %v9609 = vpop.f32.mrf.mxu0
    %v9610 = vadd.f32 0.0, %v9609
    %v9611 = vpop.f32.mrf.mxu0
    %v9612 = vpop.f32.mrf.mxu0
    %v9613 = vadd.f32 0.0, %v9612
    %v9614 = vpop.f32.mrf.mxu0
    %9615 = vmatprep.mubr.bf16.mxu0 0
    %9616 = vmatmul.mubr.bf16.gmra.mxu0 %v9505
    %v9617 = vpop.f32.mrf.mxu0
    %v9618 = vadd.f32 0.0, %v9617
    %v9619 = vpop.f32.mrf.mxu0
    %v9620 = vpop.f32.mrf.mxu0
    %v9621 = vadd.f32 0.0, %v9620
    %v9622 = vpop.f32.mrf.mxu0
    %9623 = vmatprep.mubr.bf16.mxu0 0
    %9624 = vmatmul.mubr.bf16.gmra.mxu0 %v9506
    %v9625 = vpop.f32.mrf.mxu0
    %v9626 = vadd.f32 0.0, %v9625
    %v9627 = vpop.f32.mrf.mxu0
    %v9628 = vpop.f32.mrf.mxu0
    %v9629 = vadd.f32 0.0, %v9628
    %v9630 = vpop.f32.mrf.mxu0
    %9631 = vmatprep.mubr.bf16.mxu0 0
    %9632 = vmatmul.mubr.bf16.gmra.mxu0 %v9507
    %v9633 = vpop.f32.mrf.mxu0
    %v9634 = vadd.f32 0.0, %v9633
    %v9635 = vpop.f32.mrf.mxu0
    %v9636 = vpop.f32.mrf.mxu0
    %v9637 = vadd.f32 0.0, %v9636
    %v9638 = vpop.f32.mrf.mxu0
    %9639 = vmatprep.mubr.bf16.mxu0 0
    %9640 = vmatmul.mubr.bf16.gmra.mxu0 %v9508
    %v9641 = vpop.f32.mrf.mxu0
    %v9642 = vadd.f32 0.0, %v9641
    %v9643 = vpop.f32.mrf.mxu0
    %v9644 = vpop.f32.mrf.mxu0
    %v9645 = vadd.f32 0.0, %v9644
    %v9646 = vpop.f32.mrf.mxu0
    %9647 = vmatprep.mubr.bf16.mxu0 0
    %9648 = vmatmul.mubr.bf16.gmra.mxu0 %v9509
    %v9649 = vpop.f32.mrf.mxu0
    %v9650 = vadd.f32 0.0, %v9649
    %v9651 = vpop.f32.mrf.mxu0
    %v9652 = vpop.f32.mrf.mxu0
    %v9653 = vadd.f32 0.0, %v9652
    %v9654 = vpop.f32.mrf.mxu0
    %9655 = vmatprep.mubr.bf16.mxu0 0
    %9656 = vmatmul.mubr.bf16.gmra.mxu0 %v9510
    %v9657 = vpop.f32.mrf.mxu0
    %v9658 = vadd.f32 0.0, %v9657
    %v9659 = vpop.f32.mrf.mxu0
    %v9660 = vpop.f32.mrf.mxu0
    %v9661 = vadd.f32 0.0, %v9660
    %v9662 = vpop.f32.mrf.mxu0
    %9663 = vdwg.mxu0
    %v9664 = vadd.f32 %v9190, %v9602
    %v9665 = vadd.f32 %v9191, %v9605
    %v9666 = vadd.f32 %v9192, %v9610
    %v9667 = vadd.f32 %v9193, %v9613
    %v9668 = vadd.f32 %v9194, %v9618
    %v9669 = vadd.f32 %v9195, %v9621
    %v9670 = vadd.f32 %v9196, %v9626
    %v9671 = vadd.f32 %v9197, %v9629
    %v9672 = vadd.f32 %v9198, %v9634
    %v9673 = vadd.f32 %v9199, %v9637
    %v9674 = vadd.f32 %v9200, %v9642
    %v9675 = vadd.f32 %v9201, %v9645
    %v9676 = vadd.f32 %v9202, %v9650
    %v9677 = vadd.f32 %v9203, %v9653
    %v9678 = vadd.f32 %v9204, %v9658
    %v9679 = vadd.f32 %v9205, %v9661
    %v9681 = vshrl.u32 %v9222, 16
    %v9683 = vrot.slane %v9681, 4
    %v9684 = vshll.u32 %v9222, 16
    %v9686 = vrot.slane %v9684, 5
    %v9687 = vor.u32 %v9683, %v9686
    %v9688 = vrot.slane %v9687, 4
    %v9690 = vshll.u32 %v9223, 16
    %v9692 = vrot.slane %v9690, 5
    %v9693 = vsel %vm1454, %v9688, %v9692
    %v9695 = vshrl.u32 %v9242, 16
    %v9697 = vrot.slane %v9695, 4
    %v9698 = vshll.u32 %v9242, 16
    %v9700 = vrot.slane %v9698, 5
    %v9701 = vor.u32 %v9697, %v9700
    %v9702 = vrot.slane %v9701, 4
    %v9704 = vshll.u32 %v9243, 16
    %v9706 = vrot.slane %v9704, 5
    %v9707 = vsel %vm1454, %v9702, %v9706
    %s9708 = scalar_lea.vmem [#allocation12], 256
    %v9709 = vld [vmem:[%s9708] sm:$0xf]
    %v9710 = vld [vmem:[%s9708 + $0x4] sm:$0xf]
    %v9711 = vld [vmem:[%s9708 + $0x8] sm:$0xf]
    %v9712 = vld [vmem:[%s9708 + $0xc] sm:$0xf]
    %v9713 = vld [vmem:[%s9708 + $0x10] sm:$0xf]
    %v9714 = vld [vmem:[%s9708 + $0x14] sm:$0xf]
    %v9715 = vld [vmem:[%s9708 + $0x18] sm:$0xf]
    %v9716 = vld [vmem:[%s9708 + $0x1c] sm:$0xf]
    %v9717 = vld [vmem:[%s9708 + $0x20] sm:$0xf]
    %v9718 = vld [vmem:[%s9708 + $0x24] sm:$0xf]
    %v9719 = vld [vmem:[%s9708 + $0x28] sm:$0xf]
    %v9720 = vld [vmem:[%s9708 + $0x2c] sm:$0xf]
    %v9721 = vld [vmem:[%s9708 + $0x30] sm:$0xf]
    %v9722 = vld [vmem:[%s9708 + $0x34] sm:$0xf]
    %v9723 = vld [vmem:[%s9708 + $0x38] sm:$0xf]
    %v9724 = vld [vmem:[%s9708 + $0x3c] sm:$0xf]
    %v9725 = vunpack.c.l.b16 %v9693
    %v9726 = vunpack.c.l.b16 %v9707
    %v9727 = vpack.c.b16 %v9489, %v9488
    %v9728 = vpack.c.b16 %v9491, %v9490
    %v9729 = vpack.c.b16 %v9493, %v9492
    %v9730 = vpack.c.b16 %v9725, %v9494
    %v9731 = vpack.c.b16 %v9497, %v9496
    %v9732 = vpack.c.b16 %v9499, %v9498
    %v9733 = vpack.c.b16 %v9501, %v9500
    %v9734 = vpack.c.b16 %v9726, %v9502
    %v9759 = vunpack.c.l.b16 %v9709
    %v9760 = vunpack.c.l.b16 %v9710
    %v9761 = vunpack.c.l.b16 %v9711
    %v9762 = vunpack.c.l.b16 %v9712
    %v9763 = vunpack.c.l.b16 %v9713
    %v9764 = vunpack.c.l.b16 %v9714
    %v9765 = vunpack.c.l.b16 %v9715
    %v9766 = vunpack.c.l.b16 %v9716
    %v9767 = vunpack.c.l.b16 %v9717
    %v9768 = vunpack.c.l.b16 %v9718
    %v9769 = vunpack.c.l.b16 %v9719
    %v9770 = vunpack.c.l.b16 %v9720
    %v9771 = vunpack.c.l.b16 %v9721
    %v9772 = vunpack.c.l.b16 %v9722
    %v9773 = vunpack.c.l.b16 %v9723
    %v9774 = vunpack.c.l.b16 %v9724
    %v9775 = vpack.c.b16 %v9760, %v9759
    %v9776 = vpack.c.b16 %v9762, %v9761
    %v9777 = vpack.c.b16 %v9764, %v9763
    %v9778 = vpack.c.b16 %v9766, %v9765
    %v9779 = vpack.c.b16 %v9768, %v9767
    %v9780 = vpack.c.b16 %v9770, %v9769
    %v9781 = vpack.c.b16 %v9772, %v9771
    %v9782 = vpack.c.b16 %v9774, %v9773
    %9791 = vmatprep.subr.bf16.mxu0 0
    %9792 = vmatpush1.bf16.msra.mxu0 %v9782
    %9793 = vmatprep.subr.bf16.mxu0 0
    %9794 = vmatpush1.bf16.msra.mxu0 %v9781
    %9795 = vmatprep.subr.bf16.mxu0 0
    %9796 = vmatpush1.bf16.msra.mxu0 %v9780
    %9797 = vmatprep.subr.bf16.mxu0 0
    %9798 = vmatpush1.bf16.msra.mxu0 %v9779
    %9799 = vmatprep.subr.bf16.mxu0 0
    %9800 = vmatpush1.bf16.msra.mxu0 %v9778
    %9801 = vmatprep.subr.bf16.mxu0 0
    %9802 = vmatpush1.bf16.msra.mxu0 %v9777
    %9803 = vmatprep.subr.bf16.mxu0 0
    %9804 = vmatpush1.bf16.msra.mxu0 %v9776
    %9805 = vmatprep.subr.bf16.mxu0 0
    %9806 = vmatpush1.bf16.msra.mxu0 %v9775
    %9807 = vmatprep.subr.bf16.mxu0 0
    %9808 = vmatpush2.bf16.msra.mxu0 0
    %9809 = vmatprep.subr.bf16.mxu0 0
    %9810 = vmatpush2.bf16.msra.mxu0 0
    %9811 = vmatprep.subr.bf16.mxu0 0
    %9812 = vmatpush2.bf16.msra.mxu0 0
    %9813 = vmatprep.subr.bf16.mxu0 0
    %9814 = vmatpush2.bf16.msra.mxu0 0
    %9815 = vmatprep.subr.bf16.mxu0 0
    %9816 = vmatpush2.bf16.msra.mxu0 0
    %9817 = vmatprep.subr.bf16.mxu0 0
    %9818 = vmatpush2.bf16.msra.mxu0 0
    %9819 = vmatprep.subr.bf16.mxu0 0
    %9820 = vmatpush2.bf16.msra.mxu0 0
    %9821 = vmatprep.subr.bf16.mxu0 0
    %9822 = vmatpush2.bf16.msra.mxu0 0
    %9823 = vmatprep.mubr.bf16.mxu0 0
    %9824 = vmatmul.mubr.bf16.gmra.mxu0 %v9727
    %v9825 = vpop.f32.mrf.mxu0
    %v9826 = vadd.f32 0.0, %v9825
    %v9827 = vpop.f32.mrf.mxu0
    %v9828 = vpop.f32.mrf.mxu0
    %v9829 = vadd.f32 0.0, %v9828
    %v9830 = vpop.f32.mrf.mxu0
    %9831 = vmatprep.mubr.bf16.mxu0 0
    %9832 = vmatmul.mubr.bf16.gmra.mxu0 %v9728
    %v9833 = vpop.f32.mrf.mxu0
    %v9834 = vadd.f32 0.0, %v9833
    %v9835 = vpop.f32.mrf.mxu0
    %v9836 = vpop.f32.mrf.mxu0
    %v9837 = vadd.f32 0.0, %v9836
    %v9838 = vpop.f32.mrf.mxu0
    %9839 = vmatprep.mubr.bf16.mxu0 0
    %9840 = vmatmul.mubr.bf16.gmra.mxu0 %v9729
    %v9841 = vpop.f32.mrf.mxu0
    %v9842 = vadd.f32 0.0, %v9841
    %v9843 = vpop.f32.mrf.mxu0
    %v9844 = vpop.f32.mrf.mxu0
    %v9845 = vadd.f32 0.0, %v9844
    %v9846 = vpop.f32.mrf.mxu0
    %9847 = vmatprep.mubr.bf16.mxu0 0
    %9848 = vmatmul.mubr.bf16.gmra.mxu0 %v9730
    %v9849 = vpop.f32.mrf.mxu0
    %v9850 = vadd.f32 0.0, %v9849
    %v9851 = vpop.f32.mrf.mxu0
    %v9852 = vpop.f32.mrf.mxu0
    %v9853 = vadd.f32 0.0, %v9852
    %v9854 = vpop.f32.mrf.mxu0
    %9855 = vmatprep.mubr.bf16.mxu0 0
    %9856 = vmatmul.mubr.bf16.gmra.mxu0 %v9731
    %v9857 = vpop.f32.mrf.mxu0
    %v9858 = vadd.f32 0.0, %v9857
    %v9859 = vpop.f32.mrf.mxu0
    %v9860 = vpop.f32.mrf.mxu0
    %v9861 = vadd.f32 0.0, %v9860
    %v9862 = vpop.f32.mrf.mxu0
    %9863 = vmatprep.mubr.bf16.mxu0 0
    %9864 = vmatmul.mubr.bf16.gmra.mxu0 %v9732
    %v9865 = vpop.f32.mrf.mxu0
    %v9866 = vadd.f32 0.0, %v9865
    %v9867 = vpop.f32.mrf.mxu0
    %v9868 = vpop.f32.mrf.mxu0
    %v9869 = vadd.f32 0.0, %v9868
    %v9870 = vpop.f32.mrf.mxu0
    %9871 = vmatprep.mubr.bf16.mxu0 0
    %9872 = vmatmul.mubr.bf16.gmra.mxu0 %v9733
    %v9873 = vpop.f32.mrf.mxu0
    %v9874 = vadd.f32 0.0, %v9873
    %v9875 = vpop.f32.mrf.mxu0
    %v9876 = vpop.f32.mrf.mxu0
    %v9877 = vadd.f32 0.0, %v9876
    %v9878 = vpop.f32.mrf.mxu0
    %9879 = vmatprep.mubr.bf16.mxu0 0
    %9880 = vmatmul.mubr.bf16.gmra.mxu0 %v9734
    %v9881 = vpop.f32.mrf.mxu0
    %v9882 = vadd.f32 0.0, %v9881
    %v9883 = vpop.f32.mrf.mxu0
    %v9884 = vpop.f32.mrf.mxu0
    %v9885 = vadd.f32 0.0, %v9884
    %v9886 = vpop.f32.mrf.mxu0
    %9887 = vdwg.mxu0
    %v9888 = vadd.f32 %v9664, %v9826
    %v9889 = vadd.f32 %v9665, %v9829
    %v9890 = vadd.f32 %v9666, %v9834
    %v9891 = vadd.f32 %v9667, %v9837
    %v9892 = vadd.f32 %v9668, %v9842
    %v9893 = vadd.f32 %v9669, %v9845
    %v9894 = vadd.f32 %v9670, %v9850
    %v9895 = vadd.f32 %v9671, %v9853
    %v9896 = vadd.f32 %v9672, %v9858
    %v9897 = vadd.f32 %v9673, %v9861
    %v9898 = vadd.f32 %v9674, %v9866
    %v9899 = vadd.f32 %v9675, %v9869
    %v9900 = vadd.f32 %v9676, %v9874
    %v9901 = vadd.f32 %v9677, %v9877
    %v9902 = vadd.f32 %v9678, %v9882
    %v9903 = vadd.f32 %v9679, %v9885
    %v9905 = vshrl.u32 %v9224, 16
    %v9907 = vrot.slane %v9905, 4
    %v9908 = vshll.u32 %v9224, 16
    %v9910 = vrot.slane %v9908, 5
    %v9911 = vor.u32 %v9907, %v9910
    %v9912 = vrot.slane %v9911, 4
    %v9914 = vshll.u32 %v9225, 16
    %v9916 = vrot.slane %v9914, 5
    %v9917 = vsel %vm1454, %v9912, %v9916
    %v9919 = vshrl.u32 %v9244, 16
    %v9921 = vrot.slane %v9919, 4
    %v9922 = vshll.u32 %v9244, 16
    %v9924 = vrot.slane %v9922, 5
    %v9925 = vor.u32 %v9921, %v9924
    %v9926 = vrot.slane %v9925, 4
    %v9928 = vshll.u32 %v9245, 16
    %v9930 = vrot.slane %v9928, 5
    %v9931 = vsel %vm1454, %v9926, %v9930
    %s9932 = scalar_lea.vmem [#allocation12], 448
    %v9933 = vld [vmem:[%s9932] sm:$0xf]
    %v9934 = vld [vmem:[%s9932 + $0x4] sm:$0xf]
    %v9935 = vld [vmem:[%s9932 + $0x8] sm:$0xf]
    %v9936 = vld [vmem:[%s9932 + $0xc] sm:$0xf]
    %v9937 = vld [vmem:[%s9932 + $0x10] sm:$0xf]
    %v9938 = vld [vmem:[%s9932 + $0x14] sm:$0xf]
    %v9939 = vld [vmem:[%s9932 + $0x18] sm:$0xf]
    %v9940 = vld [vmem:[%s9932 + $0x1c] sm:$0xf]
    %v9941 = vld [vmem:[%s9932 + $0x20] sm:$0xf]
    %v9942 = vld [vmem:[%s9932 + $0x24] sm:$0xf]
    %v9943 = vld [vmem:[%s9932 + $0x28] sm:$0xf]
    %v9944 = vld [vmem:[%s9932 + $0x2c] sm:$0xf]
    %v9945 = vld [vmem:[%s9932 + $0x30] sm:$0xf]
    %v9946 = vld [vmem:[%s9932 + $0x34] sm:$0xf]
    %v9947 = vld [vmem:[%s9932 + $0x38] sm:$0xf]
    %v9948 = vld [vmem:[%s9932 + $0x3c] sm:$0xf]
    %v9949 = vunpack.c.l.b16 %v9917
    %v9950 = vunpack.c.l.b16 %v9931
    %v9951 = vpack.c.b16 %v9949, %v9725
    %v9952 = vpack.c.b16 %v9950, %v9726
    %v9971 = vunpack.c.l.b16 %v9933
    %v9972 = vunpack.c.l.b16 %v9934
    %v9973 = vunpack.c.l.b16 %v9935
    %v9974 = vunpack.c.l.b16 %v9936
    %v9975 = vunpack.c.l.b16 %v9937
    %v9976 = vunpack.c.l.b16 %v9938
    %v9977 = vunpack.c.l.b16 %v9939
    %v9978 = vunpack.c.l.b16 %v9940
    %v9979 = vunpack.c.l.b16 %v9941
    %v9980 = vunpack.c.l.b16 %v9942
    %v9981 = vunpack.c.l.b16 %v9943
    %v9982 = vunpack.c.l.b16 %v9944
    %v9983 = vunpack.c.l.b16 %v9945
    %v9984 = vunpack.c.l.b16 %v9946
    %v9985 = vunpack.c.l.b16 %v9947
    %v9986 = vunpack.c.l.b16 %v9948
    %v9987 = vpack.c.b16 %v9972, %v9971
    %v9988 = vpack.c.b16 %v9974, %v9973
    %v9989 = vpack.c.b16 %v9976, %v9975
    %v9990 = vpack.c.b16 %v9978, %v9977
    %v9991 = vpack.c.b16 %v9980, %v9979
    %v9992 = vpack.c.b16 %v9982, %v9981
    %v9993 = vpack.c.b16 %v9984, %v9983
    %v9994 = vpack.c.b16 %v9986, %v9985
    %10003 = vmatprep.subr.bf16.mxu0 0
    %10004 = vmatpush1.bf16.msra.mxu0 %v9994
    %10005 = vmatprep.subr.bf16.mxu0 0
    %10006 = vmatpush1.bf16.msra.mxu0 %v9993
    %10007 = vmatprep.subr.bf16.mxu0 0
    %10008 = vmatpush1.bf16.msra.mxu0 %v9992
    %10009 = vmatprep.subr.bf16.mxu0 0
    %10010 = vmatpush1.bf16.msra.mxu0 %v9991
    %10011 = vmatprep.subr.bf16.mxu0 0
    %10012 = vmatpush1.bf16.msra.mxu0 %v9990
    %10013 = vmatprep.subr.bf16.mxu0 0
    %10014 = vmatpush1.bf16.msra.mxu0 %v9989
    %10015 = vmatprep.subr.bf16.mxu0 0
    %10016 = vmatpush1.bf16.msra.mxu0 %v9988
    %10017 = vmatprep.subr.bf16.mxu0 0
    %10018 = vmatpush1.bf16.msra.mxu0 %v9987
    %10019 = vmatprep.subr.bf16.mxu0 0
    %10020 = vmatpush2.bf16.msra.mxu0 0
    %10021 = vmatprep.subr.bf16.mxu0 0
    %10022 = vmatpush2.bf16.msra.mxu0 0
    %10023 = vmatprep.subr.bf16.mxu0 0
    %10024 = vmatpush2.bf16.msra.mxu0 0
    %10025 = vmatprep.subr.bf16.mxu0 0
    %10026 = vmatpush2.bf16.msra.mxu0 0
    %10027 = vmatprep.subr.bf16.mxu0 0
    %10028 = vmatpush2.bf16.msra.mxu0 0
    %10029 = vmatprep.subr.bf16.mxu0 0
    %10030 = vmatpush2.bf16.msra.mxu0 0
    %10031 = vmatprep.subr.bf16.mxu0 0
    %10032 = vmatpush2.bf16.msra.mxu0 0
    %10033 = vmatprep.subr.bf16.mxu0 0
    %10034 = vmatpush2.bf16.msra.mxu0 0
    %10035 = vmatprep.mubr.bf16.mxu0 0
    %10036 = vmatmul.mubr.bf16.gmra.mxu0 %v9504
    %v10037 = vpop.f32.mrf.mxu0
    %v10038 = vadd.f32 0.0, %v10037
    %v10039 = vpop.f32.mrf.mxu0
    %v10040 = vpop.f32.mrf.mxu0
    %v10041 = vadd.f32 0.0, %v10040
    %v10042 = vpop.f32.mrf.mxu0
    %10043 = vmatprep.mubr.bf16.mxu0 0
    %10044 = vmatmul.mubr.bf16.gmra.mxu0 %v9505
    %v10045 = vpop.f32.mrf.mxu0
    %v10046 = vadd.f32 0.0, %v10045
    %v10047 = vpop.f32.mrf.mxu0
    %v10048 = vpop.f32.mrf.mxu0
    %v10049 = vadd.f32 0.0, %v10048
    %v10050 = vpop.f32.mrf.mxu0
    %10051 = vmatprep.mubr.bf16.mxu0 0
    %10052 = vmatmul.mubr.bf16.gmra.mxu0 %v9506
    %v10053 = vpop.f32.mrf.mxu0
    %v10054 = vadd.f32 0.0, %v10053
    %v10055 = vpop.f32.mrf.mxu0
    %v10056 = vpop.f32.mrf.mxu0
    %v10057 = vadd.f32 0.0, %v10056
    %v10058 = vpop.f32.mrf.mxu0
    %10059 = vmatprep.mubr.bf16.mxu0 0
    %10060 = vmatmul.mubr.bf16.gmra.mxu0 %v9951
    %v10061 = vpop.f32.mrf.mxu0
    %v10062 = vadd.f32 0.0, %v10061
    %v10063 = vpop.f32.mrf.mxu0
    %v10064 = vpop.f32.mrf.mxu0
    %v10065 = vadd.f32 0.0, %v10064
    %v10066 = vpop.f32.mrf.mxu0
    %10067 = vmatprep.mubr.bf16.mxu0 0
    %10068 = vmatmul.mubr.bf16.gmra.mxu0 %v9508
    %v10069 = vpop.f32.mrf.mxu0
    %v10070 = vadd.f32 0.0, %v10069
    %v10071 = vpop.f32.mrf.mxu0
    %v10072 = vpop.f32.mrf.mxu0
    %v10073 = vadd.f32 0.0, %v10072
    %v10074 = vpop.f32.mrf.mxu0
    %10075 = vmatprep.mubr.bf16.mxu0 0
    %10076 = vmatmul.mubr.bf16.gmra.mxu0 %v9509
    %v10077 = vpop.f32.mrf.mxu0
    %v10078 = vadd.f32 0.0, %v10077
    %v10079 = vpop.f32.mrf.mxu0
    %v10080 = vpop.f32.mrf.mxu0
    %v10081 = vadd.f32 0.0, %v10080
    %v10082 = vpop.f32.mrf.mxu0
    %10083 = vmatprep.mubr.bf16.mxu0 0
    %10084 = vmatmul.mubr.bf16.gmra.mxu0 %v9510
    %v10085 = vpop.f32.mrf.mxu0
    %v10086 = vadd.f32 0.0, %v10085
    %v10087 = vpop.f32.mrf.mxu0
    %v10088 = vpop.f32.mrf.mxu0
    %v10089 = vadd.f32 0.0, %v10088
    %v10090 = vpop.f32.mrf.mxu0
    %10091 = vmatprep.mubr.bf16.mxu0 0
    %10092 = vmatmul.mubr.bf16.gmra.mxu0 %v9952
    %v10093 = vpop.f32.mrf.mxu0
    %v10094 = vadd.f32 0.0, %v10093
    %v10095 = vpop.f32.mrf.mxu0
    %v10096 = vpop.f32.mrf.mxu0
    %v10097 = vadd.f32 0.0, %v10096
    %v10098 = vpop.f32.mrf.mxu0
    %10099 = vdwg.mxu0
    %v10100 = vadd.f32 %v9888, %v10038
    %v10101 = vadd.f32 %v9889, %v10041
    %v10102 = vadd.f32 %v9890, %v10046
    %v10103 = vadd.f32 %v9891, %v10049
    %v10104 = vadd.f32 %v9892, %v10054
    %v10105 = vadd.f32 %v9893, %v10057
    %v10106 = vadd.f32 %v9894, %v10062
    %v10107 = vadd.f32 %v9895, %v10065
    %v10108 = vadd.f32 %v9896, %v10070
    %v10109 = vadd.f32 %v9897, %v10073
    %v10110 = vadd.f32 %v9898, %v10078
    %v10111 = vadd.f32 %v9899, %v10081
    %v10112 = vadd.f32 %v9900, %v10086
    %v10113 = vadd.f32 %v9901, %v10089
    %v10114 = vadd.f32 %v9902, %v10094
    %v10115 = vadd.f32 %v9903, %v10097
    %v10116 = vld [vmem:[#allocation2] sm:$0xe]
    %v10117 = vld [vmem:[#allocation2 + $0x8] sm:$0xe]
    %v10118 = vld [vmem:[#allocation2 + $0x10] sm:$0xe]
    %v10119 = vld [vmem:[#allocation2 + $0x18] sm:$0xe]
    %v10120 = vld [vmem:[#allocation2 + $0x20] sm:$0xe]
    %v10121 = vld [vmem:[#allocation2 + $0x28] sm:$0xe]
    %v10122 = vld [vmem:[#allocation2 + $0x30] sm:$0xe]
    %v10123 = vld [vmem:[#allocation2 + $0x38] sm:$0xe]
    %v10124 = vld [vmem:[#allocation2 + $0x40] sm:$0xe]
    %v10125 = vld [vmem:[#allocation2 + $0x48] sm:$0xe]
    %v10126 = vld [vmem:[#allocation2 + $0x50] sm:$0xe]
    %v10127 = vld [vmem:[#allocation2 + $0x58] sm:$0xe]
    %v10128 = vld [vmem:[#allocation2 + $0x60] sm:$0xe]
    %v10129 = vld [vmem:[#allocation2 + $0x68] sm:$0xe]
    %v10130 = vld [vmem:[#allocation2 + $0x70] sm:$0xe]
    %v10131 = vld [vmem:[#allocation2 + $0x78] sm:$0xe]
    %v10132 = vld [vmem:[#allocation2 + $0x80] sm:$0xe]
    %v10133 = vld [vmem:[#allocation2 + $0x88] sm:$0xe]
    %v10134 = vld [vmem:[#allocation2 + $0x90] sm:$0xe]
    %v10135 = vld [vmem:[#allocation2 + $0x98] sm:$0xe]
    %v10168 = vrot.slane %v10116, 5
    %v10169 = vrot.slane %v10168, 4
    %v10170 = vrot.slane %v9207, 5
    %v10171 = vsel %vm2379, %v10169, %v10170
    %v10172 = vrot.slane %v10117, 5
    %v10173 = vrot.slane %v10172, 4
    %v10174 = vrot.slane %v9209, 5
    %v10175 = vsel %vm2379, %v10173, %v10174
    %v10176 = vrot.slane %v10118, 5
    %v10177 = vrot.slane %v10176, 4
    %v10178 = vrot.slane %v9211, 5
    %v10179 = vsel %vm2379, %v10177, %v10178
    %v10180 = vrot.slane %v10119, 5
    %v10181 = vrot.slane %v10180, 4
    %v10182 = vrot.slane %v9213, 5
    %v10183 = vsel %vm2379, %v10181, %v10182
    %v10184 = vrot.slane %v10120, 5
    %v10185 = vrot.slane %v10184, 4
    %v10186 = vrot.slane %v9215, 5
    %v10187 = vsel %vm2379, %v10185, %v10186
    %v10188 = vrot.slane %v10121, 5
    %v10189 = vrot.slane %v10188, 4
    %v10190 = vrot.slane %v9217, 5
    %v10191 = vsel %vm2379, %v10189, %v10190
    %v10192 = vrot.slane %v10122, 5
    %v10193 = vrot.slane %v10192, 4
    %v10194 = vrot.slane %v9219, 5
    %v10195 = vsel %vm2379, %v10193, %v10194
    %v10196 = vrot.slane %v10123, 5
    %v10197 = vrot.slane %v10196, 4
    %v10198 = vrot.slane %v9221, 5
    %v10199 = vsel %vm2379, %v10197, %v10198
    %v10200 = vrot.slane %v10126, 5
    %v10201 = vrot.slane %v10200, 4
    %v10202 = vrot.slane %v9227, 5
    %v10203 = vsel %vm2379, %v10201, %v10202
    %v10204 = vrot.slane %v10127, 5
    %v10205 = vrot.slane %v10204, 4
    %v10206 = vrot.slane %v9229, 5
    %v10207 = vsel %vm2379, %v10205, %v10206
    %v10208 = vrot.slane %v10128, 5
    %v10209 = vrot.slane %v10208, 4
    %v10210 = vrot.slane %v9231, 5
    %v10211 = vsel %vm2379, %v10209, %v10210
    %v10212 = vrot.slane %v10129, 5
    %v10213 = vrot.slane %v10212, 4
    %v10214 = vrot.slane %v9233, 5
    %v10215 = vsel %vm2379, %v10213, %v10214
    %v10216 = vrot.slane %v10130, 5
    %v10217 = vrot.slane %v10216, 4
    %v10218 = vrot.slane %v9235, 5
    %v10219 = vsel %vm2379, %v10217, %v10218
    %v10220 = vrot.slane %v10131, 5
    %v10221 = vrot.slane %v10220, 4
    %v10222 = vrot.slane %v9237, 5
    %v10223 = vsel %vm2379, %v10221, %v10222
    %v10224 = vrot.slane %v10132, 5
    %v10225 = vrot.slane %v10224, 4
    %v10226 = vrot.slane %v9239, 5
    %v10227 = vsel %vm2379, %v10225, %v10226
    %v10228 = vrot.slane %v10133, 5
    %v10229 = vrot.slane %v10228, 4
    %v10230 = vrot.slane %v9241, 5
    %v10231 = vsel %vm2379, %v10229, %v10230
    %s10232 = scalar_lea.vmem [#allocation12], 128
    %v10233 = vld [vmem:[%s10232] sm:$0xf]
    %v10234 = vld [vmem:[%s10232 + $0x4] sm:$0xf]
    %v10235 = vld [vmem:[%s10232 + $0x8] sm:$0xf]
    %v10236 = vld [vmem:[%s10232 + $0xc] sm:$0xf]
    %v10237 = vld [vmem:[%s10232 + $0x10] sm:$0xf]
    %v10238 = vld [vmem:[%s10232 + $0x14] sm:$0xf]
    %v10239 = vld [vmem:[%s10232 + $0x18] sm:$0xf]
    %v10240 = vld [vmem:[%s10232 + $0x1c] sm:$0xf]
    %v10241 = vld [vmem:[%s10232 + $0x20] sm:$0xf]
    %v10242 = vld [vmem:[%s10232 + $0x24] sm:$0xf]
    %v10243 = vld [vmem:[%s10232 + $0x28] sm:$0xf]
    %v10244 = vld [vmem:[%s10232 + $0x2c] sm:$0xf]
    %v10245 = vld [vmem:[%s10232 + $0x30] sm:$0xf]
    %v10246 = vld [vmem:[%s10232 + $0x34] sm:$0xf]
    %v10247 = vld [vmem:[%s10232 + $0x38] sm:$0xf]
    %v10248 = vld [vmem:[%s10232 + $0x3c] sm:$0xf]
    %v10249 = vunpack.c.l.b16 %v10171
    %v10250 = vunpack.c.l.b16 %v10175
    %v10251 = vunpack.c.l.b16 %v10179
    %v10252 = vunpack.c.l.b16 %v10183
    %v10253 = vunpack.c.l.b16 %v10187
    %v10254 = vunpack.c.l.b16 %v10191
    %v10255 = vunpack.c.l.b16 %v10195
    %v10256 = vunpack.c.l.b16 %v10199
    %v10257 = vunpack.c.l.b16 %v10203
    %v10258 = vunpack.c.l.b16 %v10207
    %v10259 = vunpack.c.l.b16 %v10211
    %v10260 = vunpack.c.l.b16 %v10215
    %v10261 = vunpack.c.l.b16 %v10219
    %v10262 = vunpack.c.l.b16 %v10223
    %v10263 = vunpack.c.l.b16 %v10227
    %v10264 = vunpack.c.l.b16 %v10231
    %v10265 = vpack.c.b16 %v10250, %v10249
    %v10266 = vpack.c.b16 %v10252, %v10251
    %v10267 = vpack.c.b16 %v10254, %v10253
    %v10268 = vpack.c.b16 %v10256, %v10255
    %v10269 = vpack.c.b16 %v10258, %v10257
    %v10270 = vpack.c.b16 %v10260, %v10259
    %v10271 = vpack.c.b16 %v10262, %v10261
    %v10272 = vpack.c.b16 %v10264, %v10263
    %v10297 = vunpack.c.l.b16 %v10233
    %v10298 = vunpack.c.l.b16 %v10234
    %v10299 = vunpack.c.l.b16 %v10235
    %v10300 = vunpack.c.l.b16 %v10236
    %v10301 = vunpack.c.l.b16 %v10237
    %v10302 = vunpack.c.l.b16 %v10238
    %v10303 = vunpack.c.l.b16 %v10239
    %v10304 = vunpack.c.l.b16 %v10240
    %v10305 = vunpack.c.l.b16 %v10241
    %v10306 = vunpack.c.l.b16 %v10242
    %v10307 = vunpack.c.l.b16 %v10243
    %v10308 = vunpack.c.l.b16 %v10244
    %v10309 = vunpack.c.l.b16 %v10245
    %v10310 = vunpack.c.l.b16 %v10246
    %v10311 = vunpack.c.l.b16 %v10247
    %v10312 = vunpack.c.l.b16 %v10248
    %v10313 = vpack.c.b16 %v10298, %v10297
    %v10314 = vpack.c.b16 %v10300, %v10299
    %v10315 = vpack.c.b16 %v10302, %v10301
    %v10316 = vpack.c.b16 %v10304, %v10303
    %v10317 = vpack.c.b16 %v10306, %v10305
    %v10318 = vpack.c.b16 %v10308, %v10307
    %v10319 = vpack.c.b16 %v10310, %v10309
    %v10320 = vpack.c.b16 %v10312, %v10311
    %10329 = vmatprep.subr.bf16.mxu0 0
    %10330 = vmatpush1.bf16.msra.mxu0 %v10320
    %10331 = vmatprep.subr.bf16.mxu0 0
    %10332 = vmatpush1.bf16.msra.mxu0 %v10319
    %10333 = vmatprep.subr.bf16.mxu0 0
    %10334 = vmatpush1.bf16.msra.mxu0 %v10318
    %10335 = vmatprep.subr.bf16.mxu0 0
    %10336 = vmatpush1.bf16.msra.mxu0 %v10317
    %10337 = vmatprep.subr.bf16.mxu0 0
    %10338 = vmatpush1.bf16.msra.mxu0 %v10316
    %10339 = vmatprep.subr.bf16.mxu0 0
    %10340 = vmatpush1.bf16.msra.mxu0 %v10315
    %10341 = vmatprep.subr.bf16.mxu0 0
    %10342 = vmatpush1.bf16.msra.mxu0 %v10314
    %10343 = vmatprep.subr.bf16.mxu0 0
    %10344 = vmatpush1.bf16.msra.mxu0 %v10313
    %10345 = vmatprep.subr.bf16.mxu0 0
    %10346 = vmatpush2.bf16.msra.mxu0 0
    %10347 = vmatprep.subr.bf16.mxu0 0
    %10348 = vmatpush2.bf16.msra.mxu0 0
    %10349 = vmatprep.subr.bf16.mxu0 0
    %10350 = vmatpush2.bf16.msra.mxu0 0
    %10351 = vmatprep.subr.bf16.mxu0 0
    %10352 = vmatpush2.bf16.msra.mxu0 0
    %10353 = vmatprep.subr.bf16.mxu0 0
    %10354 = vmatpush2.bf16.msra.mxu0 0
    %10355 = vmatprep.subr.bf16.mxu0 0
    %10356 = vmatpush2.bf16.msra.mxu0 0
    %10357 = vmatprep.subr.bf16.mxu0 0
    %10358 = vmatpush2.bf16.msra.mxu0 0
    %10359 = vmatprep.subr.bf16.mxu0 0
    %10360 = vmatpush2.bf16.msra.mxu0 0
    %10361 = vmatprep.mubr.bf16.mxu0 0
    %10362 = vmatmul.mubr.bf16.gmra.mxu0 %v10265
    %v10363 = vpop.f32.mrf.mxu0
    %v10364 = vadd.f32 0.0, %v10363
    %v10365 = vpop.f32.mrf.mxu0
    %v10366 = vpop.f32.mrf.mxu0
    %v10367 = vadd.f32 0.0, %v10366
    %v10368 = vpop.f32.mrf.mxu0
    %10369 = vmatprep.mubr.bf16.mxu0 0
    %10370 = vmatmul.mubr.bf16.gmra.mxu0 %v10266
    %v10371 = vpop.f32.mrf.mxu0
    %v10372 = vadd.f32 0.0, %v10371
    %v10373 = vpop.f32.mrf.mxu0
    %v10374 = vpop.f32.mrf.mxu0
    %v10375 = vadd.f32 0.0, %v10374
    %v10376 = vpop.f32.mrf.mxu0
    %10377 = vmatprep.mubr.bf16.mxu0 0
    %10378 = vmatmul.mubr.bf16.gmra.mxu0 %v10267
    %v10379 = vpop.f32.mrf.mxu0
    %v10380 = vadd.f32 0.0, %v10379
    %v10381 = vpop.f32.mrf.mxu0
    %v10382 = vpop.f32.mrf.mxu0
    %v10383 = vadd.f32 0.0, %v10382
    %v10384 = vpop.f32.mrf.mxu0
    %10385 = vmatprep.mubr.bf16.mxu0 0
    %10386 = vmatmul.mubr.bf16.gmra.mxu0 %v10268
    %v10387 = vpop.f32.mrf.mxu0
    %v10388 = vadd.f32 0.0, %v10387
    %v10389 = vpop.f32.mrf.mxu0
    %v10390 = vpop.f32.mrf.mxu0
    %v10391 = vadd.f32 0.0, %v10390
    %v10392 = vpop.f32.mrf.mxu0
    %10393 = vmatprep.mubr.bf16.mxu0 0
    %10394 = vmatmul.mubr.bf16.gmra.mxu0 %v10269
    %v10395 = vpop.f32.mrf.mxu0
    %v10396 = vadd.f32 0.0, %v10395
    %v10397 = vpop.f32.mrf.mxu0
    %v10398 = vpop.f32.mrf.mxu0
    %v10399 = vadd.f32 0.0, %v10398
    %v10400 = vpop.f32.mrf.mxu0
    %10401 = vmatprep.mubr.bf16.mxu0 0
    %10402 = vmatmul.mubr.bf16.gmra.mxu0 %v10270
    %v10403 = vpop.f32.mrf.mxu0
    %v10404 = vadd.f32 0.0, %v10403
    %v10405 = vpop.f32.mrf.mxu0
    %v10406 = vpop.f32.mrf.mxu0
    %v10407 = vadd.f32 0.0, %v10406
    %v10408 = vpop.f32.mrf.mxu0
    %10409 = vmatprep.mubr.bf16.mxu0 0
    %10410 = vmatmul.mubr.bf16.gmra.mxu0 %v10271
    %v10411 = vpop.f32.mrf.mxu0
    %v10412 = vadd.f32 0.0, %v10411
    %v10413 = vpop.f32.mrf.mxu0
    %v10414 = vpop.f32.mrf.mxu0
    %v10415 = vadd.f32 0.0, %v10414
    %v10416 = vpop.f32.mrf.mxu0
    %10417 = vmatprep.mubr.bf16.mxu0 0
    %10418 = vmatmul.mubr.bf16.gmra.mxu0 %v10272
    %v10419 = vpop.f32.mrf.mxu0
    %v10420 = vadd.f32 0.0, %v10419
    %v10421 = vpop.f32.mrf.mxu0
    %v10422 = vpop.f32.mrf.mxu0
    %v10423 = vadd.f32 0.0, %v10422
    %v10424 = vpop.f32.mrf.mxu0
    %10425 = vdwg.mxu0
    %v10426 = vadd.f32 %v10100, %v10364
    %v10427 = vadd.f32 %v10101, %v10367
    %v10428 = vadd.f32 %v10102, %v10372
    %v10429 = vadd.f32 %v10103, %v10375
    %v10430 = vadd.f32 %v10104, %v10380
    %v10431 = vadd.f32 %v10105, %v10383
    %v10432 = vadd.f32 %v10106, %v10388
    %v10433 = vadd.f32 %v10107, %v10391
    %v10434 = vadd.f32 %v10108, %v10396
    %v10435 = vadd.f32 %v10109, %v10399
    %v10436 = vadd.f32 %v10110, %v10404
    %v10437 = vadd.f32 %v10111, %v10407
    %v10438 = vadd.f32 %v10112, %v10412
    %v10439 = vadd.f32 %v10113, %v10415
    %v10440 = vadd.f32 %v10114, %v10420
    %v10441 = vadd.f32 %v10115, %v10423
    %v10446 = vrot.slane %v10124, 5
    %v10447 = vrot.slane %v10446, 4
    %v10448 = vrot.slane %v9223, 5
    %v10449 = vsel %vm2379, %v10447, %v10448
    %v10450 = vrot.slane %v10134, 5
    %v10451 = vrot.slane %v10450, 4
    %v10452 = vrot.slane %v9243, 5
    %v10453 = vsel %vm2379, %v10451, %v10452
    %s10454 = scalar_lea.vmem [#allocation12], 320
    %v10455 = vld [vmem:[%s10454] sm:$0xf]
    %v10456 = vld [vmem:[%s10454 + $0x4] sm:$0xf]
    %v10457 = vld [vmem:[%s10454 + $0x8] sm:$0xf]
    %v10458 = vld [vmem:[%s10454 + $0xc] sm:$0xf]
    %v10459 = vld [vmem:[%s10454 + $0x10] sm:$0xf]
    %v10460 = vld [vmem:[%s10454 + $0x14] sm:$0xf]
    %v10461 = vld [vmem:[%s10454 + $0x18] sm:$0xf]
    %v10462 = vld [vmem:[%s10454 + $0x1c] sm:$0xf]
    %v10463 = vld [vmem:[%s10454 + $0x20] sm:$0xf]
    %v10464 = vld [vmem:[%s10454 + $0x24] sm:$0xf]
    %v10465 = vld [vmem:[%s10454 + $0x28] sm:$0xf]
    %v10466 = vld [vmem:[%s10454 + $0x2c] sm:$0xf]
    %v10467 = vld [vmem:[%s10454 + $0x30] sm:$0xf]
    %v10468 = vld [vmem:[%s10454 + $0x34] sm:$0xf]
    %v10469 = vld [vmem:[%s10454 + $0x38] sm:$0xf]
    %v10470 = vld [vmem:[%s10454 + $0x3c] sm:$0xf]
    %v10471 = vunpack.c.l.b16 %v10449
    %v10472 = vunpack.c.l.b16 %v10453
    %v10473 = vpack.c.b16 %v10251, %v10250
    %v10474 = vpack.c.b16 %v10253, %v10252
    %v10475 = vpack.c.b16 %v10255, %v10254
    %v10476 = vpack.c.b16 %v10471, %v10256
    %v10477 = vpack.c.b16 %v10259, %v10258
    %v10478 = vpack.c.b16 %v10261, %v10260
    %v10479 = vpack.c.b16 %v10263, %v10262
    %v10480 = vpack.c.b16 %v10472, %v10264
    %v10505 = vunpack.c.l.b16 %v10455
    %v10506 = vunpack.c.l.b16 %v10456
    %v10507 = vunpack.c.l.b16 %v10457
    %v10508 = vunpack.c.l.b16 %v10458
    %v10509 = vunpack.c.l.b16 %v10459
    %v10510 = vunpack.c.l.b16 %v10460
    %v10511 = vunpack.c.l.b16 %v10461
    %v10512 = vunpack.c.l.b16 %v10462
    %v10513 = vunpack.c.l.b16 %v10463
    %v10514 = vunpack.c.l.b16 %v10464
    %v10515 = vunpack.c.l.b16 %v10465
    %v10516 = vunpack.c.l.b16 %v10466
    %v10517 = vunpack.c.l.b16 %v10467
    %v10518 = vunpack.c.l.b16 %v10468
    %v10519 = vunpack.c.l.b16 %v10469
    %v10520 = vunpack.c.l.b16 %v10470
    %v10521 = vpack.c.b16 %v10506, %v10505
    %v10522 = vpack.c.b16 %v10508, %v10507
    %v10523 = vpack.c.b16 %v10510, %v10509
    %v10524 = vpack.c.b16 %v10512, %v10511
    %v10525 = vpack.c.b16 %v10514, %v10513
    %v10526 = vpack.c.b16 %v10516, %v10515
    %v10527 = vpack.c.b16 %v10518, %v10517
    %v10528 = vpack.c.b16 %v10520, %v10519
    %10537 = vmatprep.subr.bf16.mxu0 0
    %10538 = vmatpush1.bf16.msra.mxu0 %v10528
    %10539 = vmatprep.subr.bf16.mxu0 0
    %10540 = vmatpush1.bf16.msra.mxu0 %v10527
    %10541 = vmatprep.subr.bf16.mxu0 0
    %10542 = vmatpush1.bf16.msra.mxu0 %v10526
    %10543 = vmatprep.subr.bf16.mxu0 0
    %10544 = vmatpush1.bf16.msra.mxu0 %v10525
    %10545 = vmatprep.subr.bf16.mxu0 0
    %10546 = vmatpush1.bf16.msra.mxu0 %v10524
    %10547 = vmatprep.subr.bf16.mxu0 0
    %10548 = vmatpush1.bf16.msra.mxu0 %v10523
    %10549 = vmatprep.subr.bf16.mxu0 0
    %10550 = vmatpush1.bf16.msra.mxu0 %v10522
    %10551 = vmatprep.subr.bf16.mxu0 0
    %10552 = vmatpush1.bf16.msra.mxu0 %v10521
    %10553 = vmatprep.subr.bf16.mxu0 0
    %10554 = vmatpush2.bf16.msra.mxu0 0
    %10555 = vmatprep.subr.bf16.mxu0 0
    %10556 = vmatpush2.bf16.msra.mxu0 0
    %10557 = vmatprep.subr.bf16.mxu0 0
    %10558 = vmatpush2.bf16.msra.mxu0 0
    %10559 = vmatprep.subr.bf16.mxu0 0
    %10560 = vmatpush2.bf16.msra.mxu0 0
    %10561 = vmatprep.subr.bf16.mxu0 0
    %10562 = vmatpush2.bf16.msra.mxu0 0
    %10563 = vmatprep.subr.bf16.mxu0 0
    %10564 = vmatpush2.bf16.msra.mxu0 0
    %10565 = vmatprep.subr.bf16.mxu0 0
    %10566 = vmatpush2.bf16.msra.mxu0 0
    %10567 = vmatprep.subr.bf16.mxu0 0
    %10568 = vmatpush2.bf16.msra.mxu0 0
    %10569 = vmatprep.mubr.bf16.mxu0 0
    %10570 = vmatmul.mubr.bf16.gmra.mxu0 %v10473
    %v10571 = vpop.f32.mrf.mxu0
    %v10572 = vadd.f32 0.0, %v10571
    %v10573 = vpop.f32.mrf.mxu0
    %v10574 = vpop.f32.mrf.mxu0
    %v10575 = vadd.f32 0.0, %v10574
    %v10576 = vpop.f32.mrf.mxu0
    %10577 = vmatprep.mubr.bf16.mxu0 0
    %10578 = vmatmul.mubr.bf16.gmra.mxu0 %v10474
    %v10579 = vpop.f32.mrf.mxu0
    %v10580 = vadd.f32 0.0, %v10579
    %v10581 = vpop.f32.mrf.mxu0
    %v10582 = vpop.f32.mrf.mxu0
    %v10583 = vadd.f32 0.0, %v10582
    %v10584 = vpop.f32.mrf.mxu0
    %10585 = vmatprep.mubr.bf16.mxu0 0
    %10586 = vmatmul.mubr.bf16.gmra.mxu0 %v10475
    %v10587 = vpop.f32.mrf.mxu0
    %v10588 = vadd.f32 0.0, %v10587
    %v10589 = vpop.f32.mrf.mxu0
    %v10590 = vpop.f32.mrf.mxu0
    %v10591 = vadd.f32 0.0, %v10590
    %v10592 = vpop.f32.mrf.mxu0
    %10593 = vmatprep.mubr.bf16.mxu0 0
    %10594 = vmatmul.mubr.bf16.gmra.mxu0 %v10476
    %v10595 = vpop.f32.mrf.mxu0
    %v10596 = vadd.f32 0.0, %v10595
    %v10597 = vpop.f32.mrf.mxu0
    %v10598 = vpop.f32.mrf.mxu0
    %v10599 = vadd.f32 0.0, %v10598
    %v10600 = vpop.f32.mrf.mxu0
    %10601 = vmatprep.mubr.bf16.mxu0 0
    %10602 = vmatmul.mubr.bf16.gmra.mxu0 %v10477
    %v10603 = vpop.f32.mrf.mxu0
    %v10604 = vadd.f32 0.0, %v10603
    %v10605 = vpop.f32.mrf.mxu0
    %v10606 = vpop.f32.mrf.mxu0
    %v10607 = vadd.f32 0.0, %v10606
    %v10608 = vpop.f32.mrf.mxu0
    %10609 = vmatprep.mubr.bf16.mxu0 0
    %10610 = vmatmul.mubr.bf16.gmra.mxu0 %v10478
    %v10611 = vpop.f32.mrf.mxu0
    %v10612 = vadd.f32 0.0, %v10611
    %v10613 = vpop.f32.mrf.mxu0
    %v10614 = vpop.f32.mrf.mxu0
    %v10615 = vadd.f32 0.0, %v10614
    %v10616 = vpop.f32.mrf.mxu0
    %10617 = vmatprep.mubr.bf16.mxu0 0
    %10618 = vmatmul.mubr.bf16.gmra.mxu0 %v10479
    %v10619 = vpop.f32.mrf.mxu0
    %v10620 = vadd.f32 0.0, %v10619
    %v10621 = vpop.f32.mrf.mxu0
    %v10622 = vpop.f32.mrf.mxu0
    %v10623 = vadd.f32 0.0, %v10622
    %v10624 = vpop.f32.mrf.mxu0
    %10625 = vmatprep.mubr.bf16.mxu0 0
    %10626 = vmatmul.mubr.bf16.gmra.mxu0 %v10480
    %v10627 = vpop.f32.mrf.mxu0
    %v10628 = vadd.f32 0.0, %v10627
    %v10629 = vpop.f32.mrf.mxu0
    %v10630 = vpop.f32.mrf.mxu0
    %v10631 = vadd.f32 0.0, %v10630
    %v10632 = vpop.f32.mrf.mxu0
    %10633 = vdwg.mxu0
    %v10634 = vadd.f32 %v10426, %v10572
    %v10635 = vadd.f32 %v10427, %v10575
    %v10636 = vadd.f32 %v10428, %v10580
    %v10637 = vadd.f32 %v10429, %v10583
    %v10638 = vadd.f32 %v10430, %v10588
    %v10639 = vadd.f32 %v10431, %v10591
    %v10640 = vadd.f32 %v10432, %v10596
    %v10641 = vadd.f32 %v10433, %v10599
    %v10642 = vadd.f32 %v10434, %v10604
    %v10643 = vadd.f32 %v10435, %v10607
    %v10644 = vadd.f32 %v10436, %v10612
    %v10645 = vadd.f32 %v10437, %v10615
    %v10646 = vadd.f32 %v10438, %v10620
    %v10647 = vadd.f32 %v10439, %v10623
    %v10648 = vadd.f32 %v10440, %v10628
    %v10649 = vadd.f32 %v10441, %v10631
    %v10654 = vrot.slane %v10125, 5
    %v10655 = vrot.slane %v10654, 4
    %v10656 = vrot.slane %v9225, 5
    %v10657 = vsel %vm2379, %v10655, %v10656
    %v10658 = vrot.slane %v10135, 5
    %v10659 = vrot.slane %v10658, 4
    %v10660 = vrot.slane %v9245, 5
    %v10661 = vsel %vm2379, %v10659, %v10660
    %s10662 = scalar_lea.vmem [#allocation12], 512
    %v10663 = vld [vmem:[%s10662] sm:$0xf]
    %v10664 = vld [vmem:[%s10662 + $0x4] sm:$0xf]
    %v10665 = vld [vmem:[%s10662 + $0x8] sm:$0xf]
    %v10666 = vld [vmem:[%s10662 + $0xc] sm:$0xf]
    %v10667 = vld [vmem:[%s10662 + $0x10] sm:$0xf]
    %v10668 = vld [vmem:[%s10662 + $0x14] sm:$0xf]
    %v10669 = vld [vmem:[%s10662 + $0x18] sm:$0xf]
    %v10670 = vld [vmem:[%s10662 + $0x1c] sm:$0xf]
    %v10671 = vld [vmem:[%s10662 + $0x20] sm:$0xf]
    %v10672 = vld [vmem:[%s10662 + $0x24] sm:$0xf]
    %v10673 = vld [vmem:[%s10662 + $0x28] sm:$0xf]
    %v10674 = vld [vmem:[%s10662 + $0x2c] sm:$0xf]
    %v10675 = vld [vmem:[%s10662 + $0x30] sm:$0xf]
    %v10676 = vld [vmem:[%s10662 + $0x34] sm:$0xf]
    %v10677 = vld [vmem:[%s10662 + $0x38] sm:$0xf]
    %v10678 = vld [vmem:[%s10662 + $0x3c] sm:$0xf]
    %v10679 = vunpack.c.l.b16 %v10657
    %v10680 = vunpack.c.l.b16 %v10661
    %v10681 = vpack.c.b16 %v10679, %v10471
    %v10682 = vpack.c.b16 %v10680, %v10472
    %v10701 = vunpack.c.l.b16 %v10663
    %v10702 = vunpack.c.l.b16 %v10664
    %v10703 = vunpack.c.l.b16 %v10665
    %v10704 = vunpack.c.l.b16 %v10666
    %v10705 = vunpack.c.l.b16 %v10667
    %v10706 = vunpack.c.l.b16 %v10668
    %v10707 = vunpack.c.l.b16 %v10669
    %v10708 = vunpack.c.l.b16 %v10670
    %v10709 = vunpack.c.l.b16 %v10671
    %v10710 = vunpack.c.l.b16 %v10672
    %v10711 = vunpack.c.l.b16 %v10673
    %v10712 = vunpack.c.l.b16 %v10674
    %v10713 = vunpack.c.l.b16 %v10675
    %v10714 = vunpack.c.l.b16 %v10676
    %v10715 = vunpack.c.l.b16 %v10677
    %v10716 = vunpack.c.l.b16 %v10678
    %v10717 = vpack.c.b16 %v10702, %v10701
    %v10718 = vpack.c.b16 %v10704, %v10703
    %v10719 = vpack.c.b16 %v10706, %v10705
    %v10720 = vpack.c.b16 %v10708, %v10707
    %v10721 = vpack.c.b16 %v10710, %v10709
    %v10722 = vpack.c.b16 %v10712, %v10711
    %v10723 = vpack.c.b16 %v10714, %v10713
    %v10724 = vpack.c.b16 %v10716, %v10715
    %10733 = vmatprep.subr.bf16.mxu0 0
    %10734 = vmatpush1.bf16.msra.mxu0 %v10724
    %10735 = vmatprep.subr.bf16.mxu0 0
    %10736 = vmatpush1.bf16.msra.mxu0 %v10723
    %10737 = vmatprep.subr.bf16.mxu0 0
    %10738 = vmatpush1.bf16.msra.mxu0 %v10722
    %10739 = vmatprep.subr.bf16.mxu0 0
    %10740 = vmatpush1.bf16.msra.mxu0 %v10721
    %10741 = vmatprep.subr.bf16.mxu0 0
    %10742 = vmatpush1.bf16.msra.mxu0 %v10720
    %10743 = vmatprep.subr.bf16.mxu0 0
    %10744 = vmatpush1.bf16.msra.mxu0 %v10719
    %10745 = vmatprep.subr.bf16.mxu0 0
    %10746 = vmatpush1.bf16.msra.mxu0 %v10718
    %10747 = vmatprep.subr.bf16.mxu0 0
    %10748 = vmatpush1.bf16.msra.mxu0 %v10717
    %10749 = vmatprep.subr.bf16.mxu0 0
    %10750 = vmatpush2.bf16.msra.mxu0 0
    %10751 = vmatprep.subr.bf16.mxu0 0
    %10752 = vmatpush2.bf16.msra.mxu0 0
    %10753 = vmatprep.subr.bf16.mxu0 0
    %10754 = vmatpush2.bf16.msra.mxu0 0
    %10755 = vmatprep.subr.bf16.mxu0 0
    %10756 = vmatpush2.bf16.msra.mxu0 0
    %10757 = vmatprep.subr.bf16.mxu0 0
    %10758 = vmatpush2.bf16.msra.mxu0 0
    %10759 = vmatprep.subr.bf16.mxu0 0
    %10760 = vmatpush2.bf16.msra.mxu0 0
    %10761 = vmatprep.subr.bf16.mxu0 0
    %10762 = vmatpush2.bf16.msra.mxu0 0
    %10763 = vmatprep.subr.bf16.mxu0 0
    %10764 = vmatpush2.bf16.msra.mxu0 0
    %10765 = vmatprep.mubr.bf16.mxu0 0
    %10766 = vmatmul.mubr.bf16.gmra.mxu0 %v10266
    %v10767 = vpop.f32.mrf.mxu0
    %v10768 = vadd.f32 0.0, %v10767
    %v10769 = vpop.f32.mrf.mxu0
    %v10770 = vpop.f32.mrf.mxu0
    %v10771 = vadd.f32 0.0, %v10770
    %v10772 = vpop.f32.mrf.mxu0
    %10773 = vmatprep.mubr.bf16.mxu0 0
    %10774 = vmatmul.mubr.bf16.gmra.mxu0 %v10267
    %v10775 = vpop.f32.mrf.mxu0
    %v10776 = vadd.f32 0.0, %v10775
    %v10777 = vpop.f32.mrf.mxu0
    %v10778 = vpop.f32.mrf.mxu0
    %v10779 = vadd.f32 0.0, %v10778
    %v10780 = vpop.f32.mrf.mxu0
    %10781 = vmatprep.mubr.bf16.mxu0 0
    %10782 = vmatmul.mubr.bf16.gmra.mxu0 %v10268
    %v10783 = vpop.f32.mrf.mxu0
    %v10784 = vadd.f32 0.0, %v10783
    %v10785 = vpop.f32.mrf.mxu0
    %v10786 = vpop.f32.mrf.mxu0
    %v10787 = vadd.f32 0.0, %v10786
    %v10788 = vpop.f32.mrf.mxu0
    %10789 = vmatprep.mubr.bf16.mxu0 0
    %10790 = vmatmul.mubr.bf16.gmra.mxu0 %v10681
    %v10791 = vpop.f32.mrf.mxu0
    %v10792 = vadd.f32 0.0, %v10791
    %v10793 = vpop.f32.mrf.mxu0
    %v10794 = vpop.f32.mrf.mxu0
    %v10795 = vadd.f32 0.0, %v10794
    %v10796 = vpop.f32.mrf.mxu0
    %10797 = vmatprep.mubr.bf16.mxu0 0
    %10798 = vmatmul.mubr.bf16.gmra.mxu0 %v10270
    %v10799 = vpop.f32.mrf.mxu0
    %v10800 = vadd.f32 0.0, %v10799
    %v10801 = vpop.f32.mrf.mxu0
    %v10802 = vpop.f32.mrf.mxu0
    %v10803 = vadd.f32 0.0, %v10802
    %v10804 = vpop.f32.mrf.mxu0
    %10805 = vmatprep.mubr.bf16.mxu0 0
    %10806 = vmatmul.mubr.bf16.gmra.mxu0 %v10271
    %v10807 = vpop.f32.mrf.mxu0
    %v10808 = vadd.f32 0.0, %v10807
    %v10809 = vpop.f32.mrf.mxu0
    %v10810 = vpop.f32.mrf.mxu0
    %v10811 = vadd.f32 0.0, %v10810
    %v10812 = vpop.f32.mrf.mxu0
    %10813 = vmatprep.mubr.bf16.mxu0 0
    %10814 = vmatmul.mubr.bf16.gmra.mxu0 %v10272
    %v10815 = vpop.f32.mrf.mxu0
    %v10816 = vadd.f32 0.0, %v10815
    %v10817 = vpop.f32.mrf.mxu0
    %v10818 = vpop.f32.mrf.mxu0
    %v10819 = vadd.f32 0.0, %v10818
    %v10820 = vpop.f32.mrf.mxu0
    %10821 = vmatprep.mubr.bf16.mxu0 0
    %10822 = vmatmul.mubr.bf16.gmra.mxu0 %v10682
    %v10823 = vpop.f32.mrf.mxu0
    %v10824 = vadd.f32 0.0, %v10823
    %v10825 = vpop.f32.mrf.mxu0
    %v10826 = vpop.f32.mrf.mxu0
    %v10827 = vadd.f32 0.0, %v10826
    %v10828 = vpop.f32.mrf.mxu0
    %10829 = vdwg.mxu0
    %v10830 = vadd.f32 %v10634, %v10768
    %v10831 = vadd.f32 %v10635, %v10771
    %v10832 = vadd.f32 %v10636, %v10776
    %v10833 = vadd.f32 %v10637, %v10779
    %v10834 = vadd.f32 %v10638, %v10784
    %v10835 = vadd.f32 %v10639, %v10787
    %v10836 = vadd.f32 %v10640, %v10792
    %v10837 = vadd.f32 %v10641, %v10795
    %v10838 = vadd.f32 %v10642, %v10800
    %v10839 = vadd.f32 %v10643, %v10803
    %v10840 = vadd.f32 %v10644, %v10808
    %v10841 = vadd.f32 %v10645, %v10811
    %v10842 = vadd.f32 %v10646, %v10816
    %v10843 = vadd.f32 %v10647, %v10819
    %v10844 = vadd.f32 %v10648, %v10824
    %v10845 = vadd.f32 %v10649, %v10827
    %v10846 = vld [vmem:[%s10] sm:$0x1]
    %v10848 = vlaneseq
    %v10849 = vshrl.u32 %v10848, 7
    %v10850 = vsub.s32 0, %v10849
    %v10851 = vrot.slane %v10846, %v10850
    %v10853 = vadd.f32 %v10830, %v10851
    %v10854 = vadd.f32 %v10831, %v10851
    %v10855 = vadd.f32 %v10832, %v10851
    %v10856 = vadd.f32 %v10833, %v10851
    %v10857 = vadd.f32 %v10834, %v10851
    %v10858 = vadd.f32 %v10835, %v10851
    %v10859 = vadd.f32 %v10836, %v10851
    %v10860 = vadd.f32 %v10837, %v10851
    %v10861 = vadd.f32 %v10838, %v10851
    %v10862 = vadd.f32 %v10839, %v10851
    %v10863 = vadd.f32 %v10840, %v10851
    %v10864 = vadd.f32 %v10841, %v10851
    %v10865 = vadd.f32 %v10842, %v10851
    %v10866 = vadd.f32 %v10843, %v10851
    %v10867 = vadd.f32 %v10844, %v10851
    %v10868 = vadd.f32 %v10845, %v10851
    %v10869 = vadd.f32 %v10853, %v5677
    %v10870 = vadd.f32 %v10854, %v5678
    %v10871 = vadd.f32 %v10855, %v5679
    %v10872 = vadd.f32 %v10856, %v5680
    %v10873 = vadd.f32 %v10857, %v5681
    %v10874 = vadd.f32 %v10858, %v5682
    %v10875 = vadd.f32 %v10859, %v5683
    %v10876 = vadd.f32 %v10860, %v5684
    %v10877 = vadd.f32 %v10861, %v5685
    %v10878 = vadd.f32 %v10862, %v5686
    %v10879 = vadd.f32 %v10863, %v5687
    %v10880 = vadd.f32 %v10864, %v5688
    %v10881 = vadd.f32 %v10865, %v5689
    %v10882 = vadd.f32 %v10866, %v5690
    %v10883 = vadd.f32 %v10867, %v5691
    %v10884 = vadd.f32 %v10868, %v5692
    %v10885 = vpack.c.bf16 %v10870, %v10869
    %v10886 = vpack.c.bf16 %v10872, %v10871
    %v10887 = vpack.c.bf16 %v10874, %v10873
    %v10888 = vpack.c.bf16 %v10876, %v10875
    %v10889 = vpack.c.bf16 %v10878, %v10877
    %v10890 = vpack.c.bf16 %v10880, %v10879
    %v10891 = vpack.c.bf16 %v10882, %v10881
    %v10892 = vpack.c.bf16 %v10884, %v10883
    %v10893 = vld [vmem:[#allocation14] sm:$0xf]
    %v10894 = vld [vmem:[#allocation14 + $0x4] sm:$0xf]
    %v10895 = vld [vmem:[#allocation14 + $0x8] sm:$0xf]
    %v10896 = vld [vmem:[#allocation14 + $0xc] sm:$0xf]
    %v10897 = vld [vmem:[#allocation14 + $0x10] sm:$0xf]
    %v10898 = vld [vmem:[#allocation14 + $0x14] sm:$0xf]
    %v10899 = vld [vmem:[#allocation14 + $0x18] sm:$0xf]
    %v10900 = vld [vmem:[#allocation14 + $0x1c] sm:$0xf]
    %v10901 = vld [vmem:[#allocation14 + $0x20] sm:$0xf]
    %v10902 = vld [vmem:[#allocation14 + $0x24] sm:$0xf]
    %v10903 = vld [vmem:[#allocation14 + $0x28] sm:$0xf]
    %v10904 = vld [vmem:[#allocation14 + $0x2c] sm:$0xf]
    %v10905 = vld [vmem:[#allocation14 + $0x30] sm:$0xf]
    %v10906 = vld [vmem:[#allocation14 + $0x34] sm:$0xf]
    %v10907 = vld [vmem:[#allocation14 + $0x38] sm:$0xf]
    %v10908 = vld [vmem:[#allocation14 + $0x3c] sm:$0xf]
    %v10909 = vld [vmem:[%s12] sm:$0x1]
    %v10911 = vlaneseq
    %v10912 = vshrl.u32 %v10911, 7
    %v10913 = vsub.s32 0, %v10912
    %v10914 = vrot.slane %v10909, %v10913
    %v10932 = vunpack.c.l.b16 %v10893
    %v10933 = vunpack.c.l.b16 %v10894
    %v10934 = vunpack.c.l.b16 %v10895
    %v10935 = vunpack.c.l.b16 %v10896
    %v10936 = vunpack.c.l.b16 %v10897
    %v10937 = vunpack.c.l.b16 %v10898
    %v10938 = vunpack.c.l.b16 %v10899
    %v10939 = vunpack.c.l.b16 %v10900
    %v10940 = vunpack.c.l.b16 %v10901
    %v10941 = vunpack.c.l.b16 %v10902
    %v10942 = vunpack.c.l.b16 %v10903
    %v10943 = vunpack.c.l.b16 %v10904
    %v10944 = vunpack.c.l.b16 %v10905
    %v10945 = vunpack.c.l.b16 %v10906
    %v10946 = vunpack.c.l.b16 %v10907
    %v10947 = vunpack.c.l.b16 %v10908
    %v10948 = vpack.c.b16 %v10933, %v10932
    %v10949 = vpack.c.b16 %v10935, %v10934
    %v10950 = vpack.c.b16 %v10937, %v10936
    %v10951 = vpack.c.b16 %v10939, %v10938
    %v10952 = vpack.c.b16 %v10941, %v10940
    %v10953 = vpack.c.b16 %v10943, %v10942
    %v10954 = vpack.c.b16 %v10945, %v10944
    %v10955 = vpack.c.b16 %v10947, %v10946
    %10964 = vmatprep.subr.bf16.mxu0 0
    %10965 = vmatpush1.bf16.msra.mxu0 %v10955
    %10966 = vmatprep.subr.bf16.mxu0 0
    %10967 = vmatpush1.bf16.msra.mxu0 %v10954
    %10968 = vmatprep.subr.bf16.mxu0 0
    %10969 = vmatpush1.bf16.msra.mxu0 %v10953
    %10970 = vmatprep.subr.bf16.mxu0 0
    %10971 = vmatpush1.bf16.msra.mxu0 %v10952
    %10972 = vmatprep.subr.bf16.mxu0 0
    %10973 = vmatpush1.bf16.msra.mxu0 %v10951
    %10974 = vmatprep.subr.bf16.mxu0 0
    %10975 = vmatpush1.bf16.msra.mxu0 %v10950
    %10976 = vmatprep.subr.bf16.mxu0 0
    %10977 = vmatpush1.bf16.msra.mxu0 %v10949
    %10978 = vmatprep.subr.bf16.mxu0 0
    %10979 = vmatpush1.bf16.msra.mxu0 %v10948
    %10980 = vmatprep.subr.bf16.mxu0 0
    %10981 = vmatpush2.bf16.msra.mxu0 0
    %10982 = vmatprep.subr.bf16.mxu0 0
    %10983 = vmatpush2.bf16.msra.mxu0 0
    %10984 = vmatprep.subr.bf16.mxu0 0
    %10985 = vmatpush2.bf16.msra.mxu0 0
    %10986 = vmatprep.subr.bf16.mxu0 0
    %10987 = vmatpush2.bf16.msra.mxu0 0
    %10988 = vmatprep.subr.bf16.mxu0 0
    %10989 = vmatpush2.bf16.msra.mxu0 0
    %10990 = vmatprep.subr.bf16.mxu0 0
    %10991 = vmatpush2.bf16.msra.mxu0 0
    %10992 = vmatprep.subr.bf16.mxu0 0
    %10993 = vmatpush2.bf16.msra.mxu0 0
    %10994 = vmatprep.subr.bf16.mxu0 0
    %10995 = vmatpush2.bf16.msra.mxu0 0
    %10996 = vmatprep.mubr.bf16.mxu0 0
    %10997 = vmatmul.mubr.bf16.gmra.mxu0 %v10885
    %v10998 = vpop.f32.mrf.mxu0
    %v10999 = vadd.f32 %v10914, %v10998
    %v11000 = vpop.f32.mrf.mxu0
    %v11001 = vpop.f32.mrf.mxu0
    %v11002 = vadd.f32 %v10914, %v11001
    %v11003 = vpop.f32.mrf.mxu0
    %11004 = vmatprep.mubr.bf16.mxu0 0
    %11005 = vmatmul.mubr.bf16.gmra.mxu0 %v10886
    %v11006 = vpop.f32.mrf.mxu0
    %v11007 = vadd.f32 %v10914, %v11006
    %v11008 = vpop.f32.mrf.mxu0
    %v11009 = vpop.f32.mrf.mxu0
    %v11010 = vadd.f32 %v10914, %v11009
    %v11011 = vpop.f32.mrf.mxu0
    %11012 = vmatprep.mubr.bf16.mxu0 0
    %11013 = vmatmul.mubr.bf16.gmra.mxu0 %v10887
    %v11014 = vpop.f32.mrf.mxu0
    %v11015 = vadd.f32 %v10914, %v11014
    %v11016 = vpop.f32.mrf.mxu0
    %v11017 = vpop.f32.mrf.mxu0
    %v11018 = vadd.f32 %v10914, %v11017
    %v11019 = vpop.f32.mrf.mxu0
    %11020 = vmatprep.mubr.bf16.mxu0 0
    %11021 = vmatmul.mubr.bf16.gmra.mxu0 %v10888
    %v11022 = vpop.f32.mrf.mxu0
    %v11023 = vadd.f32 %v10914, %v11022
    %v11024 = vpop.f32.mrf.mxu0
    %v11025 = vpop.f32.mrf.mxu0
    %v11026 = vadd.f32 %v10914, %v11025
    %v11027 = vpop.f32.mrf.mxu0
    %11028 = vmatprep.mubr.bf16.mxu0 0
    %11029 = vmatmul.mubr.bf16.gmra.mxu0 %v10889
    %v11030 = vpop.f32.mrf.mxu0
    %v11031 = vadd.f32 %v10914, %v11030
    %v11032 = vpop.f32.mrf.mxu0
    %v11033 = vpop.f32.mrf.mxu0
    %v11034 = vadd.f32 %v10914, %v11033
    %v11035 = vpop.f32.mrf.mxu0
    %11036 = vmatprep.mubr.bf16.mxu0 0
    %11037 = vmatmul.mubr.bf16.gmra.mxu0 %v10890
    %v11038 = vpop.f32.mrf.mxu0
    %v11039 = vadd.f32 %v10914, %v11038
    %v11040 = vpop.f32.mrf.mxu0
    %v11041 = vpop.f32.mrf.mxu0
    %v11042 = vadd.f32 %v10914, %v11041
    %v11043 = vpop.f32.mrf.mxu0
    %11044 = vmatprep.mubr.bf16.mxu0 0
    %11045 = vmatmul.mubr.bf16.gmra.mxu0 %v10891
    %v11046 = vpop.f32.mrf.mxu0
    %v11047 = vadd.f32 %v10914, %v11046
    %v11048 = vpop.f32.mrf.mxu0
    %v11049 = vpop.f32.mrf.mxu0
    %v11050 = vadd.f32 %v10914, %v11049
    %v11051 = vpop.f32.mrf.mxu0
    %11052 = vmatprep.mubr.bf16.mxu0 0
    %11053 = vmatmul.mubr.bf16.gmra.mxu0 %v10892
    %v11054 = vpop.f32.mrf.mxu0
    %v11055 = vadd.f32 %v10914, %v11054
    %v11056 = vpop.f32.mrf.mxu0
    %v11057 = vpop.f32.mrf.mxu0
    %v11058 = vadd.f32 %v10914, %v11057
    %v11059 = vpop.f32.mrf.mxu0
    %11060 = vdwg.mxu0
    %v11061 = vpack.c.bf16 %v10999, %v10999
    %v11062 = vpack.c.bf16 %v11002, %v11002
    %v11063 = vpack.c.bf16 %v11007, %v11007
    %v11064 = vpack.c.bf16 %v11010, %v11010
    %v11065 = vpack.c.bf16 %v11015, %v11015
    %v11066 = vpack.c.bf16 %v11018, %v11018
    %v11067 = vpack.c.bf16 %v11023, %v11023
    %v11068 = vpack.c.bf16 %v11026, %v11026
    %v11069 = vpack.c.bf16 %v11031, %v11031
    %v11070 = vpack.c.bf16 %v11034, %v11034
    %v11071 = vpack.c.bf16 %v11039, %v11039
    %v11072 = vpack.c.bf16 %v11042, %v11042
    %v11073 = vpack.c.bf16 %v11047, %v11047
    %v11074 = vpack.c.bf16 %v11050, %v11050
    %v11075 = vpack.c.bf16 %v11055, %v11055
    %v11076 = vpack.c.bf16 %v11058, %v11058
    %11077 = vst [vmem:[#allocation15] sm:$0xf] %v11061
    %11078 = vst [vmem:[#allocation15 + $0x4] sm:$0xf] %v11062
    %11079 = vst [vmem:[#allocation15 + $0x8] sm:$0xf] %v11063
    %11080 = vst [vmem:[#allocation15 + $0xc] sm:$0xf] %v11064
    %11081 = vst [vmem:[#allocation15 + $0x10] sm:$0xf] %v11065
    %11082 = vst [vmem:[#allocation15 + $0x14] sm:$0xf] %v11066
    %11083 = vst [vmem:[#allocation15 + $0x18] sm:$0xf] %v11067
    %11084 = vst [vmem:[#allocation15 + $0x1c] sm:$0xf] %v11068
    %11085 = vst [vmem:[#allocation15 + $0x20] sm:$0xf] %v11069
    %11086 = vst [vmem:[#allocation15 + $0x24] sm:$0xf] %v11070
    %11087 = vst [vmem:[#allocation15 + $0x28] sm:$0xf] %v11071
    %11088 = vst [vmem:[#allocation15 + $0x2c] sm:$0xf] %v11072
    %11089 = vst [vmem:[#allocation15 + $0x30] sm:$0xf] %v11073
    %11090 = vst [vmem:[#allocation15 + $0x34] sm:$0xf] %v11074
    %11091 = vst [vmem:[#allocation15 + $0x38] sm:$0xf] %v11075
    %11092 = vst [vmem:[#allocation15 + $0x3c] sm:$0xf] %v11076
    // Predicated region
    $region82: #{tpu_custom_call.1} parent=1 // pred_check
      _
    $region83: #{tpu_custom_call.1} parent=1 // pred_check_branch
      %11094 = sbr.rel (0) target = $region85
    $region84: #{tpu_custom_call.1} parent=1 // pred_region
      %s11096 = ssub.s32 1024, 1024
      %11097 = vsyncadd [#allocation5], %s11096
      %s11098 = sshll.u32 [#allocation15], 4
      %s11099 = int_to_ptr.vmem [resolvable:$true] %s11098
      %11104 = dma.vmem_to_hbm [thread:$0]  %s11099, 1024, %s13, [#allocation5], 64, 64, 4
    $region85: #{tpu_custom_call.1} parent=1 // pred_fallthru
      _
    // Predicated region
    $region86: #{tpu_custom_call.1} parent=1 // pred_check
      _
    $region87: #{tpu_custom_call.1} parent=1 // pred_check_branch
      %11106 = sbr.rel (0) target = $region89
    $region88: #{tpu_custom_call.1} parent=1 // pred_region
      %11107 = dma.done [#allocation5], 1024
    $region89: #{tpu_custom_call.1} parent=1 // pred_fallthru
      _
    %11108 = vsyncpa [#allocation4], 1
    %11109 = vsyncpa [#allocation7], 1
    %11110 = vsyncpa [#allocation10], 1
    %11111 = vsyncpa [#allocation13], 1
    %11112 = vsyncpa [#allocation5], 1

</llo_original>
